<compile_context>
chip_gen: v7x
topology: tpu7x:2x2x1
jax: 0.10.0
libtpu: 0.0.40
codegen_flags: <defaults>
</compile_context>

<pallas_src>
import jax
import jax.numpy as jnp
from jax import lax
from jax.experimental import pallas as pl
from jax.experimental.pallas import tpu as pltpu

# ---------------- configuration (small, consistent with the module) ----------------
B = 2            # batch_size
B_PAD = 8        # batch padded to a full sublane tile
S_BERT = 8       # bert seq length
T = 8            # lstm sequence length
TB = T * B_PAD   # rows of the seq-major flattened lstm input
E = 32           # lstm embedding_dim
H = 32           # lstm hidden_dim  (bidirectional -> 2*H = 64)
BERT_DIM = 64    # bert_opt.bert_dim
P = 3            # bert_opt.polarities_dim
P_PAD = 128      # head output padded to a full lane width
V_BERT = 64      # bert vocab (surrogate)
V_LSTM = 50      # lstm_opt['vocab_size']
V_PAD = 128      # lstm vocab padded to one lane width for the one-hot gather
CLS_TAB = 128    # packed [word_emb(64) | seg_emb+pos0(2) | zeros] table rows

_VMEM = pl.BlockSpec(memory_space=pltpu.MemorySpace.VMEM)
_HP = lax.Precision.HIGHEST


# ---------------------------- the fused Pallas kernel ----------------------------

def _fused_forward_kernel(cls_ids_ref, lstm_ids_ref,                       # i32 VMEM
                          cls_table_ref, pool_w_ref, pool_b_ref,           # f32 VMEM
                          lstm_emb_ref, wih_fb_ref, whh_f_ref, b_f_ref, b_b_ref,
                          head_wp_ref, head_wf_ref, head_wb_ref, head_b_ref,
                          out_ref):
    f32 = jnp.float32

    # ---- surrogate BERT pooled output: one-hot gather on the MXU + pooler ----
    # cls_ids[:, 0] = token id (< V_BERT), cls_ids[:, 1] = V_BERT + segment id.
    cls_ids = cls_ids_ref[...]                                             # (8, 2) i32
    col = lax.broadcasted_iota(jnp.int32, (B_PAD, CLS_TAB), 1)             # (8, 128)
    cls_onehot = (jnp.where(col == cls_ids[:, 0:1], 1.0, 0.0)
                  + jnp.where(col == cls_ids[:, 1:2], 1.0, 0.0)).astype(f32)
    cls_hidden = jnp.dot(cls_onehot, cls_table_ref[...],
                         preferred_element_type=f32, precision=_HP)        # (8, 64)
    pooled = jnp.tanh(jnp.dot(cls_hidden, pool_w_ref[...],
                              preferred_element_type=f32, precision=_HP)
                      + pool_b_ref[...])
    # bert_dropout: identity in eval mode

    # ---- LSTM embedding gather as a single one-hot matmul, seq-major (T*8, E) ----
    lstm_ids = lstm_ids_ref[...]                                           # (64, 1) i32
    vcol = lax.broadcasted_iota(jnp.int32, (TB, V_PAD), 1)                 # (64, 128)
    x_onehot = jnp.where(vcol == lstm_ids, 1.0, 0.0).astype(f32)
    x_flat = jnp.dot(x_onehot, lstm_emb_ref[...],
                     preferred_element_type=f32, precision=_HP)            # (64, 32)

    # ---- hoisted input projection: fwd + bwd gate pre-activations in ONE matmul ----
    gin_all = jnp.dot(x_flat, wih_fb_ref[...],
                      preferred_element_type=f32, precision=_HP)           # (64, 256)
    gin_f = gin_all[:, :4 * H] + b_f_ref[...]                              # (64, 128)

    def gate_act(g):
        # gate columns pre-permuted to [i, f, o, g]: one wide sigmoid + one tanh
        sig = jax.nn.sigmoid(g[:, :3 * H])
        return sig[:, 0:H], sig[:, H:2 * H], sig[:, 2 * H:3 * H], jnp.tanh(g[:, 3 * H:])

    whh_f = whh_f_ref[...]

    # ---- forward recurrence, statically unrolled (T = 8), (8, .) vreg tiles ----
    # t = 0: h = c = 0  ->  recurrent matmul and f*c term are exactly zero.
    i_g, f_g, o_g, g_g = gate_act(gin_f[0:B_PAD, :])
    c = i_g * g_g
    h = o_g * jnp.tanh(c)
    for t in range(1, T):
        gates = gin_f[t * B_PAD:(t + 1) * B_PAD, :] + jnp.dot(
            h, whh_f, preferred_element_type=f32, precision=_HP)
        i_g, f_g, o_g, g_g = gate_act(gates)
        c = f_g * c + i_g * g_g
        h = o_g * jnp.tanh(c)
    h_fwd = h

    # ---- backward direction output slot T-1: one step on x[T-1] from the zero state.
    # h0 = c0 = 0  ->  no h @ whh_b matmul at all (whh_b is never loaded).
    gates_b = gin_all[(T - 1) * B_PAD:T * B_PAD, 4 * H:] + b_b_ref[...]
    i_b, _f_b, o_b, g_b = gate_act(gates_b)
    h_bwd = o_b * jnp.tanh(i_b * g_b)

    # ---- classifier head: three lane-aligned matmuls summed (no lane concat),
    #      padded-lane mask baked into head_b, masked-free lane-dense output store ----
    logits = (jnp.dot(pooled, head_wp_ref[...], preferred_element_type=f32, precision=_HP)
              + jnp.dot(h_fwd, head_wf_ref[...], preferred_element_type=f32, precision=_HP)
              + jnp.dot(h_bwd, head_wb_ref[...], preferred_element_type=f32, precision=_HP)
              + head_b_ref[...])                                           # (8, 128)
    m = jnp.max(logits, axis=-1, keepdims=True)
    z = logits - m
    lse = jnp.log(jnp.sum(jnp.exp(z), axis=-1, keepdims=True))
    out_ref[...] = z - lse                                                 # full (8,128) store


# ---------------------------- wrapper ----------------------------

@jax.jit
def bert_bilstm_forward(kparams, text_bert_indices, bert_segments_ids, lstm_inputs):
    # Only the [CLS] column of the bert inputs feeds the surrogate encoder.
    tok = text_bert_indices[:, 0].astype(jnp.int32)                        # (B,)
    seg = bert_segments_ids[:, 0].astype(jnp.int32)                        # (B,)
    cls_ids = jnp.zeros((B_PAD, 2), jnp.int32)
    cls_ids = cls_ids.at[:, 1].set(V_BERT)             # padded rows -> segment-0 row
    cls_ids = cls_ids.at[:B, 0].set(tok)
    cls_ids = cls_ids.at[:B, 1].set(V_BERT + seg)

    lstm_ids = jnp.zeros((T, B_PAD), jnp.int32).at[:, :B].set(lstm_inputs.astype(jnp.int32))
    lstm_ids = lstm_ids.reshape(TB, 1)                  # seq-major, batch padded to 8

    out = pl.pallas_call(
        _fused_forward_kernel,
        out_shape=jax.ShapeDtypeStruct((B_PAD, P_PAD), jnp.float32),
        in_specs=[_VMEM] * 14,
        out_specs=_VMEM,
    )(cls_ids, lstm_ids,
      kparams["cls_table"], kparams["pool_w"], kparams["pool_b"],
      kparams["lstm_emb"], kparams["wih_fb"], kparams["whh_f"],
      kparams["b_f"], kparams["b_b"],
      kparams["head_wp"], kparams["head_wf"], kparams["head_wb"], kparams["head_b"])
    return out[:B, :P]                                   # drop batch/lane padding


# ---------------------------- parameters ----------------------------

def init_raw_params(key):
    """Parameters in PyTorch-equivalent layout ([i,f,g,o] gate order, (in,out) matrices)."""
    ks = jax.random.split(key, 16)
    s = 0.05
    return {
        # surrogate BERT embedding tables + pooler
        "bert_word_emb": s * jax.random.normal(ks[0], (V_BERT, BERT_DIM), jnp.float32),
        "bert_seg_emb":  s * jax.random.normal(ks[1], (2, BERT_DIM), jnp.float32),
        "bert_pos_emb":  s * jax.random.normal(ks[2], (S_BERT, BERT_DIM), jnp.float32),
        "bert_pool_w":   s * jax.random.normal(ks[3], (BERT_DIM, BERT_DIM), jnp.float32),
        "bert_pool_b":   s * jax.random.normal(ks[4], (1, BERT_DIM), jnp.float32),
        # nn.Embedding(vocab_size, embedding_dim)
        "lstm_emb":      s * jax.random.normal(ks[5], (V_LSTM, E), jnp.float32),
        # nn.LSTM(E, H, bidirectional=True), stored transposed, torch gate order [i,f,g,o]
        "wih_f": s * jax.random.normal(ks[6], (E, 4 * H), jnp.float32),
        "whh_f": s * jax.random.normal(ks[7], (H, 4 * H), jnp.float32),
        "b_f":   (s * jax.random.normal(ks[8], (1, 4 * H), jnp.float32)
                  + s * jax.random.normal(ks[9], (1, 4 * H), jnp.float32)),  # bias_ih + bias_hh
        "wih_b": s * jax.random.normal(ks[10], (E, 4 * H), jnp.float32),
        "whh_b": s * jax.random.normal(ks[11], (H, 4 * H), jnp.float32),
        "b_b":   (s * jax.random.normal(ks[12], (1, 4 * H), jnp.float32)
                  + s * jax.random.normal(ks[13], (1, 4 * H), jnp.float32)),
        # nn.Linear(bert_dim + 2H, P), split into the two concat halves
        "dense_w1": s * jax.random.normal(ks[14], (BERT_DIM, P), jnp.float32),
        "dense_w2": s * jax.random.normal(ks[15], (2 * H, P), jnp.float32),
        "dense_b":  jnp.zeros((1, P), jnp.float32),
    }


def _permute_gates(w):
    """Reorder the 4H gate axis from torch [i, f, g, o] to kernel [i, f, o, g]."""
    return jnp.concatenate([w[..., 0:H], w[..., H:2 * H],
                            w[..., 3 * H:4 * H], w[..., 2 * H:3 * H]], axis=-1)


def prepare_kernel_params(raw):
    """One-time repack: one-hot gather tables, gate permutation, fwd||bwd input-weight
    fusion, lane-aligned split head with the padded-logit mask baked into the bias."""
    f32 = jnp.float32

    # packed CLS gather table: rows 0..63 word emb, rows 64..65 seg emb + position-0 row
    cls_table = jnp.zeros((CLS_TAB, BERT_DIM), f32)
    cls_table = cls_table.at[:V_BERT, :].set(raw["bert_word_emb"])
    cls_table = cls_table.at[V_BERT:V_BERT + 2, :].set(
        raw["bert_seg_emb"] + raw["bert_pos_emb"][0:1, :])

    # lstm embedding table zero-padded to one lane width of vocab rows
    lstm_emb = jnp.zeros((V_PAD, E), f32).at[:V_LSTM, :].set(raw["lstm_emb"])

    def pad_lanes(w):          # (rows, P) -> (rows, P_PAD) with zero columns
        return jnp.concatenate([w, jnp.zeros((w.shape[0], P_PAD - P), f32)], axis=1)

    # padded-logit mask baked into the head bias (no in-kernel iota/where, no infs)
    head_b = jnp.concatenate([raw["dense_b"],
                              jnp.full((1, P_PAD - P), -1e30, f32)], axis=1)

    return {
        "cls_table": cls_table,
        "pool_w":    raw["bert_pool_w"],
        "pool_b":    raw["bert_pool_b"],
        "lstm_emb":  lstm_emb,
        # forward + backward input projections fused along the output dim, gates [i,f,o,g]
        "wih_fb": jnp.concatenate([_permute_gates(raw["wih_f"]),
                                   _permute_gates(raw["wih_b"])], axis=1),   # (E, 8H)
        "whh_f":  _permute_gates(raw["whh_f"]),
        "b_f":    _permute_gates(raw["b_f"]),
        "b_b":    _permute_gates(raw["b_b"]),
        # whh_b intentionally dropped: the backward slot starts from the zero init state.
        # classifier head split into the three lane-aligned row blocks of the concat
        "head_wp": pad_lanes(raw["dense_w1"]),          # (BERT_DIM, P_PAD) for pooled
        "head_wf": pad_lanes(raw["dense_w2"][:H, :]),   # (H, P_PAD)        for h_fwd
        "head_wb": pad_lanes(raw["dense_w2"][H:, :]),   # (H, P_PAD)        for h_bwd
        "head_b":  head_b,
    }


# ---------------------------- pure-JAX reference (torch semantics) ----------------------------

def reference_forward(raw, text_bert_indices, bert_segments_ids, lstm_inputs):
    hp = lax.Precision.HIGHEST
    cls_hidden = (raw["bert_word_emb"][text_bert_indices[:, 0]]
                  + raw["bert_seg_emb"][bert_segments_ids[:, 0]]
                  + raw["bert_pos_emb"][0][None, :])
    pooled = jnp.tanh(jnp.dot(cls_hidden, raw["bert_pool_w"], precision=hp)
                      + raw["bert_pool_b"])

    x = raw["lstm_emb"][lstm_inputs]                                    # (T, B, E)

    def step(x_t, h, c, wih, whh, b):
        gates = jnp.dot(x_t, wih, precision=hp) + jnp.dot(h, whh, precision=hp) + b
        i = jax.nn.sigmoid(gates[:, 0:H]); f = jax.nn.sigmoid(gates[:, H:2 * H])
        g = jnp.tanh(gates[:, 2 * H:3 * H]); o = jax.nn.sigmoid(gates[:, 3 * H:4 * H])
        c = f * c + i * g
        return o * jnp.tanh(c), c

    h = jnp.zeros((B, H), jnp.float32); c = jnp.zeros((B, H), jnp.float32)
    for t in range(T):
        h, c = step(x[t], h, c, raw["wih_f"], raw["whh_f"], raw["b_f"])
    h_fwd = h
    h_bwd, _ = step(x[T - 1], jnp.zeros((B, H), jnp.float32),
                    jnp.zeros((B, H), jnp.float32),
                    raw["wih_b"], raw["whh_b"], raw["b_b"])

    feat = jnp.concatenate([pooled, h_fwd, h_bwd], axis=-1)
    w = jnp.concatenate([raw["dense_w1"], raw["dense_w2"]], axis=0)
    logits = jnp.dot(feat, w, precision=hp) + raw["dense_b"]
    return jax.nn.log_softmax(logits, axis=-1)


# ---------------------------- main ----------------------------

if __name__ == "__main__":
    key = jax.random.PRNGKey(0)
    k_par, k_ids, k_seg, k_lstm = jax.random.split(key, 4)

    raw = init_raw_params(k_par)
    kparams = prepare_kernel_params(raw)

    text_bert_indices = jax.random.randint(k_ids, (B, S_BERT), 0, V_BERT, dtype=jnp.int32)
    bert_segments_ids = jax.random.randint(k_seg, (B, S_BERT), 0, 2, dtype=jnp.int32)
    lstm_inputs = jax.random.randint(k_lstm, (T, B), 0, V_LSTM, dtype=jnp.int32)

    log_probs = jax.block_until_ready(
        bert_bilstm_forward(kparams, text_bert_indices, bert_segments_ids, lstm_inputs))

    assert log_probs.shape == (B, P)
    # rows of exp(log_probs) must sum to 1
    assert bool(jnp.allclose(jnp.exp(log_probs).sum(-1), 1.0, atol=1e-5))
    # fused kernel must match the plain-JAX reference of the original (torch-layout) math
    ref = reference_forward(raw, text_bert_indices, bert_segments_ids, lstm_inputs)
    assert bool(jnp.allclose(log_probs, ref, atol=3e-4, rtol=3e-4))

    print("KERNEL_OK")
</pallas_src>

<mosaic_0001>
module attributes {stable_mosaic.version = 11 : i64} {
  func.func @_fused_forward_kernel(%arg0: memref<8x2xi32, #tpu.memory_space<vmem>>, %arg1: memref<64x1xi32, #tpu.memory_space<vmem>>, %arg2: memref<128x64xf32, #tpu.memory_space<vmem>>, %arg3: memref<64x64xf32, #tpu.memory_space<vmem>>, %arg4: memref<1x64xf32, #tpu.memory_space<vmem>>, %arg5: memref<128x32xf32, #tpu.memory_space<vmem>>, %arg6: memref<32x256xf32, #tpu.memory_space<vmem>>, %arg7: memref<32x128xf32, #tpu.memory_space<vmem>>, %arg8: memref<1x128xf32, #tpu.memory_space<vmem>>, %arg9: memref<1x128xf32, #tpu.memory_space<vmem>>, %arg10: memref<64x128xf32, #tpu.memory_space<vmem>>, %arg11: memref<32x128xf32, #tpu.memory_space<vmem>>, %arg12: memref<32x128xf32, #tpu.memory_space<vmem>>, %arg13: memref<1x128xf32, #tpu.memory_space<vmem>>, %arg14: memref<8x128xf32, #tpu.memory_space<vmem>>) attributes {dimension_semantics = [], scalar_prefetch = 0 : i64, scratch_operands = 0 : i64, tpu.core_type = #tpu.core_type<tc>} {
    %c0 = arith.constant 0 : index
    %c0_0 = arith.constant 0 : index
    %0 = vector.load %arg0[%c0, %c0_0] : memref<8x2xi32, #tpu.memory_space<vmem>>, vector<8x2xi32>
    %1 = tpu.iota {dimensions = array<i32: 1>} : vector<8x128xi32>
    %2 = vector.extract_strided_slice %0 {offsets = [0, 0], sizes = [8, 1], strides = [1, 1]} : vector<8x2xi32> to vector<8x1xi32>
    %3 = vector.broadcast %2 : vector<8x1xi32> to vector<8x128xi32>
    %4 = arith.cmpi eq, %1, %3 : vector<8x128xi32>
    %cst = arith.constant 1.000000e+00 : f32
    %cst_1 = arith.constant 0.000000e+00 : f32
    %5 = vector.broadcast %cst : f32 to vector<8x128xf32>
    %6 = vector.broadcast %cst_1 : f32 to vector<8x128xf32>
    %7 = arith.select %4, %5, %6 : vector<8x128xi1>, vector<8x128xf32>
    %8 = vector.extract_strided_slice %0 {offsets = [0, 1], sizes = [8, 1], strides = [1, 1]} : vector<8x2xi32> to vector<8x1xi32>
    %9 = vector.broadcast %8 : vector<8x1xi32> to vector<8x128xi32>
    %10 = arith.cmpi eq, %1, %9 : vector<8x128xi32>
    %cst_2 = arith.constant 1.000000e+00 : f32
    %cst_3 = arith.constant 0.000000e+00 : f32
    %11 = vector.broadcast %cst_2 : f32 to vector<8x128xf32>
    %12 = vector.broadcast %cst_3 : f32 to vector<8x128xf32>
    %13 = arith.select %10, %11, %12 : vector<8x128xi1>, vector<8x128xf32>
    %14 = arith.addf %7, %13 : vector<8x128xf32>
    %c0_4 = arith.constant 0 : index
    %c0_5 = arith.constant 0 : index
    %15 = vector.load %arg2[%c0_4, %c0_5] : memref<128x64xf32, #tpu.memory_space<vmem>>, vector<128x64xf32>
    %cst_6 = arith.constant dense<0.000000e+00> : vector<8x64xf32>
    %16 = tpu.matmul %14, %15, %cst_6 {dimension_numbers = #tpu.dot_dimension_numbers<[1], [0], [0], [1], [0, 0, 1, 1], [], []>, precision = #tpu.contract_precision<fp32>} : vector<8x128xf32>, vector<128x64xf32>, vector<8x64xf32> -> vector<8x64xf32>
    %c0_7 = arith.constant 0 : index
    %c0_8 = arith.constant 0 : index
    %17 = vector.load %arg3[%c0_7, %c0_8] : memref<64x64xf32, #tpu.memory_space<vmem>>, vector<64x64xf32>
    %cst_9 = arith.constant dense<0.000000e+00> : vector<8x64xf32>
    %18 = tpu.matmul %16, %17, %cst_9 {dimension_numbers = #tpu.dot_dimension_numbers<[1], [0], [0], [1], [0, 0, 1, 1], [], []>, precision = #tpu.contract_precision<fp32>} : vector<8x64xf32>, vector<64x64xf32>, vector<8x64xf32> -> vector<8x64xf32>
    %c0_10 = arith.constant 0 : index
    %c0_11 = arith.constant 0 : index
    %19 = vector.load %arg4[%c0_10, %c0_11] : memref<1x64xf32, #tpu.memory_space<vmem>>, vector<1x64xf32>
    %20 = vector.broadcast %19 : vector<1x64xf32> to vector<8x64xf32>
    %21 = arith.addf %18, %20 : vector<8x64xf32>
    %22 = math.tanh %21 : vector<8x64xf32>
    %c0_12 = arith.constant 0 : index
    %c0_13 = arith.constant 0 : index
    %23 = vector.load %arg1[%c0_12, %c0_13] : memref<64x1xi32, #tpu.memory_space<vmem>>, vector<64x1xi32>
    %24 = tpu.iota {dimensions = array<i32: 1>} : vector<64x128xi32>
    %25 = vector.broadcast %23 : vector<64x1xi32> to vector<64x128xi32>
    %26 = arith.cmpi eq, %24, %25 : vector<64x128xi32>
    %cst_14 = arith.constant 1.000000e+00 : f32
    %cst_15 = arith.constant 0.000000e+00 : f32
    %27 = vector.broadcast %cst_14 : f32 to vector<64x128xf32>
    %28 = vector.broadcast %cst_15 : f32 to vector<64x128xf32>
    %29 = arith.select %26, %27, %28 : vector<64x128xi1>, vector<64x128xf32>
    %c0_16 = arith.constant 0 : index
    %c0_17 = arith.constant 0 : index
    %30 = vector.load %arg5[%c0_16, %c0_17] : memref<128x32xf32, #tpu.memory_space<vmem>>, vector<128x32xf32>
    %cst_18 = arith.constant dense<0.000000e+00> : vector<64x32xf32>
    %31 = tpu.matmul %29, %30, %cst_18 {dimension_numbers = #tpu.dot_dimension_numbers<[1], [0], [0], [1], [0, 0, 1, 1], [], []>, precision = #tpu.contract_precision<fp32>} : vector<64x128xf32>, vector<128x32xf32>, vector<64x32xf32> -> vector<64x32xf32>
    %c0_19 = arith.constant 0 : index
    %c0_20 = arith.constant 0 : index
    %32 = vector.load %arg6[%c0_19, %c0_20] : memref<32x256xf32, #tpu.memory_space<vmem>>, vector<32x256xf32>
    %cst_21 = arith.constant dense<0.000000e+00> : vector<64x256xf32>
    %33 = tpu.matmul %31, %32, %cst_21 {dimension_numbers = #tpu.dot_dimension_numbers<[1], [0], [0], [1], [0, 0, 1, 1], [], []>, precision = #tpu.contract_precision<fp32>} : vector<64x32xf32>, vector<32x256xf32>, vector<64x256xf32> -> vector<64x256xf32>
    %34 = vector.extract_strided_slice %33 {offsets = [0, 0], sizes = [64, 128], strides = [1, 1]} : vector<64x256xf32> to vector<64x128xf32>
    %c0_22 = arith.constant 0 : index
    %c0_23 = arith.constant 0 : index
    %35 = vector.load %arg8[%c0_22, %c0_23] : memref<1x128xf32, #tpu.memory_space<vmem>>, vector<1x128xf32>
    %36 = vector.broadcast %35 : vector<1x128xf32> to vector<64x128xf32>
    %37 = arith.addf %34, %36 : vector<64x128xf32>
    %c0_24 = arith.constant 0 : index
    %c0_25 = arith.constant 0 : index
    %38 = vector.load %arg7[%c0_24, %c0_25] : memref<32x128xf32, #tpu.memory_space<vmem>>, vector<32x128xf32>
    %39 = vector.extract_strided_slice %37 {offsets = [0, 0], sizes = [8, 128], strides = [1, 1]} : vector<64x128xf32> to vector<8x128xf32>
    %40 = vector.extract_strided_slice %39 {offsets = [0, 0], sizes = [8, 96], strides = [1, 1]} : vector<8x128xf32> to vector<8x96xf32>
    %41 = arith.negf %40 : vector<8x96xf32>
    %42 = math.exp %41 : vector<8x96xf32>
    %cst_26 = arith.constant 1.000000e+00 : f32
    %43 = vector.broadcast %cst_26 : f32 to vector<8x96xf32>
    %44 = arith.addf %43, %42 : vector<8x96xf32>
    %45 = arith.divf %43, %44 : vector<8x96xf32>
    %46 = vector.extract_strided_slice %45 {offsets = [0, 0], sizes = [8, 32], strides = [1, 1]} : vector<8x96xf32> to vector<8x32xf32>
    %47 = vector.extract_strided_slice %45 {offsets = [0, 64], sizes = [8, 32], strides = [1, 1]} : vector<8x96xf32> to vector<8x32xf32>
    %48 = vector.extract_strided_slice %39 {offsets = [0, 96], sizes = [8, 32], strides = [1, 1]} : vector<8x128xf32> to vector<8x32xf32>
    %49 = math.tanh %48 : vector<8x32xf32>
    %50 = arith.mulf %46, %49 : vector<8x32xf32>
    %51 = math.tanh %50 : vector<8x32xf32>
    %52 = arith.mulf %47, %51 : vector<8x32xf32>
    %53 = vector.extract_strided_slice %37 {offsets = [8, 0], sizes = [8, 128], strides = [1, 1]} : vector<64x128xf32> to vector<8x128xf32>
    %cst_27 = arith.constant dense<0.000000e+00> : vector<8x128xf32>
    %54 = tpu.matmul %52, %38, %cst_27 {dimension_numbers = #tpu.dot_dimension_numbers<[1], [0], [0], [1], [0, 0, 1, 1], [], []>, precision = #tpu.contract_precision<fp32>} : vector<8x32xf32>, vector<32x128xf32>, vector<8x128xf32> -> vector<8x128xf32>
    %55 = arith.addf %53, %54 : vector<8x128xf32>
    %56 = vector.extract_strided_slice %55 {offsets = [0, 0], sizes = [8, 96], strides = [1, 1]} : vector<8x128xf32> to vector<8x96xf32>
    %57 = arith.negf %56 : vector<8x96xf32>
    %58 = math.exp %57 : vector<8x96xf32>
    %cst_28 = arith.constant 1.000000e+00 : f32
    %59 = vector.broadcast %cst_28 : f32 to vector<8x96xf32>
    %60 = arith.addf %59, %58 : vector<8x96xf32>
    %61 = arith.divf %59, %60 : vector<8x96xf32>
    %62 = vector.extract_strided_slice %61 {offsets = [0, 0], sizes = [8, 32], strides = [1, 1]} : vector<8x96xf32> to vector<8x32xf32>
    %63 = vector.extract_strided_slice %61 {offsets = [0, 32], sizes = [8, 32], strides = [1, 1]} : vector<8x96xf32> to vector<8x32xf32>
    %64 = vector.extract_strided_slice %61 {offsets = [0, 64], sizes = [8, 32], strides = [1, 1]} : vector<8x96xf32> to vector<8x32xf32>
    %65 = vector.extract_strided_slice %55 {offsets = [0, 96], sizes = [8, 32], strides = [1, 1]} : vector<8x128xf32> to vector<8x32xf32>
    %66 = math.tanh %65 : vector<8x32xf32>
    %67 = arith.mulf %63, %50 : vector<8x32xf32>
    %68 = arith.mulf %62, %66 : vector<8x32xf32>
    %69 = arith.addf %67, %68 : vector<8x32xf32>
    %70 = math.tanh %69 : vector<8x32xf32>
    %71 = arith.mulf %64, %70 : vector<8x32xf32>
    %72 = vector.extract_strided_slice %37 {offsets = [16, 0], sizes = [8, 128], strides = [1, 1]} : vector<64x128xf32> to vector<8x128xf32>
    %cst_29 = arith.constant dense<0.000000e+00> : vector<8x128xf32>
    %73 = tpu.matmul %71, %38, %cst_29 {dimension_numbers = #tpu.dot_dimension_numbers<[1], [0], [0], [1], [0, 0, 1, 1], [], []>, precision = #tpu.contract_precision<fp32>} : vector<8x32xf32>, vector<32x128xf32>, vector<8x128xf32> -> vector<8x128xf32>
    %74 = arith.addf %72, %73 : vector<8x128xf32>
    %75 = vector.extract_strided_slice %74 {offsets = [0, 0], sizes = [8, 96], strides = [1, 1]} : vector<8x128xf32> to vector<8x96xf32>
    %76 = arith.negf %75 : vector<8x96xf32>
    %77 = math.exp %76 : vector<8x96xf32>
    %cst_30 = arith.constant 1.000000e+00 : f32
    %78 = vector.broadcast %cst_30 : f32 to vector<8x96xf32>
    %79 = arith.addf %78, %77 : vector<8x96xf32>
    %80 = arith.divf %78, %79 : vector<8x96xf32>
    %81 = vector.extract_strided_slice %80 {offsets = [0, 0], sizes = [8, 32], strides = [1, 1]} : vector<8x96xf32> to vector<8x32xf32>
    %82 = vector.extract_strided_slice %80 {offsets = [0, 32], sizes = [8, 32], strides = [1, 1]} : vector<8x96xf32> to vector<8x32xf32>
    %83 = vector.extract_strided_slice %80 {offsets = [0, 64], sizes = [8, 32], strides = [1, 1]} : vector<8x96xf32> to vector<8x32xf32>
    %84 = vector.extract_strided_slice %74 {offsets = [0, 96], sizes = [8, 32], strides = [1, 1]} : vector<8x128xf32> to vector<8x32xf32>
    %85 = math.tanh %84 : vector<8x32xf32>
    %86 = arith.mulf %82, %69 : vector<8x32xf32>
    %87 = arith.mulf %81, %85 : vector<8x32xf32>
    %88 = arith.addf %86, %87 : vector<8x32xf32>
    %89 = math.tanh %88 : vector<8x32xf32>
    %90 = arith.mulf %83, %89 : vector<8x32xf32>
    %91 = vector.extract_strided_slice %37 {offsets = [24, 0], sizes = [8, 128], strides = [1, 1]} : vector<64x128xf32> to vector<8x128xf32>
    %cst_31 = arith.constant dense<0.000000e+00> : vector<8x128xf32>
    %92 = tpu.matmul %90, %38, %cst_31 {dimension_numbers = #tpu.dot_dimension_numbers<[1], [0], [0], [1], [0, 0, 1, 1], [], []>, precision = #tpu.contract_precision<fp32>} : vector<8x32xf32>, vector<32x128xf32>, vector<8x128xf32> -> vector<8x128xf32>
    %93 = arith.addf %91, %92 : vector<8x128xf32>
    %94 = vector.extract_strided_slice %93 {offsets = [0, 0], sizes = [8, 96], strides = [1, 1]} : vector<8x128xf32> to vector<8x96xf32>
    %95 = arith.negf %94 : vector<8x96xf32>
    %96 = math.exp %95 : vector<8x96xf32>
    %cst_32 = arith.constant 1.000000e+00 : f32
    %97 = vector.broadcast %cst_32 : f32 to vector<8x96xf32>
    %98 = arith.addf %97, %96 : vector<8x96xf32>
    %99 = arith.divf %97, %98 : vector<8x96xf32>
    %100 = vector.extract_strided_slice %99 {offsets = [0, 0], sizes = [8, 32], strides = [1, 1]} : vector<8x96xf32> to vector<8x32xf32>
    %101 = vector.extract_strided_slice %99 {offsets = [0, 32], sizes = [8, 32], strides = [1, 1]} : vector<8x96xf32> to vector<8x32xf32>
    %102 = vector.extract_strided_slice %99 {offsets = [0, 64], sizes = [8, 32], strides = [1, 1]} : vector<8x96xf32> to vector<8x32xf32>
    %103 = vector.extract_strided_slice %93 {offsets = [0, 96], sizes = [8, 32], strides = [1, 1]} : vector<8x128xf32> to vector<8x32xf32>
    %104 = math.tanh %103 : vector<8x32xf32>
    %105 = arith.mulf %101, %88 : vector<8x32xf32>
    %106 = arith.mulf %100, %104 : vector<8x32xf32>
    %107 = arith.addf %105, %106 : vector<8x32xf32>
    %108 = math.tanh %107 : vector<8x32xf32>
    %109 = arith.mulf %102, %108 : vector<8x32xf32>
    %110 = vector.extract_strided_slice %37 {offsets = [32, 0], sizes = [8, 128], strides = [1, 1]} : vector<64x128xf32> to vector<8x128xf32>
    %cst_33 = arith.constant dense<0.000000e+00> : vector<8x128xf32>
    %111 = tpu.matmul %109, %38, %cst_33 {dimension_numbers = #tpu.dot_dimension_numbers<[1], [0], [0], [1], [0, 0, 1, 1], [], []>, precision = #tpu.contract_precision<fp32>} : vector<8x32xf32>, vector<32x128xf32>, vector<8x128xf32> -> vector<8x128xf32>
    %112 = arith.addf %110, %111 : vector<8x128xf32>
    %113 = vector.extract_strided_slice %112 {offsets = [0, 0], sizes = [8, 96], strides = [1, 1]} : vector<8x128xf32> to vector<8x96xf32>
    %114 = arith.negf %113 : vector<8x96xf32>
    %115 = math.exp %114 : vector<8x96xf32>
    %cst_34 = arith.constant 1.000000e+00 : f32
    %116 = vector.broadcast %cst_34 : f32 to vector<8x96xf32>
    %117 = arith.addf %116, %115 : vector<8x96xf32>
    %118 = arith.divf %116, %117 : vector<8x96xf32>
    %119 = vector.extract_strided_slice %118 {offsets = [0, 0], sizes = [8, 32], strides = [1, 1]} : vector<8x96xf32> to vector<8x32xf32>
    %120 = vector.extract_strided_slice %118 {offsets = [0, 32], sizes = [8, 32], strides = [1, 1]} : vector<8x96xf32> to vector<8x32xf32>
    %121 = vector.extract_strided_slice %118 {offsets = [0, 64], sizes = [8, 32], strides = [1, 1]} : vector<8x96xf32> to vector<8x32xf32>
    %122 = vector.extract_strided_slice %112 {offsets = [0, 96], sizes = [8, 32], strides = [1, 1]} : vector<8x128xf32> to vector<8x32xf32>
    %123 = math.tanh %122 : vector<8x32xf32>
    %124 = arith.mulf %120, %107 : vector<8x32xf32>
    %125 = arith.mulf %119, %123 : vector<8x32xf32>
    %126 = arith.addf %124, %125 : vector<8x32xf32>
    %127 = math.tanh %126 : vector<8x32xf32>
    %128 = arith.mulf %121, %127 : vector<8x32xf32>
    %129 = vector.extract_strided_slice %37 {offsets = [40, 0], sizes = [8, 128], strides = [1, 1]} : vector<64x128xf32> to vector<8x128xf32>
    %cst_35 = arith.constant dense<0.000000e+00> : vector<8x128xf32>
    %130 = tpu.matmul %128, %38, %cst_35 {dimension_numbers = #tpu.dot_dimension_numbers<[1], [0], [0], [1], [0, 0, 1, 1], [], []>, precision = #tpu.contract_precision<fp32>} : vector<8x32xf32>, vector<32x128xf32>, vector<8x128xf32> -> vector<8x128xf32>
    %131 = arith.addf %129, %130 : vector<8x128xf32>
    %132 = vector.extract_strided_slice %131 {offsets = [0, 0], sizes = [8, 96], strides = [1, 1]} : vector<8x128xf32> to vector<8x96xf32>
    %133 = arith.negf %132 : vector<8x96xf32>
    %134 = math.exp %133 : vector<8x96xf32>
    %cst_36 = arith.constant 1.000000e+00 : f32
    %135 = vector.broadcast %cst_36 : f32 to vector<8x96xf32>
    %136 = arith.addf %135, %134 : vector<8x96xf32>
    %137 = arith.divf %135, %136 : vector<8x96xf32>
    %138 = vector.extract_strided_slice %137 {offsets = [0, 0], sizes = [8, 32], strides = [1, 1]} : vector<8x96xf32> to vector<8x32xf32>
    %139 = vector.extract_strided_slice %137 {offsets = [0, 32], sizes = [8, 32], strides = [1, 1]} : vector<8x96xf32> to vector<8x32xf32>
    %140 = vector.extract_strided_slice %137 {offsets = [0, 64], sizes = [8, 32], strides = [1, 1]} : vector<8x96xf32> to vector<8x32xf32>
    %141 = vector.extract_strided_slice %131 {offsets = [0, 96], sizes = [8, 32], strides = [1, 1]} : vector<8x128xf32> to vector<8x32xf32>
    %142 = math.tanh %141 : vector<8x32xf32>
    %143 = arith.mulf %139, %126 : vector<8x32xf32>
    %144 = arith.mulf %138, %142 : vector<8x32xf32>
    %145 = arith.addf %143, %144 : vector<8x32xf32>
    %146 = math.tanh %145 : vector<8x32xf32>
    %147 = arith.mulf %140, %146 : vector<8x32xf32>
    %148 = vector.extract_strided_slice %37 {offsets = [48, 0], sizes = [8, 128], strides = [1, 1]} : vector<64x128xf32> to vector<8x128xf32>
    %cst_37 = arith.constant dense<0.000000e+00> : vector<8x128xf32>
    %149 = tpu.matmul %147, %38, %cst_37 {dimension_numbers = #tpu.dot_dimension_numbers<[1], [0], [0], [1], [0, 0, 1, 1], [], []>, precision = #tpu.contract_precision<fp32>} : vector<8x32xf32>, vector<32x128xf32>, vector<8x128xf32> -> vector<8x128xf32>
    %150 = arith.addf %148, %149 : vector<8x128xf32>
    %151 = vector.extract_strided_slice %150 {offsets = [0, 0], sizes = [8, 96], strides = [1, 1]} : vector<8x128xf32> to vector<8x96xf32>
    %152 = arith.negf %151 : vector<8x96xf32>
    %153 = math.exp %152 : vector<8x96xf32>
    %cst_38 = arith.constant 1.000000e+00 : f32
    %154 = vector.broadcast %cst_38 : f32 to vector<8x96xf32>
    %155 = arith.addf %154, %153 : vector<8x96xf32>
    %156 = arith.divf %154, %155 : vector<8x96xf32>
    %157 = vector.extract_strided_slice %156 {offsets = [0, 0], sizes = [8, 32], strides = [1, 1]} : vector<8x96xf32> to vector<8x32xf32>
    %158 = vector.extract_strided_slice %156 {offsets = [0, 32], sizes = [8, 32], strides = [1, 1]} : vector<8x96xf32> to vector<8x32xf32>
    %159 = vector.extract_strided_slice %156 {offsets = [0, 64], sizes = [8, 32], strides = [1, 1]} : vector<8x96xf32> to vector<8x32xf32>
    %160 = vector.extract_strided_slice %150 {offsets = [0, 96], sizes = [8, 32], strides = [1, 1]} : vector<8x128xf32> to vector<8x32xf32>
    %161 = math.tanh %160 : vector<8x32xf32>
    %162 = arith.mulf %158, %145 : vector<8x32xf32>
    %163 = arith.mulf %157, %161 : vector<8x32xf32>
    %164 = arith.addf %162, %163 : vector<8x32xf32>
    %165 = math.tanh %164 : vector<8x32xf32>
    %166 = arith.mulf %159, %165 : vector<8x32xf32>
    %167 = vector.extract_strided_slice %37 {offsets = [56, 0], sizes = [8, 128], strides = [1, 1]} : vector<64x128xf32> to vector<8x128xf32>
    %cst_39 = arith.constant dense<0.000000e+00> : vector<8x128xf32>
    %168 = tpu.matmul %166, %38, %cst_39 {dimension_numbers = #tpu.dot_dimension_numbers<[1], [0], [0], [1], [0, 0, 1, 1], [], []>, precision = #tpu.contract_precision<fp32>} : vector<8x32xf32>, vector<32x128xf32>, vector<8x128xf32> -> vector<8x128xf32>
    %169 = arith.addf %167, %168 : vector<8x128xf32>
    %170 = vector.extract_strided_slice %169 {offsets = [0, 0], sizes = [8, 96], strides = [1, 1]} : vector<8x128xf32> to vector<8x96xf32>
    %171 = arith.negf %170 : vector<8x96xf32>
    %172 = math.exp %171 : vector<8x96xf32>
    %cst_40 = arith.constant 1.000000e+00 : f32
    %173 = vector.broadcast %cst_40 : f32 to vector<8x96xf32>
    %174 = arith.addf %173, %172 : vector<8x96xf32>
    %175 = arith.divf %173, %174 : vector<8x96xf32>
    %176 = vector.extract_strided_slice %175 {offsets = [0, 0], sizes = [8, 32], strides = [1, 1]} : vector<8x96xf32> to vector<8x32xf32>
    %177 = vector.extract_strided_slice %175 {offsets = [0, 32], sizes = [8, 32], strides = [1, 1]} : vector<8x96xf32> to vector<8x32xf32>
    %178 = vector.extract_strided_slice %175 {offsets = [0, 64], sizes = [8, 32], strides = [1, 1]} : vector<8x96xf32> to vector<8x32xf32>
    %179 = vector.extract_strided_slice %169 {offsets = [0, 96], sizes = [8, 32], strides = [1, 1]} : vector<8x128xf32> to vector<8x32xf32>
    %180 = math.tanh %179 : vector<8x32xf32>
    %181 = arith.mulf %177, %164 : vector<8x32xf32>
    %182 = arith.mulf %176, %180 : vector<8x32xf32>
    %183 = arith.addf %181, %182 : vector<8x32xf32>
    %184 = math.tanh %183 : vector<8x32xf32>
    %185 = arith.mulf %178, %184 : vector<8x32xf32>
    %186 = vector.extract_strided_slice %33 {offsets = [56, 128], sizes = [8, 128], strides = [1, 1]} : vector<64x256xf32> to vector<8x128xf32>
    %c0_41 = arith.constant 0 : index
    %c0_42 = arith.constant 0 : index
    %187 = vector.load %arg9[%c0_41, %c0_42] : memref<1x128xf32, #tpu.memory_space<vmem>>, vector<1x128xf32>
    %188 = vector.broadcast %187 : vector<1x128xf32> to vector<8x128xf32>
    %189 = arith.addf %186, %188 : vector<8x128xf32>
    %190 = vector.extract_strided_slice %189 {offsets = [0, 0], sizes = [8, 96], strides = [1, 1]} : vector<8x128xf32> to vector<8x96xf32>
    %191 = arith.negf %190 : vector<8x96xf32>
    %192 = math.exp %191 : vector<8x96xf32>
    %cst_43 = arith.constant 1.000000e+00 : f32
    %193 = vector.broadcast %cst_43 : f32 to vector<8x96xf32>
    %194 = arith.addf %193, %192 : vector<8x96xf32>
    %195 = arith.divf %193, %194 : vector<8x96xf32>
    %196 = vector.extract_strided_slice %195 {offsets = [0, 0], sizes = [8, 32], strides = [1, 1]} : vector<8x96xf32> to vector<8x32xf32>
    %197 = vector.extract_strided_slice %195 {offsets = [0, 64], sizes = [8, 32], strides = [1, 1]} : vector<8x96xf32> to vector<8x32xf32>
    %198 = vector.extract_strided_slice %189 {offsets = [0, 96], sizes = [8, 32], strides = [1, 1]} : vector<8x128xf32> to vector<8x32xf32>
    %199 = math.tanh %198 : vector<8x32xf32>
    %200 = arith.mulf %196, %199 : vector<8x32xf32>
    %201 = math.tanh %200 : vector<8x32xf32>
    %202 = arith.mulf %197, %201 : vector<8x32xf32>
    %c0_44 = arith.constant 0 : index
    %c0_45 = arith.constant 0 : index
    %203 = vector.load %arg10[%c0_44, %c0_45] : memref<64x128xf32, #tpu.memory_space<vmem>>, vector<64x128xf32>
    %cst_46 = arith.constant dense<0.000000e+00> : vector<8x128xf32>
    %204 = tpu.matmul %22, %203, %cst_46 {dimension_numbers = #tpu.dot_dimension_numbers<[1], [0], [0], [1], [0, 0, 1, 1], [], []>, precision = #tpu.contract_precision<fp32>} : vector<8x64xf32>, vector<64x128xf32>, vector<8x128xf32> -> vector<8x128xf32>
    %c0_47 = arith.constant 0 : index
    %c0_48 = arith.constant 0 : index
    %205 = vector.load %arg11[%c0_47, %c0_48] : memref<32x128xf32, #tpu.memory_space<vmem>>, vector<32x128xf32>
    %cst_49 = arith.constant dense<0.000000e+00> : vector<8x128xf32>
    %206 = tpu.matmul %185, %205, %cst_49 {dimension_numbers = #tpu.dot_dimension_numbers<[1], [0], [0], [1], [0, 0, 1, 1], [], []>, precision = #tpu.contract_precision<fp32>} : vector<8x32xf32>, vector<32x128xf32>, vector<8x128xf32> -> vector<8x128xf32>
    %207 = arith.addf %204, %206 : vector<8x128xf32>
    %c0_50 = arith.constant 0 : index
    %c0_51 = arith.constant 0 : index
    %208 = vector.load %arg12[%c0_50, %c0_51] : memref<32x128xf32, #tpu.memory_space<vmem>>, vector<32x128xf32>
    %cst_52 = arith.constant dense<0.000000e+00> : vector<8x128xf32>
    %209 = tpu.matmul %202, %208, %cst_52 {dimension_numbers = #tpu.dot_dimension_numbers<[1], [0], [0], [1], [0, 0, 1, 1], [], []>, precision = #tpu.contract_precision<fp32>} : vector<8x32xf32>, vector<32x128xf32>, vector<8x128xf32> -> vector<8x128xf32>
    %210 = arith.addf %207, %209 : vector<8x128xf32>
    %c0_53 = arith.constant 0 : index
    %c0_54 = arith.constant 0 : index
    %211 = vector.load %arg13[%c0_53, %c0_54] : memref<1x128xf32, #tpu.memory_space<vmem>>, vector<1x128xf32>
    %212 = vector.broadcast %211 : vector<1x128xf32> to vector<8x128xf32>
    %213 = arith.addf %210, %212 : vector<8x128xf32>
    %cst_55 = arith.constant dense<0xFF800000> : vector<8xf32>
    %214 = vector.multi_reduction <maximumf>, %213, %cst_55 [1] : vector<8x128xf32> to vector<8xf32>
    %215 = vector.shape_cast %214 : vector<8xf32> to vector<8x1xf32>
    %216 = vector.broadcast %215 : vector<8x1xf32> to vector<8x128xf32>
    %217 = arith.subf %213, %216 : vector<8x128xf32>
    %218 = math.exp %217 : vector<8x128xf32>
    %cst_56 = arith.constant dense<0.000000e+00> : vector<8xf32>
    %219 = vector.multi_reduction <add>, %218, %cst_56 [1] : vector<8x128xf32> to vector<8xf32>
    %220 = vector.shape_cast %219 : vector<8xf32> to vector<8x1xf32>
    %221 = math.log %220 : vector<8x1xf32>
    %222 = vector.broadcast %221 : vector<8x1xf32> to vector<8x128xf32>
    %223 = arith.subf %217, %222 : vector<8x128xf32>
    %c0_57 = arith.constant 0 : index
    %c0_58 = arith.constant 0 : index
    %224 = vector.load %arg14[%c0_57, %c0_58] : memref<8x128xf32, #tpu.memory_space<vmem>>, vector<8x128xf32>
    tpu.vector_store %arg14[%c0_57, %c0_58], %223 {strides = array<i32>} : memref<8x128xf32, #tpu.memory_space<vmem>>, vector<8x128xf32>,
    return
  }
}

</mosaic_0001>

<llo_original>
// kernel: bert_bilstm_forward.1
$region0: #{bert_bilstm_forward.1}
  #allocation0 [shape = 'u32[]', space=smem, size = 0x4, offset = 0x4, fixed_abs, tag = 'smem constant byte address 0x4 - core index']
  #allocation1 [shape = 'u32[144,128]{1,0:T(1,128)}', space=vmem, size = 0x12000, scoped, tag = 'internal scratch']
  %s0 = inlined_call_operand.vmem [shape: s32[8,2], index: 0, kind: input, shape index: {}]
  %s1 = inlined_call_operand.vmem [shape: s32[64,1], index: 1, kind: input, shape index: {}]
  %s2 = inlined_call_operand.vmem [shape: f32[128,64], index: 2, kind: input, shape index: {}]
  %s3 = inlined_call_operand.vmem [shape: f32[64,64], index: 3, kind: input, shape index: {}]
  %s4 = inlined_call_operand.vmem [shape: f32[1,64], index: 4, kind: input, shape index: {}]
  %s5 = inlined_call_operand.vmem [shape: f32[128,32], index: 5, kind: input, shape index: {}]
  %s6 = inlined_call_operand.vmem [shape: f32[32,256], index: 6, kind: input, shape index: {}]
  %s7 = inlined_call_operand.vmem [shape: f32[32,128], index: 7, kind: input, shape index: {}]
  %s8 = inlined_call_operand.vmem [shape: f32[1,128], index: 8, kind: input, shape index: {}]
  %s9 = inlined_call_operand.vmem [shape: f32[1,128], index: 9, kind: input, shape index: {}]
  %s10 = inlined_call_operand.vmem [shape: f32[64,128], index: 10, kind: input, shape index: {}]
  %s11 = inlined_call_operand.vmem [shape: f32[32,128], index: 11, kind: input, shape index: {}]
  %s12 = inlined_call_operand.vmem [shape: f32[32,128], index: 12, kind: input, shape index: {}]
  %s13 = inlined_call_operand.vmem [shape: f32[1,128], index: 13, kind: input, shape index: {}]
  %s14 = inlined_call_operand.vmem [shape: f32[8,128], index: 14, kind: output, shape index: {}]
  %s15 = sld [smem:[#allocation0]]
  $region66: #{bert_bilstm_forward.1} parent=0
    _
  %s17 = ssub.s32 1, %s15
  %s18 = scalar_select 0, %s17, %s15
  // Predicated region
  $region2: #{bert_bilstm_forward.1} parent=0 // pred_check
    _
  $region3: #{bert_bilstm_forward.1} parent=0 // pred_check_branch
    %20 = sbr.rel (0) target = $region5
  $region4: #{bert_bilstm_forward.1} parent=0 // pred_region
    _
  $region5: #{bert_bilstm_forward.1} parent=0 // pred_fallthru
    _
  // Predicated region
  $region6: #{bert_bilstm_forward.1} parent=0 // pred_check
    _
  $region7: #{bert_bilstm_forward.1} parent=0 // pred_check_branch
    %22 = sbr.rel (0) target = $region9
  $region8: #{bert_bilstm_forward.1} parent=0 // pred_region
    _
  $region9: #{bert_bilstm_forward.1} parent=0 // pred_fallthru
    _
  // Predicated region
  $region10: #{bert_bilstm_forward.1} parent=0 // pred_check
    _
  $region11: #{bert_bilstm_forward.1} parent=0 // pred_check_branch
    %24 = sbr.rel (0) target = $region13
  $region12: #{bert_bilstm_forward.1} parent=0 // pred_region
    _
  $region13: #{bert_bilstm_forward.1} parent=0 // pred_fallthru
    _
  // Predicated region
  $region14: #{bert_bilstm_forward.1} parent=0 // pred_check
    _
  $region15: #{bert_bilstm_forward.1} parent=0 // pred_check_branch
    %26 = sbr.rel (0) target = $region17
  $region16: #{bert_bilstm_forward.1} parent=0 // pred_region
    _
  $region17: #{bert_bilstm_forward.1} parent=0 // pred_fallthru
    _
  // Predicated region
  $region18: #{bert_bilstm_forward.1} parent=0 // pred_check
    _
  $region19: #{bert_bilstm_forward.1} parent=0 // pred_check_branch
    %28 = sbr.rel (0) target = $region21
  $region20: #{bert_bilstm_forward.1} parent=0 // pred_region
    _
  $region21: #{bert_bilstm_forward.1} parent=0 // pred_fallthru
    _
  // Predicated region
  $region22: #{bert_bilstm_forward.1} parent=0 // pred_check
    _
  $region23: #{bert_bilstm_forward.1} parent=0 // pred_check_branch
    %30 = sbr.rel (0) target = $region25
  $region24: #{bert_bilstm_forward.1} parent=0 // pred_region
    _
  $region25: #{bert_bilstm_forward.1} parent=0 // pred_fallthru
    _
  // Predicated region
  $region26: #{bert_bilstm_forward.1} parent=0 // pred_check
    _
  $region27: #{bert_bilstm_forward.1} parent=0 // pred_check_branch
    %32 = sbr.rel (0) target = $region29
  $region28: #{bert_bilstm_forward.1} parent=0 // pred_region
    _
  $region29: #{bert_bilstm_forward.1} parent=0 // pred_fallthru
    _
  // Predicated region
  $region30: #{bert_bilstm_forward.1} parent=0 // pred_check
    _
  $region31: #{bert_bilstm_forward.1} parent=0 // pred_check_branch
    %34 = sbr.rel (0) target = $region33
  $region32: #{bert_bilstm_forward.1} parent=0 // pred_region
    _
  $region33: #{bert_bilstm_forward.1} parent=0 // pred_fallthru
    _
  // Predicated region
  $region34: #{bert_bilstm_forward.1} parent=0 // pred_check
    _
  $region35: #{bert_bilstm_forward.1} parent=0 // pred_check_branch
    %36 = sbr.rel (0) target = $region37
  $region36: #{bert_bilstm_forward.1} parent=0 // pred_region
    _
  $region37: #{bert_bilstm_forward.1} parent=0 // pred_fallthru
    _
  // Predicated region
  $region38: #{bert_bilstm_forward.1} parent=0 // pred_check
    _
  $region39: #{bert_bilstm_forward.1} parent=0 // pred_check_branch
    %38 = sbr.rel (0) target = $region41
  $region40: #{bert_bilstm_forward.1} parent=0 // pred_region
    _
  $region41: #{bert_bilstm_forward.1} parent=0 // pred_fallthru
    _
  // Predicated region
  $region42: #{bert_bilstm_forward.1} parent=0 // pred_check
    _
  $region43: #{bert_bilstm_forward.1} parent=0 // pred_check_branch
    %40 = sbr.rel (0) target = $region45
  $region44: #{bert_bilstm_forward.1} parent=0 // pred_region
    _
  $region45: #{bert_bilstm_forward.1} parent=0 // pred_fallthru
    _
  // Predicated region
  $region46: #{bert_bilstm_forward.1} parent=0 // pred_check
    _
  $region47: #{bert_bilstm_forward.1} parent=0 // pred_check_branch
    %42 = sbr.rel (0) target = $region49
  $region48: #{bert_bilstm_forward.1} parent=0 // pred_region
    _
  $region49: #{bert_bilstm_forward.1} parent=0 // pred_fallthru
    _
  // Predicated region
  $region50: #{bert_bilstm_forward.1} parent=0 // pred_check
    _
  $region51: #{bert_bilstm_forward.1} parent=0 // pred_check_branch
    %44 = sbr.rel (0) target = $region53
  $region52: #{bert_bilstm_forward.1} parent=0 // pred_region
    _
  $region53: #{bert_bilstm_forward.1} parent=0 // pred_fallthru
    _
  // Predicated region
  $region54: #{bert_bilstm_forward.1} parent=0 // pred_check
    _
  $region55: #{bert_bilstm_forward.1} parent=0 // pred_check_branch
    %46 = sbr.rel (0) target = $region57
  $region56: #{bert_bilstm_forward.1} parent=0 // pred_region
    _
  $region57: #{bert_bilstm_forward.1} parent=0 // pred_fallthru
    _
  %v47 = vld [vmem:[%s0] sm:$0xff]
  %v48 = vlaneseq
  %v49 = vand.u32 %v48, 127
  %50 = vset.pattern.permute.xlu0 0
  %51 = vperm.xlu0 %50, %v47
  %v52 = vpop.permute.xlu0 %51
  %vm53 = vcmp.eq.s32.totalorder %v49, %v52
  %v54 = vsel %vm53, 1.0, 0.0
  %55 = vset.pattern.permute.xlu0 1
  %56 = vperm.xlu0 %55, %v47
  %v57 = vpop.permute.xlu0 %56
  %vm58 = vcmp.eq.s32.totalorder %v49, %v57
  %v59 = vsel %vm58, 1.0, 0.0
  %v60 = vadd.f32 %v54, %v59
  %v61 = vld [vmem:[%s2] sm:$0xff]
  %v62 = vld [vmem:[%s2 + $0x8] sm:$0xff]
  %v63 = vld [vmem:[%s2 + $0x10] sm:$0xff]
  %v64 = vld [vmem:[%s2 + $0x18] sm:$0xff]
  %v65 = vld [vmem:[%s2 + $0x20] sm:$0xff]
  %v66 = vld [vmem:[%s2 + $0x28] sm:$0xff]
  %v67 = vld [vmem:[%s2 + $0x30] sm:$0xff]
  %v68 = vld [vmem:[%s2 + $0x38] sm:$0xff]
  %v69 = vld [vmem:[%s2 + $0x40] sm:$0xff]
  %v70 = vld [vmem:[%s2 + $0x48] sm:$0xff]
  %v71 = vld [vmem:[%s2 + $0x50] sm:$0xff]
  %v72 = vld [vmem:[%s2 + $0x58] sm:$0xff]
  %v73 = vld [vmem:[%s2 + $0x60] sm:$0xff]
  %v74 = vld [vmem:[%s2 + $0x68] sm:$0xff]
  %v75 = vld [vmem:[%s2 + $0x70] sm:$0xff]
  %v76 = vld [vmem:[%s2 + $0x78] sm:$0xff]
  %77 = vmatprep.subr.mxu0 0.0
  %v78 = vand.u32 %v61, 4294901760
  %79 = vmatpush1.msra.mxu0 %v78
  %80 = vmatprep.subr.mxu0 0.0
  %v81 = vand.u32 %v62, 4294901760
  %82 = vmatpush1.msra.mxu0 %v81
  %83 = vmatprep.subr.mxu0 0.0
  %v84 = vand.u32 %v63, 4294901760
  %85 = vmatpush1.msra.mxu0 %v84
  %86 = vmatprep.subr.mxu0 0.0
  %v87 = vand.u32 %v64, 4294901760
  %88 = vmatpush1.msra.mxu0 %v87
  %89 = vmatprep.subr.mxu0 0.0
  %v90 = vand.u32 %v65, 4294901760
  %91 = vmatpush1.msra.mxu0 %v90
  %92 = vmatprep.subr.mxu0 0.0
  %v93 = vand.u32 %v66, 4294901760
  %94 = vmatpush1.msra.mxu0 %v93
  %95 = vmatprep.subr.mxu0 0.0
  %v96 = vand.u32 %v67, 4294901760
  %97 = vmatpush1.msra.mxu0 %v96
  %98 = vmatprep.subr.mxu0 0.0
  %v99 = vand.u32 %v68, 4294901760
  %100 = vmatpush1.msra.mxu0 %v99
  %101 = vmatprep.subr.mxu0 0.0
  %v102 = vand.u32 %v69, 4294901760
  %103 = vmatpush1.msra.mxu0 %v102
  %104 = vmatprep.subr.mxu0 0.0
  %v105 = vand.u32 %v70, 4294901760
  %106 = vmatpush1.msra.mxu0 %v105
  %107 = vmatprep.subr.mxu0 0.0
  %v108 = vand.u32 %v71, 4294901760
  %109 = vmatpush1.msra.mxu0 %v108
  %110 = vmatprep.subr.mxu0 0.0
  %v111 = vand.u32 %v72, 4294901760
  %112 = vmatpush1.msra.mxu0 %v111
  %113 = vmatprep.subr.mxu0 0.0
  %v114 = vand.u32 %v73, 4294901760
  %115 = vmatpush1.msra.mxu0 %v114
  %116 = vmatprep.subr.mxu0 0.0
  %v117 = vand.u32 %v74, 4294901760
  %118 = vmatpush1.msra.mxu0 %v117
  %119 = vmatprep.subr.mxu0 0.0
  %v120 = vand.u32 %v75, 4294901760
  %121 = vmatpush1.msra.mxu0 %v120
  %122 = vmatprep.subr.mxu0 0.0
  %v123 = vand.u32 %v76, 4294901760
  %124 = vmatpush1.msra.mxu0 %v123
  %125 = vmatprep.subr.mxu0 0.0
  %126 = vmatpush1.msra.mxu0 0.0
  %127 = vmatprep.subr.mxu0 0.0
  %128 = vmatpush1.msra.mxu0 0.0
  %129 = vmatprep.subr.mxu0 0.0
  %130 = vmatpush1.msra.mxu0 0.0
  %131 = vmatprep.subr.mxu0 0.0
  %132 = vmatpush1.msra.mxu0 0.0
  %133 = vmatprep.subr.mxu0 0.0
  %134 = vmatpush1.msra.mxu0 0.0
  %135 = vmatprep.subr.mxu0 0.0
  %136 = vmatpush1.msra.mxu0 0.0
  %137 = vmatprep.subr.mxu0 0.0
  %138 = vmatpush1.msra.mxu0 0.0
  %139 = vmatprep.subr.mxu0 0.0
  %140 = vmatpush1.msra.mxu0 0.0
  %141 = vmatprep.subr.mxu0 0.0
  %142 = vmatpush1.msra.mxu0 0.0
  %143 = vmatprep.subr.mxu0 0.0
  %144 = vmatpush1.msra.mxu0 0.0
  %145 = vmatprep.subr.mxu0 0.0
  %146 = vmatpush1.msra.mxu0 0.0
  %147 = vmatprep.subr.mxu0 0.0
  %148 = vmatpush1.msra.mxu0 0.0
  %149 = vmatprep.subr.mxu0 0.0
  %150 = vmatpush1.msra.mxu0 0.0
  %151 = vmatprep.subr.mxu0 0.0
  %152 = vmatpush1.msra.mxu0 0.0
  %153 = vmatprep.subr.mxu0 0.0
  %154 = vmatpush1.msra.mxu0 0.0
  %155 = vmatprep.subr.mxu0 0.0
  %156 = vmatpush1.msra.mxu0 0.0
  %157 = vmatprep.mubr.f32.mxu0 0.0
  %v158 = vand.u32 %v60, 4294901760
  %v159 = vsub.f32 %v60, %v158
  %v160 = vand.u32 %v159, 4294901760
  %v161 = vsub.f32 %v159, %v160
  %v162 = vand.u32 %v161, 4294901760
  %163 = vmatmul.mubr.f32.gmra.mrb[0].mxu0 %v162
  %v164 = vpop.f32.mrb[0].mxu0
  %v165 = vadd.f32 0.0, %v164
  %v166 = vpop.f32.mrb[0].mxu0
  %167 = vdwg.mxu0
  %168 = vmatprep.subr.mxu0 0.0
  %v169 = vand.u32 %v61, 4294901760
  %v170 = vsub.f32 %v61, %v169
  %v171 = vand.u32 %v170, 4294901760
  %v172 = vsub.f32 %v170, %v171
  %v173 = vand.u32 %v172, 4294901760
  %174 = vmatpush1.msra.mxu0 %v173
  %175 = vmatprep.subr.mxu0 0.0
  %v176 = vand.u32 %v62, 4294901760
  %v177 = vsub.f32 %v62, %v176
  %v178 = vand.u32 %v177, 4294901760
  %v179 = vsub.f32 %v177, %v178
  %v180 = vand.u32 %v179, 4294901760
  %181 = vmatpush1.msra.mxu0 %v180
  %182 = vmatprep.subr.mxu0 0.0
  %v183 = vand.u32 %v63, 4294901760
  %v184 = vsub.f32 %v63, %v183
  %v185 = vand.u32 %v184, 4294901760
  %v186 = vsub.f32 %v184, %v185
  %v187 = vand.u32 %v186, 4294901760
  %188 = vmatpush1.msra.mxu0 %v187
  %189 = vmatprep.subr.mxu0 0.0
  %v190 = vand.u32 %v64, 4294901760
  %v191 = vsub.f32 %v64, %v190
  %v192 = vand.u32 %v191, 4294901760
  %v193 = vsub.f32 %v191, %v192
  %v194 = vand.u32 %v193, 4294901760
  %195 = vmatpush1.msra.mxu0 %v194
  %196 = vmatprep.subr.mxu0 0.0
  %v197 = vand.u32 %v65, 4294901760
  %v198 = vsub.f32 %v65, %v197
  %v199 = vand.u32 %v198, 4294901760
  %v200 = vsub.f32 %v198, %v199
  %v201 = vand.u32 %v200, 4294901760
  %202 = vmatpush1.msra.mxu0 %v201
  %203 = vmatprep.subr.mxu0 0.0
  %v204 = vand.u32 %v66, 4294901760
  %v205 = vsub.f32 %v66, %v204
  %v206 = vand.u32 %v205, 4294901760
  %v207 = vsub.f32 %v205, %v206
  %v208 = vand.u32 %v207, 4294901760
  %209 = vmatpush1.msra.mxu0 %v208
  %210 = vmatprep.subr.mxu0 0.0
  %v211 = vand.u32 %v67, 4294901760
  %v212 = vsub.f32 %v67, %v211
  %v213 = vand.u32 %v212, 4294901760
  %v214 = vsub.f32 %v212, %v213
  %v215 = vand.u32 %v214, 4294901760
  %216 = vmatpush1.msra.mxu0 %v215
  %217 = vmatprep.subr.mxu0 0.0
  %v218 = vand.u32 %v68, 4294901760
  %v219 = vsub.f32 %v68, %v218
  %v220 = vand.u32 %v219, 4294901760
  %v221 = vsub.f32 %v219, %v220
  %v222 = vand.u32 %v221, 4294901760
  %223 = vmatpush1.msra.mxu0 %v222
  %224 = vmatprep.subr.mxu0 0.0
  %v225 = vand.u32 %v69, 4294901760
  %v226 = vsub.f32 %v69, %v225
  %v227 = vand.u32 %v226, 4294901760
  %v228 = vsub.f32 %v226, %v227
  %v229 = vand.u32 %v228, 4294901760
  %230 = vmatpush1.msra.mxu0 %v229
  %231 = vmatprep.subr.mxu0 0.0
  %v232 = vand.u32 %v70, 4294901760
  %v233 = vsub.f32 %v70, %v232
  %v234 = vand.u32 %v233, 4294901760
  %v235 = vsub.f32 %v233, %v234
  %v236 = vand.u32 %v235, 4294901760
  %237 = vmatpush1.msra.mxu0 %v236
  %238 = vmatprep.subr.mxu0 0.0
  %v239 = vand.u32 %v71, 4294901760
  %v240 = vsub.f32 %v71, %v239
  %v241 = vand.u32 %v240, 4294901760
  %v242 = vsub.f32 %v240, %v241
  %v243 = vand.u32 %v242, 4294901760
  %244 = vmatpush1.msra.mxu0 %v243
  %245 = vmatprep.subr.mxu0 0.0
  %v246 = vand.u32 %v72, 4294901760
  %v247 = vsub.f32 %v72, %v246
  %v248 = vand.u32 %v247, 4294901760
  %v249 = vsub.f32 %v247, %v248
  %v250 = vand.u32 %v249, 4294901760
  %251 = vmatpush1.msra.mxu0 %v250
  %252 = vmatprep.subr.mxu0 0.0
  %v253 = vand.u32 %v73, 4294901760
  %v254 = vsub.f32 %v73, %v253
  %v255 = vand.u32 %v254, 4294901760
  %v256 = vsub.f32 %v254, %v255
  %v257 = vand.u32 %v256, 4294901760
  %258 = vmatpush1.msra.mxu0 %v257
  %259 = vmatprep.subr.mxu0 0.0
  %v260 = vand.u32 %v74, 4294901760
  %v261 = vsub.f32 %v74, %v260
  %v262 = vand.u32 %v261, 4294901760
  %v263 = vsub.f32 %v261, %v262
  %v264 = vand.u32 %v263, 4294901760
  %265 = vmatpush1.msra.mxu0 %v264
  %266 = vmatprep.subr.mxu0 0.0
  %v267 = vand.u32 %v75, 4294901760
  %v268 = vsub.f32 %v75, %v267
  %v269 = vand.u32 %v268, 4294901760
  %v270 = vsub.f32 %v268, %v269
  %v271 = vand.u32 %v270, 4294901760
  %272 = vmatpush1.msra.mxu0 %v271
  %273 = vmatprep.subr.mxu0 0.0
  %v274 = vand.u32 %v76, 4294901760
  %v275 = vsub.f32 %v76, %v274
  %v276 = vand.u32 %v275, 4294901760
  %v277 = vsub.f32 %v275, %v276
  %v278 = vand.u32 %v277, 4294901760
  %279 = vmatpush1.msra.mxu0 %v278
  %280 = vmatprep.subr.mxu0 0.0
  %281 = vmatpush1.msra.mxu0 0.0
  %282 = vmatprep.subr.mxu0 0.0
  %283 = vmatpush1.msra.mxu0 0.0
  %284 = vmatprep.subr.mxu0 0.0
  %285 = vmatpush1.msra.mxu0 0.0
  %286 = vmatprep.subr.mxu0 0.0
  %287 = vmatpush1.msra.mxu0 0.0
  %288 = vmatprep.subr.mxu0 0.0
  %289 = vmatpush1.msra.mxu0 0.0
  %290 = vmatprep.subr.mxu0 0.0
  %291 = vmatpush1.msra.mxu0 0.0
  %292 = vmatprep.subr.mxu0 0.0
  %293 = vmatpush1.msra.mxu0 0.0
  %294 = vmatprep.subr.mxu0 0.0
  %295 = vmatpush1.msra.mxu0 0.0
  %296 = vmatprep.subr.mxu0 0.0
  %297 = vmatpush1.msra.mxu0 0.0
  %298 = vmatprep.subr.mxu0 0.0
  %299 = vmatpush1.msra.mxu0 0.0
  %300 = vmatprep.subr.mxu0 0.0
  %301 = vmatpush1.msra.mxu0 0.0
  %302 = vmatprep.subr.mxu0 0.0
  %303 = vmatpush1.msra.mxu0 0.0
  %304 = vmatprep.subr.mxu0 0.0
  %305 = vmatpush1.msra.mxu0 0.0
  %306 = vmatprep.subr.mxu0 0.0
  %307 = vmatpush1.msra.mxu0 0.0
  %308 = vmatprep.subr.mxu0 0.0
  %309 = vmatpush1.msra.mxu0 0.0
  %310 = vmatprep.subr.mxu0 0.0
  %311 = vmatpush1.msra.mxu0 0.0
  %312 = vmatprep.mubr.f32.mxu0 0.0
  %v313 = vand.u32 %v60, 4294901760
  %314 = vmatmul.mubr.f32.gmra.mrb[0].mxu0 %v313
  %v315 = vpop.f32.mrb[0].mxu0
  %v316 = vadd.f32 %v165, %v315
  %v317 = vpop.f32.mrb[0].mxu0
  %318 = vdwg.mxu0
  %319 = vmatprep.subr.mxu0 0.0
  %v320 = vand.u32 %v61, 4294901760
  %v321 = vsub.f32 %v61, %v320
  %322 = vmatpush1.msra.mxu0 %v321
  %323 = vmatprep.subr.mxu0 0.0
  %v324 = vand.u32 %v62, 4294901760
  %v325 = vsub.f32 %v62, %v324
  %326 = vmatpush1.msra.mxu0 %v325
  %327 = vmatprep.subr.mxu0 0.0
  %v328 = vand.u32 %v63, 4294901760
  %v329 = vsub.f32 %v63, %v328
  %330 = vmatpush1.msra.mxu0 %v329
  %331 = vmatprep.subr.mxu0 0.0
  %v332 = vand.u32 %v64, 4294901760
  %v333 = vsub.f32 %v64, %v332
  %334 = vmatpush1.msra.mxu0 %v333
  %335 = vmatprep.subr.mxu0 0.0
  %v336 = vand.u32 %v65, 4294901760
  %v337 = vsub.f32 %v65, %v336
  %338 = vmatpush1.msra.mxu0 %v337
  %339 = vmatprep.subr.mxu0 0.0
  %v340 = vand.u32 %v66, 4294901760
  %v341 = vsub.f32 %v66, %v340
  %342 = vmatpush1.msra.mxu0 %v341
  %343 = vmatprep.subr.mxu0 0.0
  %v344 = vand.u32 %v67, 4294901760
  %v345 = vsub.f32 %v67, %v344
  %346 = vmatpush1.msra.mxu0 %v345
  %347 = vmatprep.subr.mxu0 0.0
  %v348 = vand.u32 %v68, 4294901760
  %v349 = vsub.f32 %v68, %v348
  %350 = vmatpush1.msra.mxu0 %v349
  %351 = vmatprep.subr.mxu0 0.0
  %v352 = vand.u32 %v69, 4294901760
  %v353 = vsub.f32 %v69, %v352
  %354 = vmatpush1.msra.mxu0 %v353
  %355 = vmatprep.subr.mxu0 0.0
  %v356 = vand.u32 %v70, 4294901760
  %v357 = vsub.f32 %v70, %v356
  %358 = vmatpush1.msra.mxu0 %v357
  %359 = vmatprep.subr.mxu0 0.0
  %v360 = vand.u32 %v71, 4294901760
  %v361 = vsub.f32 %v71, %v360
  %362 = vmatpush1.msra.mxu0 %v361
  %363 = vmatprep.subr.mxu0 0.0
  %v364 = vand.u32 %v72, 4294901760
  %v365 = vsub.f32 %v72, %v364
  %366 = vmatpush1.msra.mxu0 %v365
  %367 = vmatprep.subr.mxu0 0.0
  %v368 = vand.u32 %v73, 4294901760
  %v369 = vsub.f32 %v73, %v368
  %370 = vmatpush1.msra.mxu0 %v369
  %371 = vmatprep.subr.mxu0 0.0
  %v372 = vand.u32 %v74, 4294901760
  %v373 = vsub.f32 %v74, %v372
  %374 = vmatpush1.msra.mxu0 %v373
  %375 = vmatprep.subr.mxu0 0.0
  %v376 = vand.u32 %v75, 4294901760
  %v377 = vsub.f32 %v75, %v376
  %378 = vmatpush1.msra.mxu0 %v377
  %379 = vmatprep.subr.mxu0 0.0
  %v380 = vand.u32 %v76, 4294901760
  %v381 = vsub.f32 %v76, %v380
  %382 = vmatpush1.msra.mxu0 %v381
  %383 = vmatprep.subr.mxu0 0.0
  %384 = vmatpush1.msra.mxu0 0.0
  %385 = vmatprep.subr.mxu0 0.0
  %386 = vmatpush1.msra.mxu0 0.0
  %387 = vmatprep.subr.mxu0 0.0
  %388 = vmatpush1.msra.mxu0 0.0
  %389 = vmatprep.subr.mxu0 0.0
  %390 = vmatpush1.msra.mxu0 0.0
  %391 = vmatprep.subr.mxu0 0.0
  %392 = vmatpush1.msra.mxu0 0.0
  %393 = vmatprep.subr.mxu0 0.0
  %394 = vmatpush1.msra.mxu0 0.0
  %395 = vmatprep.subr.mxu0 0.0
  %396 = vmatpush1.msra.mxu0 0.0
  %397 = vmatprep.subr.mxu0 0.0
  %398 = vmatpush1.msra.mxu0 0.0
  %399 = vmatprep.subr.mxu0 0.0
  %400 = vmatpush1.msra.mxu0 0.0
  %401 = vmatprep.subr.mxu0 0.0
  %402 = vmatpush1.msra.mxu0 0.0
  %403 = vmatprep.subr.mxu0 0.0
  %404 = vmatpush1.msra.mxu0 0.0
  %405 = vmatprep.subr.mxu0 0.0
  %406 = vmatpush1.msra.mxu0 0.0
  %407 = vmatprep.subr.mxu0 0.0
  %408 = vmatpush1.msra.mxu0 0.0
  %409 = vmatprep.subr.mxu0 0.0
  %410 = vmatpush1.msra.mxu0 0.0
  %411 = vmatprep.subr.mxu0 0.0
  %412 = vmatpush1.msra.mxu0 0.0
  %413 = vmatprep.subr.mxu0 0.0
  %414 = vmatpush1.msra.mxu0 0.0
  %415 = vmatprep.mubr.f32.mxu0 0.0
  %v416 = vand.u32 %v60, 4294901760
  %v417 = vsub.f32 %v60, %v416
  %418 = vmatmul.mubr.f32.gmra.mrb[0].mxu0 %v417
  %v419 = vpop.f32.mrb[0].mxu0
  %v420 = vadd.f32 %v316, %v419
  %v421 = vpop.f32.mrb[0].mxu0
  %422 = vdwg.mxu0
  %423 = vmatprep.subr.mxu0 0.0
  %v424 = vand.u32 %v61, 4294901760
  %425 = vmatpush1.msra.mxu0 %v424
  %426 = vmatprep.subr.mxu0 0.0
  %v427 = vand.u32 %v62, 4294901760
  %428 = vmatpush1.msra.mxu0 %v427
  %429 = vmatprep.subr.mxu0 0.0
  %v430 = vand.u32 %v63, 4294901760
  %431 = vmatpush1.msra.mxu0 %v430
  %432 = vmatprep.subr.mxu0 0.0
  %v433 = vand.u32 %v64, 4294901760
  %434 = vmatpush1.msra.mxu0 %v433
  %435 = vmatprep.subr.mxu0 0.0
  %v436 = vand.u32 %v65, 4294901760
  %437 = vmatpush1.msra.mxu0 %v436
  %438 = vmatprep.subr.mxu0 0.0
  %v439 = vand.u32 %v66, 4294901760
  %440 = vmatpush1.msra.mxu0 %v439
  %441 = vmatprep.subr.mxu0 0.0
  %v442 = vand.u32 %v67, 4294901760
  %443 = vmatpush1.msra.mxu0 %v442
  %444 = vmatprep.subr.mxu0 0.0
  %v445 = vand.u32 %v68, 4294901760
  %446 = vmatpush1.msra.mxu0 %v445
  %447 = vmatprep.subr.mxu0 0.0
  %v448 = vand.u32 %v69, 4294901760
  %449 = vmatpush1.msra.mxu0 %v448
  %450 = vmatprep.subr.mxu0 0.0
  %v451 = vand.u32 %v70, 4294901760
  %452 = vmatpush1.msra.mxu0 %v451
  %453 = vmatprep.subr.mxu0 0.0
  %v454 = vand.u32 %v71, 4294901760
  %455 = vmatpush1.msra.mxu0 %v454
  %456 = vmatprep.subr.mxu0 0.0
  %v457 = vand.u32 %v72, 4294901760
  %458 = vmatpush1.msra.mxu0 %v457
  %459 = vmatprep.subr.mxu0 0.0
  %v460 = vand.u32 %v73, 4294901760
  %461 = vmatpush1.msra.mxu0 %v460
  %462 = vmatprep.subr.mxu0 0.0
  %v463 = vand.u32 %v74, 4294901760
  %464 = vmatpush1.msra.mxu0 %v463
  %465 = vmatprep.subr.mxu0 0.0
  %v466 = vand.u32 %v75, 4294901760
  %467 = vmatpush1.msra.mxu0 %v466
  %468 = vmatprep.subr.mxu0 0.0
  %v469 = vand.u32 %v76, 4294901760
  %470 = vmatpush1.msra.mxu0 %v469
  %471 = vmatprep.subr.mxu0 0.0
  %472 = vmatpush1.msra.mxu0 0.0
  %473 = vmatprep.subr.mxu0 0.0
  %474 = vmatpush1.msra.mxu0 0.0
  %475 = vmatprep.subr.mxu0 0.0
  %476 = vmatpush1.msra.mxu0 0.0
  %477 = vmatprep.subr.mxu0 0.0
  %478 = vmatpush1.msra.mxu0 0.0
  %479 = vmatprep.subr.mxu0 0.0
  %480 = vmatpush1.msra.mxu0 0.0
  %481 = vmatprep.subr.mxu0 0.0
  %482 = vmatpush1.msra.mxu0 0.0
  %483 = vmatprep.subr.mxu0 0.0
  %484 = vmatpush1.msra.mxu0 0.0
  %485 = vmatprep.subr.mxu0 0.0
  %486 = vmatpush1.msra.mxu0 0.0
  %487 = vmatprep.subr.mxu0 0.0
  %488 = vmatpush1.msra.mxu0 0.0
  %489 = vmatprep.subr.mxu0 0.0
  %490 = vmatpush1.msra.mxu0 0.0
  %491 = vmatprep.subr.mxu0 0.0
  %492 = vmatpush1.msra.mxu0 0.0
  %493 = vmatprep.subr.mxu0 0.0
  %494 = vmatpush1.msra.mxu0 0.0
  %495 = vmatprep.subr.mxu0 0.0
  %496 = vmatpush1.msra.mxu0 0.0
  %497 = vmatprep.subr.mxu0 0.0
  %498 = vmatpush1.msra.mxu0 0.0
  %499 = vmatprep.subr.mxu0 0.0
  %500 = vmatpush1.msra.mxu0 0.0
  %501 = vmatprep.subr.mxu0 0.0
  %502 = vmatpush1.msra.mxu0 0.0
  %503 = vmatprep.mubr.f32.mxu0 0.0
  %v504 = vand.u32 %v60, 4294901760
  %v505 = vsub.f32 %v60, %v504
  %v506 = vand.u32 %v505, 4294901760
  %507 = vmatmul.mubr.f32.gmra.mrb[0].mxu0 %v506
  %v508 = vpop.f32.mrb[0].mxu0
  %v509 = vadd.f32 %v420, %v508
  %v510 = vpop.f32.mrb[0].mxu0
  %511 = vdwg.mxu0
  %512 = vmatprep.subr.mxu0 0.0
  %v513 = vand.u32 %v61, 4294901760
  %v514 = vsub.f32 %v61, %v513
  %v515 = vand.u32 %v514, 4294901760
  %516 = vmatpush1.msra.mxu0 %v515
  %517 = vmatprep.subr.mxu0 0.0
  %v518 = vand.u32 %v62, 4294901760
  %v519 = vsub.f32 %v62, %v518
  %v520 = vand.u32 %v519, 4294901760
  %521 = vmatpush1.msra.mxu0 %v520
  %522 = vmatprep.subr.mxu0 0.0
  %v523 = vand.u32 %v63, 4294901760
  %v524 = vsub.f32 %v63, %v523
  %v525 = vand.u32 %v524, 4294901760
  %526 = vmatpush1.msra.mxu0 %v525
  %527 = vmatprep.subr.mxu0 0.0
  %v528 = vand.u32 %v64, 4294901760
  %v529 = vsub.f32 %v64, %v528
  %v530 = vand.u32 %v529, 4294901760
  %531 = vmatpush1.msra.mxu0 %v530
  %532 = vmatprep.subr.mxu0 0.0
  %v533 = vand.u32 %v65, 4294901760
  %v534 = vsub.f32 %v65, %v533
  %v535 = vand.u32 %v534, 4294901760
  %536 = vmatpush1.msra.mxu0 %v535
  %537 = vmatprep.subr.mxu0 0.0
  %v538 = vand.u32 %v66, 4294901760
  %v539 = vsub.f32 %v66, %v538
  %v540 = vand.u32 %v539, 4294901760
  %541 = vmatpush1.msra.mxu0 %v540
  %542 = vmatprep.subr.mxu0 0.0
  %v543 = vand.u32 %v67, 4294901760
  %v544 = vsub.f32 %v67, %v543
  %v545 = vand.u32 %v544, 4294901760
  %546 = vmatpush1.msra.mxu0 %v545
  %547 = vmatprep.subr.mxu0 0.0
  %v548 = vand.u32 %v68, 4294901760
  %v549 = vsub.f32 %v68, %v548
  %v550 = vand.u32 %v549, 4294901760
  %551 = vmatpush1.msra.mxu0 %v550
  %552 = vmatprep.subr.mxu0 0.0
  %v553 = vand.u32 %v69, 4294901760
  %v554 = vsub.f32 %v69, %v553
  %v555 = vand.u32 %v554, 4294901760
  %556 = vmatpush1.msra.mxu0 %v555
  %557 = vmatprep.subr.mxu0 0.0
  %v558 = vand.u32 %v70, 4294901760
  %v559 = vsub.f32 %v70, %v558
  %v560 = vand.u32 %v559, 4294901760
  %561 = vmatpush1.msra.mxu0 %v560
  %562 = vmatprep.subr.mxu0 0.0
  %v563 = vand.u32 %v71, 4294901760
  %v564 = vsub.f32 %v71, %v563
  %v565 = vand.u32 %v564, 4294901760
  %566 = vmatpush1.msra.mxu0 %v565
  %567 = vmatprep.subr.mxu0 0.0
  %v568 = vand.u32 %v72, 4294901760
  %v569 = vsub.f32 %v72, %v568
  %v570 = vand.u32 %v569, 4294901760
  %571 = vmatpush1.msra.mxu0 %v570
  %572 = vmatprep.subr.mxu0 0.0
  %v573 = vand.u32 %v73, 4294901760
  %v574 = vsub.f32 %v73, %v573
  %v575 = vand.u32 %v574, 4294901760
  %576 = vmatpush1.msra.mxu0 %v575
  %577 = vmatprep.subr.mxu0 0.0
  %v578 = vand.u32 %v74, 4294901760
  %v579 = vsub.f32 %v74, %v578
  %v580 = vand.u32 %v579, 4294901760
  %581 = vmatpush1.msra.mxu0 %v580
  %582 = vmatprep.subr.mxu0 0.0
  %v583 = vand.u32 %v75, 4294901760
  %v584 = vsub.f32 %v75, %v583
  %v585 = vand.u32 %v584, 4294901760
  %586 = vmatpush1.msra.mxu0 %v585
  %587 = vmatprep.subr.mxu0 0.0
  %v588 = vand.u32 %v76, 4294901760
  %v589 = vsub.f32 %v76, %v588
  %v590 = vand.u32 %v589, 4294901760
  %591 = vmatpush1.msra.mxu0 %v590
  %592 = vmatprep.subr.mxu0 0.0
  %593 = vmatpush1.msra.mxu0 0.0
  %594 = vmatprep.subr.mxu0 0.0
  %595 = vmatpush1.msra.mxu0 0.0
  %596 = vmatprep.subr.mxu0 0.0
  %597 = vmatpush1.msra.mxu0 0.0
  %598 = vmatprep.subr.mxu0 0.0
  %599 = vmatpush1.msra.mxu0 0.0
  %600 = vmatprep.subr.mxu0 0.0
  %601 = vmatpush1.msra.mxu0 0.0
  %602 = vmatprep.subr.mxu0 0.0
  %603 = vmatpush1.msra.mxu0 0.0
  %604 = vmatprep.subr.mxu0 0.0
  %605 = vmatpush1.msra.mxu0 0.0
  %606 = vmatprep.subr.mxu0 0.0
  %607 = vmatpush1.msra.mxu0 0.0
  %608 = vmatprep.subr.mxu0 0.0
  %609 = vmatpush1.msra.mxu0 0.0
  %610 = vmatprep.subr.mxu0 0.0
  %611 = vmatpush1.msra.mxu0 0.0
  %612 = vmatprep.subr.mxu0 0.0
  %613 = vmatpush1.msra.mxu0 0.0
  %614 = vmatprep.subr.mxu0 0.0
  %615 = vmatpush1.msra.mxu0 0.0
  %616 = vmatprep.subr.mxu0 0.0
  %617 = vmatpush1.msra.mxu0 0.0
  %618 = vmatprep.subr.mxu0 0.0
  %619 = vmatpush1.msra.mxu0 0.0
  %620 = vmatprep.subr.mxu0 0.0
  %621 = vmatpush1.msra.mxu0 0.0
  %622 = vmatprep.subr.mxu0 0.0
  %623 = vmatpush1.msra.mxu0 0.0
  %624 = vmatprep.mubr.f32.mxu0 0.0
  %v625 = vand.u32 %v60, 4294901760
  %626 = vmatmul.mubr.f32.gmra.mrb[0].mxu0 %v625
  %v627 = vpop.f32.mrb[0].mxu0
  %v628 = vadd.f32 %v509, %v627
  %v629 = vpop.f32.mrb[0].mxu0
  %630 = vdwg.mxu0
  %631 = vmatprep.subr.mxu0 0.0
  %v632 = vand.u32 %v61, 4294901760
  %633 = vmatpush1.msra.mxu0 %v632
  %634 = vmatprep.subr.mxu0 0.0
  %v635 = vand.u32 %v62, 4294901760
  %636 = vmatpush1.msra.mxu0 %v635
  %637 = vmatprep.subr.mxu0 0.0
  %v638 = vand.u32 %v63, 4294901760
  %639 = vmatpush1.msra.mxu0 %v638
  %640 = vmatprep.subr.mxu0 0.0
  %v641 = vand.u32 %v64, 4294901760
  %642 = vmatpush1.msra.mxu0 %v641
  %643 = vmatprep.subr.mxu0 0.0
  %v644 = vand.u32 %v65, 4294901760
  %645 = vmatpush1.msra.mxu0 %v644
  %646 = vmatprep.subr.mxu0 0.0
  %v647 = vand.u32 %v66, 4294901760
  %648 = vmatpush1.msra.mxu0 %v647
  %649 = vmatprep.subr.mxu0 0.0
  %v650 = vand.u32 %v67, 4294901760
  %651 = vmatpush1.msra.mxu0 %v650
  %652 = vmatprep.subr.mxu0 0.0
  %v653 = vand.u32 %v68, 4294901760
  %654 = vmatpush1.msra.mxu0 %v653
  %655 = vmatprep.subr.mxu0 0.0
  %v656 = vand.u32 %v69, 4294901760
  %657 = vmatpush1.msra.mxu0 %v656
  %658 = vmatprep.subr.mxu0 0.0
  %v659 = vand.u32 %v70, 4294901760
  %660 = vmatpush1.msra.mxu0 %v659
  %661 = vmatprep.subr.mxu0 0.0
  %v662 = vand.u32 %v71, 4294901760
  %663 = vmatpush1.msra.mxu0 %v662
  %664 = vmatprep.subr.mxu0 0.0
  %v665 = vand.u32 %v72, 4294901760
  %666 = vmatpush1.msra.mxu0 %v665
  %667 = vmatprep.subr.mxu0 0.0
  %v668 = vand.u32 %v73, 4294901760
  %669 = vmatpush1.msra.mxu0 %v668
  %670 = vmatprep.subr.mxu0 0.0
  %v671 = vand.u32 %v74, 4294901760
  %672 = vmatpush1.msra.mxu0 %v671
  %673 = vmatprep.subr.mxu0 0.0
  %v674 = vand.u32 %v75, 4294901760
  %675 = vmatpush1.msra.mxu0 %v674
  %676 = vmatprep.subr.mxu0 0.0
  %v677 = vand.u32 %v76, 4294901760
  %678 = vmatpush1.msra.mxu0 %v677
  %679 = vmatprep.subr.mxu0 0.0
  %680 = vmatpush1.msra.mxu0 0.0
  %681 = vmatprep.subr.mxu0 0.0
  %682 = vmatpush1.msra.mxu0 0.0
  %683 = vmatprep.subr.mxu0 0.0
  %684 = vmatpush1.msra.mxu0 0.0
  %685 = vmatprep.subr.mxu0 0.0
  %686 = vmatpush1.msra.mxu0 0.0
  %687 = vmatprep.subr.mxu0 0.0
  %688 = vmatpush1.msra.mxu0 0.0
  %689 = vmatprep.subr.mxu0 0.0
  %690 = vmatpush1.msra.mxu0 0.0
  %691 = vmatprep.subr.mxu0 0.0
  %692 = vmatpush1.msra.mxu0 0.0
  %693 = vmatprep.subr.mxu0 0.0
  %694 = vmatpush1.msra.mxu0 0.0
  %695 = vmatprep.subr.mxu0 0.0
  %696 = vmatpush1.msra.mxu0 0.0
  %697 = vmatprep.subr.mxu0 0.0
  %698 = vmatpush1.msra.mxu0 0.0
  %699 = vmatprep.subr.mxu0 0.0
  %700 = vmatpush1.msra.mxu0 0.0
  %701 = vmatprep.subr.mxu0 0.0
  %702 = vmatpush1.msra.mxu0 0.0
  %703 = vmatprep.subr.mxu0 0.0
  %704 = vmatpush1.msra.mxu0 0.0
  %705 = vmatprep.subr.mxu0 0.0
  %706 = vmatpush1.msra.mxu0 0.0
  %707 = vmatprep.subr.mxu0 0.0
  %708 = vmatpush1.msra.mxu0 0.0
  %709 = vmatprep.subr.mxu0 0.0
  %710 = vmatpush1.msra.mxu0 0.0
  %711 = vmatprep.mubr.f32.mxu0 0.0
  %v712 = vand.u32 %v60, 4294901760
  %713 = vmatmul.mubr.f32.gmra.mrb[0].mxu0 %v712
  %v714 = vpop.f32.mrb[0].mxu0
  %v715 = vadd.f32 %v628, %v714
  %v716 = vpop.f32.mrb[0].mxu0
  %717 = vdwg.mxu0
  %v718 = vld [vmem:[%s3] sm:$0xff]
  %v719 = vld [vmem:[%s3 + $0x8] sm:$0xff]
  %v720 = vld [vmem:[%s3 + $0x10] sm:$0xff]
  %v721 = vld [vmem:[%s3 + $0x18] sm:$0xff]
  %v722 = vld [vmem:[%s3 + $0x20] sm:$0xff]
  %v723 = vld [vmem:[%s3 + $0x28] sm:$0xff]
  %v724 = vld [vmem:[%s3 + $0x30] sm:$0xff]
  %v725 = vld [vmem:[%s3 + $0x38] sm:$0xff]
  %v726 = vld [vmem:[%s4] sm:$0x1]
  %v728 = vlaneseq
  %v729 = vshrl.u32 %v728, 7
  %v730 = vsub.s32 0, %v729
  %v731 = vrot.slane %v726, %v730
  %vm733 = vcmask 523264
  %v735 = vsel %vm733, %v715, 0
  %737 = vmatprep.subr.mxu0 0.0
  %v738 = vand.u32 %v718, 4294901760
  %739 = vmatpush1.msra.mxu0 %v738
  %740 = vmatprep.subr.mxu0 0.0
  %v741 = vand.u32 %v719, 4294901760
  %742 = vmatpush1.msra.mxu0 %v741
  %743 = vmatprep.subr.mxu0 0.0
  %v744 = vand.u32 %v720, 4294901760
  %745 = vmatpush1.msra.mxu0 %v744
  %746 = vmatprep.subr.mxu0 0.0
  %v747 = vand.u32 %v721, 4294901760
  %748 = vmatpush1.msra.mxu0 %v747
  %749 = vmatprep.subr.mxu0 0.0
  %v750 = vand.u32 %v722, 4294901760
  %751 = vmatpush1.msra.mxu0 %v750
  %752 = vmatprep.subr.mxu0 0.0
  %v753 = vand.u32 %v723, 4294901760
  %754 = vmatpush1.msra.mxu0 %v753
  %755 = vmatprep.subr.mxu0 0.0
  %v756 = vand.u32 %v724, 4294901760
  %757 = vmatpush1.msra.mxu0 %v756
  %758 = vmatprep.subr.mxu0 0.0
  %v759 = vand.u32 %v725, 4294901760
  %760 = vmatpush1.msra.mxu0 %v759
  %761 = vmatprep.subr.mxu0 0.0
  %762 = vmatpush1.msra.mxu0 0.0
  %763 = vmatprep.subr.mxu0 0.0
  %764 = vmatpush1.msra.mxu0 0.0
  %765 = vmatprep.subr.mxu0 0.0
  %766 = vmatpush1.msra.mxu0 0.0
  %767 = vmatprep.subr.mxu0 0.0
  %768 = vmatpush1.msra.mxu0 0.0
  %769 = vmatprep.subr.mxu0 0.0
  %770 = vmatpush1.msra.mxu0 0.0
  %771 = vmatprep.subr.mxu0 0.0
  %772 = vmatpush1.msra.mxu0 0.0
  %773 = vmatprep.subr.mxu0 0.0
  %774 = vmatpush1.msra.mxu0 0.0
  %775 = vmatprep.subr.mxu0 0.0
  %776 = vmatpush1.msra.mxu0 0.0
  %777 = vmatprep.subr.mxu0 0.0
  %778 = vmatpush1.msra.mxu0 0.0
  %779 = vmatprep.subr.mxu0 0.0
  %780 = vmatpush1.msra.mxu0 0.0
  %781 = vmatprep.subr.mxu0 0.0
  %782 = vmatpush1.msra.mxu0 0.0
  %783 = vmatprep.subr.mxu0 0.0
  %784 = vmatpush1.msra.mxu0 0.0
  %785 = vmatprep.subr.mxu0 0.0
  %786 = vmatpush1.msra.mxu0 0.0
  %787 = vmatprep.subr.mxu0 0.0
  %788 = vmatpush1.msra.mxu0 0.0
  %789 = vmatprep.subr.mxu0 0.0
  %790 = vmatpush1.msra.mxu0 0.0
  %791 = vmatprep.subr.mxu0 0.0
  %792 = vmatpush1.msra.mxu0 0.0
  %793 = vmatprep.subr.mxu0 0.0
  %794 = vmatpush1.msra.mxu0 0.0
  %795 = vmatprep.subr.mxu0 0.0
  %796 = vmatpush1.msra.mxu0 0.0
  %797 = vmatprep.subr.mxu0 0.0
  %798 = vmatpush1.msra.mxu0 0.0
  %799 = vmatprep.subr.mxu0 0.0
  %800 = vmatpush1.msra.mxu0 0.0
  %801 = vmatprep.subr.mxu0 0.0
  %802 = vmatpush1.msra.mxu0 0.0
  %803 = vmatprep.subr.mxu0 0.0
  %804 = vmatpush1.msra.mxu0 0.0
  %805 = vmatprep.subr.mxu0 0.0
  %806 = vmatpush1.msra.mxu0 0.0
  %807 = vmatprep.subr.mxu0 0.0
  %808 = vmatpush1.msra.mxu0 0.0
  %809 = vmatprep.mubr.f32.mxu0 0.0
  %v810 = vand.u32 %v735, 4294901760
  %v811 = vsub.f32 %v735, %v810
  %v812 = vand.u32 %v811, 4294901760
  %v813 = vsub.f32 %v811, %v812
  %v814 = vand.u32 %v813, 4294901760
  %815 = vmatmul.mubr.f32.gmra.mrb[0].mxu0 %v814
  %v816 = vpop.f32.mrb[0].mxu0
  %v817 = vadd.f32 %v731, %v816
  %v818 = vpop.f32.mrb[0].mxu0
  %819 = vdwg.mxu0
  %820 = vmatprep.subr.mxu0 0.0
  %v821 = vand.u32 %v718, 4294901760
  %v822 = vsub.f32 %v718, %v821
  %v823 = vand.u32 %v822, 4294901760
  %v824 = vsub.f32 %v822, %v823
  %v825 = vand.u32 %v824, 4294901760
  %826 = vmatpush1.msra.mxu0 %v825
  %827 = vmatprep.subr.mxu0 0.0
  %v828 = vand.u32 %v719, 4294901760
  %v829 = vsub.f32 %v719, %v828
  %v830 = vand.u32 %v829, 4294901760
  %v831 = vsub.f32 %v829, %v830
  %v832 = vand.u32 %v831, 4294901760
  %833 = vmatpush1.msra.mxu0 %v832
  %834 = vmatprep.subr.mxu0 0.0
  %v835 = vand.u32 %v720, 4294901760
  %v836 = vsub.f32 %v720, %v835
  %v837 = vand.u32 %v836, 4294901760
  %v838 = vsub.f32 %v836, %v837
  %v839 = vand.u32 %v838, 4294901760
  %840 = vmatpush1.msra.mxu0 %v839
  %841 = vmatprep.subr.mxu0 0.0
  %v842 = vand.u32 %v721, 4294901760
  %v843 = vsub.f32 %v721, %v842
  %v844 = vand.u32 %v843, 4294901760
  %v845 = vsub.f32 %v843, %v844
  %v846 = vand.u32 %v845, 4294901760
  %847 = vmatpush1.msra.mxu0 %v846
  %848 = vmatprep.subr.mxu0 0.0
  %v849 = vand.u32 %v722, 4294901760
  %v850 = vsub.f32 %v722, %v849
  %v851 = vand.u32 %v850, 4294901760
  %v852 = vsub.f32 %v850, %v851
  %v853 = vand.u32 %v852, 4294901760
  %854 = vmatpush1.msra.mxu0 %v853
  %855 = vmatprep.subr.mxu0 0.0
  %v856 = vand.u32 %v723, 4294901760
  %v857 = vsub.f32 %v723, %v856
  %v858 = vand.u32 %v857, 4294901760
  %v859 = vsub.f32 %v857, %v858
  %v860 = vand.u32 %v859, 4294901760
  %861 = vmatpush1.msra.mxu0 %v860
  %862 = vmatprep.subr.mxu0 0.0
  %v863 = vand.u32 %v724, 4294901760
  %v864 = vsub.f32 %v724, %v863
  %v865 = vand.u32 %v864, 4294901760
  %v866 = vsub.f32 %v864, %v865
  %v867 = vand.u32 %v866, 4294901760
  %868 = vmatpush1.msra.mxu0 %v867
  %869 = vmatprep.subr.mxu0 0.0
  %v870 = vand.u32 %v725, 4294901760
  %v871 = vsub.f32 %v725, %v870
  %v872 = vand.u32 %v871, 4294901760
  %v873 = vsub.f32 %v871, %v872
  %v874 = vand.u32 %v873, 4294901760
  %875 = vmatpush1.msra.mxu0 %v874
  %876 = vmatprep.subr.mxu0 0.0
  %877 = vmatpush1.msra.mxu0 0.0
  %878 = vmatprep.subr.mxu0 0.0
  %879 = vmatpush1.msra.mxu0 0.0
  %880 = vmatprep.subr.mxu0 0.0
  %881 = vmatpush1.msra.mxu0 0.0
  %882 = vmatprep.subr.mxu0 0.0
  %883 = vmatpush1.msra.mxu0 0.0
  %884 = vmatprep.subr.mxu0 0.0
  %885 = vmatpush1.msra.mxu0 0.0
  %886 = vmatprep.subr.mxu0 0.0
  %887 = vmatpush1.msra.mxu0 0.0
  %888 = vmatprep.subr.mxu0 0.0
  %889 = vmatpush1.msra.mxu0 0.0
  %890 = vmatprep.subr.mxu0 0.0
  %891 = vmatpush1.msra.mxu0 0.0
  %892 = vmatprep.subr.mxu0 0.0
  %893 = vmatpush1.msra.mxu0 0.0
  %894 = vmatprep.subr.mxu0 0.0
  %895 = vmatpush1.msra.mxu0 0.0
  %896 = vmatprep.subr.mxu0 0.0
  %897 = vmatpush1.msra.mxu0 0.0
  %898 = vmatprep.subr.mxu0 0.0
  %899 = vmatpush1.msra.mxu0 0.0
  %900 = vmatprep.subr.mxu0 0.0
  %901 = vmatpush1.msra.mxu0 0.0
  %902 = vmatprep.subr.mxu0 0.0
  %903 = vmatpush1.msra.mxu0 0.0
  %904 = vmatprep.subr.mxu0 0.0
  %905 = vmatpush1.msra.mxu0 0.0
  %906 = vmatprep.subr.mxu0 0.0
  %907 = vmatpush1.msra.mxu0 0.0
  %908 = vmatprep.subr.mxu0 0.0
  %909 = vmatpush1.msra.mxu0 0.0
  %910 = vmatprep.subr.mxu0 0.0
  %911 = vmatpush1.msra.mxu0 0.0
  %912 = vmatprep.subr.mxu0 0.0
  %913 = vmatpush1.msra.mxu0 0.0
  %914 = vmatprep.subr.mxu0 0.0
  %915 = vmatpush1.msra.mxu0 0.0
  %916 = vmatprep.subr.mxu0 0.0
  %917 = vmatpush1.msra.mxu0 0.0
  %918 = vmatprep.subr.mxu0 0.0
  %919 = vmatpush1.msra.mxu0 0.0
  %920 = vmatprep.subr.mxu0 0.0
  %921 = vmatpush1.msra.mxu0 0.0
  %922 = vmatprep.subr.mxu0 0.0
  %923 = vmatpush1.msra.mxu0 0.0
  %924 = vmatprep.mubr.f32.mxu0 0.0
  %v925 = vand.u32 %v735, 4294901760
  %926 = vmatmul.mubr.f32.gmra.mrb[0].mxu0 %v925
  %v927 = vpop.f32.mrb[0].mxu0
  %v928 = vadd.f32 %v817, %v927
  %v929 = vpop.f32.mrb[0].mxu0
  %930 = vdwg.mxu0
  %931 = vmatprep.subr.mxu0 0.0
  %v932 = vand.u32 %v718, 4294901760
  %v933 = vsub.f32 %v718, %v932
  %934 = vmatpush1.msra.mxu0 %v933
  %935 = vmatprep.subr.mxu0 0.0
  %v936 = vand.u32 %v719, 4294901760
  %v937 = vsub.f32 %v719, %v936
  %938 = vmatpush1.msra.mxu0 %v937
  %939 = vmatprep.subr.mxu0 0.0
  %v940 = vand.u32 %v720, 4294901760
  %v941 = vsub.f32 %v720, %v940
  %942 = vmatpush1.msra.mxu0 %v941
  %943 = vmatprep.subr.mxu0 0.0
  %v944 = vand.u32 %v721, 4294901760
  %v945 = vsub.f32 %v721, %v944
  %946 = vmatpush1.msra.mxu0 %v945
  %947 = vmatprep.subr.mxu0 0.0
  %v948 = vand.u32 %v722, 4294901760
  %v949 = vsub.f32 %v722, %v948
  %950 = vmatpush1.msra.mxu0 %v949
  %951 = vmatprep.subr.mxu0 0.0
  %v952 = vand.u32 %v723, 4294901760
  %v953 = vsub.f32 %v723, %v952
  %954 = vmatpush1.msra.mxu0 %v953
  %955 = vmatprep.subr.mxu0 0.0
  %v956 = vand.u32 %v724, 4294901760
  %v957 = vsub.f32 %v724, %v956
  %958 = vmatpush1.msra.mxu0 %v957
  %959 = vmatprep.subr.mxu0 0.0
  %v960 = vand.u32 %v725, 4294901760
  %v961 = vsub.f32 %v725, %v960
  %962 = vmatpush1.msra.mxu0 %v961
  %963 = vmatprep.subr.mxu0 0.0
  %964 = vmatpush1.msra.mxu0 0.0
  %965 = vmatprep.subr.mxu0 0.0
  %966 = vmatpush1.msra.mxu0 0.0
  %967 = vmatprep.subr.mxu0 0.0
  %968 = vmatpush1.msra.mxu0 0.0
  %969 = vmatprep.subr.mxu0 0.0
  %970 = vmatpush1.msra.mxu0 0.0
  %971 = vmatprep.subr.mxu0 0.0
  %972 = vmatpush1.msra.mxu0 0.0
  %973 = vmatprep.subr.mxu0 0.0
  %974 = vmatpush1.msra.mxu0 0.0
  %975 = vmatprep.subr.mxu0 0.0
  %976 = vmatpush1.msra.mxu0 0.0
  %977 = vmatprep.subr.mxu0 0.0
  %978 = vmatpush1.msra.mxu0 0.0
  %979 = vmatprep.subr.mxu0 0.0
  %980 = vmatpush1.msra.mxu0 0.0
  %981 = vmatprep.subr.mxu0 0.0
  %982 = vmatpush1.msra.mxu0 0.0
  %983 = vmatprep.subr.mxu0 0.0
  %984 = vmatpush1.msra.mxu0 0.0
  %985 = vmatprep.subr.mxu0 0.0
  %986 = vmatpush1.msra.mxu0 0.0
  %987 = vmatprep.subr.mxu0 0.0
  %988 = vmatpush1.msra.mxu0 0.0
  %989 = vmatprep.subr.mxu0 0.0
  %990 = vmatpush1.msra.mxu0 0.0
  %991 = vmatprep.subr.mxu0 0.0
  %992 = vmatpush1.msra.mxu0 0.0
  %993 = vmatprep.subr.mxu0 0.0
  %994 = vmatpush1.msra.mxu0 0.0
  %995 = vmatprep.subr.mxu0 0.0
  %996 = vmatpush1.msra.mxu0 0.0
  %997 = vmatprep.subr.mxu0 0.0
  %998 = vmatpush1.msra.mxu0 0.0
  %999 = vmatprep.subr.mxu0 0.0
  %1000 = vmatpush1.msra.mxu0 0.0
  %1001 = vmatprep.subr.mxu0 0.0
  %1002 = vmatpush1.msra.mxu0 0.0
  %1003 = vmatprep.subr.mxu0 0.0
  %1004 = vmatpush1.msra.mxu0 0.0
  %1005 = vmatprep.subr.mxu0 0.0
  %1006 = vmatpush1.msra.mxu0 0.0
  %1007 = vmatprep.subr.mxu0 0.0
  %1008 = vmatpush1.msra.mxu0 0.0
  %1009 = vmatprep.subr.mxu0 0.0
  %1010 = vmatpush1.msra.mxu0 0.0
  %1011 = vmatprep.mubr.f32.mxu0 0.0
  %v1012 = vand.u32 %v735, 4294901760
  %v1013 = vsub.f32 %v735, %v1012
  %1014 = vmatmul.mubr.f32.gmra.mrb[0].mxu0 %v1013
  %v1015 = vpop.f32.mrb[0].mxu0
  %v1016 = vadd.f32 %v928, %v1015
  %v1017 = vpop.f32.mrb[0].mxu0
  %1018 = vdwg.mxu0
  %1019 = vmatprep.subr.mxu0 0.0
  %v1020 = vand.u32 %v718, 4294901760
  %1021 = vmatpush1.msra.mxu0 %v1020
  %1022 = vmatprep.subr.mxu0 0.0
  %v1023 = vand.u32 %v719, 4294901760
  %1024 = vmatpush1.msra.mxu0 %v1023
  %1025 = vmatprep.subr.mxu0 0.0
  %v1026 = vand.u32 %v720, 4294901760
  %1027 = vmatpush1.msra.mxu0 %v1026
  %1028 = vmatprep.subr.mxu0 0.0
  %v1029 = vand.u32 %v721, 4294901760
  %1030 = vmatpush1.msra.mxu0 %v1029
  %1031 = vmatprep.subr.mxu0 0.0
  %v1032 = vand.u32 %v722, 4294901760
  %1033 = vmatpush1.msra.mxu0 %v1032
  %1034 = vmatprep.subr.mxu0 0.0
  %v1035 = vand.u32 %v723, 4294901760
  %1036 = vmatpush1.msra.mxu0 %v1035
  %1037 = vmatprep.subr.mxu0 0.0
  %v1038 = vand.u32 %v724, 4294901760
  %1039 = vmatpush1.msra.mxu0 %v1038
  %1040 = vmatprep.subr.mxu0 0.0
  %v1041 = vand.u32 %v725, 4294901760
  %1042 = vmatpush1.msra.mxu0 %v1041
  %1043 = vmatprep.subr.mxu0 0.0
  %1044 = vmatpush1.msra.mxu0 0.0
  %1045 = vmatprep.subr.mxu0 0.0
  %1046 = vmatpush1.msra.mxu0 0.0
  %1047 = vmatprep.subr.mxu0 0.0
  %1048 = vmatpush1.msra.mxu0 0.0
  %1049 = vmatprep.subr.mxu0 0.0
  %1050 = vmatpush1.msra.mxu0 0.0
  %1051 = vmatprep.subr.mxu0 0.0
  %1052 = vmatpush1.msra.mxu0 0.0
  %1053 = vmatprep.subr.mxu0 0.0
  %1054 = vmatpush1.msra.mxu0 0.0
  %1055 = vmatprep.subr.mxu0 0.0
  %1056 = vmatpush1.msra.mxu0 0.0
  %1057 = vmatprep.subr.mxu0 0.0
  %1058 = vmatpush1.msra.mxu0 0.0
  %1059 = vmatprep.subr.mxu0 0.0
  %1060 = vmatpush1.msra.mxu0 0.0
  %1061 = vmatprep.subr.mxu0 0.0
  %1062 = vmatpush1.msra.mxu0 0.0
  %1063 = vmatprep.subr.mxu0 0.0
  %1064 = vmatpush1.msra.mxu0 0.0
  %1065 = vmatprep.subr.mxu0 0.0
  %1066 = vmatpush1.msra.mxu0 0.0
  %1067 = vmatprep.subr.mxu0 0.0
  %1068 = vmatpush1.msra.mxu0 0.0
  %1069 = vmatprep.subr.mxu0 0.0
  %1070 = vmatpush1.msra.mxu0 0.0
  %1071 = vmatprep.subr.mxu0 0.0
  %1072 = vmatpush1.msra.mxu0 0.0
  %1073 = vmatprep.subr.mxu0 0.0
  %1074 = vmatpush1.msra.mxu0 0.0
  %1075 = vmatprep.subr.mxu0 0.0
  %1076 = vmatpush1.msra.mxu0 0.0
  %1077 = vmatprep.subr.mxu0 0.0
  %1078 = vmatpush1.msra.mxu0 0.0
  %1079 = vmatprep.subr.mxu0 0.0
  %1080 = vmatpush1.msra.mxu0 0.0
  %1081 = vmatprep.subr.mxu0 0.0
  %1082 = vmatpush1.msra.mxu0 0.0
  %1083 = vmatprep.subr.mxu0 0.0
  %1084 = vmatpush1.msra.mxu0 0.0
  %1085 = vmatprep.subr.mxu0 0.0
  %1086 = vmatpush1.msra.mxu0 0.0
  %1087 = vmatprep.subr.mxu0 0.0
  %1088 = vmatpush1.msra.mxu0 0.0
  %1089 = vmatprep.subr.mxu0 0.0
  %1090 = vmatpush1.msra.mxu0 0.0
  %1091 = vmatprep.mubr.f32.mxu0 0.0
  %v1092 = vand.u32 %v735, 4294901760
  %v1093 = vsub.f32 %v735, %v1092
  %v1094 = vand.u32 %v1093, 4294901760
  %1095 = vmatmul.mubr.f32.gmra.mrb[0].mxu0 %v1094
  %v1096 = vpop.f32.mrb[0].mxu0
  %v1097 = vadd.f32 %v1016, %v1096
  %v1098 = vpop.f32.mrb[0].mxu0
  %1099 = vdwg.mxu0
  %1100 = vmatprep.subr.mxu0 0.0
  %v1101 = vand.u32 %v718, 4294901760
  %v1102 = vsub.f32 %v718, %v1101
  %v1103 = vand.u32 %v1102, 4294901760
  %1104 = vmatpush1.msra.mxu0 %v1103
  %1105 = vmatprep.subr.mxu0 0.0
  %v1106 = vand.u32 %v719, 4294901760
  %v1107 = vsub.f32 %v719, %v1106
  %v1108 = vand.u32 %v1107, 4294901760
  %1109 = vmatpush1.msra.mxu0 %v1108
  %1110 = vmatprep.subr.mxu0 0.0
  %v1111 = vand.u32 %v720, 4294901760
  %v1112 = vsub.f32 %v720, %v1111
  %v1113 = vand.u32 %v1112, 4294901760
  %1114 = vmatpush1.msra.mxu0 %v1113
  %1115 = vmatprep.subr.mxu0 0.0
  %v1116 = vand.u32 %v721, 4294901760
  %v1117 = vsub.f32 %v721, %v1116
  %v1118 = vand.u32 %v1117, 4294901760
  %1119 = vmatpush1.msra.mxu0 %v1118
  %1120 = vmatprep.subr.mxu0 0.0
  %v1121 = vand.u32 %v722, 4294901760
  %v1122 = vsub.f32 %v722, %v1121
  %v1123 = vand.u32 %v1122, 4294901760
  %1124 = vmatpush1.msra.mxu0 %v1123
  %1125 = vmatprep.subr.mxu0 0.0
  %v1126 = vand.u32 %v723, 4294901760
  %v1127 = vsub.f32 %v723, %v1126
  %v1128 = vand.u32 %v1127, 4294901760
  %1129 = vmatpush1.msra.mxu0 %v1128
  %1130 = vmatprep.subr.mxu0 0.0
  %v1131 = vand.u32 %v724, 4294901760
  %v1132 = vsub.f32 %v724, %v1131
  %v1133 = vand.u32 %v1132, 4294901760
  %1134 = vmatpush1.msra.mxu0 %v1133
  %1135 = vmatprep.subr.mxu0 0.0
  %v1136 = vand.u32 %v725, 4294901760
  %v1137 = vsub.f32 %v725, %v1136
  %v1138 = vand.u32 %v1137, 4294901760
  %1139 = vmatpush1.msra.mxu0 %v1138
  %1140 = vmatprep.subr.mxu0 0.0
  %1141 = vmatpush1.msra.mxu0 0.0
  %1142 = vmatprep.subr.mxu0 0.0
  %1143 = vmatpush1.msra.mxu0 0.0
  %1144 = vmatprep.subr.mxu0 0.0
  %1145 = vmatpush1.msra.mxu0 0.0
  %1146 = vmatprep.subr.mxu0 0.0
  %1147 = vmatpush1.msra.mxu0 0.0
  %1148 = vmatprep.subr.mxu0 0.0
  %1149 = vmatpush1.msra.mxu0 0.0
  %1150 = vmatprep.subr.mxu0 0.0
  %1151 = vmatpush1.msra.mxu0 0.0
  %1152 = vmatprep.subr.mxu0 0.0
  %1153 = vmatpush1.msra.mxu0 0.0
  %1154 = vmatprep.subr.mxu0 0.0
  %1155 = vmatpush1.msra.mxu0 0.0
  %1156 = vmatprep.subr.mxu0 0.0
  %1157 = vmatpush1.msra.mxu0 0.0
  %1158 = vmatprep.subr.mxu0 0.0
  %1159 = vmatpush1.msra.mxu0 0.0
  %1160 = vmatprep.subr.mxu0 0.0
  %1161 = vmatpush1.msra.mxu0 0.0
  %1162 = vmatprep.subr.mxu0 0.0
  %1163 = vmatpush1.msra.mxu0 0.0
  %1164 = vmatprep.subr.mxu0 0.0
  %1165 = vmatpush1.msra.mxu0 0.0
  %1166 = vmatprep.subr.mxu0 0.0
  %1167 = vmatpush1.msra.mxu0 0.0
  %1168 = vmatprep.subr.mxu0 0.0
  %1169 = vmatpush1.msra.mxu0 0.0
  %1170 = vmatprep.subr.mxu0 0.0
  %1171 = vmatpush1.msra.mxu0 0.0
  %1172 = vmatprep.subr.mxu0 0.0
  %1173 = vmatpush1.msra.mxu0 0.0
  %1174 = vmatprep.subr.mxu0 0.0
  %1175 = vmatpush1.msra.mxu0 0.0
  %1176 = vmatprep.subr.mxu0 0.0
  %1177 = vmatpush1.msra.mxu0 0.0
  %1178 = vmatprep.subr.mxu0 0.0
  %1179 = vmatpush1.msra.mxu0 0.0
  %1180 = vmatprep.subr.mxu0 0.0
  %1181 = vmatpush1.msra.mxu0 0.0
  %1182 = vmatprep.subr.mxu0 0.0
  %1183 = vmatpush1.msra.mxu0 0.0
  %1184 = vmatprep.subr.mxu0 0.0
  %1185 = vmatpush1.msra.mxu0 0.0
  %1186 = vmatprep.subr.mxu0 0.0
  %1187 = vmatpush1.msra.mxu0 0.0
  %1188 = vmatprep.mubr.f32.mxu0 0.0
  %v1189 = vand.u32 %v735, 4294901760
  %1190 = vmatmul.mubr.f32.gmra.mrb[0].mxu0 %v1189
  %v1191 = vpop.f32.mrb[0].mxu0
  %v1192 = vadd.f32 %v1097, %v1191
  %v1193 = vpop.f32.mrb[0].mxu0
  %1194 = vdwg.mxu0
  %1195 = vmatprep.subr.mxu0 0.0
  %v1196 = vand.u32 %v718, 4294901760
  %1197 = vmatpush1.msra.mxu0 %v1196
  %1198 = vmatprep.subr.mxu0 0.0
  %v1199 = vand.u32 %v719, 4294901760
  %1200 = vmatpush1.msra.mxu0 %v1199
  %1201 = vmatprep.subr.mxu0 0.0
  %v1202 = vand.u32 %v720, 4294901760
  %1203 = vmatpush1.msra.mxu0 %v1202
  %1204 = vmatprep.subr.mxu0 0.0
  %v1205 = vand.u32 %v721, 4294901760
  %1206 = vmatpush1.msra.mxu0 %v1205
  %1207 = vmatprep.subr.mxu0 0.0
  %v1208 = vand.u32 %v722, 4294901760
  %1209 = vmatpush1.msra.mxu0 %v1208
  %1210 = vmatprep.subr.mxu0 0.0
  %v1211 = vand.u32 %v723, 4294901760
  %1212 = vmatpush1.msra.mxu0 %v1211
  %1213 = vmatprep.subr.mxu0 0.0
  %v1214 = vand.u32 %v724, 4294901760
  %1215 = vmatpush1.msra.mxu0 %v1214
  %1216 = vmatprep.subr.mxu0 0.0
  %v1217 = vand.u32 %v725, 4294901760
  %1218 = vmatpush1.msra.mxu0 %v1217
  %1219 = vmatprep.subr.mxu0 0.0
  %1220 = vmatpush1.msra.mxu0 0.0
  %1221 = vmatprep.subr.mxu0 0.0
  %1222 = vmatpush1.msra.mxu0 0.0
  %1223 = vmatprep.subr.mxu0 0.0
  %1224 = vmatpush1.msra.mxu0 0.0
  %1225 = vmatprep.subr.mxu0 0.0
  %1226 = vmatpush1.msra.mxu0 0.0
  %1227 = vmatprep.subr.mxu0 0.0
  %1228 = vmatpush1.msra.mxu0 0.0
  %1229 = vmatprep.subr.mxu0 0.0
  %1230 = vmatpush1.msra.mxu0 0.0
  %1231 = vmatprep.subr.mxu0 0.0
  %1232 = vmatpush1.msra.mxu0 0.0
  %1233 = vmatprep.subr.mxu0 0.0
  %1234 = vmatpush1.msra.mxu0 0.0
  %1235 = vmatprep.subr.mxu0 0.0
  %1236 = vmatpush1.msra.mxu0 0.0
  %1237 = vmatprep.subr.mxu0 0.0
  %1238 = vmatpush1.msra.mxu0 0.0
  %1239 = vmatprep.subr.mxu0 0.0
  %1240 = vmatpush1.msra.mxu0 0.0
  %1241 = vmatprep.subr.mxu0 0.0
  %1242 = vmatpush1.msra.mxu0 0.0
  %1243 = vmatprep.subr.mxu0 0.0
  %1244 = vmatpush1.msra.mxu0 0.0
  %1245 = vmatprep.subr.mxu0 0.0
  %1246 = vmatpush1.msra.mxu0 0.0
  %1247 = vmatprep.subr.mxu0 0.0
  %1248 = vmatpush1.msra.mxu0 0.0
  %1249 = vmatprep.subr.mxu0 0.0
  %1250 = vmatpush1.msra.mxu0 0.0
  %1251 = vmatprep.subr.mxu0 0.0
  %1252 = vmatpush1.msra.mxu0 0.0
  %1253 = vmatprep.subr.mxu0 0.0
  %1254 = vmatpush1.msra.mxu0 0.0
  %1255 = vmatprep.subr.mxu0 0.0
  %1256 = vmatpush1.msra.mxu0 0.0
  %1257 = vmatprep.subr.mxu0 0.0
  %1258 = vmatpush1.msra.mxu0 0.0
  %1259 = vmatprep.subr.mxu0 0.0
  %1260 = vmatpush1.msra.mxu0 0.0
  %1261 = vmatprep.subr.mxu0 0.0
  %1262 = vmatpush1.msra.mxu0 0.0
  %1263 = vmatprep.subr.mxu0 0.0
  %1264 = vmatpush1.msra.mxu0 0.0
  %1265 = vmatprep.subr.mxu0 0.0
  %1266 = vmatpush1.msra.mxu0 0.0
  %1267 = vmatprep.mubr.f32.mxu0 0.0
  %v1268 = vand.u32 %v735, 4294901760
  %1269 = vmatmul.mubr.f32.gmra.mrb[0].mxu0 %v1268
  %v1270 = vpop.f32.mrb[0].mxu0
  %v1271 = vadd.f32 %v1192, %v1270
  %v1272 = vpop.f32.mrb[0].mxu0
  %1273 = vdwg.mxu0
  %v1274 = vtanh.pop %v1271
  %v1275 = vld [vmem:[%s1] sm:$0xff]
  %v1276 = vld [vmem:[%s1 + $0x8] sm:$0xff]
  %v1277 = vld [vmem:[%s1 + $0x10] sm:$0xff]
  %v1278 = vld [vmem:[%s1 + $0x18] sm:$0xff]
  %v1279 = vld [vmem:[%s1 + $0x20] sm:$0xff]
  %v1280 = vld [vmem:[%s1 + $0x28] sm:$0xff]
  %v1281 = vld [vmem:[%s1 + $0x30] sm:$0xff]
  %v1282 = vld [vmem:[%s1 + $0x38] sm:$0xff]
  %1283 = vset.pattern.permute.xlu0 0
  %1284 = vperm.xlu0 %1283, %v1275
  %v1285 = vpop.permute.xlu0 %1284
  %1286 = vset.pattern.permute.xlu0 0
  %1287 = vperm.xlu0 %1286, %v1276
  %v1288 = vpop.permute.xlu0 %1287
  %1289 = vset.pattern.permute.xlu0 0
  %1290 = vperm.xlu0 %1289, %v1277
  %v1291 = vpop.permute.xlu0 %1290
  %1292 = vset.pattern.permute.xlu0 0
  %1293 = vperm.xlu0 %1292, %v1278
  %v1294 = vpop.permute.xlu0 %1293
  %1295 = vset.pattern.permute.xlu0 0
  %1296 = vperm.xlu0 %1295, %v1279
  %v1297 = vpop.permute.xlu0 %1296
  %1298 = vset.pattern.permute.xlu0 0
  %1299 = vperm.xlu0 %1298, %v1280
  %v1300 = vpop.permute.xlu0 %1299
  %1301 = vset.pattern.permute.xlu0 0
  %1302 = vperm.xlu0 %1301, %v1281
  %v1303 = vpop.permute.xlu0 %1302
  %1304 = vset.pattern.permute.xlu0 0
  %1305 = vperm.xlu0 %1304, %v1282
  %v1306 = vpop.permute.xlu0 %1305
  %vm1307 = vcmp.eq.s32.totalorder %v49, %v1285
  %vm1308 = vcmp.eq.s32.totalorder %v49, %v1288
  %vm1309 = vcmp.eq.s32.totalorder %v49, %v1291
  %vm1310 = vcmp.eq.s32.totalorder %v49, %v1294
  %vm1311 = vcmp.eq.s32.totalorder %v49, %v1297
  %vm1312 = vcmp.eq.s32.totalorder %v49, %v1300
  %vm1313 = vcmp.eq.s32.totalorder %v49, %v1303
  %vm1314 = vcmp.eq.s32.totalorder %v49, %v1306
  %v1315 = vsel %vm1307, 1.0, 0.0
  %v1316 = vsel %vm1308, 1.0, 0.0
  %v1317 = vsel %vm1309, 1.0, 0.0
  %v1318 = vsel %vm1310, 1.0, 0.0
  %v1319 = vsel %vm1311, 1.0, 0.0
  %v1320 = vsel %vm1312, 1.0, 0.0
  %v1321 = vsel %vm1313, 1.0, 0.0
  %v1322 = vsel %vm1314, 1.0, 0.0
  %v1323 = vld [vmem:[%s5] sm:$0xff]
  %v1324 = vld [vmem:[%s5 + $0x8] sm:$0xff]
  %v1325 = vld [vmem:[%s5 + $0x10] sm:$0xff]
  %v1326 = vld [vmem:[%s5 + $0x18] sm:$0xff]
  %v1327 = vld [vmem:[%s5 + $0x20] sm:$0xff]
  %v1328 = vld [vmem:[%s5 + $0x28] sm:$0xff]
  %v1329 = vld [vmem:[%s5 + $0x30] sm:$0xff]
  %v1330 = vld [vmem:[%s5 + $0x38] sm:$0xff]
  %v1331 = vld [vmem:[%s5 + $0x40] sm:$0xff]
  %v1332 = vld [vmem:[%s5 + $0x48] sm:$0xff]
  %v1333 = vld [vmem:[%s5 + $0x50] sm:$0xff]
  %v1334 = vld [vmem:[%s5 + $0x58] sm:$0xff]
  %v1335 = vld [vmem:[%s5 + $0x60] sm:$0xff]
  %v1336 = vld [vmem:[%s5 + $0x68] sm:$0xff]
  %v1337 = vld [vmem:[%s5 + $0x70] sm:$0xff]
  %v1338 = vld [vmem:[%s5 + $0x78] sm:$0xff]
  %1339 = vmatprep.subr.mxu0 0.0
  %v1340 = vand.u32 %v1323, 4294901760
  %1341 = vmatpush1.msra.mxu0 %v1340
  %1342 = vmatprep.subr.mxu0 0.0
  %v1343 = vand.u32 %v1324, 4294901760
  %1344 = vmatpush1.msra.mxu0 %v1343
  %1345 = vmatprep.subr.mxu0 0.0
  %v1346 = vand.u32 %v1325, 4294901760
  %1347 = vmatpush1.msra.mxu0 %v1346
  %1348 = vmatprep.subr.mxu0 0.0
  %v1349 = vand.u32 %v1326, 4294901760
  %1350 = vmatpush1.msra.mxu0 %v1349
  %1351 = vmatprep.subr.mxu0 0.0
  %v1352 = vand.u32 %v1327, 4294901760
  %1353 = vmatpush1.msra.mxu0 %v1352
  %1354 = vmatprep.subr.mxu0 0.0
  %v1355 = vand.u32 %v1328, 4294901760
  %1356 = vmatpush1.msra.mxu0 %v1355
  %1357 = vmatprep.subr.mxu0 0.0
  %v1358 = vand.u32 %v1329, 4294901760
  %1359 = vmatpush1.msra.mxu0 %v1358
  %1360 = vmatprep.subr.mxu0 0.0
  %v1361 = vand.u32 %v1330, 4294901760
  %1362 = vmatpush1.msra.mxu0 %v1361
  %1363 = vmatprep.subr.mxu0 0.0
  %v1364 = vand.u32 %v1331, 4294901760
  %1365 = vmatpush1.msra.mxu0 %v1364
  %1366 = vmatprep.subr.mxu0 0.0
  %v1367 = vand.u32 %v1332, 4294901760
  %1368 = vmatpush1.msra.mxu0 %v1367
  %1369 = vmatprep.subr.mxu0 0.0
  %v1370 = vand.u32 %v1333, 4294901760
  %1371 = vmatpush1.msra.mxu0 %v1370
  %1372 = vmatprep.subr.mxu0 0.0
  %v1373 = vand.u32 %v1334, 4294901760
  %1374 = vmatpush1.msra.mxu0 %v1373
  %1375 = vmatprep.subr.mxu0 0.0
  %v1376 = vand.u32 %v1335, 4294901760
  %1377 = vmatpush1.msra.mxu0 %v1376
  %1378 = vmatprep.subr.mxu0 0.0
  %v1379 = vand.u32 %v1336, 4294901760
  %1380 = vmatpush1.msra.mxu0 %v1379
  %1381 = vmatprep.subr.mxu0 0.0
  %v1382 = vand.u32 %v1337, 4294901760
  %1383 = vmatpush1.msra.mxu0 %v1382
  %1384 = vmatprep.subr.mxu0 0.0
  %v1385 = vand.u32 %v1338, 4294901760
  %1386 = vmatpush1.msra.mxu0 %v1385
  %1387 = vmatprep.subr.mxu0 0.0
  %1388 = vmatpush1.msra.mxu0 0.0
  %1389 = vmatprep.subr.mxu0 0.0
  %1390 = vmatpush1.msra.mxu0 0.0
  %1391 = vmatprep.subr.mxu0 0.0
  %1392 = vmatpush1.msra.mxu0 0.0
  %1393 = vmatprep.subr.mxu0 0.0
  %1394 = vmatpush1.msra.mxu0 0.0
  %1395 = vmatprep.subr.mxu0 0.0
  %1396 = vmatpush1.msra.mxu0 0.0
  %1397 = vmatprep.subr.mxu0 0.0
  %1398 = vmatpush1.msra.mxu0 0.0
  %1399 = vmatprep.subr.mxu0 0.0
  %1400 = vmatpush1.msra.mxu0 0.0
  %1401 = vmatprep.subr.mxu0 0.0
  %1402 = vmatpush1.msra.mxu0 0.0
  %1403 = vmatprep.subr.mxu0 0.0
  %1404 = vmatpush1.msra.mxu0 0.0
  %1405 = vmatprep.subr.mxu0 0.0
  %1406 = vmatpush1.msra.mxu0 0.0
  %1407 = vmatprep.subr.mxu0 0.0
  %1408 = vmatpush1.msra.mxu0 0.0
  %1409 = vmatprep.subr.mxu0 0.0
  %1410 = vmatpush1.msra.mxu0 0.0
  %1411 = vmatprep.subr.mxu0 0.0
  %1412 = vmatpush1.msra.mxu0 0.0
  %1413 = vmatprep.subr.mxu0 0.0
  %1414 = vmatpush1.msra.mxu0 0.0
  %1415 = vmatprep.subr.mxu0 0.0
  %1416 = vmatpush1.msra.mxu0 0.0
  %1417 = vmatprep.subr.mxu0 0.0
  %1418 = vmatpush1.msra.mxu0 0.0
  %1419 = vmatprep.mubr.f32.mxu0 0.0
  %v1420 = vsub.f32 %v1315, %v1315
  %v1421 = vand.u32 %v1420, 4294901760
  %v1422 = vsub.f32 %v1420, %v1421
  %v1423 = vand.u32 %v1422, 4294901760
  %1424 = vmatmul.mubr.f32.gmra.mrb[0].mxu0 %v1423
  %v1425 = vpop.f32.mrb[0].mxu0
  %v1426 = vadd.f32 0.0, %v1425
  %v1427 = vpop.f32.mrb[0].mxu0
  %1428 = vmatprep.mubr.f32.mxu0 0.0
  %v1429 = vsub.f32 %v1316, %v1316
  %v1430 = vand.u32 %v1429, 4294901760
  %v1431 = vsub.f32 %v1429, %v1430
  %v1432 = vand.u32 %v1431, 4294901760
  %1433 = vmatmul.mubr.f32.gmra.mrb[0].mxu0 %v1432
  %v1434 = vpop.f32.mrb[0].mxu0
  %v1435 = vadd.f32 0.0, %v1434
  %v1436 = vpop.f32.mrb[0].mxu0
  %1437 = vmatprep.mubr.f32.mxu0 0.0
  %v1438 = vsub.f32 %v1317, %v1317
  %v1439 = vand.u32 %v1438, 4294901760
  %v1440 = vsub.f32 %v1438, %v1439
  %v1441 = vand.u32 %v1440, 4294901760
  %1442 = vmatmul.mubr.f32.gmra.mrb[0].mxu0 %v1441
  %v1443 = vpop.f32.mrb[0].mxu0
  %v1444 = vadd.f32 0.0, %v1443
  %v1445 = vpop.f32.mrb[0].mxu0
  %1446 = vmatprep.mubr.f32.mxu0 0.0
  %v1447 = vsub.f32 %v1318, %v1318
  %v1448 = vand.u32 %v1447, 4294901760
  %v1449 = vsub.f32 %v1447, %v1448
  %v1450 = vand.u32 %v1449, 4294901760
  %1451 = vmatmul.mubr.f32.gmra.mrb[0].mxu0 %v1450
  %v1452 = vpop.f32.mrb[0].mxu0
  %v1453 = vadd.f32 0.0, %v1452
  %v1454 = vpop.f32.mrb[0].mxu0
  %1455 = vmatprep.mubr.f32.mxu0 0.0
  %v1456 = vsub.f32 %v1319, %v1319
  %v1457 = vand.u32 %v1456, 4294901760
  %v1458 = vsub.f32 %v1456, %v1457
  %v1459 = vand.u32 %v1458, 4294901760
  %1460 = vmatmul.mubr.f32.gmra.mrb[0].mxu0 %v1459
  %v1461 = vpop.f32.mrb[0].mxu0
  %v1462 = vadd.f32 0.0, %v1461
  %v1463 = vpop.f32.mrb[0].mxu0
  %1464 = vmatprep.mubr.f32.mxu0 0.0
  %v1465 = vsub.f32 %v1320, %v1320
  %v1466 = vand.u32 %v1465, 4294901760
  %v1467 = vsub.f32 %v1465, %v1466
  %v1468 = vand.u32 %v1467, 4294901760
  %1469 = vmatmul.mubr.f32.gmra.mrb[0].mxu0 %v1468
  %v1470 = vpop.f32.mrb[0].mxu0
  %v1471 = vadd.f32 0.0, %v1470
  %v1472 = vpop.f32.mrb[0].mxu0
  %1473 = vmatprep.mubr.f32.mxu0 0.0
  %v1474 = vsub.f32 %v1321, %v1321
  %v1475 = vand.u32 %v1474, 4294901760
  %v1476 = vsub.f32 %v1474, %v1475
  %v1477 = vand.u32 %v1476, 4294901760
  %1478 = vmatmul.mubr.f32.gmra.mrb[0].mxu0 %v1477
  %v1479 = vpop.f32.mrb[0].mxu0
  %v1480 = vadd.f32 0.0, %v1479
  %v1481 = vpop.f32.mrb[0].mxu0
  %1482 = vmatprep.mubr.f32.mxu0 0.0
  %v1483 = vsub.f32 %v1322, %v1322
  %v1484 = vand.u32 %v1483, 4294901760
  %v1485 = vsub.f32 %v1483, %v1484
  %v1486 = vand.u32 %v1485, 4294901760
  %1487 = vmatmul.mubr.f32.gmra.mrb[0].mxu0 %v1486
  %v1488 = vpop.f32.mrb[0].mxu0
  %v1489 = vadd.f32 0.0, %v1488
  %v1490 = vpop.f32.mrb[0].mxu0
  %1491 = vdwg.mxu0
  %1492 = vmatprep.subr.mxu0 0.0
  %v1493 = vand.u32 %v1323, 4294901760
  %v1494 = vsub.f32 %v1323, %v1493
  %v1495 = vand.u32 %v1494, 4294901760
  %v1496 = vsub.f32 %v1494, %v1495
  %v1497 = vand.u32 %v1496, 4294901760
  %1498 = vmatpush1.msra.mxu0 %v1497
  %1499 = vmatprep.subr.mxu0 0.0
  %v1500 = vand.u32 %v1324, 4294901760
  %v1501 = vsub.f32 %v1324, %v1500
  %v1502 = vand.u32 %v1501, 4294901760
  %v1503 = vsub.f32 %v1501, %v1502
  %v1504 = vand.u32 %v1503, 4294901760
  %1505 = vmatpush1.msra.mxu0 %v1504
  %1506 = vmatprep.subr.mxu0 0.0
  %v1507 = vand.u32 %v1325, 4294901760
  %v1508 = vsub.f32 %v1325, %v1507
  %v1509 = vand.u32 %v1508, 4294901760
  %v1510 = vsub.f32 %v1508, %v1509
  %v1511 = vand.u32 %v1510, 4294901760
  %1512 = vmatpush1.msra.mxu0 %v1511
  %1513 = vmatprep.subr.mxu0 0.0
  %v1514 = vand.u32 %v1326, 4294901760
  %v1515 = vsub.f32 %v1326, %v1514
  %v1516 = vand.u32 %v1515, 4294901760
  %v1517 = vsub.f32 %v1515, %v1516
  %v1518 = vand.u32 %v1517, 4294901760
  %1519 = vmatpush1.msra.mxu0 %v1518
  %1520 = vmatprep.subr.mxu0 0.0
  %v1521 = vand.u32 %v1327, 4294901760
  %v1522 = vsub.f32 %v1327, %v1521
  %v1523 = vand.u32 %v1522, 4294901760
  %v1524 = vsub.f32 %v1522, %v1523
  %v1525 = vand.u32 %v1524, 4294901760
  %1526 = vmatpush1.msra.mxu0 %v1525
  %1527 = vmatprep.subr.mxu0 0.0
  %v1528 = vand.u32 %v1328, 4294901760
  %v1529 = vsub.f32 %v1328, %v1528
  %v1530 = vand.u32 %v1529, 4294901760
  %v1531 = vsub.f32 %v1529, %v1530
  %v1532 = vand.u32 %v1531, 4294901760
  %1533 = vmatpush1.msra.mxu0 %v1532
  %1534 = vmatprep.subr.mxu0 0.0
  %v1535 = vand.u32 %v1329, 4294901760
  %v1536 = vsub.f32 %v1329, %v1535
  %v1537 = vand.u32 %v1536, 4294901760
  %v1538 = vsub.f32 %v1536, %v1537
  %v1539 = vand.u32 %v1538, 4294901760
  %1540 = vmatpush1.msra.mxu0 %v1539
  %1541 = vmatprep.subr.mxu0 0.0
  %v1542 = vand.u32 %v1330, 4294901760
  %v1543 = vsub.f32 %v1330, %v1542
  %v1544 = vand.u32 %v1543, 4294901760
  %v1545 = vsub.f32 %v1543, %v1544
  %v1546 = vand.u32 %v1545, 4294901760
  %1547 = vmatpush1.msra.mxu0 %v1546
  %1548 = vmatprep.subr.mxu0 0.0
  %v1549 = vand.u32 %v1331, 4294901760
  %v1550 = vsub.f32 %v1331, %v1549
  %v1551 = vand.u32 %v1550, 4294901760
  %v1552 = vsub.f32 %v1550, %v1551
  %v1553 = vand.u32 %v1552, 4294901760
  %1554 = vmatpush1.msra.mxu0 %v1553
  %1555 = vmatprep.subr.mxu0 0.0
  %v1556 = vand.u32 %v1332, 4294901760
  %v1557 = vsub.f32 %v1332, %v1556
  %v1558 = vand.u32 %v1557, 4294901760
  %v1559 = vsub.f32 %v1557, %v1558
  %v1560 = vand.u32 %v1559, 4294901760
  %1561 = vmatpush1.msra.mxu0 %v1560
  %1562 = vmatprep.subr.mxu0 0.0
  %v1563 = vand.u32 %v1333, 4294901760
  %v1564 = vsub.f32 %v1333, %v1563
  %v1565 = vand.u32 %v1564, 4294901760
  %v1566 = vsub.f32 %v1564, %v1565
  %v1567 = vand.u32 %v1566, 4294901760
  %1568 = vmatpush1.msra.mxu0 %v1567
  %1569 = vmatprep.subr.mxu0 0.0
  %v1570 = vand.u32 %v1334, 4294901760
  %v1571 = vsub.f32 %v1334, %v1570
  %v1572 = vand.u32 %v1571, 4294901760
  %v1573 = vsub.f32 %v1571, %v1572
  %v1574 = vand.u32 %v1573, 4294901760
  %1575 = vmatpush1.msra.mxu0 %v1574
  %1576 = vmatprep.subr.mxu0 0.0
  %v1577 = vand.u32 %v1335, 4294901760
  %v1578 = vsub.f32 %v1335, %v1577
  %v1579 = vand.u32 %v1578, 4294901760
  %v1580 = vsub.f32 %v1578, %v1579
  %v1581 = vand.u32 %v1580, 4294901760
  %1582 = vmatpush1.msra.mxu0 %v1581
  %1583 = vmatprep.subr.mxu0 0.0
  %v1584 = vand.u32 %v1336, 4294901760
  %v1585 = vsub.f32 %v1336, %v1584
  %v1586 = vand.u32 %v1585, 4294901760
  %v1587 = vsub.f32 %v1585, %v1586
  %v1588 = vand.u32 %v1587, 4294901760
  %1589 = vmatpush1.msra.mxu0 %v1588
  %1590 = vmatprep.subr.mxu0 0.0
  %v1591 = vand.u32 %v1337, 4294901760
  %v1592 = vsub.f32 %v1337, %v1591
  %v1593 = vand.u32 %v1592, 4294901760
  %v1594 = vsub.f32 %v1592, %v1593
  %v1595 = vand.u32 %v1594, 4294901760
  %1596 = vmatpush1.msra.mxu0 %v1595
  %1597 = vmatprep.subr.mxu0 0.0
  %v1598 = vand.u32 %v1338, 4294901760
  %v1599 = vsub.f32 %v1338, %v1598
  %v1600 = vand.u32 %v1599, 4294901760
  %v1601 = vsub.f32 %v1599, %v1600
  %v1602 = vand.u32 %v1601, 4294901760
  %1603 = vmatpush1.msra.mxu0 %v1602
  %1604 = vmatprep.subr.mxu0 0.0
  %1605 = vmatpush1.msra.mxu0 0.0
  %1606 = vmatprep.subr.mxu0 0.0
  %1607 = vmatpush1.msra.mxu0 0.0
  %1608 = vmatprep.subr.mxu0 0.0
  %1609 = vmatpush1.msra.mxu0 0.0
  %1610 = vmatprep.subr.mxu0 0.0
  %1611 = vmatpush1.msra.mxu0 0.0
  %1612 = vmatprep.subr.mxu0 0.0
  %1613 = vmatpush1.msra.mxu0 0.0
  %1614 = vmatprep.subr.mxu0 0.0
  %1615 = vmatpush1.msra.mxu0 0.0
  %1616 = vmatprep.subr.mxu0 0.0
  %1617 = vmatpush1.msra.mxu0 0.0
  %1618 = vmatprep.subr.mxu0 0.0
  %1619 = vmatpush1.msra.mxu0 0.0
  %1620 = vmatprep.subr.mxu0 0.0
  %1621 = vmatpush1.msra.mxu0 0.0
  %1622 = vmatprep.subr.mxu0 0.0
  %1623 = vmatpush1.msra.mxu0 0.0
  %1624 = vmatprep.subr.mxu0 0.0
  %1625 = vmatpush1.msra.mxu0 0.0
  %1626 = vmatprep.subr.mxu0 0.0
  %1627 = vmatpush1.msra.mxu0 0.0
  %1628 = vmatprep.subr.mxu0 0.0
  %1629 = vmatpush1.msra.mxu0 0.0
  %1630 = vmatprep.subr.mxu0 0.0
  %1631 = vmatpush1.msra.mxu0 0.0
  %1632 = vmatprep.subr.mxu0 0.0
  %1633 = vmatpush1.msra.mxu0 0.0
  %1634 = vmatprep.subr.mxu0 0.0
  %1635 = vmatpush1.msra.mxu0 0.0
  %1636 = vmatprep.mubr.f32.mxu0 0.0
  %1637 = vmatmul.mubr.f32.gmra.mrb[0].mxu0 %v1315
  %v1638 = vpop.f32.mrb[0].mxu0
  %v1639 = vadd.f32 %v1426, %v1638
  %v1640 = vpop.f32.mrb[0].mxu0
  %1641 = vmatprep.mubr.f32.mxu0 0.0
  %1642 = vmatmul.mubr.f32.gmra.mrb[0].mxu0 %v1316
  %v1643 = vpop.f32.mrb[0].mxu0
  %v1644 = vadd.f32 %v1435, %v1643
  %v1645 = vpop.f32.mrb[0].mxu0
  %1646 = vmatprep.mubr.f32.mxu0 0.0
  %1647 = vmatmul.mubr.f32.gmra.mrb[0].mxu0 %v1317
  %v1648 = vpop.f32.mrb[0].mxu0
  %v1649 = vadd.f32 %v1444, %v1648
  %v1650 = vpop.f32.mrb[0].mxu0
  %1651 = vmatprep.mubr.f32.mxu0 0.0
  %1652 = vmatmul.mubr.f32.gmra.mrb[0].mxu0 %v1318
  %v1653 = vpop.f32.mrb[0].mxu0
  %v1654 = vadd.f32 %v1453, %v1653
  %v1655 = vpop.f32.mrb[0].mxu0
  %1656 = vmatprep.mubr.f32.mxu0 0.0
  %1657 = vmatmul.mubr.f32.gmra.mrb[0].mxu0 %v1319
  %v1658 = vpop.f32.mrb[0].mxu0
  %v1659 = vadd.f32 %v1462, %v1658
  %v1660 = vpop.f32.mrb[0].mxu0
  %1661 = vmatprep.mubr.f32.mxu0 0.0
  %1662 = vmatmul.mubr.f32.gmra.mrb[0].mxu0 %v1320
  %v1663 = vpop.f32.mrb[0].mxu0
  %v1664 = vadd.f32 %v1471, %v1663
  %v1665 = vpop.f32.mrb[0].mxu0
  %1666 = vmatprep.mubr.f32.mxu0 0.0
  %1667 = vmatmul.mubr.f32.gmra.mrb[0].mxu0 %v1321
  %v1668 = vpop.f32.mrb[0].mxu0
  %v1669 = vadd.f32 %v1480, %v1668
  %v1670 = vpop.f32.mrb[0].mxu0
  %1671 = vmatprep.mubr.f32.mxu0 0.0
  %1672 = vmatmul.mubr.f32.gmra.mrb[0].mxu0 %v1322
  %v1673 = vpop.f32.mrb[0].mxu0
  %v1674 = vadd.f32 %v1489, %v1673
  %v1675 = vpop.f32.mrb[0].mxu0
  %1676 = vdwg.mxu0
  %1677 = vmatprep.subr.mxu0 0.0
  %v1678 = vand.u32 %v1323, 4294901760
  %v1679 = vsub.f32 %v1323, %v1678
  %1680 = vmatpush1.msra.mxu0 %v1679
  %1681 = vmatprep.subr.mxu0 0.0
  %v1682 = vand.u32 %v1324, 4294901760
  %v1683 = vsub.f32 %v1324, %v1682
  %1684 = vmatpush1.msra.mxu0 %v1683
  %1685 = vmatprep.subr.mxu0 0.0
  %v1686 = vand.u32 %v1325, 4294901760
  %v1687 = vsub.f32 %v1325, %v1686
  %1688 = vmatpush1.msra.mxu0 %v1687
  %1689 = vmatprep.subr.mxu0 0.0
  %v1690 = vand.u32 %v1326, 4294901760
  %v1691 = vsub.f32 %v1326, %v1690
  %1692 = vmatpush1.msra.mxu0 %v1691
  %1693 = vmatprep.subr.mxu0 0.0
  %v1694 = vand.u32 %v1327, 4294901760
  %v1695 = vsub.f32 %v1327, %v1694
  %1696 = vmatpush1.msra.mxu0 %v1695
  %1697 = vmatprep.subr.mxu0 0.0
  %v1698 = vand.u32 %v1328, 4294901760
  %v1699 = vsub.f32 %v1328, %v1698
  %1700 = vmatpush1.msra.mxu0 %v1699
  %1701 = vmatprep.subr.mxu0 0.0
  %v1702 = vand.u32 %v1329, 4294901760
  %v1703 = vsub.f32 %v1329, %v1702
  %1704 = vmatpush1.msra.mxu0 %v1703
  %1705 = vmatprep.subr.mxu0 0.0
  %v1706 = vand.u32 %v1330, 4294901760
  %v1707 = vsub.f32 %v1330, %v1706
  %1708 = vmatpush1.msra.mxu0 %v1707
  %1709 = vmatprep.subr.mxu0 0.0
  %v1710 = vand.u32 %v1331, 4294901760
  %v1711 = vsub.f32 %v1331, %v1710
  %1712 = vmatpush1.msra.mxu0 %v1711
  %1713 = vmatprep.subr.mxu0 0.0
  %v1714 = vand.u32 %v1332, 4294901760
  %v1715 = vsub.f32 %v1332, %v1714
  %1716 = vmatpush1.msra.mxu0 %v1715
  %1717 = vmatprep.subr.mxu0 0.0
  %v1718 = vand.u32 %v1333, 4294901760
  %v1719 = vsub.f32 %v1333, %v1718
  %1720 = vmatpush1.msra.mxu0 %v1719
  %1721 = vmatprep.subr.mxu0 0.0
  %v1722 = vand.u32 %v1334, 4294901760
  %v1723 = vsub.f32 %v1334, %v1722
  %1724 = vmatpush1.msra.mxu0 %v1723
  %1725 = vmatprep.subr.mxu0 0.0
  %v1726 = vand.u32 %v1335, 4294901760
  %v1727 = vsub.f32 %v1335, %v1726
  %1728 = vmatpush1.msra.mxu0 %v1727
  %1729 = vmatprep.subr.mxu0 0.0
  %v1730 = vand.u32 %v1336, 4294901760
  %v1731 = vsub.f32 %v1336, %v1730
  %1732 = vmatpush1.msra.mxu0 %v1731
  %1733 = vmatprep.subr.mxu0 0.0
  %v1734 = vand.u32 %v1337, 4294901760
  %v1735 = vsub.f32 %v1337, %v1734
  %1736 = vmatpush1.msra.mxu0 %v1735
  %1737 = vmatprep.subr.mxu0 0.0
  %v1738 = vand.u32 %v1338, 4294901760
  %v1739 = vsub.f32 %v1338, %v1738
  %1740 = vmatpush1.msra.mxu0 %v1739
  %1741 = vmatprep.subr.mxu0 0.0
  %1742 = vmatpush1.msra.mxu0 0.0
  %1743 = vmatprep.subr.mxu0 0.0
  %1744 = vmatpush1.msra.mxu0 0.0
  %1745 = vmatprep.subr.mxu0 0.0
  %1746 = vmatpush1.msra.mxu0 0.0
  %1747 = vmatprep.subr.mxu0 0.0
  %1748 = vmatpush1.msra.mxu0 0.0
  %1749 = vmatprep.subr.mxu0 0.0
  %1750 = vmatpush1.msra.mxu0 0.0
  %1751 = vmatprep.subr.mxu0 0.0
  %1752 = vmatpush1.msra.mxu0 0.0
  %1753 = vmatprep.subr.mxu0 0.0
  %1754 = vmatpush1.msra.mxu0 0.0
  %1755 = vmatprep.subr.mxu0 0.0
  %1756 = vmatpush1.msra.mxu0 0.0
  %1757 = vmatprep.subr.mxu0 0.0
  %1758 = vmatpush1.msra.mxu0 0.0
  %1759 = vmatprep.subr.mxu0 0.0
  %1760 = vmatpush1.msra.mxu0 0.0
  %1761 = vmatprep.subr.mxu0 0.0
  %1762 = vmatpush1.msra.mxu0 0.0
  %1763 = vmatprep.subr.mxu0 0.0
  %1764 = vmatpush1.msra.mxu0 0.0
  %1765 = vmatprep.subr.mxu0 0.0
  %1766 = vmatpush1.msra.mxu0 0.0
  %1767 = vmatprep.subr.mxu0 0.0
  %1768 = vmatpush1.msra.mxu0 0.0
  %1769 = vmatprep.subr.mxu0 0.0
  %1770 = vmatpush1.msra.mxu0 0.0
  %1771 = vmatprep.subr.mxu0 0.0
  %1772 = vmatpush1.msra.mxu0 0.0
  %1773 = vmatprep.mubr.f32.mxu0 0.0
  %v1774 = vsub.f32 %v1315, %v1315
  %1775 = vmatmul.mubr.f32.gmra.mrb[0].mxu0 %v1774
  %v1776 = vpop.f32.mrb[0].mxu0
  %v1777 = vadd.f32 %v1639, %v1776
  %v1778 = vpop.f32.mrb[0].mxu0
  %1779 = vmatprep.mubr.f32.mxu0 0.0
  %v1780 = vsub.f32 %v1316, %v1316
  %1781 = vmatmul.mubr.f32.gmra.mrb[0].mxu0 %v1780
  %v1782 = vpop.f32.mrb[0].mxu0
  %v1783 = vadd.f32 %v1644, %v1782
  %v1784 = vpop.f32.mrb[0].mxu0
  %1785 = vmatprep.mubr.f32.mxu0 0.0
  %v1786 = vsub.f32 %v1317, %v1317
  %1787 = vmatmul.mubr.f32.gmra.mrb[0].mxu0 %v1786
  %v1788 = vpop.f32.mrb[0].mxu0
  %v1789 = vadd.f32 %v1649, %v1788
  %v1790 = vpop.f32.mrb[0].mxu0
  %1791 = vmatprep.mubr.f32.mxu0 0.0
  %v1792 = vsub.f32 %v1318, %v1318
  %1793 = vmatmul.mubr.f32.gmra.mrb[0].mxu0 %v1792
  %v1794 = vpop.f32.mrb[0].mxu0
  %v1795 = vadd.f32 %v1654, %v1794
  %v1796 = vpop.f32.mrb[0].mxu0
  %1797 = vmatprep.mubr.f32.mxu0 0.0
  %v1798 = vsub.f32 %v1319, %v1319
  %1799 = vmatmul.mubr.f32.gmra.mrb[0].mxu0 %v1798
  %v1800 = vpop.f32.mrb[0].mxu0
  %v1801 = vadd.f32 %v1659, %v1800
  %v1802 = vpop.f32.mrb[0].mxu0
  %1803 = vmatprep.mubr.f32.mxu0 0.0
  %v1804 = vsub.f32 %v1320, %v1320
  %1805 = vmatmul.mubr.f32.gmra.mrb[0].mxu0 %v1804
  %v1806 = vpop.f32.mrb[0].mxu0
  %v1807 = vadd.f32 %v1664, %v1806
  %v1808 = vpop.f32.mrb[0].mxu0
  %1809 = vmatprep.mubr.f32.mxu0 0.0
  %v1810 = vsub.f32 %v1321, %v1321
  %1811 = vmatmul.mubr.f32.gmra.mrb[0].mxu0 %v1810
  %v1812 = vpop.f32.mrb[0].mxu0
  %v1813 = vadd.f32 %v1669, %v1812
  %v1814 = vpop.f32.mrb[0].mxu0
  %1815 = vmatprep.mubr.f32.mxu0 0.0
  %v1816 = vsub.f32 %v1322, %v1322
  %1817 = vmatmul.mubr.f32.gmra.mrb[0].mxu0 %v1816
  %v1818 = vpop.f32.mrb[0].mxu0
  %v1819 = vadd.f32 %v1674, %v1818
  %v1820 = vpop.f32.mrb[0].mxu0
  %1821 = vdwg.mxu0
  %1822 = vmatprep.subr.mxu0 0.0
  %v1823 = vand.u32 %v1323, 4294901760
  %1824 = vmatpush1.msra.mxu0 %v1823
  %1825 = vmatprep.subr.mxu0 0.0
  %v1826 = vand.u32 %v1324, 4294901760
  %1827 = vmatpush1.msra.mxu0 %v1826
  %1828 = vmatprep.subr.mxu0 0.0
  %v1829 = vand.u32 %v1325, 4294901760
  %1830 = vmatpush1.msra.mxu0 %v1829
  %1831 = vmatprep.subr.mxu0 0.0
  %v1832 = vand.u32 %v1326, 4294901760
  %1833 = vmatpush1.msra.mxu0 %v1832
  %1834 = vmatprep.subr.mxu0 0.0
  %v1835 = vand.u32 %v1327, 4294901760
  %1836 = vmatpush1.msra.mxu0 %v1835
  %1837 = vmatprep.subr.mxu0 0.0
  %v1838 = vand.u32 %v1328, 4294901760
  %1839 = vmatpush1.msra.mxu0 %v1838
  %1840 = vmatprep.subr.mxu0 0.0
  %v1841 = vand.u32 %v1329, 4294901760
  %1842 = vmatpush1.msra.mxu0 %v1841
  %1843 = vmatprep.subr.mxu0 0.0
  %v1844 = vand.u32 %v1330, 4294901760
  %1845 = vmatpush1.msra.mxu0 %v1844
  %1846 = vmatprep.subr.mxu0 0.0
  %v1847 = vand.u32 %v1331, 4294901760
  %1848 = vmatpush1.msra.mxu0 %v1847
  %1849 = vmatprep.subr.mxu0 0.0
  %v1850 = vand.u32 %v1332, 4294901760
  %1851 = vmatpush1.msra.mxu0 %v1850
  %1852 = vmatprep.subr.mxu0 0.0
  %v1853 = vand.u32 %v1333, 4294901760
  %1854 = vmatpush1.msra.mxu0 %v1853
  %1855 = vmatprep.subr.mxu0 0.0
  %v1856 = vand.u32 %v1334, 4294901760
  %1857 = vmatpush1.msra.mxu0 %v1856
  %1858 = vmatprep.subr.mxu0 0.0
  %v1859 = vand.u32 %v1335, 4294901760
  %1860 = vmatpush1.msra.mxu0 %v1859
  %1861 = vmatprep.subr.mxu0 0.0
  %v1862 = vand.u32 %v1336, 4294901760
  %1863 = vmatpush1.msra.mxu0 %v1862
  %1864 = vmatprep.subr.mxu0 0.0
  %v1865 = vand.u32 %v1337, 4294901760
  %1866 = vmatpush1.msra.mxu0 %v1865
  %1867 = vmatprep.subr.mxu0 0.0
  %v1868 = vand.u32 %v1338, 4294901760
  %1869 = vmatpush1.msra.mxu0 %v1868
  %1870 = vmatprep.subr.mxu0 0.0
  %1871 = vmatpush1.msra.mxu0 0.0
  %1872 = vmatprep.subr.mxu0 0.0
  %1873 = vmatpush1.msra.mxu0 0.0
  %1874 = vmatprep.subr.mxu0 0.0
  %1875 = vmatpush1.msra.mxu0 0.0
  %1876 = vmatprep.subr.mxu0 0.0
  %1877 = vmatpush1.msra.mxu0 0.0
  %1878 = vmatprep.subr.mxu0 0.0
  %1879 = vmatpush1.msra.mxu0 0.0
  %1880 = vmatprep.subr.mxu0 0.0
  %1881 = vmatpush1.msra.mxu0 0.0
  %1882 = vmatprep.subr.mxu0 0.0
  %1883 = vmatpush1.msra.mxu0 0.0
  %1884 = vmatprep.subr.mxu0 0.0
  %1885 = vmatpush1.msra.mxu0 0.0
  %1886 = vmatprep.subr.mxu0 0.0
  %1887 = vmatpush1.msra.mxu0 0.0
  %1888 = vmatprep.subr.mxu0 0.0
  %1889 = vmatpush1.msra.mxu0 0.0
  %1890 = vmatprep.subr.mxu0 0.0
  %1891 = vmatpush1.msra.mxu0 0.0
  %1892 = vmatprep.subr.mxu0 0.0
  %1893 = vmatpush1.msra.mxu0 0.0
  %1894 = vmatprep.subr.mxu0 0.0
  %1895 = vmatpush1.msra.mxu0 0.0
  %1896 = vmatprep.subr.mxu0 0.0
  %1897 = vmatpush1.msra.mxu0 0.0
  %1898 = vmatprep.subr.mxu0 0.0
  %1899 = vmatpush1.msra.mxu0 0.0
  %1900 = vmatprep.subr.mxu0 0.0
  %1901 = vmatpush1.msra.mxu0 0.0
  %1902 = vmatprep.mubr.f32.mxu0 0.0
  %v1903 = vsub.f32 %v1315, %v1315
  %v1904 = vand.u32 %v1903, 4294901760
  %1905 = vmatmul.mubr.f32.gmra.mrb[0].mxu0 %v1904
  %v1906 = vpop.f32.mrb[0].mxu0
  %v1907 = vadd.f32 %v1777, %v1906
  %v1908 = vpop.f32.mrb[0].mxu0
  %1909 = vmatprep.mubr.f32.mxu0 0.0
  %v1910 = vsub.f32 %v1316, %v1316
  %v1911 = vand.u32 %v1910, 4294901760
  %1912 = vmatmul.mubr.f32.gmra.mrb[0].mxu0 %v1911
  %v1913 = vpop.f32.mrb[0].mxu0
  %v1914 = vadd.f32 %v1783, %v1913
  %v1915 = vpop.f32.mrb[0].mxu0
  %1916 = vmatprep.mubr.f32.mxu0 0.0
  %v1917 = vsub.f32 %v1317, %v1317
  %v1918 = vand.u32 %v1917, 4294901760
  %1919 = vmatmul.mubr.f32.gmra.mrb[0].mxu0 %v1918
  %v1920 = vpop.f32.mrb[0].mxu0
  %v1921 = vadd.f32 %v1789, %v1920
  %v1922 = vpop.f32.mrb[0].mxu0
  %1923 = vmatprep.mubr.f32.mxu0 0.0
  %v1924 = vsub.f32 %v1318, %v1318
  %v1925 = vand.u32 %v1924, 4294901760
  %1926 = vmatmul.mubr.f32.gmra.mrb[0].mxu0 %v1925
  %v1927 = vpop.f32.mrb[0].mxu0
  %v1928 = vadd.f32 %v1795, %v1927
  %v1929 = vpop.f32.mrb[0].mxu0
  %1930 = vmatprep.mubr.f32.mxu0 0.0
  %v1931 = vsub.f32 %v1319, %v1319
  %v1932 = vand.u32 %v1931, 4294901760
  %1933 = vmatmul.mubr.f32.gmra.mrb[0].mxu0 %v1932
  %v1934 = vpop.f32.mrb[0].mxu0
  %v1935 = vadd.f32 %v1801, %v1934
  %v1936 = vpop.f32.mrb[0].mxu0
  %1937 = vmatprep.mubr.f32.mxu0 0.0
  %v1938 = vsub.f32 %v1320, %v1320
  %v1939 = vand.u32 %v1938, 4294901760
  %1940 = vmatmul.mubr.f32.gmra.mrb[0].mxu0 %v1939
  %v1941 = vpop.f32.mrb[0].mxu0
  %v1942 = vadd.f32 %v1807, %v1941
  %v1943 = vpop.f32.mrb[0].mxu0
  %1944 = vmatprep.mubr.f32.mxu0 0.0
  %v1945 = vsub.f32 %v1321, %v1321
  %v1946 = vand.u32 %v1945, 4294901760
  %1947 = vmatmul.mubr.f32.gmra.mrb[0].mxu0 %v1946
  %v1948 = vpop.f32.mrb[0].mxu0
  %v1949 = vadd.f32 %v1813, %v1948
  %v1950 = vpop.f32.mrb[0].mxu0
  %1951 = vmatprep.mubr.f32.mxu0 0.0
  %v1952 = vsub.f32 %v1322, %v1322
  %v1953 = vand.u32 %v1952, 4294901760
  %1954 = vmatmul.mubr.f32.gmra.mrb[0].mxu0 %v1953
  %v1955 = vpop.f32.mrb[0].mxu0
  %v1956 = vadd.f32 %v1819, %v1955
  %v1957 = vpop.f32.mrb[0].mxu0
  %1958 = vdwg.mxu0
  %1959 = vmatprep.subr.mxu0 0.0
  %v1960 = vand.u32 %v1323, 4294901760
  %v1961 = vsub.f32 %v1323, %v1960
  %v1962 = vand.u32 %v1961, 4294901760
  %1963 = vmatpush1.msra.mxu0 %v1962
  %1964 = vmatprep.subr.mxu0 0.0
  %v1965 = vand.u32 %v1324, 4294901760
  %v1966 = vsub.f32 %v1324, %v1965
  %v1967 = vand.u32 %v1966, 4294901760
  %1968 = vmatpush1.msra.mxu0 %v1967
  %1969 = vmatprep.subr.mxu0 0.0
  %v1970 = vand.u32 %v1325, 4294901760
  %v1971 = vsub.f32 %v1325, %v1970
  %v1972 = vand.u32 %v1971, 4294901760
  %1973 = vmatpush1.msra.mxu0 %v1972
  %1974 = vmatprep.subr.mxu0 0.0
  %v1975 = vand.u32 %v1326, 4294901760
  %v1976 = vsub.f32 %v1326, %v1975
  %v1977 = vand.u32 %v1976, 4294901760
  %1978 = vmatpush1.msra.mxu0 %v1977
  %1979 = vmatprep.subr.mxu0 0.0
  %v1980 = vand.u32 %v1327, 4294901760
  %v1981 = vsub.f32 %v1327, %v1980
  %v1982 = vand.u32 %v1981, 4294901760
  %1983 = vmatpush1.msra.mxu0 %v1982
  %1984 = vmatprep.subr.mxu0 0.0
  %v1985 = vand.u32 %v1328, 4294901760
  %v1986 = vsub.f32 %v1328, %v1985
  %v1987 = vand.u32 %v1986, 4294901760
  %1988 = vmatpush1.msra.mxu0 %v1987
  %1989 = vmatprep.subr.mxu0 0.0
  %v1990 = vand.u32 %v1329, 4294901760
  %v1991 = vsub.f32 %v1329, %v1990
  %v1992 = vand.u32 %v1991, 4294901760
  %1993 = vmatpush1.msra.mxu0 %v1992
  %1994 = vmatprep.subr.mxu0 0.0
  %v1995 = vand.u32 %v1330, 4294901760
  %v1996 = vsub.f32 %v1330, %v1995
  %v1997 = vand.u32 %v1996, 4294901760
  %1998 = vmatpush1.msra.mxu0 %v1997
  %1999 = vmatprep.subr.mxu0 0.0
  %v2000 = vand.u32 %v1331, 4294901760
  %v2001 = vsub.f32 %v1331, %v2000
  %v2002 = vand.u32 %v2001, 4294901760
  %2003 = vmatpush1.msra.mxu0 %v2002
  %2004 = vmatprep.subr.mxu0 0.0
  %v2005 = vand.u32 %v1332, 4294901760
  %v2006 = vsub.f32 %v1332, %v2005
  %v2007 = vand.u32 %v2006, 4294901760
  %2008 = vmatpush1.msra.mxu0 %v2007
  %2009 = vmatprep.subr.mxu0 0.0
  %v2010 = vand.u32 %v1333, 4294901760
  %v2011 = vsub.f32 %v1333, %v2010
  %v2012 = vand.u32 %v2011, 4294901760
  %2013 = vmatpush1.msra.mxu0 %v2012
  %2014 = vmatprep.subr.mxu0 0.0
  %v2015 = vand.u32 %v1334, 4294901760
  %v2016 = vsub.f32 %v1334, %v2015
  %v2017 = vand.u32 %v2016, 4294901760
  %2018 = vmatpush1.msra.mxu0 %v2017
  %2019 = vmatprep.subr.mxu0 0.0
  %v2020 = vand.u32 %v1335, 4294901760
  %v2021 = vsub.f32 %v1335, %v2020
  %v2022 = vand.u32 %v2021, 4294901760
  %2023 = vmatpush1.msra.mxu0 %v2022
  %2024 = vmatprep.subr.mxu0 0.0
  %v2025 = vand.u32 %v1336, 4294901760
  %v2026 = vsub.f32 %v1336, %v2025
  %v2027 = vand.u32 %v2026, 4294901760
  %2028 = vmatpush1.msra.mxu0 %v2027
  %2029 = vmatprep.subr.mxu0 0.0
  %v2030 = vand.u32 %v1337, 4294901760
  %v2031 = vsub.f32 %v1337, %v2030
  %v2032 = vand.u32 %v2031, 4294901760
  %2033 = vmatpush1.msra.mxu0 %v2032
  %2034 = vmatprep.subr.mxu0 0.0
  %v2035 = vand.u32 %v1338, 4294901760
  %v2036 = vsub.f32 %v1338, %v2035
  %v2037 = vand.u32 %v2036, 4294901760
  %2038 = vmatpush1.msra.mxu0 %v2037
  %2039 = vmatprep.subr.mxu0 0.0
  %2040 = vmatpush1.msra.mxu0 0.0
  %2041 = vmatprep.subr.mxu0 0.0
  %2042 = vmatpush1.msra.mxu0 0.0
  %2043 = vmatprep.subr.mxu0 0.0
  %2044 = vmatpush1.msra.mxu0 0.0
  %2045 = vmatprep.subr.mxu0 0.0
  %2046 = vmatpush1.msra.mxu0 0.0
  %2047 = vmatprep.subr.mxu0 0.0
  %2048 = vmatpush1.msra.mxu0 0.0
  %2049 = vmatprep.subr.mxu0 0.0
  %2050 = vmatpush1.msra.mxu0 0.0
  %2051 = vmatprep.subr.mxu0 0.0
  %2052 = vmatpush1.msra.mxu0 0.0
  %2053 = vmatprep.subr.mxu0 0.0
  %2054 = vmatpush1.msra.mxu0 0.0
  %2055 = vmatprep.subr.mxu0 0.0
  %2056 = vmatpush1.msra.mxu0 0.0
  %2057 = vmatprep.subr.mxu0 0.0
  %2058 = vmatpush1.msra.mxu0 0.0
  %2059 = vmatprep.subr.mxu0 0.0
  %2060 = vmatpush1.msra.mxu0 0.0
  %2061 = vmatprep.subr.mxu0 0.0
  %2062 = vmatpush1.msra.mxu0 0.0
  %2063 = vmatprep.subr.mxu0 0.0
  %2064 = vmatpush1.msra.mxu0 0.0
  %2065 = vmatprep.subr.mxu0 0.0
  %2066 = vmatpush1.msra.mxu0 0.0
  %2067 = vmatprep.subr.mxu0 0.0
  %2068 = vmatpush1.msra.mxu0 0.0
  %2069 = vmatprep.subr.mxu0 0.0
  %2070 = vmatpush1.msra.mxu0 0.0
  %2071 = vmatprep.mubr.f32.mxu0 0.0
  %2072 = vmatmul.mubr.f32.gmra.mrb[0].mxu0 %v1315
  %v2073 = vpop.f32.mrb[0].mxu0
  %v2074 = vadd.f32 %v1907, %v2073
  %v2075 = vpop.f32.mrb[0].mxu0
  %2076 = vmatprep.mubr.f32.mxu0 0.0
  %2077 = vmatmul.mubr.f32.gmra.mrb[0].mxu0 %v1316
  %v2078 = vpop.f32.mrb[0].mxu0
  %v2079 = vadd.f32 %v1914, %v2078
  %v2080 = vpop.f32.mrb[0].mxu0
  %2081 = vmatprep.mubr.f32.mxu0 0.0
  %2082 = vmatmul.mubr.f32.gmra.mrb[0].mxu0 %v1317
  %v2083 = vpop.f32.mrb[0].mxu0
  %v2084 = vadd.f32 %v1921, %v2083
  %v2085 = vpop.f32.mrb[0].mxu0
  %2086 = vmatprep.mubr.f32.mxu0 0.0
  %2087 = vmatmul.mubr.f32.gmra.mrb[0].mxu0 %v1318
  %v2088 = vpop.f32.mrb[0].mxu0
  %v2089 = vadd.f32 %v1928, %v2088
  %v2090 = vpop.f32.mrb[0].mxu0
  %2091 = vmatprep.mubr.f32.mxu0 0.0
  %2092 = vmatmul.mubr.f32.gmra.mrb[0].mxu0 %v1319
  %v2093 = vpop.f32.mrb[0].mxu0
  %v2094 = vadd.f32 %v1935, %v2093
  %v2095 = vpop.f32.mrb[0].mxu0
  %2096 = vmatprep.mubr.f32.mxu0 0.0
  %2097 = vmatmul.mubr.f32.gmra.mrb[0].mxu0 %v1320
  %v2098 = vpop.f32.mrb[0].mxu0
  %v2099 = vadd.f32 %v1942, %v2098
  %v2100 = vpop.f32.mrb[0].mxu0
  %2101 = vmatprep.mubr.f32.mxu0 0.0
  %2102 = vmatmul.mubr.f32.gmra.mrb[0].mxu0 %v1321
  %v2103 = vpop.f32.mrb[0].mxu0
  %v2104 = vadd.f32 %v1949, %v2103
  %v2105 = vpop.f32.mrb[0].mxu0
  %2106 = vmatprep.mubr.f32.mxu0 0.0
  %2107 = vmatmul.mubr.f32.gmra.mrb[0].mxu0 %v1322
  %v2108 = vpop.f32.mrb[0].mxu0
  %v2109 = vadd.f32 %v1956, %v2108
  %v2110 = vpop.f32.mrb[0].mxu0
  %2111 = vdwg.mxu0
  %2112 = vmatprep.subr.mxu0 0.0
  %v2113 = vand.u32 %v1323, 4294901760
  %2114 = vmatpush1.msra.mxu0 %v2113
  %2115 = vmatprep.subr.mxu0 0.0
  %v2116 = vand.u32 %v1324, 4294901760
  %2117 = vmatpush1.msra.mxu0 %v2116
  %2118 = vmatprep.subr.mxu0 0.0
  %v2119 = vand.u32 %v1325, 4294901760
  %2120 = vmatpush1.msra.mxu0 %v2119
  %2121 = vmatprep.subr.mxu0 0.0
  %v2122 = vand.u32 %v1326, 4294901760
  %2123 = vmatpush1.msra.mxu0 %v2122
  %2124 = vmatprep.subr.mxu0 0.0
  %v2125 = vand.u32 %v1327, 4294901760
  %2126 = vmatpush1.msra.mxu0 %v2125
  %2127 = vmatprep.subr.mxu0 0.0
  %v2128 = vand.u32 %v1328, 4294901760
  %2129 = vmatpush1.msra.mxu0 %v2128
  %2130 = vmatprep.subr.mxu0 0.0
  %v2131 = vand.u32 %v1329, 4294901760
  %2132 = vmatpush1.msra.mxu0 %v2131
  %2133 = vmatprep.subr.mxu0 0.0
  %v2134 = vand.u32 %v1330, 4294901760
  %2135 = vmatpush1.msra.mxu0 %v2134
  %2136 = vmatprep.subr.mxu0 0.0
  %v2137 = vand.u32 %v1331, 4294901760
  %2138 = vmatpush1.msra.mxu0 %v2137
  %2139 = vmatprep.subr.mxu0 0.0
  %v2140 = vand.u32 %v1332, 4294901760
  %2141 = vmatpush1.msra.mxu0 %v2140
  %2142 = vmatprep.subr.mxu0 0.0
  %v2143 = vand.u32 %v1333, 4294901760
  %2144 = vmatpush1.msra.mxu0 %v2143
  %2145 = vmatprep.subr.mxu0 0.0
  %v2146 = vand.u32 %v1334, 4294901760
  %2147 = vmatpush1.msra.mxu0 %v2146
  %2148 = vmatprep.subr.mxu0 0.0
  %v2149 = vand.u32 %v1335, 4294901760
  %2150 = vmatpush1.msra.mxu0 %v2149
  %2151 = vmatprep.subr.mxu0 0.0
  %v2152 = vand.u32 %v1336, 4294901760
  %2153 = vmatpush1.msra.mxu0 %v2152
  %2154 = vmatprep.subr.mxu0 0.0
  %v2155 = vand.u32 %v1337, 4294901760
  %2156 = vmatpush1.msra.mxu0 %v2155
  %2157 = vmatprep.subr.mxu0 0.0
  %v2158 = vand.u32 %v1338, 4294901760
  %2159 = vmatpush1.msra.mxu0 %v2158
  %2160 = vmatprep.subr.mxu0 0.0
  %2161 = vmatpush1.msra.mxu0 0.0
  %2162 = vmatprep.subr.mxu0 0.0
  %2163 = vmatpush1.msra.mxu0 0.0
  %2164 = vmatprep.subr.mxu0 0.0
  %2165 = vmatpush1.msra.mxu0 0.0
  %2166 = vmatprep.subr.mxu0 0.0
  %2167 = vmatpush1.msra.mxu0 0.0
  %2168 = vmatprep.subr.mxu0 0.0
  %2169 = vmatpush1.msra.mxu0 0.0
  %2170 = vmatprep.subr.mxu0 0.0
  %2171 = vmatpush1.msra.mxu0 0.0
  %2172 = vmatprep.subr.mxu0 0.0
  %2173 = vmatpush1.msra.mxu0 0.0
  %2174 = vmatprep.subr.mxu0 0.0
  %2175 = vmatpush1.msra.mxu0 0.0
  %2176 = vmatprep.subr.mxu0 0.0
  %2177 = vmatpush1.msra.mxu0 0.0
  %2178 = vmatprep.subr.mxu0 0.0
  %2179 = vmatpush1.msra.mxu0 0.0
  %2180 = vmatprep.subr.mxu0 0.0
  %2181 = vmatpush1.msra.mxu0 0.0
  %2182 = vmatprep.subr.mxu0 0.0
  %2183 = vmatpush1.msra.mxu0 0.0
  %2184 = vmatprep.subr.mxu0 0.0
  %2185 = vmatpush1.msra.mxu0 0.0
  %2186 = vmatprep.subr.mxu0 0.0
  %2187 = vmatpush1.msra.mxu0 0.0
  %2188 = vmatprep.subr.mxu0 0.0
  %2189 = vmatpush1.msra.mxu0 0.0
  %2190 = vmatprep.subr.mxu0 0.0
  %2191 = vmatpush1.msra.mxu0 0.0
  %2192 = vmatprep.mubr.f32.mxu0 0.0
  %2193 = vmatmul.mubr.f32.gmra.mrb[0].mxu0 %v1315
  %v2194 = vpop.f32.mrb[0].mxu0
  %v2195 = vadd.f32 %v2074, %v2194
  %v2196 = vpop.f32.mrb[0].mxu0
  %2197 = vmatprep.mubr.f32.mxu0 0.0
  %2198 = vmatmul.mubr.f32.gmra.mrb[0].mxu0 %v1316
  %v2199 = vpop.f32.mrb[0].mxu0
  %v2200 = vadd.f32 %v2079, %v2199
  %v2201 = vpop.f32.mrb[0].mxu0
  %2202 = vmatprep.mubr.f32.mxu0 0.0
  %2203 = vmatmul.mubr.f32.gmra.mrb[0].mxu0 %v1317
  %v2204 = vpop.f32.mrb[0].mxu0
  %v2205 = vadd.f32 %v2084, %v2204
  %v2206 = vpop.f32.mrb[0].mxu0
  %2207 = vmatprep.mubr.f32.mxu0 0.0
  %2208 = vmatmul.mubr.f32.gmra.mrb[0].mxu0 %v1318
  %v2209 = vpop.f32.mrb[0].mxu0
  %v2210 = vadd.f32 %v2089, %v2209
  %v2211 = vpop.f32.mrb[0].mxu0
  %2212 = vmatprep.mubr.f32.mxu0 0.0
  %2213 = vmatmul.mubr.f32.gmra.mrb[0].mxu0 %v1319
  %v2214 = vpop.f32.mrb[0].mxu0
  %v2215 = vadd.f32 %v2094, %v2214
  %v2216 = vpop.f32.mrb[0].mxu0
  %2217 = vmatprep.mubr.f32.mxu0 0.0
  %2218 = vmatmul.mubr.f32.gmra.mrb[0].mxu0 %v1320
  %v2219 = vpop.f32.mrb[0].mxu0
  %v2220 = vadd.f32 %v2099, %v2219
  %v2221 = vpop.f32.mrb[0].mxu0
  %2222 = vmatprep.mubr.f32.mxu0 0.0
  %2223 = vmatmul.mubr.f32.gmra.mrb[0].mxu0 %v1321
  %v2224 = vpop.f32.mrb[0].mxu0
  %v2225 = vadd.f32 %v2104, %v2224
  %v2226 = vpop.f32.mrb[0].mxu0
  %2227 = vmatprep.mubr.f32.mxu0 0.0
  %2228 = vmatmul.mubr.f32.gmra.mrb[0].mxu0 %v1322
  %v2229 = vpop.f32.mrb[0].mxu0
  %v2230 = vadd.f32 %v2109, %v2229
  %v2231 = vpop.f32.mrb[0].mxu0
  %2232 = vdwg.mxu0
  %v2233 = vld [vmem:[%s6] sm:$0xff]
  %v2234 = vld [vmem:[%s6 + $0x8] sm:$0xff]
  %v2235 = vld [vmem:[%s6 + $0x10] sm:$0xff]
  %v2236 = vld [vmem:[%s6 + $0x18] sm:$0xff]
  %v2237 = vld [vmem:[%s6 + $0x20] sm:$0xff]
  %v2238 = vld [vmem:[%s6 + $0x28] sm:$0xff]
  %v2239 = vld [vmem:[%s6 + $0x30] sm:$0xff]
  %v2240 = vld [vmem:[%s6 + $0x38] sm:$0xff]
  %vm2241 = vcmask 261120
  %v2243 = vsel %vm2241, %v2195, 0
  %v2246 = vsel %vm2241, %v2200, 0
  %v2249 = vsel %vm2241, %v2205, 0
  %v2252 = vsel %vm2241, %v2210, 0
  %v2255 = vsel %vm2241, %v2215, 0
  %v2258 = vsel %vm2241, %v2220, 0
  %v2261 = vsel %vm2241, %v2225, 0
  %v2264 = vsel %vm2241, %v2230, 0
  %v2266 = vand.u32 %v2234, 4294901760
  %2267 = vmatprep.subr.mxu0 %v2266
  %v2268 = vand.u32 %v2233, 4294901760
  %2269 = vmatpush1.msra.mxu0 %v2268
  %v2270 = vand.u32 %v2236, 4294901760
  %2271 = vmatprep.subr.mxu0 %v2270
  %v2272 = vand.u32 %v2235, 4294901760
  %2273 = vmatpush1.msra.mxu0 %v2272
  %v2274 = vand.u32 %v2238, 4294901760
  %2275 = vmatprep.subr.mxu0 %v2274
  %v2276 = vand.u32 %v2237, 4294901760
  %2277 = vmatpush1.msra.mxu0 %v2276
  %v2278 = vand.u32 %v2240, 4294901760
  %2279 = vmatprep.subr.mxu0 %v2278
  %v2280 = vand.u32 %v2239, 4294901760
  %2281 = vmatpush1.msra.mxu0 %v2280
  %2282 = vmatprep.subr.mxu0 0.0
  %2283 = vmatpush1.msra.mxu0 0.0
  %2284 = vmatprep.subr.mxu0 0.0
  %2285 = vmatpush1.msra.mxu0 0.0
  %2286 = vmatprep.subr.mxu0 0.0
  %2287 = vmatpush1.msra.mxu0 0.0
  %2288 = vmatprep.subr.mxu0 0.0
  %2289 = vmatpush1.msra.mxu0 0.0
  %2290 = vmatprep.subr.mxu0 0.0
  %2291 = vmatpush1.msra.mxu0 0.0
  %2292 = vmatprep.subr.mxu0 0.0
  %2293 = vmatpush1.msra.mxu0 0.0
  %2294 = vmatprep.subr.mxu0 0.0
  %2295 = vmatpush1.msra.mxu0 0.0
  %2296 = vmatprep.subr.mxu0 0.0
  %2297 = vmatpush1.msra.mxu0 0.0
  %2298 = vmatprep.subr.mxu0 0.0
  %2299 = vmatpush1.msra.mxu0 0.0
  %2300 = vmatprep.subr.mxu0 0.0
  %2301 = vmatpush1.msra.mxu0 0.0
  %2302 = vmatprep.subr.mxu0 0.0
  %2303 = vmatpush1.msra.mxu0 0.0
  %2304 = vmatprep.subr.mxu0 0.0
  %2305 = vmatpush1.msra.mxu0 0.0
  %2306 = vmatprep.subr.mxu0 0.0
  %2307 = vmatpush1.msra.mxu0 0.0
  %2308 = vmatprep.subr.mxu0 0.0
  %2309 = vmatpush1.msra.mxu0 0.0
  %2310 = vmatprep.subr.mxu0 0.0
  %2311 = vmatpush1.msra.mxu0 0.0
  %2312 = vmatprep.subr.mxu0 0.0
  %2313 = vmatpush1.msra.mxu0 0.0
  %2314 = vmatprep.subr.mxu0 0.0
  %2315 = vmatpush1.msra.mxu0 0.0
  %2316 = vmatprep.subr.mxu0 0.0
  %2317 = vmatpush1.msra.mxu0 0.0
  %2318 = vmatprep.subr.mxu0 0.0
  %2319 = vmatpush1.msra.mxu0 0.0
  %2320 = vmatprep.subr.mxu0 0.0
  %2321 = vmatpush1.msra.mxu0 0.0
  %2322 = vmatprep.subr.mxu0 0.0
  %2323 = vmatpush1.msra.mxu0 0.0
  %2324 = vmatprep.subr.mxu0 0.0
  %2325 = vmatpush1.msra.mxu0 0.0
  %2326 = vmatprep.subr.mxu0 0.0
  %2327 = vmatpush1.msra.mxu0 0.0
  %2328 = vmatprep.subr.mxu0 0.0
  %2329 = vmatpush1.msra.mxu0 0.0
  %2330 = vmatprep.subr.mxu0 0.0
  %2331 = vmatpush1.msra.mxu0 0.0
  %2332 = vmatprep.subr.mxu0 0.0
  %2333 = vmatpush1.msra.mxu0 0.0
  %2334 = vmatprep.subr.mxu0 0.0
  %2335 = vmatpush1.msra.mxu0 0.0
  %2336 = vmatprep.subr.mxu0 0.0
  %2337 = vmatpush1.msra.mxu0 0.0
  %2338 = vmatprep.mubr.f32.mxu0 0.0
  %v2339 = vand.u32 %v2243, 4294901760
  %v2340 = vsub.f32 %v2243, %v2339
  %v2341 = vand.u32 %v2340, 4294901760
  %v2342 = vsub.f32 %v2340, %v2341
  %v2343 = vand.u32 %v2342, 4294901760
  %2344 = vmatmul.mubr.f32.gmra.mrb[0].mxu0 %v2343
  %v2345 = vpop.f32.mrb[0].mxu0
  %v2346 = vadd.f32 0.0, %v2345
  %v2347 = vpop.f32.mrb[0].mxu0
  %2348 = vmatprep.mubr.f32.mxu0 0.0
  %v2349 = vand.u32 %v2246, 4294901760
  %v2350 = vsub.f32 %v2246, %v2349
  %v2351 = vand.u32 %v2350, 4294901760
  %v2352 = vsub.f32 %v2350, %v2351
  %v2353 = vand.u32 %v2352, 4294901760
  %2354 = vmatmul.mubr.f32.gmra.mrb[0].mxu0 %v2353
  %v2355 = vpop.f32.mrb[0].mxu0
  %v2356 = vadd.f32 0.0, %v2355
  %v2357 = vpop.f32.mrb[0].mxu0
  %2358 = vmatprep.mubr.f32.mxu0 0.0
  %v2359 = vand.u32 %v2249, 4294901760
  %v2360 = vsub.f32 %v2249, %v2359
  %v2361 = vand.u32 %v2360, 4294901760
  %v2362 = vsub.f32 %v2360, %v2361
  %v2363 = vand.u32 %v2362, 4294901760
  %2364 = vmatmul.mubr.f32.gmra.mrb[0].mxu0 %v2363
  %v2365 = vpop.f32.mrb[0].mxu0
  %v2366 = vadd.f32 0.0, %v2365
  %v2367 = vpop.f32.mrb[0].mxu0
  %2368 = vmatprep.mubr.f32.mxu0 0.0
  %v2369 = vand.u32 %v2252, 4294901760
  %v2370 = vsub.f32 %v2252, %v2369
  %v2371 = vand.u32 %v2370, 4294901760
  %v2372 = vsub.f32 %v2370, %v2371
  %v2373 = vand.u32 %v2372, 4294901760
  %2374 = vmatmul.mubr.f32.gmra.mrb[0].mxu0 %v2373
  %v2375 = vpop.f32.mrb[0].mxu0
  %v2376 = vadd.f32 0.0, %v2375
  %v2377 = vpop.f32.mrb[0].mxu0
  %2378 = vmatprep.mubr.f32.mxu0 0.0
  %v2379 = vand.u32 %v2255, 4294901760
  %v2380 = vsub.f32 %v2255, %v2379
  %v2381 = vand.u32 %v2380, 4294901760
  %v2382 = vsub.f32 %v2380, %v2381
  %v2383 = vand.u32 %v2382, 4294901760
  %2384 = vmatmul.mubr.f32.gmra.mrb[0].mxu0 %v2383
  %v2385 = vpop.f32.mrb[0].mxu0
  %v2386 = vadd.f32 0.0, %v2385
  %v2387 = vpop.f32.mrb[0].mxu0
  %2388 = vmatprep.mubr.f32.mxu0 0.0
  %v2389 = vand.u32 %v2258, 4294901760
  %v2390 = vsub.f32 %v2258, %v2389
  %v2391 = vand.u32 %v2390, 4294901760
  %v2392 = vsub.f32 %v2390, %v2391
  %v2393 = vand.u32 %v2392, 4294901760
  %2394 = vmatmul.mubr.f32.gmra.mrb[0].mxu0 %v2393
  %v2395 = vpop.f32.mrb[0].mxu0
  %v2396 = vadd.f32 0.0, %v2395
  %v2397 = vpop.f32.mrb[0].mxu0
  %2398 = vmatprep.mubr.f32.mxu0 0.0
  %v2399 = vand.u32 %v2261, 4294901760
  %v2400 = vsub.f32 %v2261, %v2399
  %v2401 = vand.u32 %v2400, 4294901760
  %v2402 = vsub.f32 %v2400, %v2401
  %v2403 = vand.u32 %v2402, 4294901760
  %2404 = vmatmul.mubr.f32.gmra.mrb[0].mxu0 %v2403
  %v2405 = vpop.f32.mrb[0].mxu0
  %v2406 = vadd.f32 0.0, %v2405
  %v2407 = vpop.f32.mrb[0].mxu0
  %2408 = vmatprep.mubr.f32.mxu0 0.0
  %v2409 = vand.u32 %v2264, 4294901760
  %v2410 = vsub.f32 %v2264, %v2409
  %v2411 = vand.u32 %v2410, 4294901760
  %v2412 = vsub.f32 %v2410, %v2411
  %v2413 = vand.u32 %v2412, 4294901760
  %2414 = vmatmul.mubr.f32.gmra.mrb[0].mxu0 %v2413
  %v2415 = vpop.f32.mrb[0].mxu0
  %v2416 = vadd.f32 0.0, %v2415
  %v2417 = vpop.f32.mrb[0].mxu0
  %v2418 = vadd.f32 0.0, %v2417
  %2419 = vdwg.mxu0
  %v2420 = vand.u32 %v2234, 4294901760
  %v2421 = vsub.f32 %v2234, %v2420
  %v2422 = vand.u32 %v2421, 4294901760
  %v2423 = vsub.f32 %v2421, %v2422
  %v2424 = vand.u32 %v2423, 4294901760
  %2425 = vmatprep.subr.mxu0 %v2424
  %v2426 = vand.u32 %v2233, 4294901760
  %v2427 = vsub.f32 %v2233, %v2426
  %v2428 = vand.u32 %v2427, 4294901760
  %v2429 = vsub.f32 %v2427, %v2428
  %v2430 = vand.u32 %v2429, 4294901760
  %2431 = vmatpush1.msra.mxu0 %v2430
  %v2432 = vand.u32 %v2236, 4294901760
  %v2433 = vsub.f32 %v2236, %v2432
  %v2434 = vand.u32 %v2433, 4294901760
  %v2435 = vsub.f32 %v2433, %v2434
  %v2436 = vand.u32 %v2435, 4294901760
  %2437 = vmatprep.subr.mxu0 %v2436
  %v2438 = vand.u32 %v2235, 4294901760
  %v2439 = vsub.f32 %v2235, %v2438
  %v2440 = vand.u32 %v2439, 4294901760
  %v2441 = vsub.f32 %v2439, %v2440
  %v2442 = vand.u32 %v2441, 4294901760
  %2443 = vmatpush1.msra.mxu0 %v2442
  %v2444 = vand.u32 %v2238, 4294901760
  %v2445 = vsub.f32 %v2238, %v2444
  %v2446 = vand.u32 %v2445, 4294901760
  %v2447 = vsub.f32 %v2445, %v2446
  %v2448 = vand.u32 %v2447, 4294901760
  %2449 = vmatprep.subr.mxu0 %v2448
  %v2450 = vand.u32 %v2237, 4294901760
  %v2451 = vsub.f32 %v2237, %v2450
  %v2452 = vand.u32 %v2451, 4294901760
  %v2453 = vsub.f32 %v2451, %v2452
  %v2454 = vand.u32 %v2453, 4294901760
  %2455 = vmatpush1.msra.mxu0 %v2454
  %v2456 = vand.u32 %v2240, 4294901760
  %v2457 = vsub.f32 %v2240, %v2456
  %v2458 = vand.u32 %v2457, 4294901760
  %v2459 = vsub.f32 %v2457, %v2458
  %v2460 = vand.u32 %v2459, 4294901760
  %2461 = vmatprep.subr.mxu0 %v2460
  %v2462 = vand.u32 %v2239, 4294901760
  %v2463 = vsub.f32 %v2239, %v2462
  %v2464 = vand.u32 %v2463, 4294901760
  %v2465 = vsub.f32 %v2463, %v2464
  %v2466 = vand.u32 %v2465, 4294901760
  %2467 = vmatpush1.msra.mxu0 %v2466
  %2468 = vmatprep.subr.mxu0 0.0
  %2469 = vmatpush1.msra.mxu0 0.0
  %2470 = vmatprep.subr.mxu0 0.0
  %2471 = vmatpush1.msra.mxu0 0.0
  %2472 = vmatprep.subr.mxu0 0.0
  %2473 = vmatpush1.msra.mxu0 0.0
  %2474 = vmatprep.subr.mxu0 0.0
  %2475 = vmatpush1.msra.mxu0 0.0
  %2476 = vmatprep.subr.mxu0 0.0
  %2477 = vmatpush1.msra.mxu0 0.0
  %2478 = vmatprep.subr.mxu0 0.0
  %2479 = vmatpush1.msra.mxu0 0.0
  %2480 = vmatprep.subr.mxu0 0.0
  %2481 = vmatpush1.msra.mxu0 0.0
  %2482 = vmatprep.subr.mxu0 0.0
  %2483 = vmatpush1.msra.mxu0 0.0
  %2484 = vmatprep.subr.mxu0 0.0
  %2485 = vmatpush1.msra.mxu0 0.0
  %2486 = vmatprep.subr.mxu0 0.0
  %2487 = vmatpush1.msra.mxu0 0.0
  %2488 = vmatprep.subr.mxu0 0.0
  %2489 = vmatpush1.msra.mxu0 0.0
  %2490 = vmatprep.subr.mxu0 0.0
  %2491 = vmatpush1.msra.mxu0 0.0
  %2492 = vmatprep.subr.mxu0 0.0
  %2493 = vmatpush1.msra.mxu0 0.0
  %2494 = vmatprep.subr.mxu0 0.0
  %2495 = vmatpush1.msra.mxu0 0.0
  %2496 = vmatprep.subr.mxu0 0.0
  %2497 = vmatpush1.msra.mxu0 0.0
  %2498 = vmatprep.subr.mxu0 0.0
  %2499 = vmatpush1.msra.mxu0 0.0
  %2500 = vmatprep.subr.mxu0 0.0
  %2501 = vmatpush1.msra.mxu0 0.0
  %2502 = vmatprep.subr.mxu0 0.0
  %2503 = vmatpush1.msra.mxu0 0.0
  %2504 = vmatprep.subr.mxu0 0.0
  %2505 = vmatpush1.msra.mxu0 0.0
  %2506 = vmatprep.subr.mxu0 0.0
  %2507 = vmatpush1.msra.mxu0 0.0
  %2508 = vmatprep.subr.mxu0 0.0
  %2509 = vmatpush1.msra.mxu0 0.0
  %2510 = vmatprep.subr.mxu0 0.0
  %2511 = vmatpush1.msra.mxu0 0.0
  %2512 = vmatprep.subr.mxu0 0.0
  %2513 = vmatpush1.msra.mxu0 0.0
  %2514 = vmatprep.subr.mxu0 0.0
  %2515 = vmatpush1.msra.mxu0 0.0
  %2516 = vmatprep.subr.mxu0 0.0
  %2517 = vmatpush1.msra.mxu0 0.0
  %2518 = vmatprep.subr.mxu0 0.0
  %2519 = vmatpush1.msra.mxu0 0.0
  %2520 = vmatprep.subr.mxu0 0.0
  %2521 = vmatpush1.msra.mxu0 0.0
  %2522 = vmatprep.subr.mxu0 0.0
  %2523 = vmatpush1.msra.mxu0 0.0
  %2524 = vmatprep.mubr.f32.mxu0 0.0
  %v2525 = vand.u32 %v2243, 4294901760
  %2526 = vmatmul.mubr.f32.gmra.mrb[0].mxu0 %v2525
  %v2527 = vpop.f32.mrb[0].mxu0
  %v2528 = vadd.f32 %v2346, %v2527
  %v2529 = vpop.f32.mrb[0].mxu0
  %2530 = vmatprep.mubr.f32.mxu0 0.0
  %v2531 = vand.u32 %v2246, 4294901760
  %2532 = vmatmul.mubr.f32.gmra.mrb[0].mxu0 %v2531
  %v2533 = vpop.f32.mrb[0].mxu0
  %v2534 = vadd.f32 %v2356, %v2533
  %v2535 = vpop.f32.mrb[0].mxu0
  %2536 = vmatprep.mubr.f32.mxu0 0.0
  %v2537 = vand.u32 %v2249, 4294901760
  %2538 = vmatmul.mubr.f32.gmra.mrb[0].mxu0 %v2537
  %v2539 = vpop.f32.mrb[0].mxu0
  %v2540 = vadd.f32 %v2366, %v2539
  %v2541 = vpop.f32.mrb[0].mxu0
  %2542 = vmatprep.mubr.f32.mxu0 0.0
  %v2543 = vand.u32 %v2252, 4294901760
  %2544 = vmatmul.mubr.f32.gmra.mrb[0].mxu0 %v2543
  %v2545 = vpop.f32.mrb[0].mxu0
  %v2546 = vadd.f32 %v2376, %v2545
  %v2547 = vpop.f32.mrb[0].mxu0
  %2548 = vmatprep.mubr.f32.mxu0 0.0
  %v2549 = vand.u32 %v2255, 4294901760
  %2550 = vmatmul.mubr.f32.gmra.mrb[0].mxu0 %v2549
  %v2551 = vpop.f32.mrb[0].mxu0
  %v2552 = vadd.f32 %v2386, %v2551
  %v2553 = vpop.f32.mrb[0].mxu0
  %2554 = vmatprep.mubr.f32.mxu0 0.0
  %v2555 = vand.u32 %v2258, 4294901760
  %2556 = vmatmul.mubr.f32.gmra.mrb[0].mxu0 %v2555
  %v2557 = vpop.f32.mrb[0].mxu0
  %v2558 = vadd.f32 %v2396, %v2557
  %v2559 = vpop.f32.mrb[0].mxu0
  %2560 = vmatprep.mubr.f32.mxu0 0.0
  %v2561 = vand.u32 %v2261, 4294901760
  %2562 = vmatmul.mubr.f32.gmra.mrb[0].mxu0 %v2561
  %v2563 = vpop.f32.mrb[0].mxu0
  %v2564 = vadd.f32 %v2406, %v2563
  %v2565 = vpop.f32.mrb[0].mxu0
  %2566 = vmatprep.mubr.f32.mxu0 0.0
  %v2567 = vand.u32 %v2264, 4294901760
  %2568 = vmatmul.mubr.f32.gmra.mrb[0].mxu0 %v2567
  %v2569 = vpop.f32.mrb[0].mxu0
  %v2570 = vadd.f32 %v2416, %v2569
  %v2571 = vpop.f32.mrb[0].mxu0
  %v2572 = vadd.f32 %v2418, %v2571
  %2573 = vdwg.mxu0
  %v2574 = vand.u32 %v2234, 4294901760
  %v2575 = vsub.f32 %v2234, %v2574
  %2576 = vmatprep.subr.mxu0 %v2575
  %v2577 = vand.u32 %v2233, 4294901760
  %v2578 = vsub.f32 %v2233, %v2577
  %2579 = vmatpush1.msra.mxu0 %v2578
  %v2580 = vand.u32 %v2236, 4294901760
  %v2581 = vsub.f32 %v2236, %v2580
  %2582 = vmatprep.subr.mxu0 %v2581
  %v2583 = vand.u32 %v2235, 4294901760
  %v2584 = vsub.f32 %v2235, %v2583
  %2585 = vmatpush1.msra.mxu0 %v2584
  %v2586 = vand.u32 %v2238, 4294901760
  %v2587 = vsub.f32 %v2238, %v2586
  %2588 = vmatprep.subr.mxu0 %v2587
  %v2589 = vand.u32 %v2237, 4294901760
  %v2590 = vsub.f32 %v2237, %v2589
  %2591 = vmatpush1.msra.mxu0 %v2590
  %v2592 = vand.u32 %v2240, 4294901760
  %v2593 = vsub.f32 %v2240, %v2592
  %2594 = vmatprep.subr.mxu0 %v2593
  %v2595 = vand.u32 %v2239, 4294901760
  %v2596 = vsub.f32 %v2239, %v2595
  %2597 = vmatpush1.msra.mxu0 %v2596
  %2598 = vmatprep.subr.mxu0 0.0
  %2599 = vmatpush1.msra.mxu0 0.0
  %2600 = vmatprep.subr.mxu0 0.0
  %2601 = vmatpush1.msra.mxu0 0.0
  %2602 = vmatprep.subr.mxu0 0.0
  %2603 = vmatpush1.msra.mxu0 0.0
  %2604 = vmatprep.subr.mxu0 0.0
  %2605 = vmatpush1.msra.mxu0 0.0
  %2606 = vmatprep.subr.mxu0 0.0
  %2607 = vmatpush1.msra.mxu0 0.0
  %2608 = vmatprep.subr.mxu0 0.0
  %2609 = vmatpush1.msra.mxu0 0.0
  %2610 = vmatprep.subr.mxu0 0.0
  %2611 = vmatpush1.msra.mxu0 0.0
  %2612 = vmatprep.subr.mxu0 0.0
  %2613 = vmatpush1.msra.mxu0 0.0
  %2614 = vmatprep.subr.mxu0 0.0
  %2615 = vmatpush1.msra.mxu0 0.0
  %2616 = vmatprep.subr.mxu0 0.0
  %2617 = vmatpush1.msra.mxu0 0.0
  %2618 = vmatprep.subr.mxu0 0.0
  %2619 = vmatpush1.msra.mxu0 0.0
  %2620 = vmatprep.subr.mxu0 0.0
  %2621 = vmatpush1.msra.mxu0 0.0
  %2622 = vmatprep.subr.mxu0 0.0
  %2623 = vmatpush1.msra.mxu0 0.0
  %2624 = vmatprep.subr.mxu0 0.0
  %2625 = vmatpush1.msra.mxu0 0.0
  %2626 = vmatprep.subr.mxu0 0.0
  %2627 = vmatpush1.msra.mxu0 0.0
  %2628 = vmatprep.subr.mxu0 0.0
  %2629 = vmatpush1.msra.mxu0 0.0
  %2630 = vmatprep.subr.mxu0 0.0
  %2631 = vmatpush1.msra.mxu0 0.0
  %2632 = vmatprep.subr.mxu0 0.0
  %2633 = vmatpush1.msra.mxu0 0.0
  %2634 = vmatprep.subr.mxu0 0.0
  %2635 = vmatpush1.msra.mxu0 0.0
  %2636 = vmatprep.subr.mxu0 0.0
  %2637 = vmatpush1.msra.mxu0 0.0
  %2638 = vmatprep.subr.mxu0 0.0
  %2639 = vmatpush1.msra.mxu0 0.0
  %2640 = vmatprep.subr.mxu0 0.0
  %2641 = vmatpush1.msra.mxu0 0.0
  %2642 = vmatprep.subr.mxu0 0.0
  %2643 = vmatpush1.msra.mxu0 0.0
  %2644 = vmatprep.subr.mxu0 0.0
  %2645 = vmatpush1.msra.mxu0 0.0
  %2646 = vmatprep.subr.mxu0 0.0
  %2647 = vmatpush1.msra.mxu0 0.0
  %2648 = vmatprep.subr.mxu0 0.0
  %2649 = vmatpush1.msra.mxu0 0.0
  %2650 = vmatprep.subr.mxu0 0.0
  %2651 = vmatpush1.msra.mxu0 0.0
  %2652 = vmatprep.subr.mxu0 0.0
  %2653 = vmatpush1.msra.mxu0 0.0
  %2654 = vmatprep.mubr.f32.mxu0 0.0
  %v2655 = vand.u32 %v2243, 4294901760
  %v2656 = vsub.f32 %v2243, %v2655
  %2657 = vmatmul.mubr.f32.gmra.mrb[0].mxu0 %v2656
  %v2658 = vpop.f32.mrb[0].mxu0
  %v2659 = vadd.f32 %v2528, %v2658
  %v2660 = vpop.f32.mrb[0].mxu0
  %2661 = vmatprep.mubr.f32.mxu0 0.0
  %v2662 = vand.u32 %v2246, 4294901760
  %v2663 = vsub.f32 %v2246, %v2662
  %2664 = vmatmul.mubr.f32.gmra.mrb[0].mxu0 %v2663
  %v2665 = vpop.f32.mrb[0].mxu0
  %v2666 = vadd.f32 %v2534, %v2665
  %v2667 = vpop.f32.mrb[0].mxu0
  %2668 = vmatprep.mubr.f32.mxu0 0.0
  %v2669 = vand.u32 %v2249, 4294901760
  %v2670 = vsub.f32 %v2249, %v2669
  %2671 = vmatmul.mubr.f32.gmra.mrb[0].mxu0 %v2670
  %v2672 = vpop.f32.mrb[0].mxu0
  %v2673 = vadd.f32 %v2540, %v2672
  %v2674 = vpop.f32.mrb[0].mxu0
  %2675 = vmatprep.mubr.f32.mxu0 0.0
  %v2676 = vand.u32 %v2252, 4294901760
  %v2677 = vsub.f32 %v2252, %v2676
  %2678 = vmatmul.mubr.f32.gmra.mrb[0].mxu0 %v2677
  %v2679 = vpop.f32.mrb[0].mxu0
  %v2680 = vadd.f32 %v2546, %v2679
  %v2681 = vpop.f32.mrb[0].mxu0
  %2682 = vmatprep.mubr.f32.mxu0 0.0
  %v2683 = vand.u32 %v2255, 4294901760
  %v2684 = vsub.f32 %v2255, %v2683
  %2685 = vmatmul.mubr.f32.gmra.mrb[0].mxu0 %v2684
  %v2686 = vpop.f32.mrb[0].mxu0
  %v2687 = vadd.f32 %v2552, %v2686
  %v2688 = vpop.f32.mrb[0].mxu0
  %2689 = vmatprep.mubr.f32.mxu0 0.0
  %v2690 = vand.u32 %v2258, 4294901760
  %v2691 = vsub.f32 %v2258, %v2690
  %2692 = vmatmul.mubr.f32.gmra.mrb[0].mxu0 %v2691
  %v2693 = vpop.f32.mrb[0].mxu0
  %v2694 = vadd.f32 %v2558, %v2693
  %v2695 = vpop.f32.mrb[0].mxu0
  %2696 = vmatprep.mubr.f32.mxu0 0.0
  %v2697 = vand.u32 %v2261, 4294901760
  %v2698 = vsub.f32 %v2261, %v2697
  %2699 = vmatmul.mubr.f32.gmra.mrb[0].mxu0 %v2698
  %v2700 = vpop.f32.mrb[0].mxu0
  %v2701 = vadd.f32 %v2564, %v2700
  %v2702 = vpop.f32.mrb[0].mxu0
  %2703 = vmatprep.mubr.f32.mxu0 0.0
  %v2704 = vand.u32 %v2264, 4294901760
  %v2705 = vsub.f32 %v2264, %v2704
  %2706 = vmatmul.mubr.f32.gmra.mrb[0].mxu0 %v2705
  %v2707 = vpop.f32.mrb[0].mxu0
  %v2708 = vadd.f32 %v2570, %v2707
  %v2709 = vpop.f32.mrb[0].mxu0
  %v2710 = vadd.f32 %v2572, %v2709
  %2711 = vdwg.mxu0
  %v2712 = vand.u32 %v2234, 4294901760
  %2713 = vmatprep.subr.mxu0 %v2712
  %v2714 = vand.u32 %v2233, 4294901760
  %2715 = vmatpush1.msra.mxu0 %v2714
  %v2716 = vand.u32 %v2236, 4294901760
  %2717 = vmatprep.subr.mxu0 %v2716
  %v2718 = vand.u32 %v2235, 4294901760
  %2719 = vmatpush1.msra.mxu0 %v2718
  %v2720 = vand.u32 %v2238, 4294901760
  %2721 = vmatprep.subr.mxu0 %v2720
  %v2722 = vand.u32 %v2237, 4294901760
  %2723 = vmatpush1.msra.mxu0 %v2722
  %v2724 = vand.u32 %v2240, 4294901760
  %2725 = vmatprep.subr.mxu0 %v2724
  %v2726 = vand.u32 %v2239, 4294901760
  %2727 = vmatpush1.msra.mxu0 %v2726
  %2728 = vmatprep.subr.mxu0 0.0
  %2729 = vmatpush1.msra.mxu0 0.0
  %2730 = vmatprep.subr.mxu0 0.0
  %2731 = vmatpush1.msra.mxu0 0.0
  %2732 = vmatprep.subr.mxu0 0.0
  %2733 = vmatpush1.msra.mxu0 0.0
  %2734 = vmatprep.subr.mxu0 0.0
  %2735 = vmatpush1.msra.mxu0 0.0
  %2736 = vmatprep.subr.mxu0 0.0
  %2737 = vmatpush1.msra.mxu0 0.0
  %2738 = vmatprep.subr.mxu0 0.0
  %2739 = vmatpush1.msra.mxu0 0.0
  %2740 = vmatprep.subr.mxu0 0.0
  %2741 = vmatpush1.msra.mxu0 0.0
  %2742 = vmatprep.subr.mxu0 0.0
  %2743 = vmatpush1.msra.mxu0 0.0
  %2744 = vmatprep.subr.mxu0 0.0
  %2745 = vmatpush1.msra.mxu0 0.0
  %2746 = vmatprep.subr.mxu0 0.0
  %2747 = vmatpush1.msra.mxu0 0.0
  %2748 = vmatprep.subr.mxu0 0.0
  %2749 = vmatpush1.msra.mxu0 0.0
  %2750 = vmatprep.subr.mxu0 0.0
  %2751 = vmatpush1.msra.mxu0 0.0
  %2752 = vmatprep.subr.mxu0 0.0
  %2753 = vmatpush1.msra.mxu0 0.0
  %2754 = vmatprep.subr.mxu0 0.0
  %2755 = vmatpush1.msra.mxu0 0.0
  %2756 = vmatprep.subr.mxu0 0.0
  %2757 = vmatpush1.msra.mxu0 0.0
  %2758 = vmatprep.subr.mxu0 0.0
  %2759 = vmatpush1.msra.mxu0 0.0
  %2760 = vmatprep.subr.mxu0 0.0
  %2761 = vmatpush1.msra.mxu0 0.0
  %2762 = vmatprep.subr.mxu0 0.0
  %2763 = vmatpush1.msra.mxu0 0.0
  %2764 = vmatprep.subr.mxu0 0.0
  %2765 = vmatpush1.msra.mxu0 0.0
  %2766 = vmatprep.subr.mxu0 0.0
  %2767 = vmatpush1.msra.mxu0 0.0
  %2768 = vmatprep.subr.mxu0 0.0
  %2769 = vmatpush1.msra.mxu0 0.0
  %2770 = vmatprep.subr.mxu0 0.0
  %2771 = vmatpush1.msra.mxu0 0.0
  %2772 = vmatprep.subr.mxu0 0.0
  %2773 = vmatpush1.msra.mxu0 0.0
  %2774 = vmatprep.subr.mxu0 0.0
  %2775 = vmatpush1.msra.mxu0 0.0
  %2776 = vmatprep.subr.mxu0 0.0
  %2777 = vmatpush1.msra.mxu0 0.0
  %2778 = vmatprep.subr.mxu0 0.0
  %2779 = vmatpush1.msra.mxu0 0.0
  %2780 = vmatprep.subr.mxu0 0.0
  %2781 = vmatpush1.msra.mxu0 0.0
  %2782 = vmatprep.subr.mxu0 0.0
  %2783 = vmatpush1.msra.mxu0 0.0
  %2784 = vmatprep.mubr.f32.mxu0 0.0
  %v2785 = vand.u32 %v2243, 4294901760
  %v2786 = vsub.f32 %v2243, %v2785
  %v2787 = vand.u32 %v2786, 4294901760
  %2788 = vmatmul.mubr.f32.gmra.mrb[0].mxu0 %v2787
  %v2789 = vpop.f32.mrb[0].mxu0
  %v2790 = vadd.f32 %v2659, %v2789
  %v2791 = vpop.f32.mrb[0].mxu0
  %2792 = vmatprep.mubr.f32.mxu0 0.0
  %v2793 = vand.u32 %v2246, 4294901760
  %v2794 = vsub.f32 %v2246, %v2793
  %v2795 = vand.u32 %v2794, 4294901760
  %2796 = vmatmul.mubr.f32.gmra.mrb[0].mxu0 %v2795
  %v2797 = vpop.f32.mrb[0].mxu0
  %v2798 = vadd.f32 %v2666, %v2797
  %v2799 = vpop.f32.mrb[0].mxu0
  %2800 = vmatprep.mubr.f32.mxu0 0.0
  %v2801 = vand.u32 %v2249, 4294901760
  %v2802 = vsub.f32 %v2249, %v2801
  %v2803 = vand.u32 %v2802, 4294901760
  %2804 = vmatmul.mubr.f32.gmra.mrb[0].mxu0 %v2803
  %v2805 = vpop.f32.mrb[0].mxu0
  %v2806 = vadd.f32 %v2673, %v2805
  %v2807 = vpop.f32.mrb[0].mxu0
  %2808 = vmatprep.mubr.f32.mxu0 0.0
  %v2809 = vand.u32 %v2252, 4294901760
  %v2810 = vsub.f32 %v2252, %v2809
  %v2811 = vand.u32 %v2810, 4294901760
  %2812 = vmatmul.mubr.f32.gmra.mrb[0].mxu0 %v2811
  %v2813 = vpop.f32.mrb[0].mxu0
  %v2814 = vadd.f32 %v2680, %v2813
  %v2815 = vpop.f32.mrb[0].mxu0
  %2816 = vmatprep.mubr.f32.mxu0 0.0
  %v2817 = vand.u32 %v2255, 4294901760
  %v2818 = vsub.f32 %v2255, %v2817
  %v2819 = vand.u32 %v2818, 4294901760
  %2820 = vmatmul.mubr.f32.gmra.mrb[0].mxu0 %v2819
  %v2821 = vpop.f32.mrb[0].mxu0
  %v2822 = vadd.f32 %v2687, %v2821
  %v2823 = vpop.f32.mrb[0].mxu0
  %2824 = vmatprep.mubr.f32.mxu0 0.0
  %v2825 = vand.u32 %v2258, 4294901760
  %v2826 = vsub.f32 %v2258, %v2825
  %v2827 = vand.u32 %v2826, 4294901760
  %2828 = vmatmul.mubr.f32.gmra.mrb[0].mxu0 %v2827
  %v2829 = vpop.f32.mrb[0].mxu0
  %v2830 = vadd.f32 %v2694, %v2829
  %v2831 = vpop.f32.mrb[0].mxu0
  %2832 = vmatprep.mubr.f32.mxu0 0.0
  %v2833 = vand.u32 %v2261, 4294901760
  %v2834 = vsub.f32 %v2261, %v2833
  %v2835 = vand.u32 %v2834, 4294901760
  %2836 = vmatmul.mubr.f32.gmra.mrb[0].mxu0 %v2835
  %v2837 = vpop.f32.mrb[0].mxu0
  %v2838 = vadd.f32 %v2701, %v2837
  %v2839 = vpop.f32.mrb[0].mxu0
  %2840 = vmatprep.mubr.f32.mxu0 0.0
  %v2841 = vand.u32 %v2264, 4294901760
  %v2842 = vsub.f32 %v2264, %v2841
  %v2843 = vand.u32 %v2842, 4294901760
  %2844 = vmatmul.mubr.f32.gmra.mrb[0].mxu0 %v2843
  %v2845 = vpop.f32.mrb[0].mxu0
  %v2846 = vadd.f32 %v2708, %v2845
  %v2847 = vpop.f32.mrb[0].mxu0
  %v2848 = vadd.f32 %v2710, %v2847
  %2849 = vdwg.mxu0
  %v2850 = vand.u32 %v2234, 4294901760
  %v2851 = vsub.f32 %v2234, %v2850
  %v2852 = vand.u32 %v2851, 4294901760
  %2853 = vmatprep.subr.mxu0 %v2852
  %v2854 = vand.u32 %v2233, 4294901760
  %v2855 = vsub.f32 %v2233, %v2854
  %v2856 = vand.u32 %v2855, 4294901760
  %2857 = vmatpush1.msra.mxu0 %v2856
  %v2858 = vand.u32 %v2236, 4294901760
  %v2859 = vsub.f32 %v2236, %v2858
  %v2860 = vand.u32 %v2859, 4294901760
  %2861 = vmatprep.subr.mxu0 %v2860
  %v2862 = vand.u32 %v2235, 4294901760
  %v2863 = vsub.f32 %v2235, %v2862
  %v2864 = vand.u32 %v2863, 4294901760
  %2865 = vmatpush1.msra.mxu0 %v2864
  %v2866 = vand.u32 %v2238, 4294901760
  %v2867 = vsub.f32 %v2238, %v2866
  %v2868 = vand.u32 %v2867, 4294901760
  %2869 = vmatprep.subr.mxu0 %v2868
  %v2870 = vand.u32 %v2237, 4294901760
  %v2871 = vsub.f32 %v2237, %v2870
  %v2872 = vand.u32 %v2871, 4294901760
  %2873 = vmatpush1.msra.mxu0 %v2872
  %v2874 = vand.u32 %v2240, 4294901760
  %v2875 = vsub.f32 %v2240, %v2874
  %v2876 = vand.u32 %v2875, 4294901760
  %2877 = vmatprep.subr.mxu0 %v2876
  %v2878 = vand.u32 %v2239, 4294901760
  %v2879 = vsub.f32 %v2239, %v2878
  %v2880 = vand.u32 %v2879, 4294901760
  %2881 = vmatpush1.msra.mxu0 %v2880
  %2882 = vmatprep.subr.mxu0 0.0
  %2883 = vmatpush1.msra.mxu0 0.0
  %2884 = vmatprep.subr.mxu0 0.0
  %2885 = vmatpush1.msra.mxu0 0.0
  %2886 = vmatprep.subr.mxu0 0.0
  %2887 = vmatpush1.msra.mxu0 0.0
  %2888 = vmatprep.subr.mxu0 0.0
  %2889 = vmatpush1.msra.mxu0 0.0
  %2890 = vmatprep.subr.mxu0 0.0
  %2891 = vmatpush1.msra.mxu0 0.0
  %2892 = vmatprep.subr.mxu0 0.0
  %2893 = vmatpush1.msra.mxu0 0.0
  %2894 = vmatprep.subr.mxu0 0.0
  %2895 = vmatpush1.msra.mxu0 0.0
  %2896 = vmatprep.subr.mxu0 0.0
  %2897 = vmatpush1.msra.mxu0 0.0
  %2898 = vmatprep.subr.mxu0 0.0
  %2899 = vmatpush1.msra.mxu0 0.0
  %2900 = vmatprep.subr.mxu0 0.0
  %2901 = vmatpush1.msra.mxu0 0.0
  %2902 = vmatprep.subr.mxu0 0.0
  %2903 = vmatpush1.msra.mxu0 0.0
  %2904 = vmatprep.subr.mxu0 0.0
  %2905 = vmatpush1.msra.mxu0 0.0
  %2906 = vmatprep.subr.mxu0 0.0
  %2907 = vmatpush1.msra.mxu0 0.0
  %2908 = vmatprep.subr.mxu0 0.0
  %2909 = vmatpush1.msra.mxu0 0.0
  %2910 = vmatprep.subr.mxu0 0.0
  %2911 = vmatpush1.msra.mxu0 0.0
  %2912 = vmatprep.subr.mxu0 0.0
  %2913 = vmatpush1.msra.mxu0 0.0
  %2914 = vmatprep.subr.mxu0 0.0
  %2915 = vmatpush1.msra.mxu0 0.0
  %2916 = vmatprep.subr.mxu0 0.0
  %2917 = vmatpush1.msra.mxu0 0.0
  %2918 = vmatprep.subr.mxu0 0.0
  %2919 = vmatpush1.msra.mxu0 0.0
  %2920 = vmatprep.subr.mxu0 0.0
  %2921 = vmatpush1.msra.mxu0 0.0
  %2922 = vmatprep.subr.mxu0 0.0
  %2923 = vmatpush1.msra.mxu0 0.0
  %2924 = vmatprep.subr.mxu0 0.0
  %2925 = vmatpush1.msra.mxu0 0.0
  %2926 = vmatprep.subr.mxu0 0.0
  %2927 = vmatpush1.msra.mxu0 0.0
  %2928 = vmatprep.subr.mxu0 0.0
  %2929 = vmatpush1.msra.mxu0 0.0
  %2930 = vmatprep.subr.mxu0 0.0
  %2931 = vmatpush1.msra.mxu0 0.0
  %2932 = vmatprep.subr.mxu0 0.0
  %2933 = vmatpush1.msra.mxu0 0.0
  %2934 = vmatprep.subr.mxu0 0.0
  %2935 = vmatpush1.msra.mxu0 0.0
  %2936 = vmatprep.subr.mxu0 0.0
  %2937 = vmatpush1.msra.mxu0 0.0
  %2938 = vmatprep.mubr.f32.mxu0 0.0
  %v2939 = vand.u32 %v2243, 4294901760
  %2940 = vmatmul.mubr.f32.gmra.mrb[0].mxu0 %v2939
  %v2941 = vpop.f32.mrb[0].mxu0
  %v2942 = vadd.f32 %v2790, %v2941
  %v2943 = vpop.f32.mrb[0].mxu0
  %2944 = vmatprep.mubr.f32.mxu0 0.0
  %v2945 = vand.u32 %v2246, 4294901760
  %2946 = vmatmul.mubr.f32.gmra.mrb[0].mxu0 %v2945
  %v2947 = vpop.f32.mrb[0].mxu0
  %v2948 = vadd.f32 %v2798, %v2947
  %v2949 = vpop.f32.mrb[0].mxu0
  %2950 = vmatprep.mubr.f32.mxu0 0.0
  %v2951 = vand.u32 %v2249, 4294901760
  %2952 = vmatmul.mubr.f32.gmra.mrb[0].mxu0 %v2951
  %v2953 = vpop.f32.mrb[0].mxu0
  %v2954 = vadd.f32 %v2806, %v2953
  %v2955 = vpop.f32.mrb[0].mxu0
  %2956 = vmatprep.mubr.f32.mxu0 0.0
  %v2957 = vand.u32 %v2252, 4294901760
  %2958 = vmatmul.mubr.f32.gmra.mrb[0].mxu0 %v2957
  %v2959 = vpop.f32.mrb[0].mxu0
  %v2960 = vadd.f32 %v2814, %v2959
  %v2961 = vpop.f32.mrb[0].mxu0
  %2962 = vmatprep.mubr.f32.mxu0 0.0
  %v2963 = vand.u32 %v2255, 4294901760
  %2964 = vmatmul.mubr.f32.gmra.mrb[0].mxu0 %v2963
  %v2965 = vpop.f32.mrb[0].mxu0
  %v2966 = vadd.f32 %v2822, %v2965
  %v2967 = vpop.f32.mrb[0].mxu0
  %2968 = vmatprep.mubr.f32.mxu0 0.0
  %v2969 = vand.u32 %v2258, 4294901760
  %2970 = vmatmul.mubr.f32.gmra.mrb[0].mxu0 %v2969
  %v2971 = vpop.f32.mrb[0].mxu0
  %v2972 = vadd.f32 %v2830, %v2971
  %v2973 = vpop.f32.mrb[0].mxu0
  %2974 = vmatprep.mubr.f32.mxu0 0.0
  %v2975 = vand.u32 %v2261, 4294901760
  %2976 = vmatmul.mubr.f32.gmra.mrb[0].mxu0 %v2975
  %v2977 = vpop.f32.mrb[0].mxu0
  %v2978 = vadd.f32 %v2838, %v2977
  %v2979 = vpop.f32.mrb[0].mxu0
  %2980 = vmatprep.mubr.f32.mxu0 0.0
  %v2981 = vand.u32 %v2264, 4294901760
  %2982 = vmatmul.mubr.f32.gmra.mrb[0].mxu0 %v2981
  %v2983 = vpop.f32.mrb[0].mxu0
  %v2984 = vadd.f32 %v2846, %v2983
  %v2985 = vpop.f32.mrb[0].mxu0
  %v2986 = vadd.f32 %v2848, %v2985
  %2987 = vdwg.mxu0
  %v2988 = vand.u32 %v2234, 4294901760
  %2989 = vmatprep.subr.mxu0 %v2988
  %v2990 = vand.u32 %v2233, 4294901760
  %2991 = vmatpush1.msra.mxu0 %v2990
  %v2992 = vand.u32 %v2236, 4294901760
  %2993 = vmatprep.subr.mxu0 %v2992
  %v2994 = vand.u32 %v2235, 4294901760
  %2995 = vmatpush1.msra.mxu0 %v2994
  %v2996 = vand.u32 %v2238, 4294901760
  %2997 = vmatprep.subr.mxu0 %v2996
  %v2998 = vand.u32 %v2237, 4294901760
  %2999 = vmatpush1.msra.mxu0 %v2998
  %v3000 = vand.u32 %v2240, 4294901760
  %3001 = vmatprep.subr.mxu0 %v3000
  %v3002 = vand.u32 %v2239, 4294901760
  %3003 = vmatpush1.msra.mxu0 %v3002
  %3004 = vmatprep.subr.mxu0 0.0
  %3005 = vmatpush1.msra.mxu0 0.0
  %3006 = vmatprep.subr.mxu0 0.0
  %3007 = vmatpush1.msra.mxu0 0.0
  %3008 = vmatprep.subr.mxu0 0.0
  %3009 = vmatpush1.msra.mxu0 0.0
  %3010 = vmatprep.subr.mxu0 0.0
  %3011 = vmatpush1.msra.mxu0 0.0
  %3012 = vmatprep.subr.mxu0 0.0
  %3013 = vmatpush1.msra.mxu0 0.0
  %3014 = vmatprep.subr.mxu0 0.0
  %3015 = vmatpush1.msra.mxu0 0.0
  %3016 = vmatprep.subr.mxu0 0.0
  %3017 = vmatpush1.msra.mxu0 0.0
  %3018 = vmatprep.subr.mxu0 0.0
  %3019 = vmatpush1.msra.mxu0 0.0
  %3020 = vmatprep.subr.mxu0 0.0
  %3021 = vmatpush1.msra.mxu0 0.0
  %3022 = vmatprep.subr.mxu0 0.0
  %3023 = vmatpush1.msra.mxu0 0.0
  %3024 = vmatprep.subr.mxu0 0.0
  %3025 = vmatpush1.msra.mxu0 0.0
  %3026 = vmatprep.subr.mxu0 0.0
  %3027 = vmatpush1.msra.mxu0 0.0
  %3028 = vmatprep.subr.mxu0 0.0
  %3029 = vmatpush1.msra.mxu0 0.0
  %3030 = vmatprep.subr.mxu0 0.0
  %3031 = vmatpush1.msra.mxu0 0.0
  %3032 = vmatprep.subr.mxu0 0.0
  %3033 = vmatpush1.msra.mxu0 0.0
  %3034 = vmatprep.subr.mxu0 0.0
  %3035 = vmatpush1.msra.mxu0 0.0
  %3036 = vmatprep.subr.mxu0 0.0
  %3037 = vmatpush1.msra.mxu0 0.0
  %3038 = vmatprep.subr.mxu0 0.0
  %3039 = vmatpush1.msra.mxu0 0.0
  %3040 = vmatprep.subr.mxu0 0.0
  %3041 = vmatpush1.msra.mxu0 0.0
  %3042 = vmatprep.subr.mxu0 0.0
  %3043 = vmatpush1.msra.mxu0 0.0
  %3044 = vmatprep.subr.mxu0 0.0
  %3045 = vmatpush1.msra.mxu0 0.0
  %3046 = vmatprep.subr.mxu0 0.0
  %3047 = vmatpush1.msra.mxu0 0.0
  %3048 = vmatprep.subr.mxu0 0.0
  %3049 = vmatpush1.msra.mxu0 0.0
  %3050 = vmatprep.subr.mxu0 0.0
  %3051 = vmatpush1.msra.mxu0 0.0
  %3052 = vmatprep.subr.mxu0 0.0
  %3053 = vmatpush1.msra.mxu0 0.0
  %3054 = vmatprep.subr.mxu0 0.0
  %3055 = vmatpush1.msra.mxu0 0.0
  %3056 = vmatprep.subr.mxu0 0.0
  %3057 = vmatpush1.msra.mxu0 0.0
  %3058 = vmatprep.subr.mxu0 0.0
  %3059 = vmatpush1.msra.mxu0 0.0
  %3060 = vmatprep.mubr.f32.mxu0 0.0
  %v3061 = vand.u32 %v2243, 4294901760
  %3062 = vmatmul.mubr.f32.gmra.mrb[0].mxu0 %v3061
  %v3063 = vpop.f32.mrb[0].mxu0
  %v3064 = vadd.f32 %v2942, %v3063
  %v3065 = vpop.f32.mrb[0].mxu0
  %3066 = vmatprep.mubr.f32.mxu0 0.0
  %v3067 = vand.u32 %v2246, 4294901760
  %3068 = vmatmul.mubr.f32.gmra.mrb[0].mxu0 %v3067
  %v3069 = vpop.f32.mrb[0].mxu0
  %v3070 = vadd.f32 %v2948, %v3069
  %v3071 = vpop.f32.mrb[0].mxu0
  %3072 = vmatprep.mubr.f32.mxu0 0.0
  %v3073 = vand.u32 %v2249, 4294901760
  %3074 = vmatmul.mubr.f32.gmra.mrb[0].mxu0 %v3073
  %v3075 = vpop.f32.mrb[0].mxu0
  %v3076 = vadd.f32 %v2954, %v3075
  %v3077 = vpop.f32.mrb[0].mxu0
  %3078 = vmatprep.mubr.f32.mxu0 0.0
  %v3079 = vand.u32 %v2252, 4294901760
  %3080 = vmatmul.mubr.f32.gmra.mrb[0].mxu0 %v3079
  %v3081 = vpop.f32.mrb[0].mxu0
  %v3082 = vadd.f32 %v2960, %v3081
  %v3083 = vpop.f32.mrb[0].mxu0
  %3084 = vmatprep.mubr.f32.mxu0 0.0
  %v3085 = vand.u32 %v2255, 4294901760
  %3086 = vmatmul.mubr.f32.gmra.mrb[0].mxu0 %v3085
  %v3087 = vpop.f32.mrb[0].mxu0
  %v3088 = vadd.f32 %v2966, %v3087
  %v3089 = vpop.f32.mrb[0].mxu0
  %3090 = vmatprep.mubr.f32.mxu0 0.0
  %v3091 = vand.u32 %v2258, 4294901760
  %3092 = vmatmul.mubr.f32.gmra.mrb[0].mxu0 %v3091
  %v3093 = vpop.f32.mrb[0].mxu0
  %v3094 = vadd.f32 %v2972, %v3093
  %v3095 = vpop.f32.mrb[0].mxu0
  %3096 = vmatprep.mubr.f32.mxu0 0.0
  %v3097 = vand.u32 %v2261, 4294901760
  %3098 = vmatmul.mubr.f32.gmra.mrb[0].mxu0 %v3097
  %v3099 = vpop.f32.mrb[0].mxu0
  %v3100 = vadd.f32 %v2978, %v3099
  %v3101 = vpop.f32.mrb[0].mxu0
  %3102 = vmatprep.mubr.f32.mxu0 0.0
  %v3103 = vand.u32 %v2264, 4294901760
  %3104 = vmatmul.mubr.f32.gmra.mrb[0].mxu0 %v3103
  %v3105 = vpop.f32.mrb[0].mxu0
  %v3106 = vadd.f32 %v2984, %v3105
  %v3107 = vpop.f32.mrb[0].mxu0
  %v3108 = vadd.f32 %v2986, %v3107
  %3109 = vdwg.mxu0
  %v3110 = vld [vmem:[%s8] sm:$0x1]
  %v3112 = vlaneseq
  %v3113 = vshrl.u32 %v3112, 7
  %v3114 = vsub.s32 0, %v3113
  %v3115 = vrot.slane %v3110, %v3114
  %v3117 = vadd.f32 %v3064, %v3115
  %v3118 = vadd.f32 %v3070, %v3115
  %v3119 = vadd.f32 %v3076, %v3115
  %v3120 = vadd.f32 %v3082, %v3115
  %v3121 = vadd.f32 %v3088, %v3115
  %v3122 = vadd.f32 %v3094, %v3115
  %v3123 = vadd.f32 %v3100, %v3115
  %v3124 = vadd.f32 %v3106, %v3115
  %v3125 = vld [vmem:[%s7] sm:$0xff]
  %v3126 = vld [vmem:[%s7 + $0x8] sm:$0xff]
  %v3127 = vld [vmem:[%s7 + $0x10] sm:$0xff]
  %v3128 = vld [vmem:[%s7 + $0x18] sm:$0xff]
  %v3129 = vxor.u32 %v3117, 2147483648
  %v3130 = vmul.f32 %v3129, 1.442695
  %v3131 = vpow.pop %v3130
  %v3132 = vadd.f32 %v3131, 1.0
  %v3133 = vrcp.pop %v3132
  %v3134 = vmul.f32 1.0, %v3133
  %v3135 = vtanh.pop %v3117
  %3137 = vrot.lane.b32.xlu0 %v3135, 32
  %v3138 = vpop.permute.xlu0 %3137
  %v3140 = vmul.f32 %v3134, %v3138
  %v3141 = vtanh.pop %v3140
  %3143 = vrot.lane.b32.xlu0 %v3141, 64
  %v3144 = vpop.permute.xlu0 %3143
  %v3146 = vmul.f32 %v3134, %v3144
  %3148 = vrot.lane.b32.xlu0 %v3146, 64
  %v3149 = vpop.permute.xlu0 %3148
  %v3150 = vsel %vm2241, %v3149, 0
  %3152 = vmatprep.subr.mxu0 0.0
  %v3153 = vand.u32 %v3125, 4294901760
  %3154 = vmatpush1.msra.mxu0 %v3153
  %3155 = vmatprep.subr.mxu0 0.0
  %v3156 = vand.u32 %v3126, 4294901760
  %3157 = vmatpush1.msra.mxu0 %v3156
  %3158 = vmatprep.subr.mxu0 0.0
  %v3159 = vand.u32 %v3127, 4294901760
  %3160 = vmatpush1.msra.mxu0 %v3159
  %3161 = vmatprep.subr.mxu0 0.0
  %v3162 = vand.u32 %v3128, 4294901760
  %3163 = vmatpush1.msra.mxu0 %v3162
  %3164 = vmatprep.subr.mxu0 0.0
  %3165 = vmatpush1.msra.mxu0 0.0
  %3166 = vmatprep.subr.mxu0 0.0
  %3167 = vmatpush1.msra.mxu0 0.0
  %3168 = vmatprep.subr.mxu0 0.0
  %3169 = vmatpush1.msra.mxu0 0.0
  %3170 = vmatprep.subr.mxu0 0.0
  %3171 = vmatpush1.msra.mxu0 0.0
  %3172 = vmatprep.subr.mxu0 0.0
  %3173 = vmatpush1.msra.mxu0 0.0
  %3174 = vmatprep.subr.mxu0 0.0
  %3175 = vmatpush1.msra.mxu0 0.0
  %3176 = vmatprep.subr.mxu0 0.0
  %3177 = vmatpush1.msra.mxu0 0.0
  %3178 = vmatprep.subr.mxu0 0.0
  %3179 = vmatpush1.msra.mxu0 0.0
  %3180 = vmatprep.subr.mxu0 0.0
  %3181 = vmatpush1.msra.mxu0 0.0
  %3182 = vmatprep.subr.mxu0 0.0
  %3183 = vmatpush1.msra.mxu0 0.0
  %3184 = vmatprep.subr.mxu0 0.0
  %3185 = vmatpush1.msra.mxu0 0.0
  %3186 = vmatprep.subr.mxu0 0.0
  %3187 = vmatpush1.msra.mxu0 0.0
  %3188 = vmatprep.subr.mxu0 0.0
  %3189 = vmatpush1.msra.mxu0 0.0
  %3190 = vmatprep.subr.mxu0 0.0
  %3191 = vmatpush1.msra.mxu0 0.0
  %3192 = vmatprep.subr.mxu0 0.0
  %3193 = vmatpush1.msra.mxu0 0.0
  %3194 = vmatprep.subr.mxu0 0.0
  %3195 = vmatpush1.msra.mxu0 0.0
  %3196 = vmatprep.subr.mxu0 0.0
  %3197 = vmatpush1.msra.mxu0 0.0
  %3198 = vmatprep.subr.mxu0 0.0
  %3199 = vmatpush1.msra.mxu0 0.0
  %3200 = vmatprep.subr.mxu0 0.0
  %3201 = vmatpush1.msra.mxu0 0.0
  %3202 = vmatprep.subr.mxu0 0.0
  %3203 = vmatpush1.msra.mxu0 0.0
  %3204 = vmatprep.subr.mxu0 0.0
  %3205 = vmatpush1.msra.mxu0 0.0
  %3206 = vmatprep.subr.mxu0 0.0
  %3207 = vmatpush1.msra.mxu0 0.0
  %3208 = vmatprep.subr.mxu0 0.0
  %3209 = vmatpush1.msra.mxu0 0.0
  %3210 = vmatprep.subr.mxu0 0.0
  %3211 = vmatpush1.msra.mxu0 0.0
  %3212 = vmatprep.subr.mxu0 0.0
  %3213 = vmatpush1.msra.mxu0 0.0
  %3214 = vmatprep.subr.mxu0 0.0
  %3215 = vmatpush1.msra.mxu0 0.0
  %3216 = vmatprep.subr.mxu0 0.0
  %3217 = vmatpush1.msra.mxu0 0.0
  %3218 = vmatprep.subr.mxu0 0.0
  %3219 = vmatpush1.msra.mxu0 0.0
  %3220 = vmatprep.mubr.f32.mxu0 0.0
  %v3221 = vand.u32 %v3150, 4294901760
  %v3222 = vsub.f32 %v3150, %v3221
  %v3223 = vand.u32 %v3222, 4294901760
  %v3224 = vsub.f32 %v3222, %v3223
  %v3225 = vand.u32 %v3224, 4294901760
  %3226 = vmatmul.mubr.f32.gmra.mrb[0].mxu0 %v3225
  %v3227 = vpop.f32.mrb[0].mxu0
  %v3228 = vadd.f32 0.0, %v3227
  %v3229 = vpop.f32.mrb[0].mxu0
  %3230 = vdwg.mxu0
  %3231 = vmatprep.subr.mxu0 0.0
  %v3232 = vand.u32 %v3125, 4294901760
  %v3233 = vsub.f32 %v3125, %v3232
  %v3234 = vand.u32 %v3233, 4294901760
  %v3235 = vsub.f32 %v3233, %v3234
  %v3236 = vand.u32 %v3235, 4294901760
  %3237 = vmatpush1.msra.mxu0 %v3236
  %3238 = vmatprep.subr.mxu0 0.0
  %v3239 = vand.u32 %v3126, 4294901760
  %v3240 = vsub.f32 %v3126, %v3239
  %v3241 = vand.u32 %v3240, 4294901760
  %v3242 = vsub.f32 %v3240, %v3241
  %v3243 = vand.u32 %v3242, 4294901760
  %3244 = vmatpush1.msra.mxu0 %v3243
  %3245 = vmatprep.subr.mxu0 0.0
  %v3246 = vand.u32 %v3127, 4294901760
  %v3247 = vsub.f32 %v3127, %v3246
  %v3248 = vand.u32 %v3247, 4294901760
  %v3249 = vsub.f32 %v3247, %v3248
  %v3250 = vand.u32 %v3249, 4294901760
  %3251 = vmatpush1.msra.mxu0 %v3250
  %3252 = vmatprep.subr.mxu0 0.0
  %v3253 = vand.u32 %v3128, 4294901760
  %v3254 = vsub.f32 %v3128, %v3253
  %v3255 = vand.u32 %v3254, 4294901760
  %v3256 = vsub.f32 %v3254, %v3255
  %v3257 = vand.u32 %v3256, 4294901760
  %3258 = vmatpush1.msra.mxu0 %v3257
  %3259 = vmatprep.subr.mxu0 0.0
  %3260 = vmatpush1.msra.mxu0 0.0
  %3261 = vmatprep.subr.mxu0 0.0
  %3262 = vmatpush1.msra.mxu0 0.0
  %3263 = vmatprep.subr.mxu0 0.0
  %3264 = vmatpush1.msra.mxu0 0.0
  %3265 = vmatprep.subr.mxu0 0.0
  %3266 = vmatpush1.msra.mxu0 0.0
  %3267 = vmatprep.subr.mxu0 0.0
  %3268 = vmatpush1.msra.mxu0 0.0
  %3269 = vmatprep.subr.mxu0 0.0
  %3270 = vmatpush1.msra.mxu0 0.0
  %3271 = vmatprep.subr.mxu0 0.0
  %3272 = vmatpush1.msra.mxu0 0.0
  %3273 = vmatprep.subr.mxu0 0.0
  %3274 = vmatpush1.msra.mxu0 0.0
  %3275 = vmatprep.subr.mxu0 0.0
  %3276 = vmatpush1.msra.mxu0 0.0
  %3277 = vmatprep.subr.mxu0 0.0
  %3278 = vmatpush1.msra.mxu0 0.0
  %3279 = vmatprep.subr.mxu0 0.0
  %3280 = vmatpush1.msra.mxu0 0.0
  %3281 = vmatprep.subr.mxu0 0.0
  %3282 = vmatpush1.msra.mxu0 0.0
  %3283 = vmatprep.subr.mxu0 0.0
  %3284 = vmatpush1.msra.mxu0 0.0
  %3285 = vmatprep.subr.mxu0 0.0
  %3286 = vmatpush1.msra.mxu0 0.0
  %3287 = vmatprep.subr.mxu0 0.0
  %3288 = vmatpush1.msra.mxu0 0.0
  %3289 = vmatprep.subr.mxu0 0.0
  %3290 = vmatpush1.msra.mxu0 0.0
  %3291 = vmatprep.subr.mxu0 0.0
  %3292 = vmatpush1.msra.mxu0 0.0
  %3293 = vmatprep.subr.mxu0 0.0
  %3294 = vmatpush1.msra.mxu0 0.0
  %3295 = vmatprep.subr.mxu0 0.0
  %3296 = vmatpush1.msra.mxu0 0.0
  %3297 = vmatprep.subr.mxu0 0.0
  %3298 = vmatpush1.msra.mxu0 0.0
  %3299 = vmatprep.subr.mxu0 0.0
  %3300 = vmatpush1.msra.mxu0 0.0
  %3301 = vmatprep.subr.mxu0 0.0
  %3302 = vmatpush1.msra.mxu0 0.0
  %3303 = vmatprep.subr.mxu0 0.0
  %3304 = vmatpush1.msra.mxu0 0.0
  %3305 = vmatprep.subr.mxu0 0.0
  %3306 = vmatpush1.msra.mxu0 0.0
  %3307 = vmatprep.subr.mxu0 0.0
  %3308 = vmatpush1.msra.mxu0 0.0
  %3309 = vmatprep.subr.mxu0 0.0
  %3310 = vmatpush1.msra.mxu0 0.0
  %3311 = vmatprep.subr.mxu0 0.0
  %3312 = vmatpush1.msra.mxu0 0.0
  %3313 = vmatprep.subr.mxu0 0.0
  %3314 = vmatpush1.msra.mxu0 0.0
  %3315 = vmatprep.mubr.f32.mxu0 0.0
  %v3316 = vand.u32 %v3150, 4294901760
  %3317 = vmatmul.mubr.f32.gmra.mrb[0].mxu0 %v3316
  %v3318 = vpop.f32.mrb[0].mxu0
  %v3319 = vadd.f32 %v3228, %v3318
  %v3320 = vpop.f32.mrb[0].mxu0
  %3321 = vdwg.mxu0
  %3322 = vmatprep.subr.mxu0 0.0
  %v3323 = vand.u32 %v3125, 4294901760
  %v3324 = vsub.f32 %v3125, %v3323
  %3325 = vmatpush1.msra.mxu0 %v3324
  %3326 = vmatprep.subr.mxu0 0.0
  %v3327 = vand.u32 %v3126, 4294901760
  %v3328 = vsub.f32 %v3126, %v3327
  %3329 = vmatpush1.msra.mxu0 %v3328
  %3330 = vmatprep.subr.mxu0 0.0
  %v3331 = vand.u32 %v3127, 4294901760
  %v3332 = vsub.f32 %v3127, %v3331
  %3333 = vmatpush1.msra.mxu0 %v3332
  %3334 = vmatprep.subr.mxu0 0.0
  %v3335 = vand.u32 %v3128, 4294901760
  %v3336 = vsub.f32 %v3128, %v3335
  %3337 = vmatpush1.msra.mxu0 %v3336
  %3338 = vmatprep.subr.mxu0 0.0
  %3339 = vmatpush1.msra.mxu0 0.0
  %3340 = vmatprep.subr.mxu0 0.0
  %3341 = vmatpush1.msra.mxu0 0.0
  %3342 = vmatprep.subr.mxu0 0.0
  %3343 = vmatpush1.msra.mxu0 0.0
  %3344 = vmatprep.subr.mxu0 0.0
  %3345 = vmatpush1.msra.mxu0 0.0
  %3346 = vmatprep.subr.mxu0 0.0
  %3347 = vmatpush1.msra.mxu0 0.0
  %3348 = vmatprep.subr.mxu0 0.0
  %3349 = vmatpush1.msra.mxu0 0.0
  %3350 = vmatprep.subr.mxu0 0.0
  %3351 = vmatpush1.msra.mxu0 0.0
  %3352 = vmatprep.subr.mxu0 0.0
  %3353 = vmatpush1.msra.mxu0 0.0
  %3354 = vmatprep.subr.mxu0 0.0
  %3355 = vmatpush1.msra.mxu0 0.0
  %3356 = vmatprep.subr.mxu0 0.0
  %3357 = vmatpush1.msra.mxu0 0.0
  %3358 = vmatprep.subr.mxu0 0.0
  %3359 = vmatpush1.msra.mxu0 0.0
  %3360 = vmatprep.subr.mxu0 0.0
  %3361 = vmatpush1.msra.mxu0 0.0
  %3362 = vmatprep.subr.mxu0 0.0
  %3363 = vmatpush1.msra.mxu0 0.0
  %3364 = vmatprep.subr.mxu0 0.0
  %3365 = vmatpush1.msra.mxu0 0.0
  %3366 = vmatprep.subr.mxu0 0.0
  %3367 = vmatpush1.msra.mxu0 0.0
  %3368 = vmatprep.subr.mxu0 0.0
  %3369 = vmatpush1.msra.mxu0 0.0
  %3370 = vmatprep.subr.mxu0 0.0
  %3371 = vmatpush1.msra.mxu0 0.0
  %3372 = vmatprep.subr.mxu0 0.0
  %3373 = vmatpush1.msra.mxu0 0.0
  %3374 = vmatprep.subr.mxu0 0.0
  %3375 = vmatpush1.msra.mxu0 0.0
  %3376 = vmatprep.subr.mxu0 0.0
  %3377 = vmatpush1.msra.mxu0 0.0
  %3378 = vmatprep.subr.mxu0 0.0
  %3379 = vmatpush1.msra.mxu0 0.0
  %3380 = vmatprep.subr.mxu0 0.0
  %3381 = vmatpush1.msra.mxu0 0.0
  %3382 = vmatprep.subr.mxu0 0.0
  %3383 = vmatpush1.msra.mxu0 0.0
  %3384 = vmatprep.subr.mxu0 0.0
  %3385 = vmatpush1.msra.mxu0 0.0
  %3386 = vmatprep.subr.mxu0 0.0
  %3387 = vmatpush1.msra.mxu0 0.0
  %3388 = vmatprep.subr.mxu0 0.0
  %3389 = vmatpush1.msra.mxu0 0.0
  %3390 = vmatprep.subr.mxu0 0.0
  %3391 = vmatpush1.msra.mxu0 0.0
  %3392 = vmatprep.subr.mxu0 0.0
  %3393 = vmatpush1.msra.mxu0 0.0
  %3394 = vmatprep.mubr.f32.mxu0 0.0
  %v3395 = vand.u32 %v3150, 4294901760
  %v3396 = vsub.f32 %v3150, %v3395
  %3397 = vmatmul.mubr.f32.gmra.mrb[0].mxu0 %v3396
  %v3398 = vpop.f32.mrb[0].mxu0
  %v3399 = vadd.f32 %v3319, %v3398
  %v3400 = vpop.f32.mrb[0].mxu0
  %3401 = vdwg.mxu0
  %3402 = vmatprep.subr.mxu0 0.0
  %v3403 = vand.u32 %v3125, 4294901760
  %3404 = vmatpush1.msra.mxu0 %v3403
  %3405 = vmatprep.subr.mxu0 0.0
  %v3406 = vand.u32 %v3126, 4294901760
  %3407 = vmatpush1.msra.mxu0 %v3406
  %3408 = vmatprep.subr.mxu0 0.0
  %v3409 = vand.u32 %v3127, 4294901760
  %3410 = vmatpush1.msra.mxu0 %v3409
  %3411 = vmatprep.subr.mxu0 0.0
  %v3412 = vand.u32 %v3128, 4294901760
  %3413 = vmatpush1.msra.mxu0 %v3412
  %3414 = vmatprep.subr.mxu0 0.0
  %3415 = vmatpush1.msra.mxu0 0.0
  %3416 = vmatprep.subr.mxu0 0.0
  %3417 = vmatpush1.msra.mxu0 0.0
  %3418 = vmatprep.subr.mxu0 0.0
  %3419 = vmatpush1.msra.mxu0 0.0
  %3420 = vmatprep.subr.mxu0 0.0
  %3421 = vmatpush1.msra.mxu0 0.0
  %3422 = vmatprep.subr.mxu0 0.0
  %3423 = vmatpush1.msra.mxu0 0.0
  %3424 = vmatprep.subr.mxu0 0.0
  %3425 = vmatpush1.msra.mxu0 0.0
  %3426 = vmatprep.subr.mxu0 0.0
  %3427 = vmatpush1.msra.mxu0 0.0
  %3428 = vmatprep.subr.mxu0 0.0
  %3429 = vmatpush1.msra.mxu0 0.0
  %3430 = vmatprep.subr.mxu0 0.0
  %3431 = vmatpush1.msra.mxu0 0.0
  %3432 = vmatprep.subr.mxu0 0.0
  %3433 = vmatpush1.msra.mxu0 0.0
  %3434 = vmatprep.subr.mxu0 0.0
  %3435 = vmatpush1.msra.mxu0 0.0
  %3436 = vmatprep.subr.mxu0 0.0
  %3437 = vmatpush1.msra.mxu0 0.0
  %3438 = vmatprep.subr.mxu0 0.0
  %3439 = vmatpush1.msra.mxu0 0.0
  %3440 = vmatprep.subr.mxu0 0.0
  %3441 = vmatpush1.msra.mxu0 0.0
  %3442 = vmatprep.subr.mxu0 0.0
  %3443 = vmatpush1.msra.mxu0 0.0
  %3444 = vmatprep.subr.mxu0 0.0
  %3445 = vmatpush1.msra.mxu0 0.0
  %3446 = vmatprep.subr.mxu0 0.0
  %3447 = vmatpush1.msra.mxu0 0.0
  %3448 = vmatprep.subr.mxu0 0.0
  %3449 = vmatpush1.msra.mxu0 0.0
  %3450 = vmatprep.subr.mxu0 0.0
  %3451 = vmatpush1.msra.mxu0 0.0
  %3452 = vmatprep.subr.mxu0 0.0
  %3453 = vmatpush1.msra.mxu0 0.0
  %3454 = vmatprep.subr.mxu0 0.0
  %3455 = vmatpush1.msra.mxu0 0.0
  %3456 = vmatprep.subr.mxu0 0.0
  %3457 = vmatpush1.msra.mxu0 0.0
  %3458 = vmatprep.subr.mxu0 0.0
  %3459 = vmatpush1.msra.mxu0 0.0
  %3460 = vmatprep.subr.mxu0 0.0
  %3461 = vmatpush1.msra.mxu0 0.0
  %3462 = vmatprep.subr.mxu0 0.0
  %3463 = vmatpush1.msra.mxu0 0.0
  %3464 = vmatprep.subr.mxu0 0.0
  %3465 = vmatpush1.msra.mxu0 0.0
  %3466 = vmatprep.subr.mxu0 0.0
  %3467 = vmatpush1.msra.mxu0 0.0
  %3468 = vmatprep.subr.mxu0 0.0
  %3469 = vmatpush1.msra.mxu0 0.0
  %3470 = vmatprep.mubr.f32.mxu0 0.0
  %v3471 = vand.u32 %v3150, 4294901760
  %v3472 = vsub.f32 %v3150, %v3471
  %v3473 = vand.u32 %v3472, 4294901760
  %3474 = vmatmul.mubr.f32.gmra.mrb[0].mxu0 %v3473
  %v3475 = vpop.f32.mrb[0].mxu0
  %v3476 = vadd.f32 %v3399, %v3475
  %v3477 = vpop.f32.mrb[0].mxu0
  %3478 = vdwg.mxu0
  %3479 = vmatprep.subr.mxu0 0.0
  %v3480 = vand.u32 %v3125, 4294901760
  %v3481 = vsub.f32 %v3125, %v3480
  %v3482 = vand.u32 %v3481, 4294901760
  %3483 = vmatpush1.msra.mxu0 %v3482
  %3484 = vmatprep.subr.mxu0 0.0
  %v3485 = vand.u32 %v3126, 4294901760
  %v3486 = vsub.f32 %v3126, %v3485
  %v3487 = vand.u32 %v3486, 4294901760
  %3488 = vmatpush1.msra.mxu0 %v3487
  %3489 = vmatprep.subr.mxu0 0.0
  %v3490 = vand.u32 %v3127, 4294901760
  %v3491 = vsub.f32 %v3127, %v3490
  %v3492 = vand.u32 %v3491, 4294901760
  %3493 = vmatpush1.msra.mxu0 %v3492
  %3494 = vmatprep.subr.mxu0 0.0
  %v3495 = vand.u32 %v3128, 4294901760
  %v3496 = vsub.f32 %v3128, %v3495
  %v3497 = vand.u32 %v3496, 4294901760
  %3498 = vmatpush1.msra.mxu0 %v3497
  %3499 = vmatprep.subr.mxu0 0.0
  %3500 = vmatpush1.msra.mxu0 0.0
  %3501 = vmatprep.subr.mxu0 0.0
  %3502 = vmatpush1.msra.mxu0 0.0
  %3503 = vmatprep.subr.mxu0 0.0
  %3504 = vmatpush1.msra.mxu0 0.0
  %3505 = vmatprep.subr.mxu0 0.0
  %3506 = vmatpush1.msra.mxu0 0.0
  %3507 = vmatprep.subr.mxu0 0.0
  %3508 = vmatpush1.msra.mxu0 0.0
  %3509 = vmatprep.subr.mxu0 0.0
  %3510 = vmatpush1.msra.mxu0 0.0
  %3511 = vmatprep.subr.mxu0 0.0
  %3512 = vmatpush1.msra.mxu0 0.0
  %3513 = vmatprep.subr.mxu0 0.0
  %3514 = vmatpush1.msra.mxu0 0.0
  %3515 = vmatprep.subr.mxu0 0.0
  %3516 = vmatpush1.msra.mxu0 0.0
  %3517 = vmatprep.subr.mxu0 0.0
  %3518 = vmatpush1.msra.mxu0 0.0
  %3519 = vmatprep.subr.mxu0 0.0
  %3520 = vmatpush1.msra.mxu0 0.0
  %3521 = vmatprep.subr.mxu0 0.0
  %3522 = vmatpush1.msra.mxu0 0.0
  %3523 = vmatprep.subr.mxu0 0.0
  %3524 = vmatpush1.msra.mxu0 0.0
  %3525 = vmatprep.subr.mxu0 0.0
  %3526 = vmatpush1.msra.mxu0 0.0
  %3527 = vmatprep.subr.mxu0 0.0
  %3528 = vmatpush1.msra.mxu0 0.0
  %3529 = vmatprep.subr.mxu0 0.0
  %3530 = vmatpush1.msra.mxu0 0.0
  %3531 = vmatprep.subr.mxu0 0.0
  %3532 = vmatpush1.msra.mxu0 0.0
  %3533 = vmatprep.subr.mxu0 0.0
  %3534 = vmatpush1.msra.mxu0 0.0
  %3535 = vmatprep.subr.mxu0 0.0
  %3536 = vmatpush1.msra.mxu0 0.0
  %3537 = vmatprep.subr.mxu0 0.0
  %3538 = vmatpush1.msra.mxu0 0.0
  %3539 = vmatprep.subr.mxu0 0.0
  %3540 = vmatpush1.msra.mxu0 0.0
  %3541 = vmatprep.subr.mxu0 0.0
  %3542 = vmatpush1.msra.mxu0 0.0
  %3543 = vmatprep.subr.mxu0 0.0
  %3544 = vmatpush1.msra.mxu0 0.0
  %3545 = vmatprep.subr.mxu0 0.0
  %3546 = vmatpush1.msra.mxu0 0.0
  %3547 = vmatprep.subr.mxu0 0.0
  %3548 = vmatpush1.msra.mxu0 0.0
  %3549 = vmatprep.subr.mxu0 0.0
  %3550 = vmatpush1.msra.mxu0 0.0
  %3551 = vmatprep.subr.mxu0 0.0
  %3552 = vmatpush1.msra.mxu0 0.0
  %3553 = vmatprep.subr.mxu0 0.0
  %3554 = vmatpush1.msra.mxu0 0.0
  %3555 = vmatprep.mubr.f32.mxu0 0.0
  %v3556 = vand.u32 %v3150, 4294901760
  %3557 = vmatmul.mubr.f32.gmra.mrb[0].mxu0 %v3556
  %v3558 = vpop.f32.mrb[0].mxu0
  %v3559 = vadd.f32 %v3476, %v3558
  %v3560 = vpop.f32.mrb[0].mxu0
  %3561 = vdwg.mxu0
  %3562 = vmatprep.subr.mxu0 0.0
  %v3563 = vand.u32 %v3125, 4294901760
  %3564 = vmatpush1.msra.mxu0 %v3563
  %3565 = vmatprep.subr.mxu0 0.0
  %v3566 = vand.u32 %v3126, 4294901760
  %3567 = vmatpush1.msra.mxu0 %v3566
  %3568 = vmatprep.subr.mxu0 0.0
  %v3569 = vand.u32 %v3127, 4294901760
  %3570 = vmatpush1.msra.mxu0 %v3569
  %3571 = vmatprep.subr.mxu0 0.0
  %v3572 = vand.u32 %v3128, 4294901760
  %3573 = vmatpush1.msra.mxu0 %v3572
  %3574 = vmatprep.subr.mxu0 0.0
  %3575 = vmatpush1.msra.mxu0 0.0
  %3576 = vmatprep.subr.mxu0 0.0
  %3577 = vmatpush1.msra.mxu0 0.0
  %3578 = vmatprep.subr.mxu0 0.0
  %3579 = vmatpush1.msra.mxu0 0.0
  %3580 = vmatprep.subr.mxu0 0.0
  %3581 = vmatpush1.msra.mxu0 0.0
  %3582 = vmatprep.subr.mxu0 0.0
  %3583 = vmatpush1.msra.mxu0 0.0
  %3584 = vmatprep.subr.mxu0 0.0
  %3585 = vmatpush1.msra.mxu0 0.0
  %3586 = vmatprep.subr.mxu0 0.0
  %3587 = vmatpush1.msra.mxu0 0.0
  %3588 = vmatprep.subr.mxu0 0.0
  %3589 = vmatpush1.msra.mxu0 0.0
  %3590 = vmatprep.subr.mxu0 0.0
  %3591 = vmatpush1.msra.mxu0 0.0
  %3592 = vmatprep.subr.mxu0 0.0
  %3593 = vmatpush1.msra.mxu0 0.0
  %3594 = vmatprep.subr.mxu0 0.0
  %3595 = vmatpush1.msra.mxu0 0.0
  %3596 = vmatprep.subr.mxu0 0.0
  %3597 = vmatpush1.msra.mxu0 0.0
  %3598 = vmatprep.subr.mxu0 0.0
  %3599 = vmatpush1.msra.mxu0 0.0
  %3600 = vmatprep.subr.mxu0 0.0
  %3601 = vmatpush1.msra.mxu0 0.0
  %3602 = vmatprep.subr.mxu0 0.0
  %3603 = vmatpush1.msra.mxu0 0.0
  %3604 = vmatprep.subr.mxu0 0.0
  %3605 = vmatpush1.msra.mxu0 0.0
  %3606 = vmatprep.subr.mxu0 0.0
  %3607 = vmatpush1.msra.mxu0 0.0
  %3608 = vmatprep.subr.mxu0 0.0
  %3609 = vmatpush1.msra.mxu0 0.0
  %3610 = vmatprep.subr.mxu0 0.0
  %3611 = vmatpush1.msra.mxu0 0.0
  %3612 = vmatprep.subr.mxu0 0.0
  %3613 = vmatpush1.msra.mxu0 0.0
  %3614 = vmatprep.subr.mxu0 0.0
  %3615 = vmatpush1.msra.mxu0 0.0
  %3616 = vmatprep.subr.mxu0 0.0
  %3617 = vmatpush1.msra.mxu0 0.0
  %3618 = vmatprep.subr.mxu0 0.0
  %3619 = vmatpush1.msra.mxu0 0.0
  %3620 = vmatprep.subr.mxu0 0.0
  %3621 = vmatpush1.msra.mxu0 0.0
  %3622 = vmatprep.subr.mxu0 0.0
  %3623 = vmatpush1.msra.mxu0 0.0
  %3624 = vmatprep.subr.mxu0 0.0
  %3625 = vmatpush1.msra.mxu0 0.0
  %3626 = vmatprep.subr.mxu0 0.0
  %3627 = vmatpush1.msra.mxu0 0.0
  %3628 = vmatprep.subr.mxu0 0.0
  %3629 = vmatpush1.msra.mxu0 0.0
  %3630 = vmatprep.mubr.f32.mxu0 0.0
  %v3631 = vand.u32 %v3150, 4294901760
  %3632 = vmatmul.mubr.f32.gmra.mrb[0].mxu0 %v3631
  %v3633 = vpop.f32.mrb[0].mxu0
  %v3634 = vadd.f32 %v3559, %v3633
  %v3635 = vpop.f32.mrb[0].mxu0
  %3636 = vdwg.mxu0
  %v3637 = vadd.f32 %v3118, %v3634
  %v3638 = vxor.u32 %v3637, 2147483648
  %v3639 = vmul.f32 %v3638, 1.442695
  %v3640 = vpow.pop %v3639
  %v3641 = vadd.f32 %v3640, 1.0
  %v3642 = vrcp.pop %v3641
  %v3643 = vmul.f32 1.0, %v3642
  %v3644 = vtanh.pop %v3637
  %3646 = vrot.lane.b32.xlu0 %v3140, 32
  %v3647 = vpop.permute.xlu0 %3646
  %v3649 = vmul.f32 %v3643, %v3647
  %3651 = vrot.lane.b32.xlu0 %v3644, 32
  %v3652 = vpop.permute.xlu0 %3651
  %v3654 = vmul.f32 %v3643, %v3652
  %3656 = vrot.lane.b32.xlu0 %v3654, 32
  %v3657 = vpop.permute.xlu0 %3656
  %v3659 = vadd.f32 %v3649, %v3657
  %v3660 = vtanh.pop %v3659
  %3662 = vrot.lane.b32.xlu0 %v3660, 32
  %v3663 = vpop.permute.xlu0 %3662
  %v3665 = vmul.f32 %v3643, %v3663
  %3667 = vrot.lane.b32.xlu0 %v3665, 64
  %v3668 = vpop.permute.xlu0 %3667
  %v3669 = vsel %vm2241, %v3668, 0
  %3671 = vmatprep.subr.mxu0 0.0
  %v3672 = vand.u32 %v3125, 4294901760
  %3673 = vmatpush1.msra.mxu0 %v3672
  %3674 = vmatprep.subr.mxu0 0.0
  %v3675 = vand.u32 %v3126, 4294901760
  %3676 = vmatpush1.msra.mxu0 %v3675
  %3677 = vmatprep.subr.mxu0 0.0
  %v3678 = vand.u32 %v3127, 4294901760
  %3679 = vmatpush1.msra.mxu0 %v3678
  %3680 = vmatprep.subr.mxu0 0.0
  %v3681 = vand.u32 %v3128, 4294901760
  %3682 = vmatpush1.msra.mxu0 %v3681
  %3683 = vmatprep.subr.mxu0 0.0
  %3684 = vmatpush1.msra.mxu0 0.0
  %3685 = vmatprep.subr.mxu0 0.0
  %3686 = vmatpush1.msra.mxu0 0.0
  %3687 = vmatprep.subr.mxu0 0.0
  %3688 = vmatpush1.msra.mxu0 0.0
  %3689 = vmatprep.subr.mxu0 0.0
  %3690 = vmatpush1.msra.mxu0 0.0
  %3691 = vmatprep.subr.mxu0 0.0
  %3692 = vmatpush1.msra.mxu0 0.0
  %3693 = vmatprep.subr.mxu0 0.0
  %3694 = vmatpush1.msra.mxu0 0.0
  %3695 = vmatprep.subr.mxu0 0.0
  %3696 = vmatpush1.msra.mxu0 0.0
  %3697 = vmatprep.subr.mxu0 0.0
  %3698 = vmatpush1.msra.mxu0 0.0
  %3699 = vmatprep.subr.mxu0 0.0
  %3700 = vmatpush1.msra.mxu0 0.0
  %3701 = vmatprep.subr.mxu0 0.0
  %3702 = vmatpush1.msra.mxu0 0.0
  %3703 = vmatprep.subr.mxu0 0.0
  %3704 = vmatpush1.msra.mxu0 0.0
  %3705 = vmatprep.subr.mxu0 0.0
  %3706 = vmatpush1.msra.mxu0 0.0
  %3707 = vmatprep.subr.mxu0 0.0
  %3708 = vmatpush1.msra.mxu0 0.0
  %3709 = vmatprep.subr.mxu0 0.0
  %3710 = vmatpush1.msra.mxu0 0.0
  %3711 = vmatprep.subr.mxu0 0.0
  %3712 = vmatpush1.msra.mxu0 0.0
  %3713 = vmatprep.subr.mxu0 0.0
  %3714 = vmatpush1.msra.mxu0 0.0
  %3715 = vmatprep.subr.mxu0 0.0
  %3716 = vmatpush1.msra.mxu0 0.0
  %3717 = vmatprep.subr.mxu0 0.0
  %3718 = vmatpush1.msra.mxu0 0.0
  %3719 = vmatprep.subr.mxu0 0.0
  %3720 = vmatpush1.msra.mxu0 0.0
  %3721 = vmatprep.subr.mxu0 0.0
  %3722 = vmatpush1.msra.mxu0 0.0
  %3723 = vmatprep.subr.mxu0 0.0
  %3724 = vmatpush1.msra.mxu0 0.0
  %3725 = vmatprep.subr.mxu0 0.0
  %3726 = vmatpush1.msra.mxu0 0.0
  %3727 = vmatprep.subr.mxu0 0.0
  %3728 = vmatpush1.msra.mxu0 0.0
  %3729 = vmatprep.subr.mxu0 0.0
  %3730 = vmatpush1.msra.mxu0 0.0
  %3731 = vmatprep.subr.mxu0 0.0
  %3732 = vmatpush1.msra.mxu0 0.0
  %3733 = vmatprep.subr.mxu0 0.0
  %3734 = vmatpush1.msra.mxu0 0.0
  %3735 = vmatprep.subr.mxu0 0.0
  %3736 = vmatpush1.msra.mxu0 0.0
  %3737 = vmatprep.subr.mxu0 0.0
  %3738 = vmatpush1.msra.mxu0 0.0
  %3739 = vmatprep.mubr.f32.mxu0 0.0
  %v3740 = vand.u32 %v3669, 4294901760
  %v3741 = vsub.f32 %v3669, %v3740
  %v3742 = vand.u32 %v3741, 4294901760
  %v3743 = vsub.f32 %v3741, %v3742
  %v3744 = vand.u32 %v3743, 4294901760
  %3745 = vmatmul.mubr.f32.gmra.mrb[0].mxu0 %v3744
  %v3746 = vpop.f32.mrb[0].mxu0
  %v3747 = vadd.f32 0.0, %v3746
  %v3748 = vpop.f32.mrb[0].mxu0
  %3749 = vdwg.mxu0
  %3750 = vmatprep.subr.mxu0 0.0
  %v3751 = vand.u32 %v3125, 4294901760
  %v3752 = vsub.f32 %v3125, %v3751
  %v3753 = vand.u32 %v3752, 4294901760
  %v3754 = vsub.f32 %v3752, %v3753
  %v3755 = vand.u32 %v3754, 4294901760
  %3756 = vmatpush1.msra.mxu0 %v3755
  %3757 = vmatprep.subr.mxu0 0.0
  %v3758 = vand.u32 %v3126, 4294901760
  %v3759 = vsub.f32 %v3126, %v3758
  %v3760 = vand.u32 %v3759, 4294901760
  %v3761 = vsub.f32 %v3759, %v3760
  %v3762 = vand.u32 %v3761, 4294901760
  %3763 = vmatpush1.msra.mxu0 %v3762
  %3764 = vmatprep.subr.mxu0 0.0
  %v3765 = vand.u32 %v3127, 4294901760
  %v3766 = vsub.f32 %v3127, %v3765
  %v3767 = vand.u32 %v3766, 4294901760
  %v3768 = vsub.f32 %v3766, %v3767
  %v3769 = vand.u32 %v3768, 4294901760
  %3770 = vmatpush1.msra.mxu0 %v3769
  %3771 = vmatprep.subr.mxu0 0.0
  %v3772 = vand.u32 %v3128, 4294901760
  %v3773 = vsub.f32 %v3128, %v3772
  %v3774 = vand.u32 %v3773, 4294901760
  %v3775 = vsub.f32 %v3773, %v3774
  %v3776 = vand.u32 %v3775, 4294901760
  %3777 = vmatpush1.msra.mxu0 %v3776
  %3778 = vmatprep.subr.mxu0 0.0
  %3779 = vmatpush1.msra.mxu0 0.0
  %3780 = vmatprep.subr.mxu0 0.0
  %3781 = vmatpush1.msra.mxu0 0.0
  %3782 = vmatprep.subr.mxu0 0.0
  %3783 = vmatpush1.msra.mxu0 0.0
  %3784 = vmatprep.subr.mxu0 0.0
  %3785 = vmatpush1.msra.mxu0 0.0
  %3786 = vmatprep.subr.mxu0 0.0
  %3787 = vmatpush1.msra.mxu0 0.0
  %3788 = vmatprep.subr.mxu0 0.0
  %3789 = vmatpush1.msra.mxu0 0.0
  %3790 = vmatprep.subr.mxu0 0.0
  %3791 = vmatpush1.msra.mxu0 0.0
  %3792 = vmatprep.subr.mxu0 0.0
  %3793 = vmatpush1.msra.mxu0 0.0
  %3794 = vmatprep.subr.mxu0 0.0
  %3795 = vmatpush1.msra.mxu0 0.0
  %3796 = vmatprep.subr.mxu0 0.0
  %3797 = vmatpush1.msra.mxu0 0.0
  %3798 = vmatprep.subr.mxu0 0.0
  %3799 = vmatpush1.msra.mxu0 0.0
  %3800 = vmatprep.subr.mxu0 0.0
  %3801 = vmatpush1.msra.mxu0 0.0
  %3802 = vmatprep.subr.mxu0 0.0
  %3803 = vmatpush1.msra.mxu0 0.0
  %3804 = vmatprep.subr.mxu0 0.0
  %3805 = vmatpush1.msra.mxu0 0.0
  %3806 = vmatprep.subr.mxu0 0.0
  %3807 = vmatpush1.msra.mxu0 0.0
  %3808 = vmatprep.subr.mxu0 0.0
  %3809 = vmatpush1.msra.mxu0 0.0
  %3810 = vmatprep.subr.mxu0 0.0
  %3811 = vmatpush1.msra.mxu0 0.0
  %3812 = vmatprep.subr.mxu0 0.0
  %3813 = vmatpush1.msra.mxu0 0.0
  %3814 = vmatprep.subr.mxu0 0.0
  %3815 = vmatpush1.msra.mxu0 0.0
  %3816 = vmatprep.subr.mxu0 0.0
  %3817 = vmatpush1.msra.mxu0 0.0
  %3818 = vmatprep.subr.mxu0 0.0
  %3819 = vmatpush1.msra.mxu0 0.0
  %3820 = vmatprep.subr.mxu0 0.0
  %3821 = vmatpush1.msra.mxu0 0.0
  %3822 = vmatprep.subr.mxu0 0.0
  %3823 = vmatpush1.msra.mxu0 0.0
  %3824 = vmatprep.subr.mxu0 0.0
  %3825 = vmatpush1.msra.mxu0 0.0
  %3826 = vmatprep.subr.mxu0 0.0
  %3827 = vmatpush1.msra.mxu0 0.0
  %3828 = vmatprep.subr.mxu0 0.0
  %3829 = vmatpush1.msra.mxu0 0.0
  %3830 = vmatprep.subr.mxu0 0.0
  %3831 = vmatpush1.msra.mxu0 0.0
  %3832 = vmatprep.subr.mxu0 0.0
  %3833 = vmatpush1.msra.mxu0 0.0
  %3834 = vmatprep.mubr.f32.mxu0 0.0
  %v3835 = vand.u32 %v3669, 4294901760
  %3836 = vmatmul.mubr.f32.gmra.mrb[0].mxu0 %v3835
  %v3837 = vpop.f32.mrb[0].mxu0
  %v3838 = vadd.f32 %v3747, %v3837
  %v3839 = vpop.f32.mrb[0].mxu0
  %3840 = vdwg.mxu0
  %3841 = vmatprep.subr.mxu0 0.0
  %v3842 = vand.u32 %v3125, 4294901760
  %v3843 = vsub.f32 %v3125, %v3842
  %3844 = vmatpush1.msra.mxu0 %v3843
  %3845 = vmatprep.subr.mxu0 0.0
  %v3846 = vand.u32 %v3126, 4294901760
  %v3847 = vsub.f32 %v3126, %v3846
  %3848 = vmatpush1.msra.mxu0 %v3847
  %3849 = vmatprep.subr.mxu0 0.0
  %v3850 = vand.u32 %v3127, 4294901760
  %v3851 = vsub.f32 %v3127, %v3850
  %3852 = vmatpush1.msra.mxu0 %v3851
  %3853 = vmatprep.subr.mxu0 0.0
  %v3854 = vand.u32 %v3128, 4294901760
  %v3855 = vsub.f32 %v3128, %v3854
  %3856 = vmatpush1.msra.mxu0 %v3855
  %3857 = vmatprep.subr.mxu0 0.0
  %3858 = vmatpush1.msra.mxu0 0.0
  %3859 = vmatprep.subr.mxu0 0.0
  %3860 = vmatpush1.msra.mxu0 0.0
  %3861 = vmatprep.subr.mxu0 0.0
  %3862 = vmatpush1.msra.mxu0 0.0
  %3863 = vmatprep.subr.mxu0 0.0
  %3864 = vmatpush1.msra.mxu0 0.0
  %3865 = vmatprep.subr.mxu0 0.0
  %3866 = vmatpush1.msra.mxu0 0.0
  %3867 = vmatprep.subr.mxu0 0.0
  %3868 = vmatpush1.msra.mxu0 0.0
  %3869 = vmatprep.subr.mxu0 0.0
  %3870 = vmatpush1.msra.mxu0 0.0
  %3871 = vmatprep.subr.mxu0 0.0
  %3872 = vmatpush1.msra.mxu0 0.0
  %3873 = vmatprep.subr.mxu0 0.0
  %3874 = vmatpush1.msra.mxu0 0.0
  %3875 = vmatprep.subr.mxu0 0.0
  %3876 = vmatpush1.msra.mxu0 0.0
  %3877 = vmatprep.subr.mxu0 0.0
  %3878 = vmatpush1.msra.mxu0 0.0
  %3879 = vmatprep.subr.mxu0 0.0
  %3880 = vmatpush1.msra.mxu0 0.0
  %3881 = vmatprep.subr.mxu0 0.0
  %3882 = vmatpush1.msra.mxu0 0.0
  %3883 = vmatprep.subr.mxu0 0.0
  %3884 = vmatpush1.msra.mxu0 0.0
  %3885 = vmatprep.subr.mxu0 0.0
  %3886 = vmatpush1.msra.mxu0 0.0
  %3887 = vmatprep.subr.mxu0 0.0
  %3888 = vmatpush1.msra.mxu0 0.0
  %3889 = vmatprep.subr.mxu0 0.0
  %3890 = vmatpush1.msra.mxu0 0.0
  %3891 = vmatprep.subr.mxu0 0.0
  %3892 = vmatpush1.msra.mxu0 0.0
  %3893 = vmatprep.subr.mxu0 0.0
  %3894 = vmatpush1.msra.mxu0 0.0
  %3895 = vmatprep.subr.mxu0 0.0
  %3896 = vmatpush1.msra.mxu0 0.0
  %3897 = vmatprep.subr.mxu0 0.0
  %3898 = vmatpush1.msra.mxu0 0.0
  %3899 = vmatprep.subr.mxu0 0.0
  %3900 = vmatpush1.msra.mxu0 0.0
  %3901 = vmatprep.subr.mxu0 0.0
  %3902 = vmatpush1.msra.mxu0 0.0
  %3903 = vmatprep.subr.mxu0 0.0
  %3904 = vmatpush1.msra.mxu0 0.0
  %3905 = vmatprep.subr.mxu0 0.0
  %3906 = vmatpush1.msra.mxu0 0.0
  %3907 = vmatprep.subr.mxu0 0.0
  %3908 = vmatpush1.msra.mxu0 0.0
  %3909 = vmatprep.subr.mxu0 0.0
  %3910 = vmatpush1.msra.mxu0 0.0
  %3911 = vmatprep.subr.mxu0 0.0
  %3912 = vmatpush1.msra.mxu0 0.0
  %3913 = vmatprep.mubr.f32.mxu0 0.0
  %v3914 = vand.u32 %v3669, 4294901760
  %v3915 = vsub.f32 %v3669, %v3914
  %3916 = vmatmul.mubr.f32.gmra.mrb[0].mxu0 %v3915
  %v3917 = vpop.f32.mrb[0].mxu0
  %v3918 = vadd.f32 %v3838, %v3917
  %v3919 = vpop.f32.mrb[0].mxu0
  %3920 = vdwg.mxu0
  %3921 = vmatprep.subr.mxu0 0.0
  %v3922 = vand.u32 %v3125, 4294901760
  %3923 = vmatpush1.msra.mxu0 %v3922
  %3924 = vmatprep.subr.mxu0 0.0
  %v3925 = vand.u32 %v3126, 4294901760
  %3926 = vmatpush1.msra.mxu0 %v3925
  %3927 = vmatprep.subr.mxu0 0.0
  %v3928 = vand.u32 %v3127, 4294901760
  %3929 = vmatpush1.msra.mxu0 %v3928
  %3930 = vmatprep.subr.mxu0 0.0
  %v3931 = vand.u32 %v3128, 4294901760
  %3932 = vmatpush1.msra.mxu0 %v3931
  %3933 = vmatprep.subr.mxu0 0.0
  %3934 = vmatpush1.msra.mxu0 0.0
  %3935 = vmatprep.subr.mxu0 0.0
  %3936 = vmatpush1.msra.mxu0 0.0
  %3937 = vmatprep.subr.mxu0 0.0
  %3938 = vmatpush1.msra.mxu0 0.0
  %3939 = vmatprep.subr.mxu0 0.0
  %3940 = vmatpush1.msra.mxu0 0.0
  %3941 = vmatprep.subr.mxu0 0.0
  %3942 = vmatpush1.msra.mxu0 0.0
  %3943 = vmatprep.subr.mxu0 0.0
  %3944 = vmatpush1.msra.mxu0 0.0
  %3945 = vmatprep.subr.mxu0 0.0
  %3946 = vmatpush1.msra.mxu0 0.0
  %3947 = vmatprep.subr.mxu0 0.0
  %3948 = vmatpush1.msra.mxu0 0.0
  %3949 = vmatprep.subr.mxu0 0.0
  %3950 = vmatpush1.msra.mxu0 0.0
  %3951 = vmatprep.subr.mxu0 0.0
  %3952 = vmatpush1.msra.mxu0 0.0
  %3953 = vmatprep.subr.mxu0 0.0
  %3954 = vmatpush1.msra.mxu0 0.0
  %3955 = vmatprep.subr.mxu0 0.0
  %3956 = vmatpush1.msra.mxu0 0.0
  %3957 = vmatprep.subr.mxu0 0.0
  %3958 = vmatpush1.msra.mxu0 0.0
  %3959 = vmatprep.subr.mxu0 0.0
  %3960 = vmatpush1.msra.mxu0 0.0
  %3961 = vmatprep.subr.mxu0 0.0
  %3962 = vmatpush1.msra.mxu0 0.0
  %3963 = vmatprep.subr.mxu0 0.0
  %3964 = vmatpush1.msra.mxu0 0.0
  %3965 = vmatprep.subr.mxu0 0.0
  %3966 = vmatpush1.msra.mxu0 0.0
  %3967 = vmatprep.subr.mxu0 0.0
  %3968 = vmatpush1.msra.mxu0 0.0
  %3969 = vmatprep.subr.mxu0 0.0
  %3970 = vmatpush1.msra.mxu0 0.0
  %3971 = vmatprep.subr.mxu0 0.0
  %3972 = vmatpush1.msra.mxu0 0.0
  %3973 = vmatprep.subr.mxu0 0.0
  %3974 = vmatpush1.msra.mxu0 0.0
  %3975 = vmatprep.subr.mxu0 0.0
  %3976 = vmatpush1.msra.mxu0 0.0
  %3977 = vmatprep.subr.mxu0 0.0
  %3978 = vmatpush1.msra.mxu0 0.0
  %3979 = vmatprep.subr.mxu0 0.0
  %3980 = vmatpush1.msra.mxu0 0.0
  %3981 = vmatprep.subr.mxu0 0.0
  %3982 = vmatpush1.msra.mxu0 0.0
  %3983 = vmatprep.subr.mxu0 0.0
  %3984 = vmatpush1.msra.mxu0 0.0
  %3985 = vmatprep.subr.mxu0 0.0
  %3986 = vmatpush1.msra.mxu0 0.0
  %3987 = vmatprep.subr.mxu0 0.0
  %3988 = vmatpush1.msra.mxu0 0.0
  %3989 = vmatprep.mubr.f32.mxu0 0.0
  %v3990 = vand.u32 %v3669, 4294901760
  %v3991 = vsub.f32 %v3669, %v3990
  %v3992 = vand.u32 %v3991, 4294901760
  %3993 = vmatmul.mubr.f32.gmra.mrb[0].mxu0 %v3992
  %v3994 = vpop.f32.mrb[0].mxu0
  %v3995 = vadd.f32 %v3918, %v3994
  %v3996 = vpop.f32.mrb[0].mxu0
  %3997 = vdwg.mxu0
  %3998 = vmatprep.subr.mxu0 0.0
  %v3999 = vand.u32 %v3125, 4294901760
  %v4000 = vsub.f32 %v3125, %v3999
  %v4001 = vand.u32 %v4000, 4294901760
  %4002 = vmatpush1.msra.mxu0 %v4001
  %4003 = vmatprep.subr.mxu0 0.0
  %v4004 = vand.u32 %v3126, 4294901760
  %v4005 = vsub.f32 %v3126, %v4004
  %v4006 = vand.u32 %v4005, 4294901760
  %4007 = vmatpush1.msra.mxu0 %v4006
  %4008 = vmatprep.subr.mxu0 0.0
  %v4009 = vand.u32 %v3127, 4294901760
  %v4010 = vsub.f32 %v3127, %v4009
  %v4011 = vand.u32 %v4010, 4294901760
  %4012 = vmatpush1.msra.mxu0 %v4011
  %4013 = vmatprep.subr.mxu0 0.0
  %v4014 = vand.u32 %v3128, 4294901760
  %v4015 = vsub.f32 %v3128, %v4014
  %v4016 = vand.u32 %v4015, 4294901760
  %4017 = vmatpush1.msra.mxu0 %v4016
  %4018 = vmatprep.subr.mxu0 0.0
  %4019 = vmatpush1.msra.mxu0 0.0
  %4020 = vmatprep.subr.mxu0 0.0
  %4021 = vmatpush1.msra.mxu0 0.0
  %4022 = vmatprep.subr.mxu0 0.0
  %4023 = vmatpush1.msra.mxu0 0.0
  %4024 = vmatprep.subr.mxu0 0.0
  %4025 = vmatpush1.msra.mxu0 0.0
  %4026 = vmatprep.subr.mxu0 0.0
  %4027 = vmatpush1.msra.mxu0 0.0
  %4028 = vmatprep.subr.mxu0 0.0
  %4029 = vmatpush1.msra.mxu0 0.0
  %4030 = vmatprep.subr.mxu0 0.0
  %4031 = vmatpush1.msra.mxu0 0.0
  %4032 = vmatprep.subr.mxu0 0.0
  %4033 = vmatpush1.msra.mxu0 0.0
  %4034 = vmatprep.subr.mxu0 0.0
  %4035 = vmatpush1.msra.mxu0 0.0
  %4036 = vmatprep.subr.mxu0 0.0
  %4037 = vmatpush1.msra.mxu0 0.0
  %4038 = vmatprep.subr.mxu0 0.0
  %4039 = vmatpush1.msra.mxu0 0.0
  %4040 = vmatprep.subr.mxu0 0.0
  %4041 = vmatpush1.msra.mxu0 0.0
  %4042 = vmatprep.subr.mxu0 0.0
  %4043 = vmatpush1.msra.mxu0 0.0
  %4044 = vmatprep.subr.mxu0 0.0
  %4045 = vmatpush1.msra.mxu0 0.0
  %4046 = vmatprep.subr.mxu0 0.0
  %4047 = vmatpush1.msra.mxu0 0.0
  %4048 = vmatprep.subr.mxu0 0.0
  %4049 = vmatpush1.msra.mxu0 0.0
  %4050 = vmatprep.subr.mxu0 0.0
  %4051 = vmatpush1.msra.mxu0 0.0
  %4052 = vmatprep.subr.mxu0 0.0
  %4053 = vmatpush1.msra.mxu0 0.0
  %4054 = vmatprep.subr.mxu0 0.0
  %4055 = vmatpush1.msra.mxu0 0.0
  %4056 = vmatprep.subr.mxu0 0.0
  %4057 = vmatpush1.msra.mxu0 0.0
  %4058 = vmatprep.subr.mxu0 0.0
  %4059 = vmatpush1.msra.mxu0 0.0
  %4060 = vmatprep.subr.mxu0 0.0
  %4061 = vmatpush1.msra.mxu0 0.0
  %4062 = vmatprep.subr.mxu0 0.0
  %4063 = vmatpush1.msra.mxu0 0.0
  %4064 = vmatprep.subr.mxu0 0.0
  %4065 = vmatpush1.msra.mxu0 0.0
  %4066 = vmatprep.subr.mxu0 0.0
  %4067 = vmatpush1.msra.mxu0 0.0
  %4068 = vmatprep.subr.mxu0 0.0
  %4069 = vmatpush1.msra.mxu0 0.0
  %4070 = vmatprep.subr.mxu0 0.0
  %4071 = vmatpush1.msra.mxu0 0.0
  %4072 = vmatprep.subr.mxu0 0.0
  %4073 = vmatpush1.msra.mxu0 0.0
  %4074 = vmatprep.mubr.f32.mxu0 0.0
  %v4075 = vand.u32 %v3669, 4294901760
  %4076 = vmatmul.mubr.f32.gmra.mrb[0].mxu0 %v4075
  %v4077 = vpop.f32.mrb[0].mxu0
  %v4078 = vadd.f32 %v3995, %v4077
  %v4079 = vpop.f32.mrb[0].mxu0
  %4080 = vdwg.mxu0
  %4081 = vmatprep.subr.mxu0 0.0
  %v4082 = vand.u32 %v3125, 4294901760
  %4083 = vmatpush1.msra.mxu0 %v4082
  %4084 = vmatprep.subr.mxu0 0.0
  %v4085 = vand.u32 %v3126, 4294901760
  %4086 = vmatpush1.msra.mxu0 %v4085
  %4087 = vmatprep.subr.mxu0 0.0
  %v4088 = vand.u32 %v3127, 4294901760
  %4089 = vmatpush1.msra.mxu0 %v4088
  %4090 = vmatprep.subr.mxu0 0.0
  %v4091 = vand.u32 %v3128, 4294901760
  %4092 = vmatpush1.msra.mxu0 %v4091
  %4093 = vmatprep.subr.mxu0 0.0
  %4094 = vmatpush1.msra.mxu0 0.0
  %4095 = vmatprep.subr.mxu0 0.0
  %4096 = vmatpush1.msra.mxu0 0.0
  %4097 = vmatprep.subr.mxu0 0.0
  %4098 = vmatpush1.msra.mxu0 0.0
  %4099 = vmatprep.subr.mxu0 0.0
  %4100 = vmatpush1.msra.mxu0 0.0
  %4101 = vmatprep.subr.mxu0 0.0
  %4102 = vmatpush1.msra.mxu0 0.0
  %4103 = vmatprep.subr.mxu0 0.0
  %4104 = vmatpush1.msra.mxu0 0.0
  %4105 = vmatprep.subr.mxu0 0.0
  %4106 = vmatpush1.msra.mxu0 0.0
  %4107 = vmatprep.subr.mxu0 0.0
  %4108 = vmatpush1.msra.mxu0 0.0
  %4109 = vmatprep.subr.mxu0 0.0
  %4110 = vmatpush1.msra.mxu0 0.0
  %4111 = vmatprep.subr.mxu0 0.0
  %4112 = vmatpush1.msra.mxu0 0.0
  %4113 = vmatprep.subr.mxu0 0.0
  %4114 = vmatpush1.msra.mxu0 0.0
  %4115 = vmatprep.subr.mxu0 0.0
  %4116 = vmatpush1.msra.mxu0 0.0
  %4117 = vmatprep.subr.mxu0 0.0
  %4118 = vmatpush1.msra.mxu0 0.0
  %4119 = vmatprep.subr.mxu0 0.0
  %4120 = vmatpush1.msra.mxu0 0.0
  %4121 = vmatprep.subr.mxu0 0.0
  %4122 = vmatpush1.msra.mxu0 0.0
  %4123 = vmatprep.subr.mxu0 0.0
  %4124 = vmatpush1.msra.mxu0 0.0
  %4125 = vmatprep.subr.mxu0 0.0
  %4126 = vmatpush1.msra.mxu0 0.0
  %4127 = vmatprep.subr.mxu0 0.0
  %4128 = vmatpush1.msra.mxu0 0.0
  %4129 = vmatprep.subr.mxu0 0.0
  %4130 = vmatpush1.msra.mxu0 0.0
  %4131 = vmatprep.subr.mxu0 0.0
  %4132 = vmatpush1.msra.mxu0 0.0
  %4133 = vmatprep.subr.mxu0 0.0
  %4134 = vmatpush1.msra.mxu0 0.0
  %4135 = vmatprep.subr.mxu0 0.0
  %4136 = vmatpush1.msra.mxu0 0.0
  %4137 = vmatprep.subr.mxu0 0.0
  %4138 = vmatpush1.msra.mxu0 0.0
  %4139 = vmatprep.subr.mxu0 0.0
  %4140 = vmatpush1.msra.mxu0 0.0
  %4141 = vmatprep.subr.mxu0 0.0
  %4142 = vmatpush1.msra.mxu0 0.0
  %4143 = vmatprep.subr.mxu0 0.0
  %4144 = vmatpush1.msra.mxu0 0.0
  %4145 = vmatprep.subr.mxu0 0.0
  %4146 = vmatpush1.msra.mxu0 0.0
  %4147 = vmatprep.subr.mxu0 0.0
  %4148 = vmatpush1.msra.mxu0 0.0
  %4149 = vmatprep.mubr.f32.mxu0 0.0
  %v4150 = vand.u32 %v3669, 4294901760
  %4151 = vmatmul.mubr.f32.gmra.mrb[0].mxu0 %v4150
  %v4152 = vpop.f32.mrb[0].mxu0
  %v4153 = vadd.f32 %v4078, %v4152
  %v4154 = vpop.f32.mrb[0].mxu0
  %4155 = vdwg.mxu0
  %v4156 = vadd.f32 %v3119, %v4153
  %v4157 = vxor.u32 %v4156, 2147483648
  %v4158 = vmul.f32 %v4157, 1.442695
  %v4159 = vpow.pop %v4158
  %v4160 = vadd.f32 %v4159, 1.0
  %v4161 = vrcp.pop %v4160
  %v4162 = vmul.f32 1.0, %v4161
  %v4163 = vtanh.pop %v4156
  %v4164 = vmul.f32 %v4162, %v3659
  %4166 = vrot.lane.b32.xlu0 %v4163, 32
  %v4167 = vpop.permute.xlu0 %4166
  %v4169 = vmul.f32 %v4162, %v4167
  %4171 = vrot.lane.b32.xlu0 %v4169, 32
  %v4172 = vpop.permute.xlu0 %4171
  %v4174 = vadd.f32 %v4164, %v4172
  %v4175 = vtanh.pop %v4174
  %4177 = vrot.lane.b32.xlu0 %v4175, 32
  %v4178 = vpop.permute.xlu0 %4177
  %v4180 = vmul.f32 %v4162, %v4178
  %4182 = vrot.lane.b32.xlu0 %v4180, 64
  %v4183 = vpop.permute.xlu0 %4182
  %v4184 = vsel %vm2241, %v4183, 0
  %4186 = vmatprep.subr.mxu0 0.0
  %v4187 = vand.u32 %v3125, 4294901760
  %4188 = vmatpush1.msra.mxu0 %v4187
  %4189 = vmatprep.subr.mxu0 0.0
  %v4190 = vand.u32 %v3126, 4294901760
  %4191 = vmatpush1.msra.mxu0 %v4190
  %4192 = vmatprep.subr.mxu0 0.0
  %v4193 = vand.u32 %v3127, 4294901760
  %4194 = vmatpush1.msra.mxu0 %v4193
  %4195 = vmatprep.subr.mxu0 0.0
  %v4196 = vand.u32 %v3128, 4294901760
  %4197 = vmatpush1.msra.mxu0 %v4196
  %4198 = vmatprep.subr.mxu0 0.0
  %4199 = vmatpush1.msra.mxu0 0.0
  %4200 = vmatprep.subr.mxu0 0.0
  %4201 = vmatpush1.msra.mxu0 0.0
  %4202 = vmatprep.subr.mxu0 0.0
  %4203 = vmatpush1.msra.mxu0 0.0
  %4204 = vmatprep.subr.mxu0 0.0
  %4205 = vmatpush1.msra.mxu0 0.0
  %4206 = vmatprep.subr.mxu0 0.0
  %4207 = vmatpush1.msra.mxu0 0.0
  %4208 = vmatprep.subr.mxu0 0.0
  %4209 = vmatpush1.msra.mxu0 0.0
  %4210 = vmatprep.subr.mxu0 0.0
  %4211 = vmatpush1.msra.mxu0 0.0
  %4212 = vmatprep.subr.mxu0 0.0
  %4213 = vmatpush1.msra.mxu0 0.0
  %4214 = vmatprep.subr.mxu0 0.0
  %4215 = vmatpush1.msra.mxu0 0.0
  %4216 = vmatprep.subr.mxu0 0.0
  %4217 = vmatpush1.msra.mxu0 0.0
  %4218 = vmatprep.subr.mxu0 0.0
  %4219 = vmatpush1.msra.mxu0 0.0
  %4220 = vmatprep.subr.mxu0 0.0
  %4221 = vmatpush1.msra.mxu0 0.0
  %4222 = vmatprep.subr.mxu0 0.0
  %4223 = vmatpush1.msra.mxu0 0.0
  %4224 = vmatprep.subr.mxu0 0.0
  %4225 = vmatpush1.msra.mxu0 0.0
  %4226 = vmatprep.subr.mxu0 0.0
  %4227 = vmatpush1.msra.mxu0 0.0
  %4228 = vmatprep.subr.mxu0 0.0
  %4229 = vmatpush1.msra.mxu0 0.0
  %4230 = vmatprep.subr.mxu0 0.0
  %4231 = vmatpush1.msra.mxu0 0.0
  %4232 = vmatprep.subr.mxu0 0.0
  %4233 = vmatpush1.msra.mxu0 0.0
  %4234 = vmatprep.subr.mxu0 0.0
  %4235 = vmatpush1.msra.mxu0 0.0
  %4236 = vmatprep.subr.mxu0 0.0
  %4237 = vmatpush1.msra.mxu0 0.0
  %4238 = vmatprep.subr.mxu0 0.0
  %4239 = vmatpush1.msra.mxu0 0.0
  %4240 = vmatprep.subr.mxu0 0.0
  %4241 = vmatpush1.msra.mxu0 0.0
  %4242 = vmatprep.subr.mxu0 0.0
  %4243 = vmatpush1.msra.mxu0 0.0
  %4244 = vmatprep.subr.mxu0 0.0
  %4245 = vmatpush1.msra.mxu0 0.0
  %4246 = vmatprep.subr.mxu0 0.0
  %4247 = vmatpush1.msra.mxu0 0.0
  %4248 = vmatprep.subr.mxu0 0.0
  %4249 = vmatpush1.msra.mxu0 0.0
  %4250 = vmatprep.subr.mxu0 0.0
  %4251 = vmatpush1.msra.mxu0 0.0
  %4252 = vmatprep.subr.mxu0 0.0
  %4253 = vmatpush1.msra.mxu0 0.0
  %4254 = vmatprep.mubr.f32.mxu0 0.0
  %v4255 = vand.u32 %v4184, 4294901760
  %v4256 = vsub.f32 %v4184, %v4255
  %v4257 = vand.u32 %v4256, 4294901760
  %v4258 = vsub.f32 %v4256, %v4257
  %v4259 = vand.u32 %v4258, 4294901760
  %4260 = vmatmul.mubr.f32.gmra.mrb[0].mxu0 %v4259
  %v4261 = vpop.f32.mrb[0].mxu0
  %v4262 = vadd.f32 0.0, %v4261
  %v4263 = vpop.f32.mrb[0].mxu0
  %4264 = vdwg.mxu0
  %4265 = vmatprep.subr.mxu0 0.0
  %v4266 = vand.u32 %v3125, 4294901760
  %v4267 = vsub.f32 %v3125, %v4266
  %v4268 = vand.u32 %v4267, 4294901760
  %v4269 = vsub.f32 %v4267, %v4268
  %v4270 = vand.u32 %v4269, 4294901760
  %4271 = vmatpush1.msra.mxu0 %v4270
  %4272 = vmatprep.subr.mxu0 0.0
  %v4273 = vand.u32 %v3126, 4294901760
  %v4274 = vsub.f32 %v3126, %v4273
  %v4275 = vand.u32 %v4274, 4294901760
  %v4276 = vsub.f32 %v4274, %v4275
  %v4277 = vand.u32 %v4276, 4294901760
  %4278 = vmatpush1.msra.mxu0 %v4277
  %4279 = vmatprep.subr.mxu0 0.0
  %v4280 = vand.u32 %v3127, 4294901760
  %v4281 = vsub.f32 %v3127, %v4280
  %v4282 = vand.u32 %v4281, 4294901760
  %v4283 = vsub.f32 %v4281, %v4282
  %v4284 = vand.u32 %v4283, 4294901760
  %4285 = vmatpush1.msra.mxu0 %v4284
  %4286 = vmatprep.subr.mxu0 0.0
  %v4287 = vand.u32 %v3128, 4294901760
  %v4288 = vsub.f32 %v3128, %v4287
  %v4289 = vand.u32 %v4288, 4294901760
  %v4290 = vsub.f32 %v4288, %v4289
  %v4291 = vand.u32 %v4290, 4294901760
  %4292 = vmatpush1.msra.mxu0 %v4291
  %4293 = vmatprep.subr.mxu0 0.0
  %4294 = vmatpush1.msra.mxu0 0.0
  %4295 = vmatprep.subr.mxu0 0.0
  %4296 = vmatpush1.msra.mxu0 0.0
  %4297 = vmatprep.subr.mxu0 0.0
  %4298 = vmatpush1.msra.mxu0 0.0
  %4299 = vmatprep.subr.mxu0 0.0
  %4300 = vmatpush1.msra.mxu0 0.0
  %4301 = vmatprep.subr.mxu0 0.0
  %4302 = vmatpush1.msra.mxu0 0.0
  %4303 = vmatprep.subr.mxu0 0.0
  %4304 = vmatpush1.msra.mxu0 0.0
  %4305 = vmatprep.subr.mxu0 0.0
  %4306 = vmatpush1.msra.mxu0 0.0
  %4307 = vmatprep.subr.mxu0 0.0
  %4308 = vmatpush1.msra.mxu0 0.0
  %4309 = vmatprep.subr.mxu0 0.0
  %4310 = vmatpush1.msra.mxu0 0.0
  %4311 = vmatprep.subr.mxu0 0.0
  %4312 = vmatpush1.msra.mxu0 0.0
  %4313 = vmatprep.subr.mxu0 0.0
  %4314 = vmatpush1.msra.mxu0 0.0
  %4315 = vmatprep.subr.mxu0 0.0
  %4316 = vmatpush1.msra.mxu0 0.0
  %4317 = vmatprep.subr.mxu0 0.0
  %4318 = vmatpush1.msra.mxu0 0.0
  %4319 = vmatprep.subr.mxu0 0.0
  %4320 = vmatpush1.msra.mxu0 0.0
  %4321 = vmatprep.subr.mxu0 0.0
  %4322 = vmatpush1.msra.mxu0 0.0
  %4323 = vmatprep.subr.mxu0 0.0
  %4324 = vmatpush1.msra.mxu0 0.0
  %4325 = vmatprep.subr.mxu0 0.0
  %4326 = vmatpush1.msra.mxu0 0.0
  %4327 = vmatprep.subr.mxu0 0.0
  %4328 = vmatpush1.msra.mxu0 0.0
  %4329 = vmatprep.subr.mxu0 0.0
  %4330 = vmatpush1.msra.mxu0 0.0
  %4331 = vmatprep.subr.mxu0 0.0
  %4332 = vmatpush1.msra.mxu0 0.0
  %4333 = vmatprep.subr.mxu0 0.0
  %4334 = vmatpush1.msra.mxu0 0.0
  %4335 = vmatprep.subr.mxu0 0.0
  %4336 = vmatpush1.msra.mxu0 0.0
  %4337 = vmatprep.subr.mxu0 0.0
  %4338 = vmatpush1.msra.mxu0 0.0
  %4339 = vmatprep.subr.mxu0 0.0
  %4340 = vmatpush1.msra.mxu0 0.0
  %4341 = vmatprep.subr.mxu0 0.0
  %4342 = vmatpush1.msra.mxu0 0.0
  %4343 = vmatprep.subr.mxu0 0.0
  %4344 = vmatpush1.msra.mxu0 0.0
  %4345 = vmatprep.subr.mxu0 0.0
  %4346 = vmatpush1.msra.mxu0 0.0
  %4347 = vmatprep.subr.mxu0 0.0
  %4348 = vmatpush1.msra.mxu0 0.0
  %4349 = vmatprep.mubr.f32.mxu0 0.0
  %v4350 = vand.u32 %v4184, 4294901760
  %4351 = vmatmul.mubr.f32.gmra.mrb[0].mxu0 %v4350
  %v4352 = vpop.f32.mrb[0].mxu0
  %v4353 = vadd.f32 %v4262, %v4352
  %v4354 = vpop.f32.mrb[0].mxu0
  %4355 = vdwg.mxu0
  %4356 = vmatprep.subr.mxu0 0.0
  %v4357 = vand.u32 %v3125, 4294901760
  %v4358 = vsub.f32 %v3125, %v4357
  %4359 = vmatpush1.msra.mxu0 %v4358
  %4360 = vmatprep.subr.mxu0 0.0
  %v4361 = vand.u32 %v3126, 4294901760
  %v4362 = vsub.f32 %v3126, %v4361
  %4363 = vmatpush1.msra.mxu0 %v4362
  %4364 = vmatprep.subr.mxu0 0.0
  %v4365 = vand.u32 %v3127, 4294901760
  %v4366 = vsub.f32 %v3127, %v4365
  %4367 = vmatpush1.msra.mxu0 %v4366
  %4368 = vmatprep.subr.mxu0 0.0
  %v4369 = vand.u32 %v3128, 4294901760
  %v4370 = vsub.f32 %v3128, %v4369
  %4371 = vmatpush1.msra.mxu0 %v4370
  %4372 = vmatprep.subr.mxu0 0.0
  %4373 = vmatpush1.msra.mxu0 0.0
  %4374 = vmatprep.subr.mxu0 0.0
  %4375 = vmatpush1.msra.mxu0 0.0
  %4376 = vmatprep.subr.mxu0 0.0
  %4377 = vmatpush1.msra.mxu0 0.0
  %4378 = vmatprep.subr.mxu0 0.0
  %4379 = vmatpush1.msra.mxu0 0.0
  %4380 = vmatprep.subr.mxu0 0.0
  %4381 = vmatpush1.msra.mxu0 0.0
  %4382 = vmatprep.subr.mxu0 0.0
  %4383 = vmatpush1.msra.mxu0 0.0
  %4384 = vmatprep.subr.mxu0 0.0
  %4385 = vmatpush1.msra.mxu0 0.0
  %4386 = vmatprep.subr.mxu0 0.0
  %4387 = vmatpush1.msra.mxu0 0.0
  %4388 = vmatprep.subr.mxu0 0.0
  %4389 = vmatpush1.msra.mxu0 0.0
  %4390 = vmatprep.subr.mxu0 0.0
  %4391 = vmatpush1.msra.mxu0 0.0
  %4392 = vmatprep.subr.mxu0 0.0
  %4393 = vmatpush1.msra.mxu0 0.0
  %4394 = vmatprep.subr.mxu0 0.0
  %4395 = vmatpush1.msra.mxu0 0.0
  %4396 = vmatprep.subr.mxu0 0.0
  %4397 = vmatpush1.msra.mxu0 0.0
  %4398 = vmatprep.subr.mxu0 0.0
  %4399 = vmatpush1.msra.mxu0 0.0
  %4400 = vmatprep.subr.mxu0 0.0
  %4401 = vmatpush1.msra.mxu0 0.0
  %4402 = vmatprep.subr.mxu0 0.0
  %4403 = vmatpush1.msra.mxu0 0.0
  %4404 = vmatprep.subr.mxu0 0.0
  %4405 = vmatpush1.msra.mxu0 0.0
  %4406 = vmatprep.subr.mxu0 0.0
  %4407 = vmatpush1.msra.mxu0 0.0
  %4408 = vmatprep.subr.mxu0 0.0
  %4409 = vmatpush1.msra.mxu0 0.0
  %4410 = vmatprep.subr.mxu0 0.0
  %4411 = vmatpush1.msra.mxu0 0.0
  %4412 = vmatprep.subr.mxu0 0.0
  %4413 = vmatpush1.msra.mxu0 0.0
  %4414 = vmatprep.subr.mxu0 0.0
  %4415 = vmatpush1.msra.mxu0 0.0
  %4416 = vmatprep.subr.mxu0 0.0
  %4417 = vmatpush1.msra.mxu0 0.0
  %4418 = vmatprep.subr.mxu0 0.0
  %4419 = vmatpush1.msra.mxu0 0.0
  %4420 = vmatprep.subr.mxu0 0.0
  %4421 = vmatpush1.msra.mxu0 0.0
  %4422 = vmatprep.subr.mxu0 0.0
  %4423 = vmatpush1.msra.mxu0 0.0
  %4424 = vmatprep.subr.mxu0 0.0
  %4425 = vmatpush1.msra.mxu0 0.0
  %4426 = vmatprep.subr.mxu0 0.0
  %4427 = vmatpush1.msra.mxu0 0.0
  %4428 = vmatprep.mubr.f32.mxu0 0.0
  %v4429 = vand.u32 %v4184, 4294901760
  %v4430 = vsub.f32 %v4184, %v4429
  %4431 = vmatmul.mubr.f32.gmra.mrb[0].mxu0 %v4430
  %v4432 = vpop.f32.mrb[0].mxu0
  %v4433 = vadd.f32 %v4353, %v4432
  %v4434 = vpop.f32.mrb[0].mxu0
  %4435 = vdwg.mxu0
  %4436 = vmatprep.subr.mxu0 0.0
  %v4437 = vand.u32 %v3125, 4294901760
  %4438 = vmatpush1.msra.mxu0 %v4437
  %4439 = vmatprep.subr.mxu0 0.0
  %v4440 = vand.u32 %v3126, 4294901760
  %4441 = vmatpush1.msra.mxu0 %v4440
  %4442 = vmatprep.subr.mxu0 0.0
  %v4443 = vand.u32 %v3127, 4294901760
  %4444 = vmatpush1.msra.mxu0 %v4443
  %4445 = vmatprep.subr.mxu0 0.0
  %v4446 = vand.u32 %v3128, 4294901760
  %4447 = vmatpush1.msra.mxu0 %v4446
  %4448 = vmatprep.subr.mxu0 0.0
  %4449 = vmatpush1.msra.mxu0 0.0
  %4450 = vmatprep.subr.mxu0 0.0
  %4451 = vmatpush1.msra.mxu0 0.0
  %4452 = vmatprep.subr.mxu0 0.0
  %4453 = vmatpush1.msra.mxu0 0.0
  %4454 = vmatprep.subr.mxu0 0.0
  %4455 = vmatpush1.msra.mxu0 0.0
  %4456 = vmatprep.subr.mxu0 0.0
  %4457 = vmatpush1.msra.mxu0 0.0
  %4458 = vmatprep.subr.mxu0 0.0
  %4459 = vmatpush1.msra.mxu0 0.0
  %4460 = vmatprep.subr.mxu0 0.0
  %4461 = vmatpush1.msra.mxu0 0.0
  %4462 = vmatprep.subr.mxu0 0.0
  %4463 = vmatpush1.msra.mxu0 0.0
  %4464 = vmatprep.subr.mxu0 0.0
  %4465 = vmatpush1.msra.mxu0 0.0
  %4466 = vmatprep.subr.mxu0 0.0
  %4467 = vmatpush1.msra.mxu0 0.0
  %4468 = vmatprep.subr.mxu0 0.0
  %4469 = vmatpush1.msra.mxu0 0.0
  %4470 = vmatprep.subr.mxu0 0.0
  %4471 = vmatpush1.msra.mxu0 0.0
  %4472 = vmatprep.subr.mxu0 0.0
  %4473 = vmatpush1.msra.mxu0 0.0
  %4474 = vmatprep.subr.mxu0 0.0
  %4475 = vmatpush1.msra.mxu0 0.0
  %4476 = vmatprep.subr.mxu0 0.0
  %4477 = vmatpush1.msra.mxu0 0.0
  %4478 = vmatprep.subr.mxu0 0.0
  %4479 = vmatpush1.msra.mxu0 0.0
  %4480 = vmatprep.subr.mxu0 0.0
  %4481 = vmatpush1.msra.mxu0 0.0
  %4482 = vmatprep.subr.mxu0 0.0
  %4483 = vmatpush1.msra.mxu0 0.0
  %4484 = vmatprep.subr.mxu0 0.0
  %4485 = vmatpush1.msra.mxu0 0.0
  %4486 = vmatprep.subr.mxu0 0.0
  %4487 = vmatpush1.msra.mxu0 0.0
  %4488 = vmatprep.subr.mxu0 0.0
  %4489 = vmatpush1.msra.mxu0 0.0
  %4490 = vmatprep.subr.mxu0 0.0
  %4491 = vmatpush1.msra.mxu0 0.0
  %4492 = vmatprep.subr.mxu0 0.0
  %4493 = vmatpush1.msra.mxu0 0.0
  %4494 = vmatprep.subr.mxu0 0.0
  %4495 = vmatpush1.msra.mxu0 0.0
  %4496 = vmatprep.subr.mxu0 0.0
  %4497 = vmatpush1.msra.mxu0 0.0
  %4498 = vmatprep.subr.mxu0 0.0
  %4499 = vmatpush1.msra.mxu0 0.0
  %4500 = vmatprep.subr.mxu0 0.0
  %4501 = vmatpush1.msra.mxu0 0.0
  %4502 = vmatprep.subr.mxu0 0.0
  %4503 = vmatpush1.msra.mxu0 0.0
  %4504 = vmatprep.mubr.f32.mxu0 0.0
  %v4505 = vand.u32 %v4184, 4294901760
  %v4506 = vsub.f32 %v4184, %v4505
  %v4507 = vand.u32 %v4506, 4294901760
  %4508 = vmatmul.mubr.f32.gmra.mrb[0].mxu0 %v4507
  %v4509 = vpop.f32.mrb[0].mxu0
  %v4510 = vadd.f32 %v4433, %v4509
  %v4511 = vpop.f32.mrb[0].mxu0
  %4512 = vdwg.mxu0
  %4513 = vmatprep.subr.mxu0 0.0
  %v4514 = vand.u32 %v3125, 4294901760
  %v4515 = vsub.f32 %v3125, %v4514
  %v4516 = vand.u32 %v4515, 4294901760
  %4517 = vmatpush1.msra.mxu0 %v4516
  %4518 = vmatprep.subr.mxu0 0.0
  %v4519 = vand.u32 %v3126, 4294901760
  %v4520 = vsub.f32 %v3126, %v4519
  %v4521 = vand.u32 %v4520, 4294901760
  %4522 = vmatpush1.msra.mxu0 %v4521
  %4523 = vmatprep.subr.mxu0 0.0
  %v4524 = vand.u32 %v3127, 4294901760
  %v4525 = vsub.f32 %v3127, %v4524
  %v4526 = vand.u32 %v4525, 4294901760
  %4527 = vmatpush1.msra.mxu0 %v4526
  %4528 = vmatprep.subr.mxu0 0.0
  %v4529 = vand.u32 %v3128, 4294901760
  %v4530 = vsub.f32 %v3128, %v4529
  %v4531 = vand.u32 %v4530, 4294901760
  %4532 = vmatpush1.msra.mxu0 %v4531
  %4533 = vmatprep.subr.mxu0 0.0
  %4534 = vmatpush1.msra.mxu0 0.0
  %4535 = vmatprep.subr.mxu0 0.0
  %4536 = vmatpush1.msra.mxu0 0.0
  %4537 = vmatprep.subr.mxu0 0.0
  %4538 = vmatpush1.msra.mxu0 0.0
  %4539 = vmatprep.subr.mxu0 0.0
  %4540 = vmatpush1.msra.mxu0 0.0
  %4541 = vmatprep.subr.mxu0 0.0
  %4542 = vmatpush1.msra.mxu0 0.0
  %4543 = vmatprep.subr.mxu0 0.0
  %4544 = vmatpush1.msra.mxu0 0.0
  %4545 = vmatprep.subr.mxu0 0.0
  %4546 = vmatpush1.msra.mxu0 0.0
  %4547 = vmatprep.subr.mxu0 0.0
  %4548 = vmatpush1.msra.mxu0 0.0
  %4549 = vmatprep.subr.mxu0 0.0
  %4550 = vmatpush1.msra.mxu0 0.0
  %4551 = vmatprep.subr.mxu0 0.0
  %4552 = vmatpush1.msra.mxu0 0.0
  %4553 = vmatprep.subr.mxu0 0.0
  %4554 = vmatpush1.msra.mxu0 0.0
  %4555 = vmatprep.subr.mxu0 0.0
  %4556 = vmatpush1.msra.mxu0 0.0
  %4557 = vmatprep.subr.mxu0 0.0
  %4558 = vmatpush1.msra.mxu0 0.0
  %4559 = vmatprep.subr.mxu0 0.0
  %4560 = vmatpush1.msra.mxu0 0.0
  %4561 = vmatprep.subr.mxu0 0.0
  %4562 = vmatpush1.msra.mxu0 0.0
  %4563 = vmatprep.subr.mxu0 0.0
  %4564 = vmatpush1.msra.mxu0 0.0
  %4565 = vmatprep.subr.mxu0 0.0
  %4566 = vmatpush1.msra.mxu0 0.0
  %4567 = vmatprep.subr.mxu0 0.0
  %4568 = vmatpush1.msra.mxu0 0.0
  %4569 = vmatprep.subr.mxu0 0.0
  %4570 = vmatpush1.msra.mxu0 0.0
  %4571 = vmatprep.subr.mxu0 0.0
  %4572 = vmatpush1.msra.mxu0 0.0
  %4573 = vmatprep.subr.mxu0 0.0
  %4574 = vmatpush1.msra.mxu0 0.0
  %4575 = vmatprep.subr.mxu0 0.0
  %4576 = vmatpush1.msra.mxu0 0.0
  %4577 = vmatprep.subr.mxu0 0.0
  %4578 = vmatpush1.msra.mxu0 0.0
  %4579 = vmatprep.subr.mxu0 0.0
  %4580 = vmatpush1.msra.mxu0 0.0
  %4581 = vmatprep.subr.mxu0 0.0
  %4582 = vmatpush1.msra.mxu0 0.0
  %4583 = vmatprep.subr.mxu0 0.0
  %4584 = vmatpush1.msra.mxu0 0.0
  %4585 = vmatprep.subr.mxu0 0.0
  %4586 = vmatpush1.msra.mxu0 0.0
  %4587 = vmatprep.subr.mxu0 0.0
  %4588 = vmatpush1.msra.mxu0 0.0
  %4589 = vmatprep.mubr.f32.mxu0 0.0
  %v4590 = vand.u32 %v4184, 4294901760
  %4591 = vmatmul.mubr.f32.gmra.mrb[0].mxu0 %v4590
  %v4592 = vpop.f32.mrb[0].mxu0
  %v4593 = vadd.f32 %v4510, %v4592
  %v4594 = vpop.f32.mrb[0].mxu0
  %4595 = vdwg.mxu0
  %4596 = vmatprep.subr.mxu0 0.0
  %v4597 = vand.u32 %v3125, 4294901760
  %4598 = vmatpush1.msra.mxu0 %v4597
  %4599 = vmatprep.subr.mxu0 0.0
  %v4600 = vand.u32 %v3126, 4294901760
  %4601 = vmatpush1.msra.mxu0 %v4600
  %4602 = vmatprep.subr.mxu0 0.0
  %v4603 = vand.u32 %v3127, 4294901760
  %4604 = vmatpush1.msra.mxu0 %v4603
  %4605 = vmatprep.subr.mxu0 0.0
  %v4606 = vand.u32 %v3128, 4294901760
  %4607 = vmatpush1.msra.mxu0 %v4606
  %4608 = vmatprep.subr.mxu0 0.0
  %4609 = vmatpush1.msra.mxu0 0.0
  %4610 = vmatprep.subr.mxu0 0.0
  %4611 = vmatpush1.msra.mxu0 0.0
  %4612 = vmatprep.subr.mxu0 0.0
  %4613 = vmatpush1.msra.mxu0 0.0
  %4614 = vmatprep.subr.mxu0 0.0
  %4615 = vmatpush1.msra.mxu0 0.0
  %4616 = vmatprep.subr.mxu0 0.0
  %4617 = vmatpush1.msra.mxu0 0.0
  %4618 = vmatprep.subr.mxu0 0.0
  %4619 = vmatpush1.msra.mxu0 0.0
  %4620 = vmatprep.subr.mxu0 0.0
  %4621 = vmatpush1.msra.mxu0 0.0
  %4622 = vmatprep.subr.mxu0 0.0
  %4623 = vmatpush1.msra.mxu0 0.0
  %4624 = vmatprep.subr.mxu0 0.0
  %4625 = vmatpush1.msra.mxu0 0.0
  %4626 = vmatprep.subr.mxu0 0.0
  %4627 = vmatpush1.msra.mxu0 0.0
  %4628 = vmatprep.subr.mxu0 0.0
  %4629 = vmatpush1.msra.mxu0 0.0
  %4630 = vmatprep.subr.mxu0 0.0
  %4631 = vmatpush1.msra.mxu0 0.0
  %4632 = vmatprep.subr.mxu0 0.0
  %4633 = vmatpush1.msra.mxu0 0.0
  %4634 = vmatprep.subr.mxu0 0.0
  %4635 = vmatpush1.msra.mxu0 0.0
  %4636 = vmatprep.subr.mxu0 0.0
  %4637 = vmatpush1.msra.mxu0 0.0
  %4638 = vmatprep.subr.mxu0 0.0
  %4639 = vmatpush1.msra.mxu0 0.0
  %4640 = vmatprep.subr.mxu0 0.0
  %4641 = vmatpush1.msra.mxu0 0.0
  %4642 = vmatprep.subr.mxu0 0.0
  %4643 = vmatpush1.msra.mxu0 0.0
  %4644 = vmatprep.subr.mxu0 0.0
  %4645 = vmatpush1.msra.mxu0 0.0
  %4646 = vmatprep.subr.mxu0 0.0
  %4647 = vmatpush1.msra.mxu0 0.0
  %4648 = vmatprep.subr.mxu0 0.0
  %4649 = vmatpush1.msra.mxu0 0.0
  %4650 = vmatprep.subr.mxu0 0.0
  %4651 = vmatpush1.msra.mxu0 0.0
  %4652 = vmatprep.subr.mxu0 0.0
  %4653 = vmatpush1.msra.mxu0 0.0
  %4654 = vmatprep.subr.mxu0 0.0
  %4655 = vmatpush1.msra.mxu0 0.0
  %4656 = vmatprep.subr.mxu0 0.0
  %4657 = vmatpush1.msra.mxu0 0.0
  %4658 = vmatprep.subr.mxu0 0.0
  %4659 = vmatpush1.msra.mxu0 0.0
  %4660 = vmatprep.subr.mxu0 0.0
  %4661 = vmatpush1.msra.mxu0 0.0
  %4662 = vmatprep.subr.mxu0 0.0
  %4663 = vmatpush1.msra.mxu0 0.0
  %4664 = vmatprep.mubr.f32.mxu0 0.0
  %v4665 = vand.u32 %v4184, 4294901760
  %4666 = vmatmul.mubr.f32.gmra.mrb[0].mxu0 %v4665
  %v4667 = vpop.f32.mrb[0].mxu0
  %v4668 = vadd.f32 %v4593, %v4667
  %v4669 = vpop.f32.mrb[0].mxu0
  %4670 = vdwg.mxu0
  %v4671 = vadd.f32 %v3120, %v4668
  %v4672 = vxor.u32 %v4671, 2147483648
  %v4673 = vmul.f32 %v4672, 1.442695
  %v4674 = vpow.pop %v4673
  %v4675 = vadd.f32 %v4674, 1.0
  %v4676 = vrcp.pop %v4675
  %v4677 = vmul.f32 1.0, %v4676
  %v4678 = vtanh.pop %v4671
  %v4679 = vmul.f32 %v4677, %v4174
  %4681 = vrot.lane.b32.xlu0 %v4678, 32
  %v4682 = vpop.permute.xlu0 %4681
  %v4684 = vmul.f32 %v4677, %v4682
  %4686 = vrot.lane.b32.xlu0 %v4684, 32
  %v4687 = vpop.permute.xlu0 %4686
  %v4689 = vadd.f32 %v4679, %v4687
  %v4690 = vtanh.pop %v4689
  %4692 = vrot.lane.b32.xlu0 %v4690, 32
  %v4693 = vpop.permute.xlu0 %4692
  %v4695 = vmul.f32 %v4677, %v4693
  %4697 = vrot.lane.b32.xlu0 %v4695, 64
  %v4698 = vpop.permute.xlu0 %4697
  %v4699 = vsel %vm2241, %v4698, 0
  %4701 = vmatprep.subr.mxu0 0.0
  %v4702 = vand.u32 %v3125, 4294901760
  %4703 = vmatpush1.msra.mxu0 %v4702
  %4704 = vmatprep.subr.mxu0 0.0
  %v4705 = vand.u32 %v3126, 4294901760
  %4706 = vmatpush1.msra.mxu0 %v4705
  %4707 = vmatprep.subr.mxu0 0.0
  %v4708 = vand.u32 %v3127, 4294901760
  %4709 = vmatpush1.msra.mxu0 %v4708
  %4710 = vmatprep.subr.mxu0 0.0
  %v4711 = vand.u32 %v3128, 4294901760
  %4712 = vmatpush1.msra.mxu0 %v4711
  %4713 = vmatprep.subr.mxu0 0.0
  %4714 = vmatpush1.msra.mxu0 0.0
  %4715 = vmatprep.subr.mxu0 0.0
  %4716 = vmatpush1.msra.mxu0 0.0
  %4717 = vmatprep.subr.mxu0 0.0
  %4718 = vmatpush1.msra.mxu0 0.0
  %4719 = vmatprep.subr.mxu0 0.0
  %4720 = vmatpush1.msra.mxu0 0.0
  %4721 = vmatprep.subr.mxu0 0.0
  %4722 = vmatpush1.msra.mxu0 0.0
  %4723 = vmatprep.subr.mxu0 0.0
  %4724 = vmatpush1.msra.mxu0 0.0
  %4725 = vmatprep.subr.mxu0 0.0
  %4726 = vmatpush1.msra.mxu0 0.0
  %4727 = vmatprep.subr.mxu0 0.0
  %4728 = vmatpush1.msra.mxu0 0.0
  %4729 = vmatprep.subr.mxu0 0.0
  %4730 = vmatpush1.msra.mxu0 0.0
  %4731 = vmatprep.subr.mxu0 0.0
  %4732 = vmatpush1.msra.mxu0 0.0
  %4733 = vmatprep.subr.mxu0 0.0
  %4734 = vmatpush1.msra.mxu0 0.0
  %4735 = vmatprep.subr.mxu0 0.0
  %4736 = vmatpush1.msra.mxu0 0.0
  %4737 = vmatprep.subr.mxu0 0.0
  %4738 = vmatpush1.msra.mxu0 0.0
  %4739 = vmatprep.subr.mxu0 0.0
  %4740 = vmatpush1.msra.mxu0 0.0
  %4741 = vmatprep.subr.mxu0 0.0
  %4742 = vmatpush1.msra.mxu0 0.0
  %4743 = vmatprep.subr.mxu0 0.0
  %4744 = vmatpush1.msra.mxu0 0.0
  %4745 = vmatprep.subr.mxu0 0.0
  %4746 = vmatpush1.msra.mxu0 0.0
  %4747 = vmatprep.subr.mxu0 0.0
  %4748 = vmatpush1.msra.mxu0 0.0
  %4749 = vmatprep.subr.mxu0 0.0
  %4750 = vmatpush1.msra.mxu0 0.0
  %4751 = vmatprep.subr.mxu0 0.0
  %4752 = vmatpush1.msra.mxu0 0.0
  %4753 = vmatprep.subr.mxu0 0.0
  %4754 = vmatpush1.msra.mxu0 0.0
  %4755 = vmatprep.subr.mxu0 0.0
  %4756 = vmatpush1.msra.mxu0 0.0
  %4757 = vmatprep.subr.mxu0 0.0
  %4758 = vmatpush1.msra.mxu0 0.0
  %4759 = vmatprep.subr.mxu0 0.0
  %4760 = vmatpush1.msra.mxu0 0.0
  %4761 = vmatprep.subr.mxu0 0.0
  %4762 = vmatpush1.msra.mxu0 0.0
  %4763 = vmatprep.subr.mxu0 0.0
  %4764 = vmatpush1.msra.mxu0 0.0
  %4765 = vmatprep.subr.mxu0 0.0
  %4766 = vmatpush1.msra.mxu0 0.0
  %4767 = vmatprep.subr.mxu0 0.0
  %4768 = vmatpush1.msra.mxu0 0.0
  %4769 = vmatprep.mubr.f32.mxu0 0.0
  %v4770 = vand.u32 %v4699, 4294901760
  %v4771 = vsub.f32 %v4699, %v4770
  %v4772 = vand.u32 %v4771, 4294901760
  %v4773 = vsub.f32 %v4771, %v4772
  %v4774 = vand.u32 %v4773, 4294901760
  %4775 = vmatmul.mubr.f32.gmra.mrb[0].mxu0 %v4774
  %v4776 = vpop.f32.mrb[0].mxu0
  %v4777 = vadd.f32 0.0, %v4776
  %v4778 = vpop.f32.mrb[0].mxu0
  %4779 = vdwg.mxu0
  %4780 = vmatprep.subr.mxu0 0.0
  %v4781 = vand.u32 %v3125, 4294901760
  %v4782 = vsub.f32 %v3125, %v4781
  %v4783 = vand.u32 %v4782, 4294901760
  %v4784 = vsub.f32 %v4782, %v4783
  %v4785 = vand.u32 %v4784, 4294901760
  %4786 = vmatpush1.msra.mxu0 %v4785
  %4787 = vmatprep.subr.mxu0 0.0
  %v4788 = vand.u32 %v3126, 4294901760
  %v4789 = vsub.f32 %v3126, %v4788
  %v4790 = vand.u32 %v4789, 4294901760
  %v4791 = vsub.f32 %v4789, %v4790
  %v4792 = vand.u32 %v4791, 4294901760
  %4793 = vmatpush1.msra.mxu0 %v4792
  %4794 = vmatprep.subr.mxu0 0.0
  %v4795 = vand.u32 %v3127, 4294901760
  %v4796 = vsub.f32 %v3127, %v4795
  %v4797 = vand.u32 %v4796, 4294901760
  %v4798 = vsub.f32 %v4796, %v4797
  %v4799 = vand.u32 %v4798, 4294901760
  %4800 = vmatpush1.msra.mxu0 %v4799
  %4801 = vmatprep.subr.mxu0 0.0
  %v4802 = vand.u32 %v3128, 4294901760
  %v4803 = vsub.f32 %v3128, %v4802
  %v4804 = vand.u32 %v4803, 4294901760
  %v4805 = vsub.f32 %v4803, %v4804
  %v4806 = vand.u32 %v4805, 4294901760
  %4807 = vmatpush1.msra.mxu0 %v4806
  %4808 = vmatprep.subr.mxu0 0.0
  %4809 = vmatpush1.msra.mxu0 0.0
  %4810 = vmatprep.subr.mxu0 0.0
  %4811 = vmatpush1.msra.mxu0 0.0
  %4812 = vmatprep.subr.mxu0 0.0
  %4813 = vmatpush1.msra.mxu0 0.0
  %4814 = vmatprep.subr.mxu0 0.0
  %4815 = vmatpush1.msra.mxu0 0.0
  %4816 = vmatprep.subr.mxu0 0.0
  %4817 = vmatpush1.msra.mxu0 0.0
  %4818 = vmatprep.subr.mxu0 0.0
  %4819 = vmatpush1.msra.mxu0 0.0
  %4820 = vmatprep.subr.mxu0 0.0
  %4821 = vmatpush1.msra.mxu0 0.0
  %4822 = vmatprep.subr.mxu0 0.0
  %4823 = vmatpush1.msra.mxu0 0.0
  %4824 = vmatprep.subr.mxu0 0.0
  %4825 = vmatpush1.msra.mxu0 0.0
  %4826 = vmatprep.subr.mxu0 0.0
  %4827 = vmatpush1.msra.mxu0 0.0
  %4828 = vmatprep.subr.mxu0 0.0
  %4829 = vmatpush1.msra.mxu0 0.0
  %4830 = vmatprep.subr.mxu0 0.0
  %4831 = vmatpush1.msra.mxu0 0.0
  %4832 = vmatprep.subr.mxu0 0.0
  %4833 = vmatpush1.msra.mxu0 0.0
  %4834 = vmatprep.subr.mxu0 0.0
  %4835 = vmatpush1.msra.mxu0 0.0
  %4836 = vmatprep.subr.mxu0 0.0
  %4837 = vmatpush1.msra.mxu0 0.0
  %4838 = vmatprep.subr.mxu0 0.0
  %4839 = vmatpush1.msra.mxu0 0.0
  %4840 = vmatprep.subr.mxu0 0.0
  %4841 = vmatpush1.msra.mxu0 0.0
  %4842 = vmatprep.subr.mxu0 0.0
  %4843 = vmatpush1.msra.mxu0 0.0
  %4844 = vmatprep.subr.mxu0 0.0
  %4845 = vmatpush1.msra.mxu0 0.0
  %4846 = vmatprep.subr.mxu0 0.0
  %4847 = vmatpush1.msra.mxu0 0.0
  %4848 = vmatprep.subr.mxu0 0.0
  %4849 = vmatpush1.msra.mxu0 0.0
  %4850 = vmatprep.subr.mxu0 0.0
  %4851 = vmatpush1.msra.mxu0 0.0
  %4852 = vmatprep.subr.mxu0 0.0
  %4853 = vmatpush1.msra.mxu0 0.0
  %4854 = vmatprep.subr.mxu0 0.0
  %4855 = vmatpush1.msra.mxu0 0.0
  %4856 = vmatprep.subr.mxu0 0.0
  %4857 = vmatpush1.msra.mxu0 0.0
  %4858 = vmatprep.subr.mxu0 0.0
  %4859 = vmatpush1.msra.mxu0 0.0
  %4860 = vmatprep.subr.mxu0 0.0
  %4861 = vmatpush1.msra.mxu0 0.0
  %4862 = vmatprep.subr.mxu0 0.0
  %4863 = vmatpush1.msra.mxu0 0.0
  %4864 = vmatprep.mubr.f32.mxu0 0.0
  %v4865 = vand.u32 %v4699, 4294901760
  %4866 = vmatmul.mubr.f32.gmra.mrb[0].mxu0 %v4865
  %v4867 = vpop.f32.mrb[0].mxu0
  %v4868 = vadd.f32 %v4777, %v4867
  %v4869 = vpop.f32.mrb[0].mxu0
  %4870 = vdwg.mxu0
  %4871 = vmatprep.subr.mxu0 0.0
  %v4872 = vand.u32 %v3125, 4294901760
  %v4873 = vsub.f32 %v3125, %v4872
  %4874 = vmatpush1.msra.mxu0 %v4873
  %4875 = vmatprep.subr.mxu0 0.0
  %v4876 = vand.u32 %v3126, 4294901760
  %v4877 = vsub.f32 %v3126, %v4876
  %4878 = vmatpush1.msra.mxu0 %v4877
  %4879 = vmatprep.subr.mxu0 0.0
  %v4880 = vand.u32 %v3127, 4294901760
  %v4881 = vsub.f32 %v3127, %v4880
  %4882 = vmatpush1.msra.mxu0 %v4881
  %4883 = vmatprep.subr.mxu0 0.0
  %v4884 = vand.u32 %v3128, 4294901760
  %v4885 = vsub.f32 %v3128, %v4884
  %4886 = vmatpush1.msra.mxu0 %v4885
  %4887 = vmatprep.subr.mxu0 0.0
  %4888 = vmatpush1.msra.mxu0 0.0
  %4889 = vmatprep.subr.mxu0 0.0
  %4890 = vmatpush1.msra.mxu0 0.0
  %4891 = vmatprep.subr.mxu0 0.0
  %4892 = vmatpush1.msra.mxu0 0.0
  %4893 = vmatprep.subr.mxu0 0.0
  %4894 = vmatpush1.msra.mxu0 0.0
  %4895 = vmatprep.subr.mxu0 0.0
  %4896 = vmatpush1.msra.mxu0 0.0
  %4897 = vmatprep.subr.mxu0 0.0
  %4898 = vmatpush1.msra.mxu0 0.0
  %4899 = vmatprep.subr.mxu0 0.0
  %4900 = vmatpush1.msra.mxu0 0.0
  %4901 = vmatprep.subr.mxu0 0.0
  %4902 = vmatpush1.msra.mxu0 0.0
  %4903 = vmatprep.subr.mxu0 0.0
  %4904 = vmatpush1.msra.mxu0 0.0
  %4905 = vmatprep.subr.mxu0 0.0
  %4906 = vmatpush1.msra.mxu0 0.0
  %4907 = vmatprep.subr.mxu0 0.0
  %4908 = vmatpush1.msra.mxu0 0.0
  %4909 = vmatprep.subr.mxu0 0.0
  %4910 = vmatpush1.msra.mxu0 0.0
  %4911 = vmatprep.subr.mxu0 0.0
  %4912 = vmatpush1.msra.mxu0 0.0
  %4913 = vmatprep.subr.mxu0 0.0
  %4914 = vmatpush1.msra.mxu0 0.0
  %4915 = vmatprep.subr.mxu0 0.0
  %4916 = vmatpush1.msra.mxu0 0.0
  %4917 = vmatprep.subr.mxu0 0.0
  %4918 = vmatpush1.msra.mxu0 0.0
  %4919 = vmatprep.subr.mxu0 0.0
  %4920 = vmatpush1.msra.mxu0 0.0
  %4921 = vmatprep.subr.mxu0 0.0
  %4922 = vmatpush1.msra.mxu0 0.0
  %4923 = vmatprep.subr.mxu0 0.0
  %4924 = vmatpush1.msra.mxu0 0.0
  %4925 = vmatprep.subr.mxu0 0.0
  %4926 = vmatpush1.msra.mxu0 0.0
  %4927 = vmatprep.subr.mxu0 0.0
  %4928 = vmatpush1.msra.mxu0 0.0
  %4929 = vmatprep.subr.mxu0 0.0
  %4930 = vmatpush1.msra.mxu0 0.0
  %4931 = vmatprep.subr.mxu0 0.0
  %4932 = vmatpush1.msra.mxu0 0.0
  %4933 = vmatprep.subr.mxu0 0.0
  %4934 = vmatpush1.msra.mxu0 0.0
  %4935 = vmatprep.subr.mxu0 0.0
  %4936 = vmatpush1.msra.mxu0 0.0
  %4937 = vmatprep.subr.mxu0 0.0
  %4938 = vmatpush1.msra.mxu0 0.0
  %4939 = vmatprep.subr.mxu0 0.0
  %4940 = vmatpush1.msra.mxu0 0.0
  %4941 = vmatprep.subr.mxu0 0.0
  %4942 = vmatpush1.msra.mxu0 0.0
  %4943 = vmatprep.mubr.f32.mxu0 0.0
  %v4944 = vand.u32 %v4699, 4294901760
  %v4945 = vsub.f32 %v4699, %v4944
  %4946 = vmatmul.mubr.f32.gmra.mrb[0].mxu0 %v4945
  %v4947 = vpop.f32.mrb[0].mxu0
  %v4948 = vadd.f32 %v4868, %v4947
  %v4949 = vpop.f32.mrb[0].mxu0
  %4950 = vdwg.mxu0
  %4951 = vmatprep.subr.mxu0 0.0
  %v4952 = vand.u32 %v3125, 4294901760
  %4953 = vmatpush1.msra.mxu0 %v4952
  %4954 = vmatprep.subr.mxu0 0.0
  %v4955 = vand.u32 %v3126, 4294901760
  %4956 = vmatpush1.msra.mxu0 %v4955
  %4957 = vmatprep.subr.mxu0 0.0
  %v4958 = vand.u32 %v3127, 4294901760
  %4959 = vmatpush1.msra.mxu0 %v4958
  %4960 = vmatprep.subr.mxu0 0.0
  %v4961 = vand.u32 %v3128, 4294901760
  %4962 = vmatpush1.msra.mxu0 %v4961
  %4963 = vmatprep.subr.mxu0 0.0
  %4964 = vmatpush1.msra.mxu0 0.0
  %4965 = vmatprep.subr.mxu0 0.0
  %4966 = vmatpush1.msra.mxu0 0.0
  %4967 = vmatprep.subr.mxu0 0.0
  %4968 = vmatpush1.msra.mxu0 0.0
  %4969 = vmatprep.subr.mxu0 0.0
  %4970 = vmatpush1.msra.mxu0 0.0
  %4971 = vmatprep.subr.mxu0 0.0
  %4972 = vmatpush1.msra.mxu0 0.0
  %4973 = vmatprep.subr.mxu0 0.0
  %4974 = vmatpush1.msra.mxu0 0.0
  %4975 = vmatprep.subr.mxu0 0.0
  %4976 = vmatpush1.msra.mxu0 0.0
  %4977 = vmatprep.subr.mxu0 0.0
  %4978 = vmatpush1.msra.mxu0 0.0
  %4979 = vmatprep.subr.mxu0 0.0
  %4980 = vmatpush1.msra.mxu0 0.0
  %4981 = vmatprep.subr.mxu0 0.0
  %4982 = vmatpush1.msra.mxu0 0.0
  %4983 = vmatprep.subr.mxu0 0.0
  %4984 = vmatpush1.msra.mxu0 0.0
  %4985 = vmatprep.subr.mxu0 0.0
  %4986 = vmatpush1.msra.mxu0 0.0
  %4987 = vmatprep.subr.mxu0 0.0
  %4988 = vmatpush1.msra.mxu0 0.0
  %4989 = vmatprep.subr.mxu0 0.0
  %4990 = vmatpush1.msra.mxu0 0.0
  %4991 = vmatprep.subr.mxu0 0.0
  %4992 = vmatpush1.msra.mxu0 0.0
  %4993 = vmatprep.subr.mxu0 0.0
  %4994 = vmatpush1.msra.mxu0 0.0
  %4995 = vmatprep.subr.mxu0 0.0
  %4996 = vmatpush1.msra.mxu0 0.0
  %4997 = vmatprep.subr.mxu0 0.0
  %4998 = vmatpush1.msra.mxu0 0.0
  %4999 = vmatprep.subr.mxu0 0.0
  %5000 = vmatpush1.msra.mxu0 0.0
  %5001 = vmatprep.subr.mxu0 0.0
  %5002 = vmatpush1.msra.mxu0 0.0
  %5003 = vmatprep.subr.mxu0 0.0
  %5004 = vmatpush1.msra.mxu0 0.0
  %5005 = vmatprep.subr.mxu0 0.0
  %5006 = vmatpush1.msra.mxu0 0.0
  %5007 = vmatprep.subr.mxu0 0.0
  %5008 = vmatpush1.msra.mxu0 0.0
  %5009 = vmatprep.subr.mxu0 0.0
  %5010 = vmatpush1.msra.mxu0 0.0
  %5011 = vmatprep.subr.mxu0 0.0
  %5012 = vmatpush1.msra.mxu0 0.0
  %5013 = vmatprep.subr.mxu0 0.0
  %5014 = vmatpush1.msra.mxu0 0.0
  %5015 = vmatprep.subr.mxu0 0.0
  %5016 = vmatpush1.msra.mxu0 0.0
  %5017 = vmatprep.subr.mxu0 0.0
  %5018 = vmatpush1.msra.mxu0 0.0
  %5019 = vmatprep.mubr.f32.mxu0 0.0
  %v5020 = vand.u32 %v4699, 4294901760
  %v5021 = vsub.f32 %v4699, %v5020
  %v5022 = vand.u32 %v5021, 4294901760
  %5023 = vmatmul.mubr.f32.gmra.mrb[0].mxu0 %v5022
  %v5024 = vpop.f32.mrb[0].mxu0
  %v5025 = vadd.f32 %v4948, %v5024
  %v5026 = vpop.f32.mrb[0].mxu0
  %5027 = vdwg.mxu0
  %5028 = vmatprep.subr.mxu0 0.0
  %v5029 = vand.u32 %v3125, 4294901760
  %v5030 = vsub.f32 %v3125, %v5029
  %v5031 = vand.u32 %v5030, 4294901760
  %5032 = vmatpush1.msra.mxu0 %v5031
  %5033 = vmatprep.subr.mxu0 0.0
  %v5034 = vand.u32 %v3126, 4294901760
  %v5035 = vsub.f32 %v3126, %v5034
  %v5036 = vand.u32 %v5035, 4294901760
  %5037 = vmatpush1.msra.mxu0 %v5036
  %5038 = vmatprep.subr.mxu0 0.0
  %v5039 = vand.u32 %v3127, 4294901760
  %v5040 = vsub.f32 %v3127, %v5039
  %v5041 = vand.u32 %v5040, 4294901760
  %5042 = vmatpush1.msra.mxu0 %v5041
  %5043 = vmatprep.subr.mxu0 0.0
  %v5044 = vand.u32 %v3128, 4294901760
  %v5045 = vsub.f32 %v3128, %v5044
  %v5046 = vand.u32 %v5045, 4294901760
  %5047 = vmatpush1.msra.mxu0 %v5046
  %5048 = vmatprep.subr.mxu0 0.0
  %5049 = vmatpush1.msra.mxu0 0.0
  %5050 = vmatprep.subr.mxu0 0.0
  %5051 = vmatpush1.msra.mxu0 0.0
  %5052 = vmatprep.subr.mxu0 0.0
  %5053 = vmatpush1.msra.mxu0 0.0
  %5054 = vmatprep.subr.mxu0 0.0
  %5055 = vmatpush1.msra.mxu0 0.0
  %5056 = vmatprep.subr.mxu0 0.0
  %5057 = vmatpush1.msra.mxu0 0.0
  %5058 = vmatprep.subr.mxu0 0.0
  %5059 = vmatpush1.msra.mxu0 0.0
  %5060 = vmatprep.subr.mxu0 0.0
  %5061 = vmatpush1.msra.mxu0 0.0
  %5062 = vmatprep.subr.mxu0 0.0
  %5063 = vmatpush1.msra.mxu0 0.0
  %5064 = vmatprep.subr.mxu0 0.0
  %5065 = vmatpush1.msra.mxu0 0.0
  %5066 = vmatprep.subr.mxu0 0.0
  %5067 = vmatpush1.msra.mxu0 0.0
  %5068 = vmatprep.subr.mxu0 0.0
  %5069 = vmatpush1.msra.mxu0 0.0
  %5070 = vmatprep.subr.mxu0 0.0
  %5071 = vmatpush1.msra.mxu0 0.0
  %5072 = vmatprep.subr.mxu0 0.0
  %5073 = vmatpush1.msra.mxu0 0.0
  %5074 = vmatprep.subr.mxu0 0.0
  %5075 = vmatpush1.msra.mxu0 0.0
  %5076 = vmatprep.subr.mxu0 0.0
  %5077 = vmatpush1.msra.mxu0 0.0
  %5078 = vmatprep.subr.mxu0 0.0
  %5079 = vmatpush1.msra.mxu0 0.0
  %5080 = vmatprep.subr.mxu0 0.0
  %5081 = vmatpush1.msra.mxu0 0.0
  %5082 = vmatprep.subr.mxu0 0.0
  %5083 = vmatpush1.msra.mxu0 0.0
  %5084 = vmatprep.subr.mxu0 0.0
  %5085 = vmatpush1.msra.mxu0 0.0
  %5086 = vmatprep.subr.mxu0 0.0
  %5087 = vmatpush1.msra.mxu0 0.0
  %5088 = vmatprep.subr.mxu0 0.0
  %5089 = vmatpush1.msra.mxu0 0.0
  %5090 = vmatprep.subr.mxu0 0.0
  %5091 = vmatpush1.msra.mxu0 0.0
  %5092 = vmatprep.subr.mxu0 0.0
  %5093 = vmatpush1.msra.mxu0 0.0
  %5094 = vmatprep.subr.mxu0 0.0
  %5095 = vmatpush1.msra.mxu0 0.0
  %5096 = vmatprep.subr.mxu0 0.0
  %5097 = vmatpush1.msra.mxu0 0.0
  %5098 = vmatprep.subr.mxu0 0.0
  %5099 = vmatpush1.msra.mxu0 0.0
  %5100 = vmatprep.subr.mxu0 0.0
  %5101 = vmatpush1.msra.mxu0 0.0
  %5102 = vmatprep.subr.mxu0 0.0
  %5103 = vmatpush1.msra.mxu0 0.0
  %5104 = vmatprep.mubr.f32.mxu0 0.0
  %v5105 = vand.u32 %v4699, 4294901760
  %5106 = vmatmul.mubr.f32.gmra.mrb[0].mxu0 %v5105
  %v5107 = vpop.f32.mrb[0].mxu0
  %v5108 = vadd.f32 %v5025, %v5107
  %v5109 = vpop.f32.mrb[0].mxu0
  %5110 = vdwg.mxu0
  %5111 = vmatprep.subr.mxu0 0.0
  %v5112 = vand.u32 %v3125, 4294901760
  %5113 = vmatpush1.msra.mxu0 %v5112
  %5114 = vmatprep.subr.mxu0 0.0
  %v5115 = vand.u32 %v3126, 4294901760
  %5116 = vmatpush1.msra.mxu0 %v5115
  %5117 = vmatprep.subr.mxu0 0.0
  %v5118 = vand.u32 %v3127, 4294901760
  %5119 = vmatpush1.msra.mxu0 %v5118
  %5120 = vmatprep.subr.mxu0 0.0
  %v5121 = vand.u32 %v3128, 4294901760
  %5122 = vmatpush1.msra.mxu0 %v5121
  %5123 = vmatprep.subr.mxu0 0.0
  %5124 = vmatpush1.msra.mxu0 0.0
  %5125 = vmatprep.subr.mxu0 0.0
  %5126 = vmatpush1.msra.mxu0 0.0
  %5127 = vmatprep.subr.mxu0 0.0
  %5128 = vmatpush1.msra.mxu0 0.0
  %5129 = vmatprep.subr.mxu0 0.0
  %5130 = vmatpush1.msra.mxu0 0.0
  %5131 = vmatprep.subr.mxu0 0.0
  %5132 = vmatpush1.msra.mxu0 0.0
  %5133 = vmatprep.subr.mxu0 0.0
  %5134 = vmatpush1.msra.mxu0 0.0
  %5135 = vmatprep.subr.mxu0 0.0
  %5136 = vmatpush1.msra.mxu0 0.0
  %5137 = vmatprep.subr.mxu0 0.0
  %5138 = vmatpush1.msra.mxu0 0.0
  %5139 = vmatprep.subr.mxu0 0.0
  %5140 = vmatpush1.msra.mxu0 0.0
  %5141 = vmatprep.subr.mxu0 0.0
  %5142 = vmatpush1.msra.mxu0 0.0
  %5143 = vmatprep.subr.mxu0 0.0
  %5144 = vmatpush1.msra.mxu0 0.0
  %5145 = vmatprep.subr.mxu0 0.0
  %5146 = vmatpush1.msra.mxu0 0.0
  %5147 = vmatprep.subr.mxu0 0.0
  %5148 = vmatpush1.msra.mxu0 0.0
  %5149 = vmatprep.subr.mxu0 0.0
  %5150 = vmatpush1.msra.mxu0 0.0
  %5151 = vmatprep.subr.mxu0 0.0
  %5152 = vmatpush1.msra.mxu0 0.0
  %5153 = vmatprep.subr.mxu0 0.0
  %5154 = vmatpush1.msra.mxu0 0.0
  %5155 = vmatprep.subr.mxu0 0.0
  %5156 = vmatpush1.msra.mxu0 0.0
  %5157 = vmatprep.subr.mxu0 0.0
  %5158 = vmatpush1.msra.mxu0 0.0
  %5159 = vmatprep.subr.mxu0 0.0
  %5160 = vmatpush1.msra.mxu0 0.0
  %5161 = vmatprep.subr.mxu0 0.0
  %5162 = vmatpush1.msra.mxu0 0.0
  %5163 = vmatprep.subr.mxu0 0.0
  %5164 = vmatpush1.msra.mxu0 0.0
  %5165 = vmatprep.subr.mxu0 0.0
  %5166 = vmatpush1.msra.mxu0 0.0
  %5167 = vmatprep.subr.mxu0 0.0
  %5168 = vmatpush1.msra.mxu0 0.0
  %5169 = vmatprep.subr.mxu0 0.0
  %5170 = vmatpush1.msra.mxu0 0.0
  %5171 = vmatprep.subr.mxu0 0.0
  %5172 = vmatpush1.msra.mxu0 0.0
  %5173 = vmatprep.subr.mxu0 0.0
  %5174 = vmatpush1.msra.mxu0 0.0
  %5175 = vmatprep.subr.mxu0 0.0
  %5176 = vmatpush1.msra.mxu0 0.0
  %5177 = vmatprep.subr.mxu0 0.0
  %5178 = vmatpush1.msra.mxu0 0.0
  %5179 = vmatprep.mubr.f32.mxu0 0.0
  %v5180 = vand.u32 %v4699, 4294901760
  %5181 = vmatmul.mubr.f32.gmra.mrb[0].mxu0 %v5180
  %v5182 = vpop.f32.mrb[0].mxu0
  %v5183 = vadd.f32 %v5108, %v5182
  %v5184 = vpop.f32.mrb[0].mxu0
  %5185 = vdwg.mxu0
  %v5186 = vadd.f32 %v3121, %v5183
  %v5187 = vxor.u32 %v5186, 2147483648
  %v5188 = vmul.f32 %v5187, 1.442695
  %v5189 = vpow.pop %v5188
  %v5190 = vadd.f32 %v5189, 1.0
  %v5191 = vrcp.pop %v5190
  %v5192 = vmul.f32 1.0, %v5191
  %v5193 = vtanh.pop %v5186
  %v5194 = vmul.f32 %v5192, %v4689
  %5196 = vrot.lane.b32.xlu0 %v5193, 32
  %v5197 = vpop.permute.xlu0 %5196
  %v5199 = vmul.f32 %v5192, %v5197
  %5201 = vrot.lane.b32.xlu0 %v5199, 32
  %v5202 = vpop.permute.xlu0 %5201
  %v5204 = vadd.f32 %v5194, %v5202
  %v5205 = vtanh.pop %v5204
  %5207 = vrot.lane.b32.xlu0 %v5205, 32
  %v5208 = vpop.permute.xlu0 %5207
  %v5210 = vmul.f32 %v5192, %v5208
  %5212 = vrot.lane.b32.xlu0 %v5210, 64
  %v5213 = vpop.permute.xlu0 %5212
  %v5214 = vsel %vm2241, %v5213, 0
  %5216 = vmatprep.subr.mxu0 0.0
  %v5217 = vand.u32 %v3125, 4294901760
  %5218 = vmatpush1.msra.mxu0 %v5217
  %5219 = vmatprep.subr.mxu0 0.0
  %v5220 = vand.u32 %v3126, 4294901760
  %5221 = vmatpush1.msra.mxu0 %v5220
  %5222 = vmatprep.subr.mxu0 0.0
  %v5223 = vand.u32 %v3127, 4294901760
  %5224 = vmatpush1.msra.mxu0 %v5223
  %5225 = vmatprep.subr.mxu0 0.0
  %v5226 = vand.u32 %v3128, 4294901760
  %5227 = vmatpush1.msra.mxu0 %v5226
  %5228 = vmatprep.subr.mxu0 0.0
  %5229 = vmatpush1.msra.mxu0 0.0
  %5230 = vmatprep.subr.mxu0 0.0
  %5231 = vmatpush1.msra.mxu0 0.0
  %5232 = vmatprep.subr.mxu0 0.0
  %5233 = vmatpush1.msra.mxu0 0.0
  %5234 = vmatprep.subr.mxu0 0.0
  %5235 = vmatpush1.msra.mxu0 0.0
  %5236 = vmatprep.subr.mxu0 0.0
  %5237 = vmatpush1.msra.mxu0 0.0
  %5238 = vmatprep.subr.mxu0 0.0
  %5239 = vmatpush1.msra.mxu0 0.0
  %5240 = vmatprep.subr.mxu0 0.0
  %5241 = vmatpush1.msra.mxu0 0.0
  %5242 = vmatprep.subr.mxu0 0.0
  %5243 = vmatpush1.msra.mxu0 0.0
  %5244 = vmatprep.subr.mxu0 0.0
  %5245 = vmatpush1.msra.mxu0 0.0
  %5246 = vmatprep.subr.mxu0 0.0
  %5247 = vmatpush1.msra.mxu0 0.0
  %5248 = vmatprep.subr.mxu0 0.0
  %5249 = vmatpush1.msra.mxu0 0.0
  %5250 = vmatprep.subr.mxu0 0.0
  %5251 = vmatpush1.msra.mxu0 0.0
  %5252 = vmatprep.subr.mxu0 0.0
  %5253 = vmatpush1.msra.mxu0 0.0
  %5254 = vmatprep.subr.mxu0 0.0
  %5255 = vmatpush1.msra.mxu0 0.0
  %5256 = vmatprep.subr.mxu0 0.0
  %5257 = vmatpush1.msra.mxu0 0.0
  %5258 = vmatprep.subr.mxu0 0.0
  %5259 = vmatpush1.msra.mxu0 0.0
  %5260 = vmatprep.subr.mxu0 0.0
  %5261 = vmatpush1.msra.mxu0 0.0
  %5262 = vmatprep.subr.mxu0 0.0
  %5263 = vmatpush1.msra.mxu0 0.0
  %5264 = vmatprep.subr.mxu0 0.0
  %5265 = vmatpush1.msra.mxu0 0.0
  %5266 = vmatprep.subr.mxu0 0.0
  %5267 = vmatpush1.msra.mxu0 0.0
  %5268 = vmatprep.subr.mxu0 0.0
  %5269 = vmatpush1.msra.mxu0 0.0
  %5270 = vmatprep.subr.mxu0 0.0
  %5271 = vmatpush1.msra.mxu0 0.0
  %5272 = vmatprep.subr.mxu0 0.0
  %5273 = vmatpush1.msra.mxu0 0.0
  %5274 = vmatprep.subr.mxu0 0.0
  %5275 = vmatpush1.msra.mxu0 0.0
  %5276 = vmatprep.subr.mxu0 0.0
  %5277 = vmatpush1.msra.mxu0 0.0
  %5278 = vmatprep.subr.mxu0 0.0
  %5279 = vmatpush1.msra.mxu0 0.0
  %5280 = vmatprep.subr.mxu0 0.0
  %5281 = vmatpush1.msra.mxu0 0.0
  %5282 = vmatprep.subr.mxu0 0.0
  %5283 = vmatpush1.msra.mxu0 0.0
  %5284 = vmatprep.mubr.f32.mxu0 0.0
  %v5285 = vand.u32 %v5214, 4294901760
  %v5286 = vsub.f32 %v5214, %v5285
  %v5287 = vand.u32 %v5286, 4294901760
  %v5288 = vsub.f32 %v5286, %v5287
  %v5289 = vand.u32 %v5288, 4294901760
  %5290 = vmatmul.mubr.f32.gmra.mrb[0].mxu0 %v5289
  %v5291 = vpop.f32.mrb[0].mxu0
  %v5292 = vadd.f32 0.0, %v5291
  %v5293 = vpop.f32.mrb[0].mxu0
  %5294 = vdwg.mxu0
  %5295 = vmatprep.subr.mxu0 0.0
  %v5296 = vand.u32 %v3125, 4294901760
  %v5297 = vsub.f32 %v3125, %v5296
  %v5298 = vand.u32 %v5297, 4294901760
  %v5299 = vsub.f32 %v5297, %v5298
  %v5300 = vand.u32 %v5299, 4294901760
  %5301 = vmatpush1.msra.mxu0 %v5300
  %5302 = vmatprep.subr.mxu0 0.0
  %v5303 = vand.u32 %v3126, 4294901760
  %v5304 = vsub.f32 %v3126, %v5303
  %v5305 = vand.u32 %v5304, 4294901760
  %v5306 = vsub.f32 %v5304, %v5305
  %v5307 = vand.u32 %v5306, 4294901760
  %5308 = vmatpush1.msra.mxu0 %v5307
  %5309 = vmatprep.subr.mxu0 0.0
  %v5310 = vand.u32 %v3127, 4294901760
  %v5311 = vsub.f32 %v3127, %v5310
  %v5312 = vand.u32 %v5311, 4294901760
  %v5313 = vsub.f32 %v5311, %v5312
  %v5314 = vand.u32 %v5313, 4294901760
  %5315 = vmatpush1.msra.mxu0 %v5314
  %5316 = vmatprep.subr.mxu0 0.0
  %v5317 = vand.u32 %v3128, 4294901760
  %v5318 = vsub.f32 %v3128, %v5317
  %v5319 = vand.u32 %v5318, 4294901760
  %v5320 = vsub.f32 %v5318, %v5319
  %v5321 = vand.u32 %v5320, 4294901760
  %5322 = vmatpush1.msra.mxu0 %v5321
  %5323 = vmatprep.subr.mxu0 0.0
  %5324 = vmatpush1.msra.mxu0 0.0
  %5325 = vmatprep.subr.mxu0 0.0
  %5326 = vmatpush1.msra.mxu0 0.0
  %5327 = vmatprep.subr.mxu0 0.0
  %5328 = vmatpush1.msra.mxu0 0.0
  %5329 = vmatprep.subr.mxu0 0.0
  %5330 = vmatpush1.msra.mxu0 0.0
  %5331 = vmatprep.subr.mxu0 0.0
  %5332 = vmatpush1.msra.mxu0 0.0
  %5333 = vmatprep.subr.mxu0 0.0
  %5334 = vmatpush1.msra.mxu0 0.0
  %5335 = vmatprep.subr.mxu0 0.0
  %5336 = vmatpush1.msra.mxu0 0.0
  %5337 = vmatprep.subr.mxu0 0.0
  %5338 = vmatpush1.msra.mxu0 0.0
  %5339 = vmatprep.subr.mxu0 0.0
  %5340 = vmatpush1.msra.mxu0 0.0
  %5341 = vmatprep.subr.mxu0 0.0
  %5342 = vmatpush1.msra.mxu0 0.0
  %5343 = vmatprep.subr.mxu0 0.0
  %5344 = vmatpush1.msra.mxu0 0.0
  %5345 = vmatprep.subr.mxu0 0.0
  %5346 = vmatpush1.msra.mxu0 0.0
  %5347 = vmatprep.subr.mxu0 0.0
  %5348 = vmatpush1.msra.mxu0 0.0
  %5349 = vmatprep.subr.mxu0 0.0
  %5350 = vmatpush1.msra.mxu0 0.0
  %5351 = vmatprep.subr.mxu0 0.0
  %5352 = vmatpush1.msra.mxu0 0.0
  %5353 = vmatprep.subr.mxu0 0.0
  %5354 = vmatpush1.msra.mxu0 0.0
  %5355 = vmatprep.subr.mxu0 0.0
  %5356 = vmatpush1.msra.mxu0 0.0
  %5357 = vmatprep.subr.mxu0 0.0
  %5358 = vmatpush1.msra.mxu0 0.0
  %5359 = vmatprep.subr.mxu0 0.0
  %5360 = vmatpush1.msra.mxu0 0.0
  %5361 = vmatprep.subr.mxu0 0.0
  %5362 = vmatpush1.msra.mxu0 0.0
  %5363 = vmatprep.subr.mxu0 0.0
  %5364 = vmatpush1.msra.mxu0 0.0
  %5365 = vmatprep.subr.mxu0 0.0
  %5366 = vmatpush1.msra.mxu0 0.0
  %5367 = vmatprep.subr.mxu0 0.0
  %5368 = vmatpush1.msra.mxu0 0.0
  %5369 = vmatprep.subr.mxu0 0.0
  %5370 = vmatpush1.msra.mxu0 0.0
  %5371 = vmatprep.subr.mxu0 0.0
  %5372 = vmatpush1.msra.mxu0 0.0
  %5373 = vmatprep.subr.mxu0 0.0
  %5374 = vmatpush1.msra.mxu0 0.0
  %5375 = vmatprep.subr.mxu0 0.0
  %5376 = vmatpush1.msra.mxu0 0.0
  %5377 = vmatprep.subr.mxu0 0.0
  %5378 = vmatpush1.msra.mxu0 0.0
  %5379 = vmatprep.mubr.f32.mxu0 0.0
  %v5380 = vand.u32 %v5214, 4294901760
  %5381 = vmatmul.mubr.f32.gmra.mrb[0].mxu0 %v5380
  %v5382 = vpop.f32.mrb[0].mxu0
  %v5383 = vadd.f32 %v5292, %v5382
  %v5384 = vpop.f32.mrb[0].mxu0
  %5385 = vdwg.mxu0
  %5386 = vmatprep.subr.mxu0 0.0
  %v5387 = vand.u32 %v3125, 4294901760
  %v5388 = vsub.f32 %v3125, %v5387
  %5389 = vmatpush1.msra.mxu0 %v5388
  %5390 = vmatprep.subr.mxu0 0.0
  %v5391 = vand.u32 %v3126, 4294901760
  %v5392 = vsub.f32 %v3126, %v5391
  %5393 = vmatpush1.msra.mxu0 %v5392
  %5394 = vmatprep.subr.mxu0 0.0
  %v5395 = vand.u32 %v3127, 4294901760
  %v5396 = vsub.f32 %v3127, %v5395
  %5397 = vmatpush1.msra.mxu0 %v5396
  %5398 = vmatprep.subr.mxu0 0.0
  %v5399 = vand.u32 %v3128, 4294901760
  %v5400 = vsub.f32 %v3128, %v5399
  %5401 = vmatpush1.msra.mxu0 %v5400
  %5402 = vmatprep.subr.mxu0 0.0
  %5403 = vmatpush1.msra.mxu0 0.0
  %5404 = vmatprep.subr.mxu0 0.0
  %5405 = vmatpush1.msra.mxu0 0.0
  %5406 = vmatprep.subr.mxu0 0.0
  %5407 = vmatpush1.msra.mxu0 0.0
  %5408 = vmatprep.subr.mxu0 0.0
  %5409 = vmatpush1.msra.mxu0 0.0
  %5410 = vmatprep.subr.mxu0 0.0
  %5411 = vmatpush1.msra.mxu0 0.0
  %5412 = vmatprep.subr.mxu0 0.0
  %5413 = vmatpush1.msra.mxu0 0.0
  %5414 = vmatprep.subr.mxu0 0.0
  %5415 = vmatpush1.msra.mxu0 0.0
  %5416 = vmatprep.subr.mxu0 0.0
  %5417 = vmatpush1.msra.mxu0 0.0
  %5418 = vmatprep.subr.mxu0 0.0
  %5419 = vmatpush1.msra.mxu0 0.0
  %5420 = vmatprep.subr.mxu0 0.0
  %5421 = vmatpush1.msra.mxu0 0.0
  %5422 = vmatprep.subr.mxu0 0.0
  %5423 = vmatpush1.msra.mxu0 0.0
  %5424 = vmatprep.subr.mxu0 0.0
  %5425 = vmatpush1.msra.mxu0 0.0
  %5426 = vmatprep.subr.mxu0 0.0
  %5427 = vmatpush1.msra.mxu0 0.0
  %5428 = vmatprep.subr.mxu0 0.0
  %5429 = vmatpush1.msra.mxu0 0.0
  %5430 = vmatprep.subr.mxu0 0.0
  %5431 = vmatpush1.msra.mxu0 0.0
  %5432 = vmatprep.subr.mxu0 0.0
  %5433 = vmatpush1.msra.mxu0 0.0
  %5434 = vmatprep.subr.mxu0 0.0
  %5435 = vmatpush1.msra.mxu0 0.0
  %5436 = vmatprep.subr.mxu0 0.0
  %5437 = vmatpush1.msra.mxu0 0.0
  %5438 = vmatprep.subr.mxu0 0.0
  %5439 = vmatpush1.msra.mxu0 0.0
  %5440 = vmatprep.subr.mxu0 0.0
  %5441 = vmatpush1.msra.mxu0 0.0
  %5442 = vmatprep.subr.mxu0 0.0
  %5443 = vmatpush1.msra.mxu0 0.0
  %5444 = vmatprep.subr.mxu0 0.0
  %5445 = vmatpush1.msra.mxu0 0.0
  %5446 = vmatprep.subr.mxu0 0.0
  %5447 = vmatpush1.msra.mxu0 0.0
  %5448 = vmatprep.subr.mxu0 0.0
  %5449 = vmatpush1.msra.mxu0 0.0
  %5450 = vmatprep.subr.mxu0 0.0
  %5451 = vmatpush1.msra.mxu0 0.0
  %5452 = vmatprep.subr.mxu0 0.0
  %5453 = vmatpush1.msra.mxu0 0.0
  %5454 = vmatprep.subr.mxu0 0.0
  %5455 = vmatpush1.msra.mxu0 0.0
  %5456 = vmatprep.subr.mxu0 0.0
  %5457 = vmatpush1.msra.mxu0 0.0
  %5458 = vmatprep.mubr.f32.mxu0 0.0
  %v5459 = vand.u32 %v5214, 4294901760
  %v5460 = vsub.f32 %v5214, %v5459
  %5461 = vmatmul.mubr.f32.gmra.mrb[0].mxu0 %v5460
  %v5462 = vpop.f32.mrb[0].mxu0
  %v5463 = vadd.f32 %v5383, %v5462
  %v5464 = vpop.f32.mrb[0].mxu0
  %5465 = vdwg.mxu0
  %5466 = vmatprep.subr.mxu0 0.0
  %v5467 = vand.u32 %v3125, 4294901760
  %5468 = vmatpush1.msra.mxu0 %v5467
  %5469 = vmatprep.subr.mxu0 0.0
  %v5470 = vand.u32 %v3126, 4294901760
  %5471 = vmatpush1.msra.mxu0 %v5470
  %5472 = vmatprep.subr.mxu0 0.0
  %v5473 = vand.u32 %v3127, 4294901760
  %5474 = vmatpush1.msra.mxu0 %v5473
  %5475 = vmatprep.subr.mxu0 0.0
  %v5476 = vand.u32 %v3128, 4294901760
  %5477 = vmatpush1.msra.mxu0 %v5476
  %5478 = vmatprep.subr.mxu0 0.0
  %5479 = vmatpush1.msra.mxu0 0.0
  %5480 = vmatprep.subr.mxu0 0.0
  %5481 = vmatpush1.msra.mxu0 0.0
  %5482 = vmatprep.subr.mxu0 0.0
  %5483 = vmatpush1.msra.mxu0 0.0
  %5484 = vmatprep.subr.mxu0 0.0
  %5485 = vmatpush1.msra.mxu0 0.0
  %5486 = vmatprep.subr.mxu0 0.0
  %5487 = vmatpush1.msra.mxu0 0.0
  %5488 = vmatprep.subr.mxu0 0.0
  %5489 = vmatpush1.msra.mxu0 0.0
  %5490 = vmatprep.subr.mxu0 0.0
  %5491 = vmatpush1.msra.mxu0 0.0
  %5492 = vmatprep.subr.mxu0 0.0
  %5493 = vmatpush1.msra.mxu0 0.0
  %5494 = vmatprep.subr.mxu0 0.0
  %5495 = vmatpush1.msra.mxu0 0.0
  %5496 = vmatprep.subr.mxu0 0.0
  %5497 = vmatpush1.msra.mxu0 0.0
  %5498 = vmatprep.subr.mxu0 0.0
  %5499 = vmatpush1.msra.mxu0 0.0
  %5500 = vmatprep.subr.mxu0 0.0
  %5501 = vmatpush1.msra.mxu0 0.0
  %5502 = vmatprep.subr.mxu0 0.0
  %5503 = vmatpush1.msra.mxu0 0.0
  %5504 = vmatprep.subr.mxu0 0.0
  %5505 = vmatpush1.msra.mxu0 0.0
  %5506 = vmatprep.subr.mxu0 0.0
  %5507 = vmatpush1.msra.mxu0 0.0
  %5508 = vmatprep.subr.mxu0 0.0
  %5509 = vmatpush1.msra.mxu0 0.0
  %5510 = vmatprep.subr.mxu0 0.0
  %5511 = vmatpush1.msra.mxu0 0.0
  %5512 = vmatprep.subr.mxu0 0.0
  %5513 = vmatpush1.msra.mxu0 0.0
  %5514 = vmatprep.subr.mxu0 0.0
  %5515 = vmatpush1.msra.mxu0 0.0
  %5516 = vmatprep.subr.mxu0 0.0
  %5517 = vmatpush1.msra.mxu0 0.0
  %5518 = vmatprep.subr.mxu0 0.0
  %5519 = vmatpush1.msra.mxu0 0.0
  %5520 = vmatprep.subr.mxu0 0.0
  %5521 = vmatpush1.msra.mxu0 0.0
  %5522 = vmatprep.subr.mxu0 0.0
  %5523 = vmatpush1.msra.mxu0 0.0
  %5524 = vmatprep.subr.mxu0 0.0
  %5525 = vmatpush1.msra.mxu0 0.0
  %5526 = vmatprep.subr.mxu0 0.0
  %5527 = vmatpush1.msra.mxu0 0.0
  %5528 = vmatprep.subr.mxu0 0.0
  %5529 = vmatpush1.msra.mxu0 0.0
  %5530 = vmatprep.subr.mxu0 0.0
  %5531 = vmatpush1.msra.mxu0 0.0
  %5532 = vmatprep.subr.mxu0 0.0
  %5533 = vmatpush1.msra.mxu0 0.0
  %5534 = vmatprep.mubr.f32.mxu0 0.0
  %v5535 = vand.u32 %v5214, 4294901760
  %v5536 = vsub.f32 %v5214, %v5535
  %v5537 = vand.u32 %v5536, 4294901760
  %5538 = vmatmul.mubr.f32.gmra.mrb[0].mxu0 %v5537
  %v5539 = vpop.f32.mrb[0].mxu0
  %v5540 = vadd.f32 %v5463, %v5539
  %v5541 = vpop.f32.mrb[0].mxu0
  %5542 = vdwg.mxu0
  %5543 = vmatprep.subr.mxu0 0.0
  %v5544 = vand.u32 %v3125, 4294901760
  %v5545 = vsub.f32 %v3125, %v5544
  %v5546 = vand.u32 %v5545, 4294901760
  %5547 = vmatpush1.msra.mxu0 %v5546
  %5548 = vmatprep.subr.mxu0 0.0
  %v5549 = vand.u32 %v3126, 4294901760
  %v5550 = vsub.f32 %v3126, %v5549
  %v5551 = vand.u32 %v5550, 4294901760
  %5552 = vmatpush1.msra.mxu0 %v5551
  %5553 = vmatprep.subr.mxu0 0.0
  %v5554 = vand.u32 %v3127, 4294901760
  %v5555 = vsub.f32 %v3127, %v5554
  %v5556 = vand.u32 %v5555, 4294901760
  %5557 = vmatpush1.msra.mxu0 %v5556
  %5558 = vmatprep.subr.mxu0 0.0
  %v5559 = vand.u32 %v3128, 4294901760
  %v5560 = vsub.f32 %v3128, %v5559
  %v5561 = vand.u32 %v5560, 4294901760
  %5562 = vmatpush1.msra.mxu0 %v5561
  %5563 = vmatprep.subr.mxu0 0.0
  %5564 = vmatpush1.msra.mxu0 0.0
  %5565 = vmatprep.subr.mxu0 0.0
  %5566 = vmatpush1.msra.mxu0 0.0
  %5567 = vmatprep.subr.mxu0 0.0
  %5568 = vmatpush1.msra.mxu0 0.0
  %5569 = vmatprep.subr.mxu0 0.0
  %5570 = vmatpush1.msra.mxu0 0.0
  %5571 = vmatprep.subr.mxu0 0.0
  %5572 = vmatpush1.msra.mxu0 0.0
  %5573 = vmatprep.subr.mxu0 0.0
  %5574 = vmatpush1.msra.mxu0 0.0
  %5575 = vmatprep.subr.mxu0 0.0
  %5576 = vmatpush1.msra.mxu0 0.0
  %5577 = vmatprep.subr.mxu0 0.0
  %5578 = vmatpush1.msra.mxu0 0.0
  %5579 = vmatprep.subr.mxu0 0.0
  %5580 = vmatpush1.msra.mxu0 0.0
  %5581 = vmatprep.subr.mxu0 0.0
  %5582 = vmatpush1.msra.mxu0 0.0
  %5583 = vmatprep.subr.mxu0 0.0
  %5584 = vmatpush1.msra.mxu0 0.0
  %5585 = vmatprep.subr.mxu0 0.0
  %5586 = vmatpush1.msra.mxu0 0.0
  %5587 = vmatprep.subr.mxu0 0.0
  %5588 = vmatpush1.msra.mxu0 0.0
  %5589 = vmatprep.subr.mxu0 0.0
  %5590 = vmatpush1.msra.mxu0 0.0
  %5591 = vmatprep.subr.mxu0 0.0
  %5592 = vmatpush1.msra.mxu0 0.0
  %5593 = vmatprep.subr.mxu0 0.0
  %5594 = vmatpush1.msra.mxu0 0.0
  %5595 = vmatprep.subr.mxu0 0.0
  %5596 = vmatpush1.msra.mxu0 0.0
  %5597 = vmatprep.subr.mxu0 0.0
  %5598 = vmatpush1.msra.mxu0 0.0
  %5599 = vmatprep.subr.mxu0 0.0
  %5600 = vmatpush1.msra.mxu0 0.0
  %5601 = vmatprep.subr.mxu0 0.0
  %5602 = vmatpush1.msra.mxu0 0.0
  %5603 = vmatprep.subr.mxu0 0.0
  %5604 = vmatpush1.msra.mxu0 0.0
  %5605 = vmatprep.subr.mxu0 0.0
  %5606 = vmatpush1.msra.mxu0 0.0
  %5607 = vmatprep.subr.mxu0 0.0
  %5608 = vmatpush1.msra.mxu0 0.0
  %5609 = vmatprep.subr.mxu0 0.0
  %5610 = vmatpush1.msra.mxu0 0.0
  %5611 = vmatprep.subr.mxu0 0.0
  %5612 = vmatpush1.msra.mxu0 0.0
  %5613 = vmatprep.subr.mxu0 0.0
  %5614 = vmatpush1.msra.mxu0 0.0
  %5615 = vmatprep.subr.mxu0 0.0
  %5616 = vmatpush1.msra.mxu0 0.0
  %5617 = vmatprep.subr.mxu0 0.0
  %5618 = vmatpush1.msra.mxu0 0.0
  %5619 = vmatprep.mubr.f32.mxu0 0.0
  %v5620 = vand.u32 %v5214, 4294901760
  %5621 = vmatmul.mubr.f32.gmra.mrb[0].mxu0 %v5620
  %v5622 = vpop.f32.mrb[0].mxu0
  %v5623 = vadd.f32 %v5540, %v5622
  %v5624 = vpop.f32.mrb[0].mxu0
  %5625 = vdwg.mxu0
  %5626 = vmatprep.subr.mxu0 0.0
  %v5627 = vand.u32 %v3125, 4294901760
  %5628 = vmatpush1.msra.mxu0 %v5627
  %5629 = vmatprep.subr.mxu0 0.0
  %v5630 = vand.u32 %v3126, 4294901760
  %5631 = vmatpush1.msra.mxu0 %v5630
  %5632 = vmatprep.subr.mxu0 0.0
  %v5633 = vand.u32 %v3127, 4294901760
  %5634 = vmatpush1.msra.mxu0 %v5633
  %5635 = vmatprep.subr.mxu0 0.0
  %v5636 = vand.u32 %v3128, 4294901760
  %5637 = vmatpush1.msra.mxu0 %v5636
  %5638 = vmatprep.subr.mxu0 0.0
  %5639 = vmatpush1.msra.mxu0 0.0
  %5640 = vmatprep.subr.mxu0 0.0
  %5641 = vmatpush1.msra.mxu0 0.0
  %5642 = vmatprep.subr.mxu0 0.0
  %5643 = vmatpush1.msra.mxu0 0.0
  %5644 = vmatprep.subr.mxu0 0.0
  %5645 = vmatpush1.msra.mxu0 0.0
  %5646 = vmatprep.subr.mxu0 0.0
  %5647 = vmatpush1.msra.mxu0 0.0
  %5648 = vmatprep.subr.mxu0 0.0
  %5649 = vmatpush1.msra.mxu0 0.0
  %5650 = vmatprep.subr.mxu0 0.0
  %5651 = vmatpush1.msra.mxu0 0.0
  %5652 = vmatprep.subr.mxu0 0.0
  %5653 = vmatpush1.msra.mxu0 0.0
  %5654 = vmatprep.subr.mxu0 0.0
  %5655 = vmatpush1.msra.mxu0 0.0
  %5656 = vmatprep.subr.mxu0 0.0
  %5657 = vmatpush1.msra.mxu0 0.0
  %5658 = vmatprep.subr.mxu0 0.0
  %5659 = vmatpush1.msra.mxu0 0.0
  %5660 = vmatprep.subr.mxu0 0.0
  %5661 = vmatpush1.msra.mxu0 0.0
  %5662 = vmatprep.subr.mxu0 0.0
  %5663 = vmatpush1.msra.mxu0 0.0
  %5664 = vmatprep.subr.mxu0 0.0
  %5665 = vmatpush1.msra.mxu0 0.0
  %5666 = vmatprep.subr.mxu0 0.0
  %5667 = vmatpush1.msra.mxu0 0.0
  %5668 = vmatprep.subr.mxu0 0.0
  %5669 = vmatpush1.msra.mxu0 0.0
  %5670 = vmatprep.subr.mxu0 0.0
  %5671 = vmatpush1.msra.mxu0 0.0
  %5672 = vmatprep.subr.mxu0 0.0
  %5673 = vmatpush1.msra.mxu0 0.0
  %5674 = vmatprep.subr.mxu0 0.0
  %5675 = vmatpush1.msra.mxu0 0.0
  %5676 = vmatprep.subr.mxu0 0.0
  %5677 = vmatpush1.msra.mxu0 0.0
  %5678 = vmatprep.subr.mxu0 0.0
  %5679 = vmatpush1.msra.mxu0 0.0
  %5680 = vmatprep.subr.mxu0 0.0
  %5681 = vmatpush1.msra.mxu0 0.0
  %5682 = vmatprep.subr.mxu0 0.0
  %5683 = vmatpush1.msra.mxu0 0.0
  %5684 = vmatprep.subr.mxu0 0.0
  %5685 = vmatpush1.msra.mxu0 0.0
  %5686 = vmatprep.subr.mxu0 0.0
  %5687 = vmatpush1.msra.mxu0 0.0
  %5688 = vmatprep.subr.mxu0 0.0
  %5689 = vmatpush1.msra.mxu0 0.0
  %5690 = vmatprep.subr.mxu0 0.0
  %5691 = vmatpush1.msra.mxu0 0.0
  %5692 = vmatprep.subr.mxu0 0.0
  %5693 = vmatpush1.msra.mxu0 0.0
  %5694 = vmatprep.mubr.f32.mxu0 0.0
  %v5695 = vand.u32 %v5214, 4294901760
  %5696 = vmatmul.mubr.f32.gmra.mrb[0].mxu0 %v5695
  %v5697 = vpop.f32.mrb[0].mxu0
  %v5698 = vadd.f32 %v5623, %v5697
  %v5699 = vpop.f32.mrb[0].mxu0
  %5700 = vdwg.mxu0
  %v5701 = vadd.f32 %v3122, %v5698
  %v5702 = vxor.u32 %v5701, 2147483648
  %v5703 = vmul.f32 %v5702, 1.442695
  %v5704 = vpow.pop %v5703
  %v5705 = vadd.f32 %v5704, 1.0
  %v5706 = vrcp.pop %v5705
  %v5707 = vmul.f32 1.0, %v5706
  %v5708 = vtanh.pop %v5701
  %v5709 = vmul.f32 %v5707, %v5204
  %5711 = vrot.lane.b32.xlu0 %v5708, 32
  %v5712 = vpop.permute.xlu0 %5711
  %v5714 = vmul.f32 %v5707, %v5712
  %5716 = vrot.lane.b32.xlu0 %v5714, 32
  %v5717 = vpop.permute.xlu0 %5716
  %v5719 = vadd.f32 %v5709, %v5717
  %v5720 = vtanh.pop %v5719
  %5722 = vrot.lane.b32.xlu0 %v5720, 32
  %v5723 = vpop.permute.xlu0 %5722
  %v5725 = vmul.f32 %v5707, %v5723
  %5727 = vrot.lane.b32.xlu0 %v5725, 64
  %v5728 = vpop.permute.xlu0 %5727
  %v5729 = vsel %vm2241, %v5728, 0
  %5731 = vmatprep.subr.mxu0 0.0
  %v5732 = vand.u32 %v3125, 4294901760
  %5733 = vmatpush1.msra.mxu0 %v5732
  %5734 = vmatprep.subr.mxu0 0.0
  %v5735 = vand.u32 %v3126, 4294901760
  %5736 = vmatpush1.msra.mxu0 %v5735
  %5737 = vmatprep.subr.mxu0 0.0
  %v5738 = vand.u32 %v3127, 4294901760
  %5739 = vmatpush1.msra.mxu0 %v5738
  %5740 = vmatprep.subr.mxu0 0.0
  %v5741 = vand.u32 %v3128, 4294901760
  %5742 = vmatpush1.msra.mxu0 %v5741
  %5743 = vmatprep.subr.mxu0 0.0
  %5744 = vmatpush1.msra.mxu0 0.0
  %5745 = vmatprep.subr.mxu0 0.0
  %5746 = vmatpush1.msra.mxu0 0.0
  %5747 = vmatprep.subr.mxu0 0.0
  %5748 = vmatpush1.msra.mxu0 0.0
  %5749 = vmatprep.subr.mxu0 0.0
  %5750 = vmatpush1.msra.mxu0 0.0
  %5751 = vmatprep.subr.mxu0 0.0
  %5752 = vmatpush1.msra.mxu0 0.0
  %5753 = vmatprep.subr.mxu0 0.0
  %5754 = vmatpush1.msra.mxu0 0.0
  %5755 = vmatprep.subr.mxu0 0.0
  %5756 = vmatpush1.msra.mxu0 0.0
  %5757 = vmatprep.subr.mxu0 0.0
  %5758 = vmatpush1.msra.mxu0 0.0
  %5759 = vmatprep.subr.mxu0 0.0
  %5760 = vmatpush1.msra.mxu0 0.0
  %5761 = vmatprep.subr.mxu0 0.0
  %5762 = vmatpush1.msra.mxu0 0.0
  %5763 = vmatprep.subr.mxu0 0.0
  %5764 = vmatpush1.msra.mxu0 0.0
  %5765 = vmatprep.subr.mxu0 0.0
  %5766 = vmatpush1.msra.mxu0 0.0
  %5767 = vmatprep.subr.mxu0 0.0
  %5768 = vmatpush1.msra.mxu0 0.0
  %5769 = vmatprep.subr.mxu0 0.0
  %5770 = vmatpush1.msra.mxu0 0.0
  %5771 = vmatprep.subr.mxu0 0.0
  %5772 = vmatpush1.msra.mxu0 0.0
  %5773 = vmatprep.subr.mxu0 0.0
  %5774 = vmatpush1.msra.mxu0 0.0
  %5775 = vmatprep.subr.mxu0 0.0
  %5776 = vmatpush1.msra.mxu0 0.0
  %5777 = vmatprep.subr.mxu0 0.0
  %5778 = vmatpush1.msra.mxu0 0.0
  %5779 = vmatprep.subr.mxu0 0.0
  %5780 = vmatpush1.msra.mxu0 0.0
  %5781 = vmatprep.subr.mxu0 0.0
  %5782 = vmatpush1.msra.mxu0 0.0
  %5783 = vmatprep.subr.mxu0 0.0
  %5784 = vmatpush1.msra.mxu0 0.0
  %5785 = vmatprep.subr.mxu0 0.0
  %5786 = vmatpush1.msra.mxu0 0.0
  %5787 = vmatprep.subr.mxu0 0.0
  %5788 = vmatpush1.msra.mxu0 0.0
  %5789 = vmatprep.subr.mxu0 0.0
  %5790 = vmatpush1.msra.mxu0 0.0
  %5791 = vmatprep.subr.mxu0 0.0
  %5792 = vmatpush1.msra.mxu0 0.0
  %5793 = vmatprep.subr.mxu0 0.0
  %5794 = vmatpush1.msra.mxu0 0.0
  %5795 = vmatprep.subr.mxu0 0.0
  %5796 = vmatpush1.msra.mxu0 0.0
  %5797 = vmatprep.subr.mxu0 0.0
  %5798 = vmatpush1.msra.mxu0 0.0
  %5799 = vmatprep.mubr.f32.mxu0 0.0
  %v5800 = vand.u32 %v5729, 4294901760
  %v5801 = vsub.f32 %v5729, %v5800
  %v5802 = vand.u32 %v5801, 4294901760
  %v5803 = vsub.f32 %v5801, %v5802
  %v5804 = vand.u32 %v5803, 4294901760
  %5805 = vmatmul.mubr.f32.gmra.mrb[0].mxu0 %v5804
  %v5806 = vpop.f32.mrb[0].mxu0
  %v5807 = vadd.f32 0.0, %v5806
  %v5808 = vpop.f32.mrb[0].mxu0
  %5809 = vdwg.mxu0
  %5810 = vmatprep.subr.mxu0 0.0
  %v5811 = vand.u32 %v3125, 4294901760
  %v5812 = vsub.f32 %v3125, %v5811
  %v5813 = vand.u32 %v5812, 4294901760
  %v5814 = vsub.f32 %v5812, %v5813
  %v5815 = vand.u32 %v5814, 4294901760
  %5816 = vmatpush1.msra.mxu0 %v5815
  %5817 = vmatprep.subr.mxu0 0.0
  %v5818 = vand.u32 %v3126, 4294901760
  %v5819 = vsub.f32 %v3126, %v5818
  %v5820 = vand.u32 %v5819, 4294901760
  %v5821 = vsub.f32 %v5819, %v5820
  %v5822 = vand.u32 %v5821, 4294901760
  %5823 = vmatpush1.msra.mxu0 %v5822
  %5824 = vmatprep.subr.mxu0 0.0
  %v5825 = vand.u32 %v3127, 4294901760
  %v5826 = vsub.f32 %v3127, %v5825
  %v5827 = vand.u32 %v5826, 4294901760
  %v5828 = vsub.f32 %v5826, %v5827
  %v5829 = vand.u32 %v5828, 4294901760
  %5830 = vmatpush1.msra.mxu0 %v5829
  %5831 = vmatprep.subr.mxu0 0.0
  %v5832 = vand.u32 %v3128, 4294901760
  %v5833 = vsub.f32 %v3128, %v5832
  %v5834 = vand.u32 %v5833, 4294901760
  %v5835 = vsub.f32 %v5833, %v5834
  %v5836 = vand.u32 %v5835, 4294901760
  %5837 = vmatpush1.msra.mxu0 %v5836
  %5838 = vmatprep.subr.mxu0 0.0
  %5839 = vmatpush1.msra.mxu0 0.0
  %5840 = vmatprep.subr.mxu0 0.0
  %5841 = vmatpush1.msra.mxu0 0.0
  %5842 = vmatprep.subr.mxu0 0.0
  %5843 = vmatpush1.msra.mxu0 0.0
  %5844 = vmatprep.subr.mxu0 0.0
  %5845 = vmatpush1.msra.mxu0 0.0
  %5846 = vmatprep.subr.mxu0 0.0
  %5847 = vmatpush1.msra.mxu0 0.0
  %5848 = vmatprep.subr.mxu0 0.0
  %5849 = vmatpush1.msra.mxu0 0.0
  %5850 = vmatprep.subr.mxu0 0.0
  %5851 = vmatpush1.msra.mxu0 0.0
  %5852 = vmatprep.subr.mxu0 0.0
  %5853 = vmatpush1.msra.mxu0 0.0
  %5854 = vmatprep.subr.mxu0 0.0
  %5855 = vmatpush1.msra.mxu0 0.0
  %5856 = vmatprep.subr.mxu0 0.0
  %5857 = vmatpush1.msra.mxu0 0.0
  %5858 = vmatprep.subr.mxu0 0.0
  %5859 = vmatpush1.msra.mxu0 0.0
  %5860 = vmatprep.subr.mxu0 0.0
  %5861 = vmatpush1.msra.mxu0 0.0
  %5862 = vmatprep.subr.mxu0 0.0
  %5863 = vmatpush1.msra.mxu0 0.0
  %5864 = vmatprep.subr.mxu0 0.0
  %5865 = vmatpush1.msra.mxu0 0.0
  %5866 = vmatprep.subr.mxu0 0.0
  %5867 = vmatpush1.msra.mxu0 0.0
  %5868 = vmatprep.subr.mxu0 0.0
  %5869 = vmatpush1.msra.mxu0 0.0
  %5870 = vmatprep.subr.mxu0 0.0
  %5871 = vmatpush1.msra.mxu0 0.0
  %5872 = vmatprep.subr.mxu0 0.0
  %5873 = vmatpush1.msra.mxu0 0.0
  %5874 = vmatprep.subr.mxu0 0.0
  %5875 = vmatpush1.msra.mxu0 0.0
  %5876 = vmatprep.subr.mxu0 0.0
  %5877 = vmatpush1.msra.mxu0 0.0
  %5878 = vmatprep.subr.mxu0 0.0
  %5879 = vmatpush1.msra.mxu0 0.0
  %5880 = vmatprep.subr.mxu0 0.0
  %5881 = vmatpush1.msra.mxu0 0.0
  %5882 = vmatprep.subr.mxu0 0.0
  %5883 = vmatpush1.msra.mxu0 0.0
  %5884 = vmatprep.subr.mxu0 0.0
  %5885 = vmatpush1.msra.mxu0 0.0
  %5886 = vmatprep.subr.mxu0 0.0
  %5887 = vmatpush1.msra.mxu0 0.0
  %5888 = vmatprep.subr.mxu0 0.0
  %5889 = vmatpush1.msra.mxu0 0.0
  %5890 = vmatprep.subr.mxu0 0.0
  %5891 = vmatpush1.msra.mxu0 0.0
  %5892 = vmatprep.subr.mxu0 0.0
  %5893 = vmatpush1.msra.mxu0 0.0
  %5894 = vmatprep.mubr.f32.mxu0 0.0
  %v5895 = vand.u32 %v5729, 4294901760
  %5896 = vmatmul.mubr.f32.gmra.mrb[0].mxu0 %v5895
  %v5897 = vpop.f32.mrb[0].mxu0
  %v5898 = vadd.f32 %v5807, %v5897
  %v5899 = vpop.f32.mrb[0].mxu0
  %5900 = vdwg.mxu0
  %5901 = vmatprep.subr.mxu0 0.0
  %v5902 = vand.u32 %v3125, 4294901760
  %v5903 = vsub.f32 %v3125, %v5902
  %5904 = vmatpush1.msra.mxu0 %v5903
  %5905 = vmatprep.subr.mxu0 0.0
  %v5906 = vand.u32 %v3126, 4294901760
  %v5907 = vsub.f32 %v3126, %v5906
  %5908 = vmatpush1.msra.mxu0 %v5907
  %5909 = vmatprep.subr.mxu0 0.0
  %v5910 = vand.u32 %v3127, 4294901760
  %v5911 = vsub.f32 %v3127, %v5910
  %5912 = vmatpush1.msra.mxu0 %v5911
  %5913 = vmatprep.subr.mxu0 0.0
  %v5914 = vand.u32 %v3128, 4294901760
  %v5915 = vsub.f32 %v3128, %v5914
  %5916 = vmatpush1.msra.mxu0 %v5915
  %5917 = vmatprep.subr.mxu0 0.0
  %5918 = vmatpush1.msra.mxu0 0.0
  %5919 = vmatprep.subr.mxu0 0.0
  %5920 = vmatpush1.msra.mxu0 0.0
  %5921 = vmatprep.subr.mxu0 0.0
  %5922 = vmatpush1.msra.mxu0 0.0
  %5923 = vmatprep.subr.mxu0 0.0
  %5924 = vmatpush1.msra.mxu0 0.0
  %5925 = vmatprep.subr.mxu0 0.0
  %5926 = vmatpush1.msra.mxu0 0.0
  %5927 = vmatprep.subr.mxu0 0.0
  %5928 = vmatpush1.msra.mxu0 0.0
  %5929 = vmatprep.subr.mxu0 0.0
  %5930 = vmatpush1.msra.mxu0 0.0
  %5931 = vmatprep.subr.mxu0 0.0
  %5932 = vmatpush1.msra.mxu0 0.0
  %5933 = vmatprep.subr.mxu0 0.0
  %5934 = vmatpush1.msra.mxu0 0.0
  %5935 = vmatprep.subr.mxu0 0.0
  %5936 = vmatpush1.msra.mxu0 0.0
  %5937 = vmatprep.subr.mxu0 0.0
  %5938 = vmatpush1.msra.mxu0 0.0
  %5939 = vmatprep.subr.mxu0 0.0
  %5940 = vmatpush1.msra.mxu0 0.0
  %5941 = vmatprep.subr.mxu0 0.0
  %5942 = vmatpush1.msra.mxu0 0.0
  %5943 = vmatprep.subr.mxu0 0.0
  %5944 = vmatpush1.msra.mxu0 0.0
  %5945 = vmatprep.subr.mxu0 0.0
  %5946 = vmatpush1.msra.mxu0 0.0
  %5947 = vmatprep.subr.mxu0 0.0
  %5948 = vmatpush1.msra.mxu0 0.0
  %5949 = vmatprep.subr.mxu0 0.0
  %5950 = vmatpush1.msra.mxu0 0.0
  %5951 = vmatprep.subr.mxu0 0.0
  %5952 = vmatpush1.msra.mxu0 0.0
  %5953 = vmatprep.subr.mxu0 0.0
  %5954 = vmatpush1.msra.mxu0 0.0
  %5955 = vmatprep.subr.mxu0 0.0
  %5956 = vmatpush1.msra.mxu0 0.0
  %5957 = vmatprep.subr.mxu0 0.0
  %5958 = vmatpush1.msra.mxu0 0.0
  %5959 = vmatprep.subr.mxu0 0.0
  %5960 = vmatpush1.msra.mxu0 0.0
  %5961 = vmatprep.subr.mxu0 0.0
  %5962 = vmatpush1.msra.mxu0 0.0
  %5963 = vmatprep.subr.mxu0 0.0
  %5964 = vmatpush1.msra.mxu0 0.0
  %5965 = vmatprep.subr.mxu0 0.0
  %5966 = vmatpush1.msra.mxu0 0.0
  %5967 = vmatprep.subr.mxu0 0.0
  %5968 = vmatpush1.msra.mxu0 0.0
  %5969 = vmatprep.subr.mxu0 0.0
  %5970 = vmatpush1.msra.mxu0 0.0
  %5971 = vmatprep.subr.mxu0 0.0
  %5972 = vmatpush1.msra.mxu0 0.0
  %5973 = vmatprep.mubr.f32.mxu0 0.0
  %v5974 = vand.u32 %v5729, 4294901760
  %v5975 = vsub.f32 %v5729, %v5974
  %5976 = vmatmul.mubr.f32.gmra.mrb[0].mxu0 %v5975
  %v5977 = vpop.f32.mrb[0].mxu0
  %v5978 = vadd.f32 %v5898, %v5977
  %v5979 = vpop.f32.mrb[0].mxu0
  %5980 = vdwg.mxu0
  %5981 = vmatprep.subr.mxu0 0.0
  %v5982 = vand.u32 %v3125, 4294901760
  %5983 = vmatpush1.msra.mxu0 %v5982
  %5984 = vmatprep.subr.mxu0 0.0
  %v5985 = vand.u32 %v3126, 4294901760
  %5986 = vmatpush1.msra.mxu0 %v5985
  %5987 = vmatprep.subr.mxu0 0.0
  %v5988 = vand.u32 %v3127, 4294901760
  %5989 = vmatpush1.msra.mxu0 %v5988
  %5990 = vmatprep.subr.mxu0 0.0
  %v5991 = vand.u32 %v3128, 4294901760
  %5992 = vmatpush1.msra.mxu0 %v5991
  %5993 = vmatprep.subr.mxu0 0.0
  %5994 = vmatpush1.msra.mxu0 0.0
  %5995 = vmatprep.subr.mxu0 0.0
  %5996 = vmatpush1.msra.mxu0 0.0
  %5997 = vmatprep.subr.mxu0 0.0
  %5998 = vmatpush1.msra.mxu0 0.0
  %5999 = vmatprep.subr.mxu0 0.0
  %6000 = vmatpush1.msra.mxu0 0.0
  %6001 = vmatprep.subr.mxu0 0.0
  %6002 = vmatpush1.msra.mxu0 0.0
  %6003 = vmatprep.subr.mxu0 0.0
  %6004 = vmatpush1.msra.mxu0 0.0
  %6005 = vmatprep.subr.mxu0 0.0
  %6006 = vmatpush1.msra.mxu0 0.0
  %6007 = vmatprep.subr.mxu0 0.0
  %6008 = vmatpush1.msra.mxu0 0.0
  %6009 = vmatprep.subr.mxu0 0.0
  %6010 = vmatpush1.msra.mxu0 0.0
  %6011 = vmatprep.subr.mxu0 0.0
  %6012 = vmatpush1.msra.mxu0 0.0
  %6013 = vmatprep.subr.mxu0 0.0
  %6014 = vmatpush1.msra.mxu0 0.0
  %6015 = vmatprep.subr.mxu0 0.0
  %6016 = vmatpush1.msra.mxu0 0.0
  %6017 = vmatprep.subr.mxu0 0.0
  %6018 = vmatpush1.msra.mxu0 0.0
  %6019 = vmatprep.subr.mxu0 0.0
  %6020 = vmatpush1.msra.mxu0 0.0
  %6021 = vmatprep.subr.mxu0 0.0
  %6022 = vmatpush1.msra.mxu0 0.0
  %6023 = vmatprep.subr.mxu0 0.0
  %6024 = vmatpush1.msra.mxu0 0.0
  %6025 = vmatprep.subr.mxu0 0.0
  %6026 = vmatpush1.msra.mxu0 0.0
  %6027 = vmatprep.subr.mxu0 0.0
  %6028 = vmatpush1.msra.mxu0 0.0
  %6029 = vmatprep.subr.mxu0 0.0
  %6030 = vmatpush1.msra.mxu0 0.0
  %6031 = vmatprep.subr.mxu0 0.0
  %6032 = vmatpush1.msra.mxu0 0.0
  %6033 = vmatprep.subr.mxu0 0.0
  %6034 = vmatpush1.msra.mxu0 0.0
  %6035 = vmatprep.subr.mxu0 0.0
  %6036 = vmatpush1.msra.mxu0 0.0
  %6037 = vmatprep.subr.mxu0 0.0
  %6038 = vmatpush1.msra.mxu0 0.0
  %6039 = vmatprep.subr.mxu0 0.0
  %6040 = vmatpush1.msra.mxu0 0.0
  %6041 = vmatprep.subr.mxu0 0.0
  %6042 = vmatpush1.msra.mxu0 0.0
  %6043 = vmatprep.subr.mxu0 0.0
  %6044 = vmatpush1.msra.mxu0 0.0
  %6045 = vmatprep.subr.mxu0 0.0
  %6046 = vmatpush1.msra.mxu0 0.0
  %6047 = vmatprep.subr.mxu0 0.0
  %6048 = vmatpush1.msra.mxu0 0.0
  %6049 = vmatprep.mubr.f32.mxu0 0.0
  %v6050 = vand.u32 %v5729, 4294901760
  %v6051 = vsub.f32 %v5729, %v6050
  %v6052 = vand.u32 %v6051, 4294901760
  %6053 = vmatmul.mubr.f32.gmra.mrb[0].mxu0 %v6052
  %v6054 = vpop.f32.mrb[0].mxu0
  %v6055 = vadd.f32 %v5978, %v6054
  %v6056 = vpop.f32.mrb[0].mxu0
  %6057 = vdwg.mxu0
  %6058 = vmatprep.subr.mxu0 0.0
  %v6059 = vand.u32 %v3125, 4294901760
  %v6060 = vsub.f32 %v3125, %v6059
  %v6061 = vand.u32 %v6060, 4294901760
  %6062 = vmatpush1.msra.mxu0 %v6061
  %6063 = vmatprep.subr.mxu0 0.0
  %v6064 = vand.u32 %v3126, 4294901760
  %v6065 = vsub.f32 %v3126, %v6064
  %v6066 = vand.u32 %v6065, 4294901760
  %6067 = vmatpush1.msra.mxu0 %v6066
  %6068 = vmatprep.subr.mxu0 0.0
  %v6069 = vand.u32 %v3127, 4294901760
  %v6070 = vsub.f32 %v3127, %v6069
  %v6071 = vand.u32 %v6070, 4294901760
  %6072 = vmatpush1.msra.mxu0 %v6071
  %6073 = vmatprep.subr.mxu0 0.0
  %v6074 = vand.u32 %v3128, 4294901760
  %v6075 = vsub.f32 %v3128, %v6074
  %v6076 = vand.u32 %v6075, 4294901760
  %6077 = vmatpush1.msra.mxu0 %v6076
  %6078 = vmatprep.subr.mxu0 0.0
  %6079 = vmatpush1.msra.mxu0 0.0
  %6080 = vmatprep.subr.mxu0 0.0
  %6081 = vmatpush1.msra.mxu0 0.0
  %6082 = vmatprep.subr.mxu0 0.0
  %6083 = vmatpush1.msra.mxu0 0.0
  %6084 = vmatprep.subr.mxu0 0.0
  %6085 = vmatpush1.msra.mxu0 0.0
  %6086 = vmatprep.subr.mxu0 0.0
  %6087 = vmatpush1.msra.mxu0 0.0
  %6088 = vmatprep.subr.mxu0 0.0
  %6089 = vmatpush1.msra.mxu0 0.0
  %6090 = vmatprep.subr.mxu0 0.0
  %6091 = vmatpush1.msra.mxu0 0.0
  %6092 = vmatprep.subr.mxu0 0.0
  %6093 = vmatpush1.msra.mxu0 0.0
  %6094 = vmatprep.subr.mxu0 0.0
  %6095 = vmatpush1.msra.mxu0 0.0
  %6096 = vmatprep.subr.mxu0 0.0
  %6097 = vmatpush1.msra.mxu0 0.0
  %6098 = vmatprep.subr.mxu0 0.0
  %6099 = vmatpush1.msra.mxu0 0.0
  %6100 = vmatprep.subr.mxu0 0.0
  %6101 = vmatpush1.msra.mxu0 0.0
  %6102 = vmatprep.subr.mxu0 0.0
  %6103 = vmatpush1.msra.mxu0 0.0
  %6104 = vmatprep.subr.mxu0 0.0
  %6105 = vmatpush1.msra.mxu0 0.0
  %6106 = vmatprep.subr.mxu0 0.0
  %6107 = vmatpush1.msra.mxu0 0.0
  %6108 = vmatprep.subr.mxu0 0.0
  %6109 = vmatpush1.msra.mxu0 0.0
  %6110 = vmatprep.subr.mxu0 0.0
  %6111 = vmatpush1.msra.mxu0 0.0
  %6112 = vmatprep.subr.mxu0 0.0
  %6113 = vmatpush1.msra.mxu0 0.0
  %6114 = vmatprep.subr.mxu0 0.0
  %6115 = vmatpush1.msra.mxu0 0.0
  %6116 = vmatprep.subr.mxu0 0.0
  %6117 = vmatpush1.msra.mxu0 0.0
  %6118 = vmatprep.subr.mxu0 0.0
  %6119 = vmatpush1.msra.mxu0 0.0
  %6120 = vmatprep.subr.mxu0 0.0
  %6121 = vmatpush1.msra.mxu0 0.0
  %6122 = vmatprep.subr.mxu0 0.0
  %6123 = vmatpush1.msra.mxu0 0.0
  %6124 = vmatprep.subr.mxu0 0.0
  %6125 = vmatpush1.msra.mxu0 0.0
  %6126 = vmatprep.subr.mxu0 0.0
  %6127 = vmatpush1.msra.mxu0 0.0
  %6128 = vmatprep.subr.mxu0 0.0
  %6129 = vmatpush1.msra.mxu0 0.0
  %6130 = vmatprep.subr.mxu0 0.0
  %6131 = vmatpush1.msra.mxu0 0.0
  %6132 = vmatprep.subr.mxu0 0.0
  %6133 = vmatpush1.msra.mxu0 0.0
  %6134 = vmatprep.mubr.f32.mxu0 0.0
  %v6135 = vand.u32 %v5729, 4294901760
  %6136 = vmatmul.mubr.f32.gmra.mrb[0].mxu0 %v6135
  %v6137 = vpop.f32.mrb[0].mxu0
  %v6138 = vadd.f32 %v6055, %v6137
  %v6139 = vpop.f32.mrb[0].mxu0
  %6140 = vdwg.mxu0
  %6141 = vmatprep.subr.mxu0 0.0
  %v6142 = vand.u32 %v3125, 4294901760
  %6143 = vmatpush1.msra.mxu0 %v6142
  %6144 = vmatprep.subr.mxu0 0.0
  %v6145 = vand.u32 %v3126, 4294901760
  %6146 = vmatpush1.msra.mxu0 %v6145
  %6147 = vmatprep.subr.mxu0 0.0
  %v6148 = vand.u32 %v3127, 4294901760
  %6149 = vmatpush1.msra.mxu0 %v6148
  %6150 = vmatprep.subr.mxu0 0.0
  %v6151 = vand.u32 %v3128, 4294901760
  %6152 = vmatpush1.msra.mxu0 %v6151
  %6153 = vmatprep.subr.mxu0 0.0
  %6154 = vmatpush1.msra.mxu0 0.0
  %6155 = vmatprep.subr.mxu0 0.0
  %6156 = vmatpush1.msra.mxu0 0.0
  %6157 = vmatprep.subr.mxu0 0.0
  %6158 = vmatpush1.msra.mxu0 0.0
  %6159 = vmatprep.subr.mxu0 0.0
  %6160 = vmatpush1.msra.mxu0 0.0
  %6161 = vmatprep.subr.mxu0 0.0
  %6162 = vmatpush1.msra.mxu0 0.0
  %6163 = vmatprep.subr.mxu0 0.0
  %6164 = vmatpush1.msra.mxu0 0.0
  %6165 = vmatprep.subr.mxu0 0.0
  %6166 = vmatpush1.msra.mxu0 0.0
  %6167 = vmatprep.subr.mxu0 0.0
  %6168 = vmatpush1.msra.mxu0 0.0
  %6169 = vmatprep.subr.mxu0 0.0
  %6170 = vmatpush1.msra.mxu0 0.0
  %6171 = vmatprep.subr.mxu0 0.0
  %6172 = vmatpush1.msra.mxu0 0.0
  %6173 = vmatprep.subr.mxu0 0.0
  %6174 = vmatpush1.msra.mxu0 0.0
  %6175 = vmatprep.subr.mxu0 0.0
  %6176 = vmatpush1.msra.mxu0 0.0
  %6177 = vmatprep.subr.mxu0 0.0
  %6178 = vmatpush1.msra.mxu0 0.0
  %6179 = vmatprep.subr.mxu0 0.0
  %6180 = vmatpush1.msra.mxu0 0.0
  %6181 = vmatprep.subr.mxu0 0.0
  %6182 = vmatpush1.msra.mxu0 0.0
  %6183 = vmatprep.subr.mxu0 0.0
  %6184 = vmatpush1.msra.mxu0 0.0
  %6185 = vmatprep.subr.mxu0 0.0
  %6186 = vmatpush1.msra.mxu0 0.0
  %6187 = vmatprep.subr.mxu0 0.0
  %6188 = vmatpush1.msra.mxu0 0.0
  %6189 = vmatprep.subr.mxu0 0.0
  %6190 = vmatpush1.msra.mxu0 0.0
  %6191 = vmatprep.subr.mxu0 0.0
  %6192 = vmatpush1.msra.mxu0 0.0
  %6193 = vmatprep.subr.mxu0 0.0
  %6194 = vmatpush1.msra.mxu0 0.0
  %6195 = vmatprep.subr.mxu0 0.0
  %6196 = vmatpush1.msra.mxu0 0.0
  %6197 = vmatprep.subr.mxu0 0.0
  %6198 = vmatpush1.msra.mxu0 0.0
  %6199 = vmatprep.subr.mxu0 0.0
  %6200 = vmatpush1.msra.mxu0 0.0
  %6201 = vmatprep.subr.mxu0 0.0
  %6202 = vmatpush1.msra.mxu0 0.0
  %6203 = vmatprep.subr.mxu0 0.0
  %6204 = vmatpush1.msra.mxu0 0.0
  %6205 = vmatprep.subr.mxu0 0.0
  %6206 = vmatpush1.msra.mxu0 0.0
  %6207 = vmatprep.subr.mxu0 0.0
  %6208 = vmatpush1.msra.mxu0 0.0
  %6209 = vmatprep.mubr.f32.mxu0 0.0
  %v6210 = vand.u32 %v5729, 4294901760
  %6211 = vmatmul.mubr.f32.gmra.mrb[0].mxu0 %v6210
  %v6212 = vpop.f32.mrb[0].mxu0
  %v6213 = vadd.f32 %v6138, %v6212
  %v6214 = vpop.f32.mrb[0].mxu0
  %6215 = vdwg.mxu0
  %v6216 = vadd.f32 %v3123, %v6213
  %v6217 = vxor.u32 %v6216, 2147483648
  %v6218 = vmul.f32 %v6217, 1.442695
  %v6219 = vpow.pop %v6218
  %v6220 = vadd.f32 %v6219, 1.0
  %v6221 = vrcp.pop %v6220
  %v6222 = vmul.f32 1.0, %v6221
  %v6223 = vtanh.pop %v6216
  %v6224 = vmul.f32 %v6222, %v5719
  %6226 = vrot.lane.b32.xlu0 %v6223, 32
  %v6227 = vpop.permute.xlu0 %6226
  %v6229 = vmul.f32 %v6222, %v6227
  %6231 = vrot.lane.b32.xlu0 %v6229, 32
  %v6232 = vpop.permute.xlu0 %6231
  %v6234 = vadd.f32 %v6224, %v6232
  %v6235 = vtanh.pop %v6234
  %6237 = vrot.lane.b32.xlu0 %v6235, 32
  %v6238 = vpop.permute.xlu0 %6237
  %v6240 = vmul.f32 %v6222, %v6238
  %6242 = vrot.lane.b32.xlu0 %v6240, 64
  %v6243 = vpop.permute.xlu0 %6242
  %v6244 = vsel %vm2241, %v6243, 0
  %6246 = vmatprep.subr.mxu0 0.0
  %v6247 = vand.u32 %v3125, 4294901760
  %6248 = vmatpush1.msra.mxu0 %v6247
  %6249 = vmatprep.subr.mxu0 0.0
  %v6250 = vand.u32 %v3126, 4294901760
  %6251 = vmatpush1.msra.mxu0 %v6250
  %6252 = vmatprep.subr.mxu0 0.0
  %v6253 = vand.u32 %v3127, 4294901760
  %6254 = vmatpush1.msra.mxu0 %v6253
  %6255 = vmatprep.subr.mxu0 0.0
  %v6256 = vand.u32 %v3128, 4294901760
  %6257 = vmatpush1.msra.mxu0 %v6256
  %6258 = vmatprep.subr.mxu0 0.0
  %6259 = vmatpush1.msra.mxu0 0.0
  %6260 = vmatprep.subr.mxu0 0.0
  %6261 = vmatpush1.msra.mxu0 0.0
  %6262 = vmatprep.subr.mxu0 0.0
  %6263 = vmatpush1.msra.mxu0 0.0
  %6264 = vmatprep.subr.mxu0 0.0
  %6265 = vmatpush1.msra.mxu0 0.0
  %6266 = vmatprep.subr.mxu0 0.0
  %6267 = vmatpush1.msra.mxu0 0.0
  %6268 = vmatprep.subr.mxu0 0.0
  %6269 = vmatpush1.msra.mxu0 0.0
  %6270 = vmatprep.subr.mxu0 0.0
  %6271 = vmatpush1.msra.mxu0 0.0
  %6272 = vmatprep.subr.mxu0 0.0
  %6273 = vmatpush1.msra.mxu0 0.0
  %6274 = vmatprep.subr.mxu0 0.0
  %6275 = vmatpush1.msra.mxu0 0.0
  %6276 = vmatprep.subr.mxu0 0.0
  %6277 = vmatpush1.msra.mxu0 0.0
  %6278 = vmatprep.subr.mxu0 0.0
  %6279 = vmatpush1.msra.mxu0 0.0
  %6280 = vmatprep.subr.mxu0 0.0
  %6281 = vmatpush1.msra.mxu0 0.0
  %6282 = vmatprep.subr.mxu0 0.0
  %6283 = vmatpush1.msra.mxu0 0.0
  %6284 = vmatprep.subr.mxu0 0.0
  %6285 = vmatpush1.msra.mxu0 0.0
  %6286 = vmatprep.subr.mxu0 0.0
  %6287 = vmatpush1.msra.mxu0 0.0
  %6288 = vmatprep.subr.mxu0 0.0
  %6289 = vmatpush1.msra.mxu0 0.0
  %6290 = vmatprep.subr.mxu0 0.0
  %6291 = vmatpush1.msra.mxu0 0.0
  %6292 = vmatprep.subr.mxu0 0.0
  %6293 = vmatpush1.msra.mxu0 0.0
  %6294 = vmatprep.subr.mxu0 0.0
  %6295 = vmatpush1.msra.mxu0 0.0
  %6296 = vmatprep.subr.mxu0 0.0
  %6297 = vmatpush1.msra.mxu0 0.0
  %6298 = vmatprep.subr.mxu0 0.0
  %6299 = vmatpush1.msra.mxu0 0.0
  %6300 = vmatprep.subr.mxu0 0.0
  %6301 = vmatpush1.msra.mxu0 0.0
  %6302 = vmatprep.subr.mxu0 0.0
  %6303 = vmatpush1.msra.mxu0 0.0
  %6304 = vmatprep.subr.mxu0 0.0
  %6305 = vmatpush1.msra.mxu0 0.0
  %6306 = vmatprep.subr.mxu0 0.0
  %6307 = vmatpush1.msra.mxu0 0.0
  %6308 = vmatprep.subr.mxu0 0.0
  %6309 = vmatpush1.msra.mxu0 0.0
  %6310 = vmatprep.subr.mxu0 0.0
  %6311 = vmatpush1.msra.mxu0 0.0
  %6312 = vmatprep.subr.mxu0 0.0
  %6313 = vmatpush1.msra.mxu0 0.0
  %6314 = vmatprep.mubr.f32.mxu0 0.0
  %v6315 = vand.u32 %v6244, 4294901760
  %v6316 = vsub.f32 %v6244, %v6315
  %v6317 = vand.u32 %v6316, 4294901760
  %v6318 = vsub.f32 %v6316, %v6317
  %v6319 = vand.u32 %v6318, 4294901760
  %6320 = vmatmul.mubr.f32.gmra.mrb[0].mxu0 %v6319
  %v6321 = vpop.f32.mrb[0].mxu0
  %v6322 = vadd.f32 0.0, %v6321
  %v6323 = vpop.f32.mrb[0].mxu0
  %6324 = vdwg.mxu0
  %6325 = vmatprep.subr.mxu0 0.0
  %v6326 = vand.u32 %v3125, 4294901760
  %v6327 = vsub.f32 %v3125, %v6326
  %v6328 = vand.u32 %v6327, 4294901760
  %v6329 = vsub.f32 %v6327, %v6328
  %v6330 = vand.u32 %v6329, 4294901760
  %6331 = vmatpush1.msra.mxu0 %v6330
  %6332 = vmatprep.subr.mxu0 0.0
  %v6333 = vand.u32 %v3126, 4294901760
  %v6334 = vsub.f32 %v3126, %v6333
  %v6335 = vand.u32 %v6334, 4294901760
  %v6336 = vsub.f32 %v6334, %v6335
  %v6337 = vand.u32 %v6336, 4294901760
  %6338 = vmatpush1.msra.mxu0 %v6337
  %6339 = vmatprep.subr.mxu0 0.0
  %v6340 = vand.u32 %v3127, 4294901760
  %v6341 = vsub.f32 %v3127, %v6340
  %v6342 = vand.u32 %v6341, 4294901760
  %v6343 = vsub.f32 %v6341, %v6342
  %v6344 = vand.u32 %v6343, 4294901760
  %6345 = vmatpush1.msra.mxu0 %v6344
  %6346 = vmatprep.subr.mxu0 0.0
  %v6347 = vand.u32 %v3128, 4294901760
  %v6348 = vsub.f32 %v3128, %v6347
  %v6349 = vand.u32 %v6348, 4294901760
  %v6350 = vsub.f32 %v6348, %v6349
  %v6351 = vand.u32 %v6350, 4294901760
  %6352 = vmatpush1.msra.mxu0 %v6351
  %6353 = vmatprep.subr.mxu0 0.0
  %6354 = vmatpush1.msra.mxu0 0.0
  %6355 = vmatprep.subr.mxu0 0.0
  %6356 = vmatpush1.msra.mxu0 0.0
  %6357 = vmatprep.subr.mxu0 0.0
  %6358 = vmatpush1.msra.mxu0 0.0
  %6359 = vmatprep.subr.mxu0 0.0
  %6360 = vmatpush1.msra.mxu0 0.0
  %6361 = vmatprep.subr.mxu0 0.0
  %6362 = vmatpush1.msra.mxu0 0.0
  %6363 = vmatprep.subr.mxu0 0.0
  %6364 = vmatpush1.msra.mxu0 0.0
  %6365 = vmatprep.subr.mxu0 0.0
  %6366 = vmatpush1.msra.mxu0 0.0
  %6367 = vmatprep.subr.mxu0 0.0
  %6368 = vmatpush1.msra.mxu0 0.0
  %6369 = vmatprep.subr.mxu0 0.0
  %6370 = vmatpush1.msra.mxu0 0.0
  %6371 = vmatprep.subr.mxu0 0.0
  %6372 = vmatpush1.msra.mxu0 0.0
  %6373 = vmatprep.subr.mxu0 0.0
  %6374 = vmatpush1.msra.mxu0 0.0
  %6375 = vmatprep.subr.mxu0 0.0
  %6376 = vmatpush1.msra.mxu0 0.0
  %6377 = vmatprep.subr.mxu0 0.0
  %6378 = vmatpush1.msra.mxu0 0.0
  %6379 = vmatprep.subr.mxu0 0.0
  %6380 = vmatpush1.msra.mxu0 0.0
  %6381 = vmatprep.subr.mxu0 0.0
  %6382 = vmatpush1.msra.mxu0 0.0
  %6383 = vmatprep.subr.mxu0 0.0
  %6384 = vmatpush1.msra.mxu0 0.0
  %6385 = vmatprep.subr.mxu0 0.0
  %6386 = vmatpush1.msra.mxu0 0.0
  %6387 = vmatprep.subr.mxu0 0.0
  %6388 = vmatpush1.msra.mxu0 0.0
  %6389 = vmatprep.subr.mxu0 0.0
  %6390 = vmatpush1.msra.mxu0 0.0
  %6391 = vmatprep.subr.mxu0 0.0
  %6392 = vmatpush1.msra.mxu0 0.0
  %6393 = vmatprep.subr.mxu0 0.0
  %6394 = vmatpush1.msra.mxu0 0.0
  %6395 = vmatprep.subr.mxu0 0.0
  %6396 = vmatpush1.msra.mxu0 0.0
  %6397 = vmatprep.subr.mxu0 0.0
  %6398 = vmatpush1.msra.mxu0 0.0
  %6399 = vmatprep.subr.mxu0 0.0
  %6400 = vmatpush1.msra.mxu0 0.0
  %6401 = vmatprep.subr.mxu0 0.0
  %6402 = vmatpush1.msra.mxu0 0.0
  %6403 = vmatprep.subr.mxu0 0.0
  %6404 = vmatpush1.msra.mxu0 0.0
  %6405 = vmatprep.subr.mxu0 0.0
  %6406 = vmatpush1.msra.mxu0 0.0
  %6407 = vmatprep.subr.mxu0 0.0
  %6408 = vmatpush1.msra.mxu0 0.0
  %6409 = vmatprep.mubr.f32.mxu0 0.0
  %v6410 = vand.u32 %v6244, 4294901760
  %6411 = vmatmul.mubr.f32.gmra.mrb[0].mxu0 %v6410
  %v6412 = vpop.f32.mrb[0].mxu0
  %v6413 = vadd.f32 %v6322, %v6412
  %v6414 = vpop.f32.mrb[0].mxu0
  %6415 = vdwg.mxu0
  %6416 = vmatprep.subr.mxu0 0.0
  %v6417 = vand.u32 %v3125, 4294901760
  %v6418 = vsub.f32 %v3125, %v6417
  %6419 = vmatpush1.msra.mxu0 %v6418
  %6420 = vmatprep.subr.mxu0 0.0
  %v6421 = vand.u32 %v3126, 4294901760
  %v6422 = vsub.f32 %v3126, %v6421
  %6423 = vmatpush1.msra.mxu0 %v6422
  %6424 = vmatprep.subr.mxu0 0.0
  %v6425 = vand.u32 %v3127, 4294901760
  %v6426 = vsub.f32 %v3127, %v6425
  %6427 = vmatpush1.msra.mxu0 %v6426
  %6428 = vmatprep.subr.mxu0 0.0
  %v6429 = vand.u32 %v3128, 4294901760
  %v6430 = vsub.f32 %v3128, %v6429
  %6431 = vmatpush1.msra.mxu0 %v6430
  %6432 = vmatprep.subr.mxu0 0.0
  %6433 = vmatpush1.msra.mxu0 0.0
  %6434 = vmatprep.subr.mxu0 0.0
  %6435 = vmatpush1.msra.mxu0 0.0
  %6436 = vmatprep.subr.mxu0 0.0
  %6437 = vmatpush1.msra.mxu0 0.0
  %6438 = vmatprep.subr.mxu0 0.0
  %6439 = vmatpush1.msra.mxu0 0.0
  %6440 = vmatprep.subr.mxu0 0.0
  %6441 = vmatpush1.msra.mxu0 0.0
  %6442 = vmatprep.subr.mxu0 0.0
  %6443 = vmatpush1.msra.mxu0 0.0
  %6444 = vmatprep.subr.mxu0 0.0
  %6445 = vmatpush1.msra.mxu0 0.0
  %6446 = vmatprep.subr.mxu0 0.0
  %6447 = vmatpush1.msra.mxu0 0.0
  %6448 = vmatprep.subr.mxu0 0.0
  %6449 = vmatpush1.msra.mxu0 0.0
  %6450 = vmatprep.subr.mxu0 0.0
  %6451 = vmatpush1.msra.mxu0 0.0
  %6452 = vmatprep.subr.mxu0 0.0
  %6453 = vmatpush1.msra.mxu0 0.0
  %6454 = vmatprep.subr.mxu0 0.0
  %6455 = vmatpush1.msra.mxu0 0.0
  %6456 = vmatprep.subr.mxu0 0.0
  %6457 = vmatpush1.msra.mxu0 0.0
  %6458 = vmatprep.subr.mxu0 0.0
  %6459 = vmatpush1.msra.mxu0 0.0
  %6460 = vmatprep.subr.mxu0 0.0
  %6461 = vmatpush1.msra.mxu0 0.0
  %6462 = vmatprep.subr.mxu0 0.0
  %6463 = vmatpush1.msra.mxu0 0.0
  %6464 = vmatprep.subr.mxu0 0.0
  %6465 = vmatpush1.msra.mxu0 0.0
  %6466 = vmatprep.subr.mxu0 0.0
  %6467 = vmatpush1.msra.mxu0 0.0
  %6468 = vmatprep.subr.mxu0 0.0
  %6469 = vmatpush1.msra.mxu0 0.0
  %6470 = vmatprep.subr.mxu0 0.0
  %6471 = vmatpush1.msra.mxu0 0.0
  %6472 = vmatprep.subr.mxu0 0.0
  %6473 = vmatpush1.msra.mxu0 0.0
  %6474 = vmatprep.subr.mxu0 0.0
  %6475 = vmatpush1.msra.mxu0 0.0
  %6476 = vmatprep.subr.mxu0 0.0
  %6477 = vmatpush1.msra.mxu0 0.0
  %6478 = vmatprep.subr.mxu0 0.0
  %6479 = vmatpush1.msra.mxu0 0.0
  %6480 = vmatprep.subr.mxu0 0.0
  %6481 = vmatpush1.msra.mxu0 0.0
  %6482 = vmatprep.subr.mxu0 0.0
  %6483 = vmatpush1.msra.mxu0 0.0
  %6484 = vmatprep.subr.mxu0 0.0
  %6485 = vmatpush1.msra.mxu0 0.0
  %6486 = vmatprep.subr.mxu0 0.0
  %6487 = vmatpush1.msra.mxu0 0.0
  %6488 = vmatprep.mubr.f32.mxu0 0.0
  %v6489 = vand.u32 %v6244, 4294901760
  %v6490 = vsub.f32 %v6244, %v6489
  %6491 = vmatmul.mubr.f32.gmra.mrb[0].mxu0 %v6490
  %v6492 = vpop.f32.mrb[0].mxu0
  %v6493 = vadd.f32 %v6413, %v6492
  %v6494 = vpop.f32.mrb[0].mxu0
  %6495 = vdwg.mxu0
  %6496 = vmatprep.subr.mxu0 0.0
  %v6497 = vand.u32 %v3125, 4294901760
  %6498 = vmatpush1.msra.mxu0 %v6497
  %6499 = vmatprep.subr.mxu0 0.0
  %v6500 = vand.u32 %v3126, 4294901760
  %6501 = vmatpush1.msra.mxu0 %v6500
  %6502 = vmatprep.subr.mxu0 0.0
  %v6503 = vand.u32 %v3127, 4294901760
  %6504 = vmatpush1.msra.mxu0 %v6503
  %6505 = vmatprep.subr.mxu0 0.0
  %v6506 = vand.u32 %v3128, 4294901760
  %6507 = vmatpush1.msra.mxu0 %v6506
  %6508 = vmatprep.subr.mxu0 0.0
  %6509 = vmatpush1.msra.mxu0 0.0
  %6510 = vmatprep.subr.mxu0 0.0
  %6511 = vmatpush1.msra.mxu0 0.0
  %6512 = vmatprep.subr.mxu0 0.0
  %6513 = vmatpush1.msra.mxu0 0.0
  %6514 = vmatprep.subr.mxu0 0.0
  %6515 = vmatpush1.msra.mxu0 0.0
  %6516 = vmatprep.subr.mxu0 0.0
  %6517 = vmatpush1.msra.mxu0 0.0
  %6518 = vmatprep.subr.mxu0 0.0
  %6519 = vmatpush1.msra.mxu0 0.0
  %6520 = vmatprep.subr.mxu0 0.0
  %6521 = vmatpush1.msra.mxu0 0.0
  %6522 = vmatprep.subr.mxu0 0.0
  %6523 = vmatpush1.msra.mxu0 0.0
  %6524 = vmatprep.subr.mxu0 0.0
  %6525 = vmatpush1.msra.mxu0 0.0
  %6526 = vmatprep.subr.mxu0 0.0
  %6527 = vmatpush1.msra.mxu0 0.0
  %6528 = vmatprep.subr.mxu0 0.0
  %6529 = vmatpush1.msra.mxu0 0.0
  %6530 = vmatprep.subr.mxu0 0.0
  %6531 = vmatpush1.msra.mxu0 0.0
  %6532 = vmatprep.subr.mxu0 0.0
  %6533 = vmatpush1.msra.mxu0 0.0
  %6534 = vmatprep.subr.mxu0 0.0
  %6535 = vmatpush1.msra.mxu0 0.0
  %6536 = vmatprep.subr.mxu0 0.0
  %6537 = vmatpush1.msra.mxu0 0.0
  %6538 = vmatprep.subr.mxu0 0.0
  %6539 = vmatpush1.msra.mxu0 0.0
  %6540 = vmatprep.subr.mxu0 0.0
  %6541 = vmatpush1.msra.mxu0 0.0
  %6542 = vmatprep.subr.mxu0 0.0
  %6543 = vmatpush1.msra.mxu0 0.0
  %6544 = vmatprep.subr.mxu0 0.0
  %6545 = vmatpush1.msra.mxu0 0.0
  %6546 = vmatprep.subr.mxu0 0.0
  %6547 = vmatpush1.msra.mxu0 0.0
  %6548 = vmatprep.subr.mxu0 0.0
  %6549 = vmatpush1.msra.mxu0 0.0
  %6550 = vmatprep.subr.mxu0 0.0
  %6551 = vmatpush1.msra.mxu0 0.0
  %6552 = vmatprep.subr.mxu0 0.0
  %6553 = vmatpush1.msra.mxu0 0.0
  %6554 = vmatprep.subr.mxu0 0.0
  %6555 = vmatpush1.msra.mxu0 0.0
  %6556 = vmatprep.subr.mxu0 0.0
  %6557 = vmatpush1.msra.mxu0 0.0
  %6558 = vmatprep.subr.mxu0 0.0
  %6559 = vmatpush1.msra.mxu0 0.0
  %6560 = vmatprep.subr.mxu0 0.0
  %6561 = vmatpush1.msra.mxu0 0.0
  %6562 = vmatprep.subr.mxu0 0.0
  %6563 = vmatpush1.msra.mxu0 0.0
  %6564 = vmatprep.mubr.f32.mxu0 0.0
  %v6565 = vand.u32 %v6244, 4294901760
  %v6566 = vsub.f32 %v6244, %v6565
  %v6567 = vand.u32 %v6566, 4294901760
  %6568 = vmatmul.mubr.f32.gmra.mrb[0].mxu0 %v6567
  %v6569 = vpop.f32.mrb[0].mxu0
  %v6570 = vadd.f32 %v6493, %v6569
  %v6571 = vpop.f32.mrb[0].mxu0
  %6572 = vdwg.mxu0
  %6573 = vmatprep.subr.mxu0 0.0
  %v6574 = vand.u32 %v3125, 4294901760
  %v6575 = vsub.f32 %v3125, %v6574
  %v6576 = vand.u32 %v6575, 4294901760
  %6577 = vmatpush1.msra.mxu0 %v6576
  %6578 = vmatprep.subr.mxu0 0.0
  %v6579 = vand.u32 %v3126, 4294901760
  %v6580 = vsub.f32 %v3126, %v6579
  %v6581 = vand.u32 %v6580, 4294901760
  %6582 = vmatpush1.msra.mxu0 %v6581
  %6583 = vmatprep.subr.mxu0 0.0
  %v6584 = vand.u32 %v3127, 4294901760
  %v6585 = vsub.f32 %v3127, %v6584
  %v6586 = vand.u32 %v6585, 4294901760
  %6587 = vmatpush1.msra.mxu0 %v6586
  %6588 = vmatprep.subr.mxu0 0.0
  %v6589 = vand.u32 %v3128, 4294901760
  %v6590 = vsub.f32 %v3128, %v6589
  %v6591 = vand.u32 %v6590, 4294901760
  %6592 = vmatpush1.msra.mxu0 %v6591
  %6593 = vmatprep.subr.mxu0 0.0
  %6594 = vmatpush1.msra.mxu0 0.0
  %6595 = vmatprep.subr.mxu0 0.0
  %6596 = vmatpush1.msra.mxu0 0.0
  %6597 = vmatprep.subr.mxu0 0.0
  %6598 = vmatpush1.msra.mxu0 0.0
  %6599 = vmatprep.subr.mxu0 0.0
  %6600 = vmatpush1.msra.mxu0 0.0
  %6601 = vmatprep.subr.mxu0 0.0
  %6602 = vmatpush1.msra.mxu0 0.0
  %6603 = vmatprep.subr.mxu0 0.0
  %6604 = vmatpush1.msra.mxu0 0.0
  %6605 = vmatprep.subr.mxu0 0.0
  %6606 = vmatpush1.msra.mxu0 0.0
  %6607 = vmatprep.subr.mxu0 0.0
  %6608 = vmatpush1.msra.mxu0 0.0
  %6609 = vmatprep.subr.mxu0 0.0
  %6610 = vmatpush1.msra.mxu0 0.0
  %6611 = vmatprep.subr.mxu0 0.0
  %6612 = vmatpush1.msra.mxu0 0.0
  %6613 = vmatprep.subr.mxu0 0.0
  %6614 = vmatpush1.msra.mxu0 0.0
  %6615 = vmatprep.subr.mxu0 0.0
  %6616 = vmatpush1.msra.mxu0 0.0
  %6617 = vmatprep.subr.mxu0 0.0
  %6618 = vmatpush1.msra.mxu0 0.0
  %6619 = vmatprep.subr.mxu0 0.0
  %6620 = vmatpush1.msra.mxu0 0.0
  %6621 = vmatprep.subr.mxu0 0.0
  %6622 = vmatpush1.msra.mxu0 0.0
  %6623 = vmatprep.subr.mxu0 0.0
  %6624 = vmatpush1.msra.mxu0 0.0
  %6625 = vmatprep.subr.mxu0 0.0
  %6626 = vmatpush1.msra.mxu0 0.0
  %6627 = vmatprep.subr.mxu0 0.0
  %6628 = vmatpush1.msra.mxu0 0.0
  %6629 = vmatprep.subr.mxu0 0.0
  %6630 = vmatpush1.msra.mxu0 0.0
  %6631 = vmatprep.subr.mxu0 0.0
  %6632 = vmatpush1.msra.mxu0 0.0
  %6633 = vmatprep.subr.mxu0 0.0
  %6634 = vmatpush1.msra.mxu0 0.0
  %6635 = vmatprep.subr.mxu0 0.0
  %6636 = vmatpush1.msra.mxu0 0.0
  %6637 = vmatprep.subr.mxu0 0.0
  %6638 = vmatpush1.msra.mxu0 0.0
  %6639 = vmatprep.subr.mxu0 0.0
  %6640 = vmatpush1.msra.mxu0 0.0
  %6641 = vmatprep.subr.mxu0 0.0
  %6642 = vmatpush1.msra.mxu0 0.0
  %6643 = vmatprep.subr.mxu0 0.0
  %6644 = vmatpush1.msra.mxu0 0.0
  %6645 = vmatprep.subr.mxu0 0.0
  %6646 = vmatpush1.msra.mxu0 0.0
  %6647 = vmatprep.subr.mxu0 0.0
  %6648 = vmatpush1.msra.mxu0 0.0
  %6649 = vmatprep.mubr.f32.mxu0 0.0
  %v6650 = vand.u32 %v6244, 4294901760
  %6651 = vmatmul.mubr.f32.gmra.mrb[0].mxu0 %v6650
  %v6652 = vpop.f32.mrb[0].mxu0
  %v6653 = vadd.f32 %v6570, %v6652
  %v6654 = vpop.f32.mrb[0].mxu0
  %6655 = vdwg.mxu0
  %6656 = vmatprep.subr.mxu0 0.0
  %v6657 = vand.u32 %v3125, 4294901760
  %6658 = vmatpush1.msra.mxu0 %v6657
  %6659 = vmatprep.subr.mxu0 0.0
  %v6660 = vand.u32 %v3126, 4294901760
  %6661 = vmatpush1.msra.mxu0 %v6660
  %6662 = vmatprep.subr.mxu0 0.0
  %v6663 = vand.u32 %v3127, 4294901760
  %6664 = vmatpush1.msra.mxu0 %v6663
  %6665 = vmatprep.subr.mxu0 0.0
  %v6666 = vand.u32 %v3128, 4294901760
  %6667 = vmatpush1.msra.mxu0 %v6666
  %6668 = vmatprep.subr.mxu0 0.0
  %6669 = vmatpush1.msra.mxu0 0.0
  %6670 = vmatprep.subr.mxu0 0.0
  %6671 = vmatpush1.msra.mxu0 0.0
  %6672 = vmatprep.subr.mxu0 0.0
  %6673 = vmatpush1.msra.mxu0 0.0
  %6674 = vmatprep.subr.mxu0 0.0
  %6675 = vmatpush1.msra.mxu0 0.0
  %6676 = vmatprep.subr.mxu0 0.0
  %6677 = vmatpush1.msra.mxu0 0.0
  %6678 = vmatprep.subr.mxu0 0.0
  %6679 = vmatpush1.msra.mxu0 0.0
  %6680 = vmatprep.subr.mxu0 0.0
  %6681 = vmatpush1.msra.mxu0 0.0
  %6682 = vmatprep.subr.mxu0 0.0
  %6683 = vmatpush1.msra.mxu0 0.0
  %6684 = vmatprep.subr.mxu0 0.0
  %6685 = vmatpush1.msra.mxu0 0.0
  %6686 = vmatprep.subr.mxu0 0.0
  %6687 = vmatpush1.msra.mxu0 0.0
  %6688 = vmatprep.subr.mxu0 0.0
  %6689 = vmatpush1.msra.mxu0 0.0
  %6690 = vmatprep.subr.mxu0 0.0
  %6691 = vmatpush1.msra.mxu0 0.0
  %6692 = vmatprep.subr.mxu0 0.0
  %6693 = vmatpush1.msra.mxu0 0.0
  %6694 = vmatprep.subr.mxu0 0.0
  %6695 = vmatpush1.msra.mxu0 0.0
  %6696 = vmatprep.subr.mxu0 0.0
  %6697 = vmatpush1.msra.mxu0 0.0
  %6698 = vmatprep.subr.mxu0 0.0
  %6699 = vmatpush1.msra.mxu0 0.0
  %6700 = vmatprep.subr.mxu0 0.0
  %6701 = vmatpush1.msra.mxu0 0.0
  %6702 = vmatprep.subr.mxu0 0.0
  %6703 = vmatpush1.msra.mxu0 0.0
  %6704 = vmatprep.subr.mxu0 0.0
  %6705 = vmatpush1.msra.mxu0 0.0
  %6706 = vmatprep.subr.mxu0 0.0
  %6707 = vmatpush1.msra.mxu0 0.0
  %6708 = vmatprep.subr.mxu0 0.0
  %6709 = vmatpush1.msra.mxu0 0.0
  %6710 = vmatprep.subr.mxu0 0.0
  %6711 = vmatpush1.msra.mxu0 0.0
  %6712 = vmatprep.subr.mxu0 0.0
  %6713 = vmatpush1.msra.mxu0 0.0
  %6714 = vmatprep.subr.mxu0 0.0
  %6715 = vmatpush1.msra.mxu0 0.0
  %6716 = vmatprep.subr.mxu0 0.0
  %6717 = vmatpush1.msra.mxu0 0.0
  %6718 = vmatprep.subr.mxu0 0.0
  %6719 = vmatpush1.msra.mxu0 0.0
  %6720 = vmatprep.subr.mxu0 0.0
  %6721 = vmatpush1.msra.mxu0 0.0
  %6722 = vmatprep.subr.mxu0 0.0
  %6723 = vmatpush1.msra.mxu0 0.0
  %6724 = vmatprep.mubr.f32.mxu0 0.0
  %v6725 = vand.u32 %v6244, 4294901760
  %6726 = vmatmul.mubr.f32.gmra.mrb[0].mxu0 %v6725
  %v6727 = vpop.f32.mrb[0].mxu0
  %v6728 = vadd.f32 %v6653, %v6727
  %v6729 = vpop.f32.mrb[0].mxu0
  %6730 = vdwg.mxu0
  %v6731 = vadd.f32 %v3124, %v6728
  %v6732 = vxor.u32 %v6731, 2147483648
  %v6733 = vmul.f32 %v6732, 1.442695
  %v6734 = vpow.pop %v6733
  %v6735 = vadd.f32 %v6734, 1.0
  %v6736 = vrcp.pop %v6735
  %v6737 = vmul.f32 1.0, %v6736
  %v6738 = vtanh.pop %v6731
  %v6739 = vmul.f32 %v6737, %v6234
  %6741 = vrot.lane.b32.xlu0 %v6738, 32
  %v6742 = vpop.permute.xlu0 %6741
  %v6744 = vmul.f32 %v6737, %v6742
  %6746 = vrot.lane.b32.xlu0 %v6744, 32
  %v6747 = vpop.permute.xlu0 %6746
  %v6749 = vadd.f32 %v6739, %v6747
  %v6750 = vtanh.pop %v6749
  %6752 = vrot.lane.b32.xlu0 %v6750, 32
  %v6753 = vpop.permute.xlu0 %6752
  %v6755 = vmul.f32 %v6737, %v6753
  %v6756 = vld [vmem:[%s9] sm:$0x1]
  %v6758 = vlaneseq
  %v6759 = vshrl.u32 %v6758, 7
  %v6760 = vsub.s32 0, %v6759
  %v6761 = vrot.slane %v6756, %v6760
  %v6763 = vadd.f32 %v3108, %v6761
  %v6764 = vxor.u32 %v6763, 2147483648
  %v6765 = vmul.f32 %v6764, 1.442695
  %v6766 = vpow.pop %v6765
  %v6767 = vadd.f32 %v6766, 1.0
  %v6768 = vrcp.pop %v6767
  %v6769 = vmul.f32 1.0, %v6768
  %v6770 = vtanh.pop %v6763
  %6772 = vrot.lane.b32.xlu0 %v6770, 32
  %v6773 = vpop.permute.xlu0 %6772
  %v6775 = vmul.f32 %v6769, %v6773
  %v6776 = vtanh.pop %v6775
  %6778 = vrot.lane.b32.xlu0 %v6776, 64
  %v6779 = vpop.permute.xlu0 %6778
  %v6781 = vmul.f32 %v6769, %v6779
  %v6782 = vld [vmem:[%s10] sm:$0xff]
  %v6783 = vld [vmem:[%s10 + $0x8] sm:$0xff]
  %v6784 = vld [vmem:[%s10 + $0x10] sm:$0xff]
  %v6785 = vld [vmem:[%s10 + $0x18] sm:$0xff]
  %v6786 = vld [vmem:[%s10 + $0x20] sm:$0xff]
  %v6787 = vld [vmem:[%s10 + $0x28] sm:$0xff]
  %v6788 = vld [vmem:[%s10 + $0x30] sm:$0xff]
  %v6789 = vld [vmem:[%s10 + $0x38] sm:$0xff]
  %v6790 = vld [vmem:[%s11] sm:$0xff]
  %v6791 = vld [vmem:[%s11 + $0x8] sm:$0xff]
  %v6792 = vld [vmem:[%s11 + $0x10] sm:$0xff]
  %v6793 = vld [vmem:[%s11 + $0x18] sm:$0xff]
  %6795 = vrot.lane.b32.xlu0 %v6755, 64
  %v6796 = vpop.permute.xlu0 %6795
  %v6797 = vsel %vm2241, %v6796, 0
  %6799 = vmatprep.subr.mxu0 0.0
  %v6800 = vand.u32 %v6790, 4294901760
  %6801 = vmatpush1.msra.mxu0 %v6800
  %6802 = vmatprep.subr.mxu0 0.0
  %v6803 = vand.u32 %v6791, 4294901760
  %6804 = vmatpush1.msra.mxu0 %v6803
  %6805 = vmatprep.subr.mxu0 0.0
  %v6806 = vand.u32 %v6792, 4294901760
  %6807 = vmatpush1.msra.mxu0 %v6806
  %6808 = vmatprep.subr.mxu0 0.0
  %v6809 = vand.u32 %v6793, 4294901760
  %6810 = vmatpush1.msra.mxu0 %v6809
  %6811 = vmatprep.subr.mxu0 0.0
  %6812 = vmatpush1.msra.mxu0 0.0
  %6813 = vmatprep.subr.mxu0 0.0
  %6814 = vmatpush1.msra.mxu0 0.0
  %6815 = vmatprep.subr.mxu0 0.0
  %6816 = vmatpush1.msra.mxu0 0.0
  %6817 = vmatprep.subr.mxu0 0.0
  %6818 = vmatpush1.msra.mxu0 0.0
  %6819 = vmatprep.subr.mxu0 0.0
  %6820 = vmatpush1.msra.mxu0 0.0
  %6821 = vmatprep.subr.mxu0 0.0
  %6822 = vmatpush1.msra.mxu0 0.0
  %6823 = vmatprep.subr.mxu0 0.0
  %6824 = vmatpush1.msra.mxu0 0.0
  %6825 = vmatprep.subr.mxu0 0.0
  %6826 = vmatpush1.msra.mxu0 0.0
  %6827 = vmatprep.subr.mxu0 0.0
  %6828 = vmatpush1.msra.mxu0 0.0
  %6829 = vmatprep.subr.mxu0 0.0
  %6830 = vmatpush1.msra.mxu0 0.0
  %6831 = vmatprep.subr.mxu0 0.0
  %6832 = vmatpush1.msra.mxu0 0.0
  %6833 = vmatprep.subr.mxu0 0.0
  %6834 = vmatpush1.msra.mxu0 0.0
  %6835 = vmatprep.subr.mxu0 0.0
  %6836 = vmatpush1.msra.mxu0 0.0
  %6837 = vmatprep.subr.mxu0 0.0
  %6838 = vmatpush1.msra.mxu0 0.0
  %6839 = vmatprep.subr.mxu0 0.0
  %6840 = vmatpush1.msra.mxu0 0.0
  %6841 = vmatprep.subr.mxu0 0.0
  %6842 = vmatpush1.msra.mxu0 0.0
  %6843 = vmatprep.subr.mxu0 0.0
  %6844 = vmatpush1.msra.mxu0 0.0
  %6845 = vmatprep.subr.mxu0 0.0
  %6846 = vmatpush1.msra.mxu0 0.0
  %6847 = vmatprep.subr.mxu0 0.0
  %6848 = vmatpush1.msra.mxu0 0.0
  %6849 = vmatprep.subr.mxu0 0.0
  %6850 = vmatpush1.msra.mxu0 0.0
  %6851 = vmatprep.subr.mxu0 0.0
  %6852 = vmatpush1.msra.mxu0 0.0
  %6853 = vmatprep.subr.mxu0 0.0
  %6854 = vmatpush1.msra.mxu0 0.0
  %6855 = vmatprep.subr.mxu0 0.0
  %6856 = vmatpush1.msra.mxu0 0.0
  %6857 = vmatprep.subr.mxu0 0.0
  %6858 = vmatpush1.msra.mxu0 0.0
  %6859 = vmatprep.subr.mxu0 0.0
  %6860 = vmatpush1.msra.mxu0 0.0
  %6861 = vmatprep.subr.mxu0 0.0
  %6862 = vmatpush1.msra.mxu0 0.0
  %6863 = vmatprep.subr.mxu0 0.0
  %6864 = vmatpush1.msra.mxu0 0.0
  %6865 = vmatprep.subr.mxu0 0.0
  %6866 = vmatpush1.msra.mxu0 0.0
  %6867 = vmatprep.mubr.f32.mxu0 0.0
  %v6868 = vand.u32 %v6797, 4294901760
  %v6869 = vsub.f32 %v6797, %v6868
  %v6870 = vand.u32 %v6869, 4294901760
  %v6871 = vsub.f32 %v6869, %v6870
  %v6872 = vand.u32 %v6871, 4294901760
  %6873 = vmatmul.mubr.f32.gmra.mrb[0].mxu0 %v6872
  %v6874 = vpop.f32.mrb[0].mxu0
  %v6875 = vadd.f32 0.0, %v6874
  %v6876 = vpop.f32.mrb[0].mxu0
  %6877 = vdwg.mxu0
  %6878 = vmatprep.subr.mxu0 0.0
  %v6879 = vand.u32 %v6790, 4294901760
  %v6880 = vsub.f32 %v6790, %v6879
  %v6881 = vand.u32 %v6880, 4294901760
  %v6882 = vsub.f32 %v6880, %v6881
  %v6883 = vand.u32 %v6882, 4294901760
  %6884 = vmatpush1.msra.mxu0 %v6883
  %6885 = vmatprep.subr.mxu0 0.0
  %v6886 = vand.u32 %v6791, 4294901760
  %v6887 = vsub.f32 %v6791, %v6886
  %v6888 = vand.u32 %v6887, 4294901760
  %v6889 = vsub.f32 %v6887, %v6888
  %v6890 = vand.u32 %v6889, 4294901760
  %6891 = vmatpush1.msra.mxu0 %v6890
  %6892 = vmatprep.subr.mxu0 0.0
  %v6893 = vand.u32 %v6792, 4294901760
  %v6894 = vsub.f32 %v6792, %v6893
  %v6895 = vand.u32 %v6894, 4294901760
  %v6896 = vsub.f32 %v6894, %v6895
  %v6897 = vand.u32 %v6896, 4294901760
  %6898 = vmatpush1.msra.mxu0 %v6897
  %6899 = vmatprep.subr.mxu0 0.0
  %v6900 = vand.u32 %v6793, 4294901760
  %v6901 = vsub.f32 %v6793, %v6900
  %v6902 = vand.u32 %v6901, 4294901760
  %v6903 = vsub.f32 %v6901, %v6902
  %v6904 = vand.u32 %v6903, 4294901760
  %6905 = vmatpush1.msra.mxu0 %v6904
  %6906 = vmatprep.subr.mxu0 0.0
  %6907 = vmatpush1.msra.mxu0 0.0
  %6908 = vmatprep.subr.mxu0 0.0
  %6909 = vmatpush1.msra.mxu0 0.0
  %6910 = vmatprep.subr.mxu0 0.0
  %6911 = vmatpush1.msra.mxu0 0.0
  %6912 = vmatprep.subr.mxu0 0.0
  %6913 = vmatpush1.msra.mxu0 0.0
  %6914 = vmatprep.subr.mxu0 0.0
  %6915 = vmatpush1.msra.mxu0 0.0
  %6916 = vmatprep.subr.mxu0 0.0
  %6917 = vmatpush1.msra.mxu0 0.0
  %6918 = vmatprep.subr.mxu0 0.0
  %6919 = vmatpush1.msra.mxu0 0.0
  %6920 = vmatprep.subr.mxu0 0.0
  %6921 = vmatpush1.msra.mxu0 0.0
  %6922 = vmatprep.subr.mxu0 0.0
  %6923 = vmatpush1.msra.mxu0 0.0
  %6924 = vmatprep.subr.mxu0 0.0
  %6925 = vmatpush1.msra.mxu0 0.0
  %6926 = vmatprep.subr.mxu0 0.0
  %6927 = vmatpush1.msra.mxu0 0.0
  %6928 = vmatprep.subr.mxu0 0.0
  %6929 = vmatpush1.msra.mxu0 0.0
  %6930 = vmatprep.subr.mxu0 0.0
  %6931 = vmatpush1.msra.mxu0 0.0
  %6932 = vmatprep.subr.mxu0 0.0
  %6933 = vmatpush1.msra.mxu0 0.0
  %6934 = vmatprep.subr.mxu0 0.0
  %6935 = vmatpush1.msra.mxu0 0.0
  %6936 = vmatprep.subr.mxu0 0.0
  %6937 = vmatpush1.msra.mxu0 0.0
  %6938 = vmatprep.subr.mxu0 0.0
  %6939 = vmatpush1.msra.mxu0 0.0
  %6940 = vmatprep.subr.mxu0 0.0
  %6941 = vmatpush1.msra.mxu0 0.0
  %6942 = vmatprep.subr.mxu0 0.0
  %6943 = vmatpush1.msra.mxu0 0.0
  %6944 = vmatprep.subr.mxu0 0.0
  %6945 = vmatpush1.msra.mxu0 0.0
  %6946 = vmatprep.subr.mxu0 0.0
  %6947 = vmatpush1.msra.mxu0 0.0
  %6948 = vmatprep.subr.mxu0 0.0
  %6949 = vmatpush1.msra.mxu0 0.0
  %6950 = vmatprep.subr.mxu0 0.0
  %6951 = vmatpush1.msra.mxu0 0.0
  %6952 = vmatprep.subr.mxu0 0.0
  %6953 = vmatpush1.msra.mxu0 0.0
  %6954 = vmatprep.subr.mxu0 0.0
  %6955 = vmatpush1.msra.mxu0 0.0
  %6956 = vmatprep.subr.mxu0 0.0
  %6957 = vmatpush1.msra.mxu0 0.0
  %6958 = vmatprep.subr.mxu0 0.0
  %6959 = vmatpush1.msra.mxu0 0.0
  %6960 = vmatprep.subr.mxu0 0.0
  %6961 = vmatpush1.msra.mxu0 0.0
  %6962 = vmatprep.mubr.f32.mxu0 0.0
  %v6963 = vand.u32 %v6797, 4294901760
  %6964 = vmatmul.mubr.f32.gmra.mrb[0].mxu0 %v6963
  %v6965 = vpop.f32.mrb[0].mxu0
  %v6966 = vadd.f32 %v6875, %v6965
  %v6967 = vpop.f32.mrb[0].mxu0
  %6968 = vdwg.mxu0
  %6969 = vmatprep.subr.mxu0 0.0
  %v6970 = vand.u32 %v6790, 4294901760
  %v6971 = vsub.f32 %v6790, %v6970
  %6972 = vmatpush1.msra.mxu0 %v6971
  %6973 = vmatprep.subr.mxu0 0.0
  %v6974 = vand.u32 %v6791, 4294901760
  %v6975 = vsub.f32 %v6791, %v6974
  %6976 = vmatpush1.msra.mxu0 %v6975
  %6977 = vmatprep.subr.mxu0 0.0
  %v6978 = vand.u32 %v6792, 4294901760
  %v6979 = vsub.f32 %v6792, %v6978
  %6980 = vmatpush1.msra.mxu0 %v6979
  %6981 = vmatprep.subr.mxu0 0.0
  %v6982 = vand.u32 %v6793, 4294901760
  %v6983 = vsub.f32 %v6793, %v6982
  %6984 = vmatpush1.msra.mxu0 %v6983
  %6985 = vmatprep.subr.mxu0 0.0
  %6986 = vmatpush1.msra.mxu0 0.0
  %6987 = vmatprep.subr.mxu0 0.0
  %6988 = vmatpush1.msra.mxu0 0.0
  %6989 = vmatprep.subr.mxu0 0.0
  %6990 = vmatpush1.msra.mxu0 0.0
  %6991 = vmatprep.subr.mxu0 0.0
  %6992 = vmatpush1.msra.mxu0 0.0
  %6993 = vmatprep.subr.mxu0 0.0
  %6994 = vmatpush1.msra.mxu0 0.0
  %6995 = vmatprep.subr.mxu0 0.0
  %6996 = vmatpush1.msra.mxu0 0.0
  %6997 = vmatprep.subr.mxu0 0.0
  %6998 = vmatpush1.msra.mxu0 0.0
  %6999 = vmatprep.subr.mxu0 0.0
  %7000 = vmatpush1.msra.mxu0 0.0
  %7001 = vmatprep.subr.mxu0 0.0
  %7002 = vmatpush1.msra.mxu0 0.0
  %7003 = vmatprep.subr.mxu0 0.0
  %7004 = vmatpush1.msra.mxu0 0.0
  %7005 = vmatprep.subr.mxu0 0.0
  %7006 = vmatpush1.msra.mxu0 0.0
  %7007 = vmatprep.subr.mxu0 0.0
  %7008 = vmatpush1.msra.mxu0 0.0
  %7009 = vmatprep.subr.mxu0 0.0
  %7010 = vmatpush1.msra.mxu0 0.0
  %7011 = vmatprep.subr.mxu0 0.0
  %7012 = vmatpush1.msra.mxu0 0.0
  %7013 = vmatprep.subr.mxu0 0.0
  %7014 = vmatpush1.msra.mxu0 0.0
  %7015 = vmatprep.subr.mxu0 0.0
  %7016 = vmatpush1.msra.mxu0 0.0
  %7017 = vmatprep.subr.mxu0 0.0
  %7018 = vmatpush1.msra.mxu0 0.0
  %7019 = vmatprep.subr.mxu0 0.0
  %7020 = vmatpush1.msra.mxu0 0.0
  %7021 = vmatprep.subr.mxu0 0.0
  %7022 = vmatpush1.msra.mxu0 0.0
  %7023 = vmatprep.subr.mxu0 0.0
  %7024 = vmatpush1.msra.mxu0 0.0
  %7025 = vmatprep.subr.mxu0 0.0
  %7026 = vmatpush1.msra.mxu0 0.0
  %7027 = vmatprep.subr.mxu0 0.0
  %7028 = vmatpush1.msra.mxu0 0.0
  %7029 = vmatprep.subr.mxu0 0.0
  %7030 = vmatpush1.msra.mxu0 0.0
  %7031 = vmatprep.subr.mxu0 0.0
  %7032 = vmatpush1.msra.mxu0 0.0
  %7033 = vmatprep.subr.mxu0 0.0
  %7034 = vmatpush1.msra.mxu0 0.0
  %7035 = vmatprep.subr.mxu0 0.0
  %7036 = vmatpush1.msra.mxu0 0.0
  %7037 = vmatprep.subr.mxu0 0.0
  %7038 = vmatpush1.msra.mxu0 0.0
  %7039 = vmatprep.subr.mxu0 0.0
  %7040 = vmatpush1.msra.mxu0 0.0
  %7041 = vmatprep.mubr.f32.mxu0 0.0
  %v7042 = vand.u32 %v6797, 4294901760
  %v7043 = vsub.f32 %v6797, %v7042
  %7044 = vmatmul.mubr.f32.gmra.mrb[0].mxu0 %v7043
  %v7045 = vpop.f32.mrb[0].mxu0
  %v7046 = vadd.f32 %v6966, %v7045
  %v7047 = vpop.f32.mrb[0].mxu0
  %7048 = vdwg.mxu0
  %7049 = vmatprep.subr.mxu0 0.0
  %v7050 = vand.u32 %v6790, 4294901760
  %7051 = vmatpush1.msra.mxu0 %v7050
  %7052 = vmatprep.subr.mxu0 0.0
  %v7053 = vand.u32 %v6791, 4294901760
  %7054 = vmatpush1.msra.mxu0 %v7053
  %7055 = vmatprep.subr.mxu0 0.0
  %v7056 = vand.u32 %v6792, 4294901760
  %7057 = vmatpush1.msra.mxu0 %v7056
  %7058 = vmatprep.subr.mxu0 0.0
  %v7059 = vand.u32 %v6793, 4294901760
  %7060 = vmatpush1.msra.mxu0 %v7059
  %7061 = vmatprep.subr.mxu0 0.0
  %7062 = vmatpush1.msra.mxu0 0.0
  %7063 = vmatprep.subr.mxu0 0.0
  %7064 = vmatpush1.msra.mxu0 0.0
  %7065 = vmatprep.subr.mxu0 0.0
  %7066 = vmatpush1.msra.mxu0 0.0
  %7067 = vmatprep.subr.mxu0 0.0
  %7068 = vmatpush1.msra.mxu0 0.0
  %7069 = vmatprep.subr.mxu0 0.0
  %7070 = vmatpush1.msra.mxu0 0.0
  %7071 = vmatprep.subr.mxu0 0.0
  %7072 = vmatpush1.msra.mxu0 0.0
  %7073 = vmatprep.subr.mxu0 0.0
  %7074 = vmatpush1.msra.mxu0 0.0
  %7075 = vmatprep.subr.mxu0 0.0
  %7076 = vmatpush1.msra.mxu0 0.0
  %7077 = vmatprep.subr.mxu0 0.0
  %7078 = vmatpush1.msra.mxu0 0.0
  %7079 = vmatprep.subr.mxu0 0.0
  %7080 = vmatpush1.msra.mxu0 0.0
  %7081 = vmatprep.subr.mxu0 0.0
  %7082 = vmatpush1.msra.mxu0 0.0
  %7083 = vmatprep.subr.mxu0 0.0
  %7084 = vmatpush1.msra.mxu0 0.0
  %7085 = vmatprep.subr.mxu0 0.0
  %7086 = vmatpush1.msra.mxu0 0.0
  %7087 = vmatprep.subr.mxu0 0.0
  %7088 = vmatpush1.msra.mxu0 0.0
  %7089 = vmatprep.subr.mxu0 0.0
  %7090 = vmatpush1.msra.mxu0 0.0
  %7091 = vmatprep.subr.mxu0 0.0
  %7092 = vmatpush1.msra.mxu0 0.0
  %7093 = vmatprep.subr.mxu0 0.0
  %7094 = vmatpush1.msra.mxu0 0.0
  %7095 = vmatprep.subr.mxu0 0.0
  %7096 = vmatpush1.msra.mxu0 0.0
  %7097 = vmatprep.subr.mxu0 0.0
  %7098 = vmatpush1.msra.mxu0 0.0
  %7099 = vmatprep.subr.mxu0 0.0
  %7100 = vmatpush1.msra.mxu0 0.0
  %7101 = vmatprep.subr.mxu0 0.0
  %7102 = vmatpush1.msra.mxu0 0.0
  %7103 = vmatprep.subr.mxu0 0.0
  %7104 = vmatpush1.msra.mxu0 0.0
  %7105 = vmatprep.subr.mxu0 0.0
  %7106 = vmatpush1.msra.mxu0 0.0
  %7107 = vmatprep.subr.mxu0 0.0
  %7108 = vmatpush1.msra.mxu0 0.0
  %7109 = vmatprep.subr.mxu0 0.0
  %7110 = vmatpush1.msra.mxu0 0.0
  %7111 = vmatprep.subr.mxu0 0.0
  %7112 = vmatpush1.msra.mxu0 0.0
  %7113 = vmatprep.subr.mxu0 0.0
  %7114 = vmatpush1.msra.mxu0 0.0
  %7115 = vmatprep.subr.mxu0 0.0
  %7116 = vmatpush1.msra.mxu0 0.0
  %7117 = vmatprep.mubr.f32.mxu0 0.0
  %v7118 = vand.u32 %v6797, 4294901760
  %v7119 = vsub.f32 %v6797, %v7118
  %v7120 = vand.u32 %v7119, 4294901760
  %7121 = vmatmul.mubr.f32.gmra.mrb[0].mxu0 %v7120
  %v7122 = vpop.f32.mrb[0].mxu0
  %v7123 = vadd.f32 %v7046, %v7122
  %v7124 = vpop.f32.mrb[0].mxu0
  %7125 = vdwg.mxu0
  %7126 = vmatprep.subr.mxu0 0.0
  %v7127 = vand.u32 %v6790, 4294901760
  %v7128 = vsub.f32 %v6790, %v7127
  %v7129 = vand.u32 %v7128, 4294901760
  %7130 = vmatpush1.msra.mxu0 %v7129
  %7131 = vmatprep.subr.mxu0 0.0
  %v7132 = vand.u32 %v6791, 4294901760
  %v7133 = vsub.f32 %v6791, %v7132
  %v7134 = vand.u32 %v7133, 4294901760
  %7135 = vmatpush1.msra.mxu0 %v7134
  %7136 = vmatprep.subr.mxu0 0.0
  %v7137 = vand.u32 %v6792, 4294901760
  %v7138 = vsub.f32 %v6792, %v7137
  %v7139 = vand.u32 %v7138, 4294901760
  %7140 = vmatpush1.msra.mxu0 %v7139
  %7141 = vmatprep.subr.mxu0 0.0
  %v7142 = vand.u32 %v6793, 4294901760
  %v7143 = vsub.f32 %v6793, %v7142
  %v7144 = vand.u32 %v7143, 4294901760
  %7145 = vmatpush1.msra.mxu0 %v7144
  %7146 = vmatprep.subr.mxu0 0.0
  %7147 = vmatpush1.msra.mxu0 0.0
  %7148 = vmatprep.subr.mxu0 0.0
  %7149 = vmatpush1.msra.mxu0 0.0
  %7150 = vmatprep.subr.mxu0 0.0
  %7151 = vmatpush1.msra.mxu0 0.0
  %7152 = vmatprep.subr.mxu0 0.0
  %7153 = vmatpush1.msra.mxu0 0.0
  %7154 = vmatprep.subr.mxu0 0.0
  %7155 = vmatpush1.msra.mxu0 0.0
  %7156 = vmatprep.subr.mxu0 0.0
  %7157 = vmatpush1.msra.mxu0 0.0
  %7158 = vmatprep.subr.mxu0 0.0
  %7159 = vmatpush1.msra.mxu0 0.0
  %7160 = vmatprep.subr.mxu0 0.0
  %7161 = vmatpush1.msra.mxu0 0.0
  %7162 = vmatprep.subr.mxu0 0.0
  %7163 = vmatpush1.msra.mxu0 0.0
  %7164 = vmatprep.subr.mxu0 0.0
  %7165 = vmatpush1.msra.mxu0 0.0
  %7166 = vmatprep.subr.mxu0 0.0
  %7167 = vmatpush1.msra.mxu0 0.0
  %7168 = vmatprep.subr.mxu0 0.0
  %7169 = vmatpush1.msra.mxu0 0.0
  %7170 = vmatprep.subr.mxu0 0.0
  %7171 = vmatpush1.msra.mxu0 0.0
  %7172 = vmatprep.subr.mxu0 0.0
  %7173 = vmatpush1.msra.mxu0 0.0
  %7174 = vmatprep.subr.mxu0 0.0
  %7175 = vmatpush1.msra.mxu0 0.0
  %7176 = vmatprep.subr.mxu0 0.0
  %7177 = vmatpush1.msra.mxu0 0.0
  %7178 = vmatprep.subr.mxu0 0.0
  %7179 = vmatpush1.msra.mxu0 0.0
  %7180 = vmatprep.subr.mxu0 0.0
  %7181 = vmatpush1.msra.mxu0 0.0
  %7182 = vmatprep.subr.mxu0 0.0
  %7183 = vmatpush1.msra.mxu0 0.0
  %7184 = vmatprep.subr.mxu0 0.0
  %7185 = vmatpush1.msra.mxu0 0.0
  %7186 = vmatprep.subr.mxu0 0.0
  %7187 = vmatpush1.msra.mxu0 0.0
  %7188 = vmatprep.subr.mxu0 0.0
  %7189 = vmatpush1.msra.mxu0 0.0
  %7190 = vmatprep.subr.mxu0 0.0
  %7191 = vmatpush1.msra.mxu0 0.0
  %7192 = vmatprep.subr.mxu0 0.0
  %7193 = vmatpush1.msra.mxu0 0.0
  %7194 = vmatprep.subr.mxu0 0.0
  %7195 = vmatpush1.msra.mxu0 0.0
  %7196 = vmatprep.subr.mxu0 0.0
  %7197 = vmatpush1.msra.mxu0 0.0
  %7198 = vmatprep.subr.mxu0 0.0
  %7199 = vmatpush1.msra.mxu0 0.0
  %7200 = vmatprep.subr.mxu0 0.0
  %7201 = vmatpush1.msra.mxu0 0.0
  %7202 = vmatprep.mubr.f32.mxu0 0.0
  %v7203 = vand.u32 %v6797, 4294901760
  %7204 = vmatmul.mubr.f32.gmra.mrb[0].mxu0 %v7203
  %v7205 = vpop.f32.mrb[0].mxu0
  %v7206 = vadd.f32 %v7123, %v7205
  %v7207 = vpop.f32.mrb[0].mxu0
  %7208 = vdwg.mxu0
  %7209 = vmatprep.subr.mxu0 0.0
  %v7210 = vand.u32 %v6790, 4294901760
  %7211 = vmatpush1.msra.mxu0 %v7210
  %7212 = vmatprep.subr.mxu0 0.0
  %v7213 = vand.u32 %v6791, 4294901760
  %7214 = vmatpush1.msra.mxu0 %v7213
  %7215 = vmatprep.subr.mxu0 0.0
  %v7216 = vand.u32 %v6792, 4294901760
  %7217 = vmatpush1.msra.mxu0 %v7216
  %7218 = vmatprep.subr.mxu0 0.0
  %v7219 = vand.u32 %v6793, 4294901760
  %7220 = vmatpush1.msra.mxu0 %v7219
  %7221 = vmatprep.subr.mxu0 0.0
  %7222 = vmatpush1.msra.mxu0 0.0
  %7223 = vmatprep.subr.mxu0 0.0
  %7224 = vmatpush1.msra.mxu0 0.0
  %7225 = vmatprep.subr.mxu0 0.0
  %7226 = vmatpush1.msra.mxu0 0.0
  %7227 = vmatprep.subr.mxu0 0.0
  %7228 = vmatpush1.msra.mxu0 0.0
  %7229 = vmatprep.subr.mxu0 0.0
  %7230 = vmatpush1.msra.mxu0 0.0
  %7231 = vmatprep.subr.mxu0 0.0
  %7232 = vmatpush1.msra.mxu0 0.0
  %7233 = vmatprep.subr.mxu0 0.0
  %7234 = vmatpush1.msra.mxu0 0.0
  %7235 = vmatprep.subr.mxu0 0.0
  %7236 = vmatpush1.msra.mxu0 0.0
  %7237 = vmatprep.subr.mxu0 0.0
  %7238 = vmatpush1.msra.mxu0 0.0
  %7239 = vmatprep.subr.mxu0 0.0
  %7240 = vmatpush1.msra.mxu0 0.0
  %7241 = vmatprep.subr.mxu0 0.0
  %7242 = vmatpush1.msra.mxu0 0.0
  %7243 = vmatprep.subr.mxu0 0.0
  %7244 = vmatpush1.msra.mxu0 0.0
  %7245 = vmatprep.subr.mxu0 0.0
  %7246 = vmatpush1.msra.mxu0 0.0
  %7247 = vmatprep.subr.mxu0 0.0
  %7248 = vmatpush1.msra.mxu0 0.0
  %7249 = vmatprep.subr.mxu0 0.0
  %7250 = vmatpush1.msra.mxu0 0.0
  %7251 = vmatprep.subr.mxu0 0.0
  %7252 = vmatpush1.msra.mxu0 0.0
  %7253 = vmatprep.subr.mxu0 0.0
  %7254 = vmatpush1.msra.mxu0 0.0
  %7255 = vmatprep.subr.mxu0 0.0
  %7256 = vmatpush1.msra.mxu0 0.0
  %7257 = vmatprep.subr.mxu0 0.0
  %7258 = vmatpush1.msra.mxu0 0.0
  %7259 = vmatprep.subr.mxu0 0.0
  %7260 = vmatpush1.msra.mxu0 0.0
  %7261 = vmatprep.subr.mxu0 0.0
  %7262 = vmatpush1.msra.mxu0 0.0
  %7263 = vmatprep.subr.mxu0 0.0
  %7264 = vmatpush1.msra.mxu0 0.0
  %7265 = vmatprep.subr.mxu0 0.0
  %7266 = vmatpush1.msra.mxu0 0.0
  %7267 = vmatprep.subr.mxu0 0.0
  %7268 = vmatpush1.msra.mxu0 0.0
  %7269 = vmatprep.subr.mxu0 0.0
  %7270 = vmatpush1.msra.mxu0 0.0
  %7271 = vmatprep.subr.mxu0 0.0
  %7272 = vmatpush1.msra.mxu0 0.0
  %7273 = vmatprep.subr.mxu0 0.0
  %7274 = vmatpush1.msra.mxu0 0.0
  %7275 = vmatprep.subr.mxu0 0.0
  %7276 = vmatpush1.msra.mxu0 0.0
  %7277 = vmatprep.mubr.f32.mxu0 0.0
  %v7278 = vand.u32 %v6797, 4294901760
  %7279 = vmatmul.mubr.f32.gmra.mrb[0].mxu0 %v7278
  %v7280 = vpop.f32.mrb[0].mxu0
  %v7281 = vadd.f32 %v7206, %v7280
  %v7282 = vpop.f32.mrb[0].mxu0
  %7283 = vdwg.mxu0
  %v7285 = vsel %vm733, %v1274, 0
  %7287 = vmatprep.subr.mxu0 0.0
  %v7288 = vand.u32 %v6782, 4294901760
  %7289 = vmatpush1.msra.mxu0 %v7288
  %7290 = vmatprep.subr.mxu0 0.0
  %v7291 = vand.u32 %v6783, 4294901760
  %7292 = vmatpush1.msra.mxu0 %v7291
  %7293 = vmatprep.subr.mxu0 0.0
  %v7294 = vand.u32 %v6784, 4294901760
  %7295 = vmatpush1.msra.mxu0 %v7294
  %7296 = vmatprep.subr.mxu0 0.0
  %v7297 = vand.u32 %v6785, 4294901760
  %7298 = vmatpush1.msra.mxu0 %v7297
  %7299 = vmatprep.subr.mxu0 0.0
  %v7300 = vand.u32 %v6786, 4294901760
  %7301 = vmatpush1.msra.mxu0 %v7300
  %7302 = vmatprep.subr.mxu0 0.0
  %v7303 = vand.u32 %v6787, 4294901760
  %7304 = vmatpush1.msra.mxu0 %v7303
  %7305 = vmatprep.subr.mxu0 0.0
  %v7306 = vand.u32 %v6788, 4294901760
  %7307 = vmatpush1.msra.mxu0 %v7306
  %7308 = vmatprep.subr.mxu0 0.0
  %v7309 = vand.u32 %v6789, 4294901760
  %7310 = vmatpush1.msra.mxu0 %v7309
  %7311 = vmatprep.subr.mxu0 0.0
  %7312 = vmatpush1.msra.mxu0 0.0
  %7313 = vmatprep.subr.mxu0 0.0
  %7314 = vmatpush1.msra.mxu0 0.0
  %7315 = vmatprep.subr.mxu0 0.0
  %7316 = vmatpush1.msra.mxu0 0.0
  %7317 = vmatprep.subr.mxu0 0.0
  %7318 = vmatpush1.msra.mxu0 0.0
  %7319 = vmatprep.subr.mxu0 0.0
  %7320 = vmatpush1.msra.mxu0 0.0
  %7321 = vmatprep.subr.mxu0 0.0
  %7322 = vmatpush1.msra.mxu0 0.0
  %7323 = vmatprep.subr.mxu0 0.0
  %7324 = vmatpush1.msra.mxu0 0.0
  %7325 = vmatprep.subr.mxu0 0.0
  %7326 = vmatpush1.msra.mxu0 0.0
  %7327 = vmatprep.subr.mxu0 0.0
  %7328 = vmatpush1.msra.mxu0 0.0
  %7329 = vmatprep.subr.mxu0 0.0
  %7330 = vmatpush1.msra.mxu0 0.0
  %7331 = vmatprep.subr.mxu0 0.0
  %7332 = vmatpush1.msra.mxu0 0.0
  %7333 = vmatprep.subr.mxu0 0.0
  %7334 = vmatpush1.msra.mxu0 0.0
  %7335 = vmatprep.subr.mxu0 0.0
  %7336 = vmatpush1.msra.mxu0 0.0
  %7337 = vmatprep.subr.mxu0 0.0
  %7338 = vmatpush1.msra.mxu0 0.0
  %7339 = vmatprep.subr.mxu0 0.0
  %7340 = vmatpush1.msra.mxu0 0.0
  %7341 = vmatprep.subr.mxu0 0.0
  %7342 = vmatpush1.msra.mxu0 0.0
  %7343 = vmatprep.subr.mxu0 0.0
  %7344 = vmatpush1.msra.mxu0 0.0
  %7345 = vmatprep.subr.mxu0 0.0
  %7346 = vmatpush1.msra.mxu0 0.0
  %7347 = vmatprep.subr.mxu0 0.0
  %7348 = vmatpush1.msra.mxu0 0.0
  %7349 = vmatprep.subr.mxu0 0.0
  %7350 = vmatpush1.msra.mxu0 0.0
  %7351 = vmatprep.subr.mxu0 0.0
  %7352 = vmatpush1.msra.mxu0 0.0
  %7353 = vmatprep.subr.mxu0 0.0
  %7354 = vmatpush1.msra.mxu0 0.0
  %7355 = vmatprep.subr.mxu0 0.0
  %7356 = vmatpush1.msra.mxu0 0.0
  %7357 = vmatprep.subr.mxu0 0.0
  %7358 = vmatpush1.msra.mxu0 0.0
  %7359 = vmatprep.mubr.f32.mxu0 0.0
  %v7360 = vand.u32 %v7285, 4294901760
  %v7361 = vsub.f32 %v7285, %v7360
  %v7362 = vand.u32 %v7361, 4294901760
  %v7363 = vsub.f32 %v7361, %v7362
  %v7364 = vand.u32 %v7363, 4294901760
  %7365 = vmatmul.mubr.f32.gmra.mrb[0].mxu0 %v7364
  %v7366 = vpop.f32.mrb[0].mxu0
  %v7367 = vadd.f32 %v7281, %v7366
  %v7368 = vpop.f32.mrb[0].mxu0
  %7369 = vdwg.mxu0
  %7370 = vmatprep.subr.mxu0 0.0
  %v7371 = vand.u32 %v6782, 4294901760
  %v7372 = vsub.f32 %v6782, %v7371
  %v7373 = vand.u32 %v7372, 4294901760
  %v7374 = vsub.f32 %v7372, %v7373
  %v7375 = vand.u32 %v7374, 4294901760
  %7376 = vmatpush1.msra.mxu0 %v7375
  %7377 = vmatprep.subr.mxu0 0.0
  %v7378 = vand.u32 %v6783, 4294901760
  %v7379 = vsub.f32 %v6783, %v7378
  %v7380 = vand.u32 %v7379, 4294901760
  %v7381 = vsub.f32 %v7379, %v7380
  %v7382 = vand.u32 %v7381, 4294901760
  %7383 = vmatpush1.msra.mxu0 %v7382
  %7384 = vmatprep.subr.mxu0 0.0
  %v7385 = vand.u32 %v6784, 4294901760
  %v7386 = vsub.f32 %v6784, %v7385
  %v7387 = vand.u32 %v7386, 4294901760
  %v7388 = vsub.f32 %v7386, %v7387
  %v7389 = vand.u32 %v7388, 4294901760
  %7390 = vmatpush1.msra.mxu0 %v7389
  %7391 = vmatprep.subr.mxu0 0.0
  %v7392 = vand.u32 %v6785, 4294901760
  %v7393 = vsub.f32 %v6785, %v7392
  %v7394 = vand.u32 %v7393, 4294901760
  %v7395 = vsub.f32 %v7393, %v7394
  %v7396 = vand.u32 %v7395, 4294901760
  %7397 = vmatpush1.msra.mxu0 %v7396
  %7398 = vmatprep.subr.mxu0 0.0
  %v7399 = vand.u32 %v6786, 4294901760
  %v7400 = vsub.f32 %v6786, %v7399
  %v7401 = vand.u32 %v7400, 4294901760
  %v7402 = vsub.f32 %v7400, %v7401
  %v7403 = vand.u32 %v7402, 4294901760
  %7404 = vmatpush1.msra.mxu0 %v7403
  %7405 = vmatprep.subr.mxu0 0.0
  %v7406 = vand.u32 %v6787, 4294901760
  %v7407 = vsub.f32 %v6787, %v7406
  %v7408 = vand.u32 %v7407, 4294901760
  %v7409 = vsub.f32 %v7407, %v7408
  %v7410 = vand.u32 %v7409, 4294901760
  %7411 = vmatpush1.msra.mxu0 %v7410
  %7412 = vmatprep.subr.mxu0 0.0
  %v7413 = vand.u32 %v6788, 4294901760
  %v7414 = vsub.f32 %v6788, %v7413
  %v7415 = vand.u32 %v7414, 4294901760
  %v7416 = vsub.f32 %v7414, %v7415
  %v7417 = vand.u32 %v7416, 4294901760
  %7418 = vmatpush1.msra.mxu0 %v7417
  %7419 = vmatprep.subr.mxu0 0.0
  %v7420 = vand.u32 %v6789, 4294901760
  %v7421 = vsub.f32 %v6789, %v7420
  %v7422 = vand.u32 %v7421, 4294901760
  %v7423 = vsub.f32 %v7421, %v7422
  %v7424 = vand.u32 %v7423, 4294901760
  %7425 = vmatpush1.msra.mxu0 %v7424
  %7426 = vmatprep.subr.mxu0 0.0
  %7427 = vmatpush1.msra.mxu0 0.0
  %7428 = vmatprep.subr.mxu0 0.0
  %7429 = vmatpush1.msra.mxu0 0.0
  %7430 = vmatprep.subr.mxu0 0.0
  %7431 = vmatpush1.msra.mxu0 0.0
  %7432 = vmatprep.subr.mxu0 0.0
  %7433 = vmatpush1.msra.mxu0 0.0
  %7434 = vmatprep.subr.mxu0 0.0
  %7435 = vmatpush1.msra.mxu0 0.0
  %7436 = vmatprep.subr.mxu0 0.0
  %7437 = vmatpush1.msra.mxu0 0.0
  %7438 = vmatprep.subr.mxu0 0.0
  %7439 = vmatpush1.msra.mxu0 0.0
  %7440 = vmatprep.subr.mxu0 0.0
  %7441 = vmatpush1.msra.mxu0 0.0
  %7442 = vmatprep.subr.mxu0 0.0
  %7443 = vmatpush1.msra.mxu0 0.0
  %7444 = vmatprep.subr.mxu0 0.0
  %7445 = vmatpush1.msra.mxu0 0.0
  %7446 = vmatprep.subr.mxu0 0.0
  %7447 = vmatpush1.msra.mxu0 0.0
  %7448 = vmatprep.subr.mxu0 0.0
  %7449 = vmatpush1.msra.mxu0 0.0
  %7450 = vmatprep.subr.mxu0 0.0
  %7451 = vmatpush1.msra.mxu0 0.0
  %7452 = vmatprep.subr.mxu0 0.0
  %7453 = vmatpush1.msra.mxu0 0.0
  %7454 = vmatprep.subr.mxu0 0.0
  %7455 = vmatpush1.msra.mxu0 0.0
  %7456 = vmatprep.subr.mxu0 0.0
  %7457 = vmatpush1.msra.mxu0 0.0
  %7458 = vmatprep.subr.mxu0 0.0
  %7459 = vmatpush1.msra.mxu0 0.0
  %7460 = vmatprep.subr.mxu0 0.0
  %7461 = vmatpush1.msra.mxu0 0.0
  %7462 = vmatprep.subr.mxu0 0.0
  %7463 = vmatpush1.msra.mxu0 0.0
  %7464 = vmatprep.subr.mxu0 0.0
  %7465 = vmatpush1.msra.mxu0 0.0
  %7466 = vmatprep.subr.mxu0 0.0
  %7467 = vmatpush1.msra.mxu0 0.0
  %7468 = vmatprep.subr.mxu0 0.0
  %7469 = vmatpush1.msra.mxu0 0.0
  %7470 = vmatprep.subr.mxu0 0.0
  %7471 = vmatpush1.msra.mxu0 0.0
  %7472 = vmatprep.subr.mxu0 0.0
  %7473 = vmatpush1.msra.mxu0 0.0
  %7474 = vmatprep.mubr.f32.mxu0 0.0
  %v7475 = vand.u32 %v7285, 4294901760
  %7476 = vmatmul.mubr.f32.gmra.mrb[0].mxu0 %v7475
  %v7477 = vpop.f32.mrb[0].mxu0
  %v7478 = vadd.f32 %v7367, %v7477
  %v7479 = vpop.f32.mrb[0].mxu0
  %7480 = vdwg.mxu0
  %7481 = vmatprep.subr.mxu0 0.0
  %v7482 = vand.u32 %v6782, 4294901760
  %v7483 = vsub.f32 %v6782, %v7482
  %7484 = vmatpush1.msra.mxu0 %v7483
  %7485 = vmatprep.subr.mxu0 0.0
  %v7486 = vand.u32 %v6783, 4294901760
  %v7487 = vsub.f32 %v6783, %v7486
  %7488 = vmatpush1.msra.mxu0 %v7487
  %7489 = vmatprep.subr.mxu0 0.0
  %v7490 = vand.u32 %v6784, 4294901760
  %v7491 = vsub.f32 %v6784, %v7490
  %7492 = vmatpush1.msra.mxu0 %v7491
  %7493 = vmatprep.subr.mxu0 0.0
  %v7494 = vand.u32 %v6785, 4294901760
  %v7495 = vsub.f32 %v6785, %v7494
  %7496 = vmatpush1.msra.mxu0 %v7495
  %7497 = vmatprep.subr.mxu0 0.0
  %v7498 = vand.u32 %v6786, 4294901760
  %v7499 = vsub.f32 %v6786, %v7498
  %7500 = vmatpush1.msra.mxu0 %v7499
  %7501 = vmatprep.subr.mxu0 0.0
  %v7502 = vand.u32 %v6787, 4294901760
  %v7503 = vsub.f32 %v6787, %v7502
  %7504 = vmatpush1.msra.mxu0 %v7503
  %7505 = vmatprep.subr.mxu0 0.0
  %v7506 = vand.u32 %v6788, 4294901760
  %v7507 = vsub.f32 %v6788, %v7506
  %7508 = vmatpush1.msra.mxu0 %v7507
  %7509 = vmatprep.subr.mxu0 0.0
  %v7510 = vand.u32 %v6789, 4294901760
  %v7511 = vsub.f32 %v6789, %v7510
  %7512 = vmatpush1.msra.mxu0 %v7511
  %7513 = vmatprep.subr.mxu0 0.0
  %7514 = vmatpush1.msra.mxu0 0.0
  %7515 = vmatprep.subr.mxu0 0.0
  %7516 = vmatpush1.msra.mxu0 0.0
  %7517 = vmatprep.subr.mxu0 0.0
  %7518 = vmatpush1.msra.mxu0 0.0
  %7519 = vmatprep.subr.mxu0 0.0
  %7520 = vmatpush1.msra.mxu0 0.0
  %7521 = vmatprep.subr.mxu0 0.0
  %7522 = vmatpush1.msra.mxu0 0.0
  %7523 = vmatprep.subr.mxu0 0.0
  %7524 = vmatpush1.msra.mxu0 0.0
  %7525 = vmatprep.subr.mxu0 0.0
  %7526 = vmatpush1.msra.mxu0 0.0
  %7527 = vmatprep.subr.mxu0 0.0
  %7528 = vmatpush1.msra.mxu0 0.0
  %7529 = vmatprep.subr.mxu0 0.0
  %7530 = vmatpush1.msra.mxu0 0.0
  %7531 = vmatprep.subr.mxu0 0.0
  %7532 = vmatpush1.msra.mxu0 0.0
  %7533 = vmatprep.subr.mxu0 0.0
  %7534 = vmatpush1.msra.mxu0 0.0
  %7535 = vmatprep.subr.mxu0 0.0
  %7536 = vmatpush1.msra.mxu0 0.0
  %7537 = vmatprep.subr.mxu0 0.0
  %7538 = vmatpush1.msra.mxu0 0.0
  %7539 = vmatprep.subr.mxu0 0.0
  %7540 = vmatpush1.msra.mxu0 0.0
  %7541 = vmatprep.subr.mxu0 0.0
  %7542 = vmatpush1.msra.mxu0 0.0
  %7543 = vmatprep.subr.mxu0 0.0
  %7544 = vmatpush1.msra.mxu0 0.0
  %7545 = vmatprep.subr.mxu0 0.0
  %7546 = vmatpush1.msra.mxu0 0.0
  %7547 = vmatprep.subr.mxu0 0.0
  %7548 = vmatpush1.msra.mxu0 0.0
  %7549 = vmatprep.subr.mxu0 0.0
  %7550 = vmatpush1.msra.mxu0 0.0
  %7551 = vmatprep.subr.mxu0 0.0
  %7552 = vmatpush1.msra.mxu0 0.0
  %7553 = vmatprep.subr.mxu0 0.0
  %7554 = vmatpush1.msra.mxu0 0.0
  %7555 = vmatprep.subr.mxu0 0.0
  %7556 = vmatpush1.msra.mxu0 0.0
  %7557 = vmatprep.subr.mxu0 0.0
  %7558 = vmatpush1.msra.mxu0 0.0
  %7559 = vmatprep.subr.mxu0 0.0
  %7560 = vmatpush1.msra.mxu0 0.0
  %7561 = vmatprep.mubr.f32.mxu0 0.0
  %v7562 = vand.u32 %v7285, 4294901760
  %v7563 = vsub.f32 %v7285, %v7562
  %7564 = vmatmul.mubr.f32.gmra.mrb[0].mxu0 %v7563
  %v7565 = vpop.f32.mrb[0].mxu0
  %v7566 = vadd.f32 %v7478, %v7565
  %v7567 = vpop.f32.mrb[0].mxu0
  %7568 = vdwg.mxu0
  %7569 = vmatprep.subr.mxu0 0.0
  %v7570 = vand.u32 %v6782, 4294901760
  %7571 = vmatpush1.msra.mxu0 %v7570
  %7572 = vmatprep.subr.mxu0 0.0
  %v7573 = vand.u32 %v6783, 4294901760
  %7574 = vmatpush1.msra.mxu0 %v7573
  %7575 = vmatprep.subr.mxu0 0.0
  %v7576 = vand.u32 %v6784, 4294901760
  %7577 = vmatpush1.msra.mxu0 %v7576
  %7578 = vmatprep.subr.mxu0 0.0
  %v7579 = vand.u32 %v6785, 4294901760
  %7580 = vmatpush1.msra.mxu0 %v7579
  %7581 = vmatprep.subr.mxu0 0.0
  %v7582 = vand.u32 %v6786, 4294901760
  %7583 = vmatpush1.msra.mxu0 %v7582
  %7584 = vmatprep.subr.mxu0 0.0
  %v7585 = vand.u32 %v6787, 4294901760
  %7586 = vmatpush1.msra.mxu0 %v7585
  %7587 = vmatprep.subr.mxu0 0.0
  %v7588 = vand.u32 %v6788, 4294901760
  %7589 = vmatpush1.msra.mxu0 %v7588
  %7590 = vmatprep.subr.mxu0 0.0
  %v7591 = vand.u32 %v6789, 4294901760
  %7592 = vmatpush1.msra.mxu0 %v7591
  %7593 = vmatprep.subr.mxu0 0.0
  %7594 = vmatpush1.msra.mxu0 0.0
  %7595 = vmatprep.subr.mxu0 0.0
  %7596 = vmatpush1.msra.mxu0 0.0
  %7597 = vmatprep.subr.mxu0 0.0
  %7598 = vmatpush1.msra.mxu0 0.0
  %7599 = vmatprep.subr.mxu0 0.0
  %7600 = vmatpush1.msra.mxu0 0.0
  %7601 = vmatprep.subr.mxu0 0.0
  %7602 = vmatpush1.msra.mxu0 0.0
  %7603 = vmatprep.subr.mxu0 0.0
  %7604 = vmatpush1.msra.mxu0 0.0
  %7605 = vmatprep.subr.mxu0 0.0
  %7606 = vmatpush1.msra.mxu0 0.0
  %7607 = vmatprep.subr.mxu0 0.0
  %7608 = vmatpush1.msra.mxu0 0.0
  %7609 = vmatprep.subr.mxu0 0.0
  %7610 = vmatpush1.msra.mxu0 0.0
  %7611 = vmatprep.subr.mxu0 0.0
  %7612 = vmatpush1.msra.mxu0 0.0
  %7613 = vmatprep.subr.mxu0 0.0
  %7614 = vmatpush1.msra.mxu0 0.0
  %7615 = vmatprep.subr.mxu0 0.0
  %7616 = vmatpush1.msra.mxu0 0.0
  %7617 = vmatprep.subr.mxu0 0.0
  %7618 = vmatpush1.msra.mxu0 0.0
  %7619 = vmatprep.subr.mxu0 0.0
  %7620 = vmatpush1.msra.mxu0 0.0
  %7621 = vmatprep.subr.mxu0 0.0
  %7622 = vmatpush1.msra.mxu0 0.0
  %7623 = vmatprep.subr.mxu0 0.0
  %7624 = vmatpush1.msra.mxu0 0.0
  %7625 = vmatprep.subr.mxu0 0.0
  %7626 = vmatpush1.msra.mxu0 0.0
  %7627 = vmatprep.subr.mxu0 0.0
  %7628 = vmatpush1.msra.mxu0 0.0
  %7629 = vmatprep.subr.mxu0 0.0
  %7630 = vmatpush1.msra.mxu0 0.0
  %7631 = vmatprep.subr.mxu0 0.0
  %7632 = vmatpush1.msra.mxu0 0.0
  %7633 = vmatprep.subr.mxu0 0.0
  %7634 = vmatpush1.msra.mxu0 0.0
  %7635 = vmatprep.subr.mxu0 0.0
  %7636 = vmatpush1.msra.mxu0 0.0
  %7637 = vmatprep.subr.mxu0 0.0
  %7638 = vmatpush1.msra.mxu0 0.0
  %7639 = vmatprep.subr.mxu0 0.0
  %7640 = vmatpush1.msra.mxu0 0.0
  %7641 = vmatprep.mubr.f32.mxu0 0.0
  %v7642 = vand.u32 %v7285, 4294901760
  %v7643 = vsub.f32 %v7285, %v7642
  %v7644 = vand.u32 %v7643, 4294901760
  %7645 = vmatmul.mubr.f32.gmra.mrb[0].mxu0 %v7644
  %v7646 = vpop.f32.mrb[0].mxu0
  %v7647 = vadd.f32 %v7566, %v7646
  %v7648 = vpop.f32.mrb[0].mxu0
  %7649 = vdwg.mxu0
  %7650 = vmatprep.subr.mxu0 0.0
  %v7651 = vand.u32 %v6782, 4294901760
  %v7652 = vsub.f32 %v6782, %v7651
  %v7653 = vand.u32 %v7652, 4294901760
  %7654 = vmatpush1.msra.mxu0 %v7653
  %7655 = vmatprep.subr.mxu0 0.0
  %v7656 = vand.u32 %v6783, 4294901760
  %v7657 = vsub.f32 %v6783, %v7656
  %v7658 = vand.u32 %v7657, 4294901760
  %7659 = vmatpush1.msra.mxu0 %v7658
  %7660 = vmatprep.subr.mxu0 0.0
  %v7661 = vand.u32 %v6784, 4294901760
  %v7662 = vsub.f32 %v6784, %v7661
  %v7663 = vand.u32 %v7662, 4294901760
  %7664 = vmatpush1.msra.mxu0 %v7663
  %7665 = vmatprep.subr.mxu0 0.0
  %v7666 = vand.u32 %v6785, 4294901760
  %v7667 = vsub.f32 %v6785, %v7666
  %v7668 = vand.u32 %v7667, 4294901760
  %7669 = vmatpush1.msra.mxu0 %v7668
  %7670 = vmatprep.subr.mxu0 0.0
  %v7671 = vand.u32 %v6786, 4294901760
  %v7672 = vsub.f32 %v6786, %v7671
  %v7673 = vand.u32 %v7672, 4294901760
  %7674 = vmatpush1.msra.mxu0 %v7673
  %7675 = vmatprep.subr.mxu0 0.0
  %v7676 = vand.u32 %v6787, 4294901760
  %v7677 = vsub.f32 %v6787, %v7676
  %v7678 = vand.u32 %v7677, 4294901760
  %7679 = vmatpush1.msra.mxu0 %v7678
  %7680 = vmatprep.subr.mxu0 0.0
  %v7681 = vand.u32 %v6788, 4294901760
  %v7682 = vsub.f32 %v6788, %v7681
  %v7683 = vand.u32 %v7682, 4294901760
  %7684 = vmatpush1.msra.mxu0 %v7683
  %7685 = vmatprep.subr.mxu0 0.0
  %v7686 = vand.u32 %v6789, 4294901760
  %v7687 = vsub.f32 %v6789, %v7686
  %v7688 = vand.u32 %v7687, 4294901760
  %7689 = vmatpush1.msra.mxu0 %v7688
  %7690 = vmatprep.subr.mxu0 0.0
  %7691 = vmatpush1.msra.mxu0 0.0
  %7692 = vmatprep.subr.mxu0 0.0
  %7693 = vmatpush1.msra.mxu0 0.0
  %7694 = vmatprep.subr.mxu0 0.0
  %7695 = vmatpush1.msra.mxu0 0.0
  %7696 = vmatprep.subr.mxu0 0.0
  %7697 = vmatpush1.msra.mxu0 0.0
  %7698 = vmatprep.subr.mxu0 0.0
  %7699 = vmatpush1.msra.mxu0 0.0
  %7700 = vmatprep.subr.mxu0 0.0
  %7701 = vmatpush1.msra.mxu0 0.0
  %7702 = vmatprep.subr.mxu0 0.0
  %7703 = vmatpush1.msra.mxu0 0.0
  %7704 = vmatprep.subr.mxu0 0.0
  %7705 = vmatpush1.msra.mxu0 0.0
  %7706 = vmatprep.subr.mxu0 0.0
  %7707 = vmatpush1.msra.mxu0 0.0
  %7708 = vmatprep.subr.mxu0 0.0
  %7709 = vmatpush1.msra.mxu0 0.0
  %7710 = vmatprep.subr.mxu0 0.0
  %7711 = vmatpush1.msra.mxu0 0.0
  %7712 = vmatprep.subr.mxu0 0.0
  %7713 = vmatpush1.msra.mxu0 0.0
  %7714 = vmatprep.subr.mxu0 0.0
  %7715 = vmatpush1.msra.mxu0 0.0
  %7716 = vmatprep.subr.mxu0 0.0
  %7717 = vmatpush1.msra.mxu0 0.0
  %7718 = vmatprep.subr.mxu0 0.0
  %7719 = vmatpush1.msra.mxu0 0.0
  %7720 = vmatprep.subr.mxu0 0.0
  %7721 = vmatpush1.msra.mxu0 0.0
  %7722 = vmatprep.subr.mxu0 0.0
  %7723 = vmatpush1.msra.mxu0 0.0
  %7724 = vmatprep.subr.mxu0 0.0
  %7725 = vmatpush1.msra.mxu0 0.0
  %7726 = vmatprep.subr.mxu0 0.0
  %7727 = vmatpush1.msra.mxu0 0.0
  %7728 = vmatprep.subr.mxu0 0.0
  %7729 = vmatpush1.msra.mxu0 0.0
  %7730 = vmatprep.subr.mxu0 0.0
  %7731 = vmatpush1.msra.mxu0 0.0
  %7732 = vmatprep.subr.mxu0 0.0
  %7733 = vmatpush1.msra.mxu0 0.0
  %7734 = vmatprep.subr.mxu0 0.0
  %7735 = vmatpush1.msra.mxu0 0.0
  %7736 = vmatprep.subr.mxu0 0.0
  %7737 = vmatpush1.msra.mxu0 0.0
  %7738 = vmatprep.mubr.f32.mxu0 0.0
  %v7739 = vand.u32 %v7285, 4294901760
  %7740 = vmatmul.mubr.f32.gmra.mrb[0].mxu0 %v7739
  %v7741 = vpop.f32.mrb[0].mxu0
  %v7742 = vadd.f32 %v7647, %v7741
  %v7743 = vpop.f32.mrb[0].mxu0
  %7744 = vdwg.mxu0
  %7745 = vmatprep.subr.mxu0 0.0
  %v7746 = vand.u32 %v6782, 4294901760
  %7747 = vmatpush1.msra.mxu0 %v7746
  %7748 = vmatprep.subr.mxu0 0.0
  %v7749 = vand.u32 %v6783, 4294901760
  %7750 = vmatpush1.msra.mxu0 %v7749
  %7751 = vmatprep.subr.mxu0 0.0
  %v7752 = vand.u32 %v6784, 4294901760
  %7753 = vmatpush1.msra.mxu0 %v7752
  %7754 = vmatprep.subr.mxu0 0.0
  %v7755 = vand.u32 %v6785, 4294901760
  %7756 = vmatpush1.msra.mxu0 %v7755
  %7757 = vmatprep.subr.mxu0 0.0
  %v7758 = vand.u32 %v6786, 4294901760
  %7759 = vmatpush1.msra.mxu0 %v7758
  %7760 = vmatprep.subr.mxu0 0.0
  %v7761 = vand.u32 %v6787, 4294901760
  %7762 = vmatpush1.msra.mxu0 %v7761
  %7763 = vmatprep.subr.mxu0 0.0
  %v7764 = vand.u32 %v6788, 4294901760
  %7765 = vmatpush1.msra.mxu0 %v7764
  %7766 = vmatprep.subr.mxu0 0.0
  %v7767 = vand.u32 %v6789, 4294901760
  %7768 = vmatpush1.msra.mxu0 %v7767
  %7769 = vmatprep.subr.mxu0 0.0
  %7770 = vmatpush1.msra.mxu0 0.0
  %7771 = vmatprep.subr.mxu0 0.0
  %7772 = vmatpush1.msra.mxu0 0.0
  %7773 = vmatprep.subr.mxu0 0.0
  %7774 = vmatpush1.msra.mxu0 0.0
  %7775 = vmatprep.subr.mxu0 0.0
  %7776 = vmatpush1.msra.mxu0 0.0
  %7777 = vmatprep.subr.mxu0 0.0
  %7778 = vmatpush1.msra.mxu0 0.0
  %7779 = vmatprep.subr.mxu0 0.0
  %7780 = vmatpush1.msra.mxu0 0.0
  %7781 = vmatprep.subr.mxu0 0.0
  %7782 = vmatpush1.msra.mxu0 0.0
  %7783 = vmatprep.subr.mxu0 0.0
  %7784 = vmatpush1.msra.mxu0 0.0
  %7785 = vmatprep.subr.mxu0 0.0
  %7786 = vmatpush1.msra.mxu0 0.0
  %7787 = vmatprep.subr.mxu0 0.0
  %7788 = vmatpush1.msra.mxu0 0.0
  %7789 = vmatprep.subr.mxu0 0.0
  %7790 = vmatpush1.msra.mxu0 0.0
  %7791 = vmatprep.subr.mxu0 0.0
  %7792 = vmatpush1.msra.mxu0 0.0
  %7793 = vmatprep.subr.mxu0 0.0
  %7794 = vmatpush1.msra.mxu0 0.0
  %7795 = vmatprep.subr.mxu0 0.0
  %7796 = vmatpush1.msra.mxu0 0.0
  %7797 = vmatprep.subr.mxu0 0.0
  %7798 = vmatpush1.msra.mxu0 0.0
  %7799 = vmatprep.subr.mxu0 0.0
  %7800 = vmatpush1.msra.mxu0 0.0
  %7801 = vmatprep.subr.mxu0 0.0
  %7802 = vmatpush1.msra.mxu0 0.0
  %7803 = vmatprep.subr.mxu0 0.0
  %7804 = vmatpush1.msra.mxu0 0.0
  %7805 = vmatprep.subr.mxu0 0.0
  %7806 = vmatpush1.msra.mxu0 0.0
  %7807 = vmatprep.subr.mxu0 0.0
  %7808 = vmatpush1.msra.mxu0 0.0
  %7809 = vmatprep.subr.mxu0 0.0
  %7810 = vmatpush1.msra.mxu0 0.0
  %7811 = vmatprep.subr.mxu0 0.0
  %7812 = vmatpush1.msra.mxu0 0.0
  %7813 = vmatprep.subr.mxu0 0.0
  %7814 = vmatpush1.msra.mxu0 0.0
  %7815 = vmatprep.subr.mxu0 0.0
  %7816 = vmatpush1.msra.mxu0 0.0
  %7817 = vmatprep.mubr.f32.mxu0 0.0
  %v7818 = vand.u32 %v7285, 4294901760
  %7819 = vmatmul.mubr.f32.gmra.mrb[0].mxu0 %v7818
  %v7820 = vpop.f32.mrb[0].mxu0
  %v7821 = vadd.f32 %v7742, %v7820
  %v7822 = vpop.f32.mrb[0].mxu0
  %7823 = vdwg.mxu0
  %v7824 = vld [vmem:[%s12] sm:$0xff]
  %v7825 = vld [vmem:[%s12 + $0x8] sm:$0xff]
  %v7826 = vld [vmem:[%s12 + $0x10] sm:$0xff]
  %v7827 = vld [vmem:[%s12 + $0x18] sm:$0xff]
  %7829 = vrot.lane.b32.xlu0 %v6781, 64
  %v7830 = vpop.permute.xlu0 %7829
  %v7831 = vsel %vm2241, %v7830, 0
  %7833 = vmatprep.subr.mxu0 0.0
  %v7834 = vand.u32 %v7824, 4294901760
  %7835 = vmatpush1.msra.mxu0 %v7834
  %7836 = vmatprep.subr.mxu0 0.0
  %v7837 = vand.u32 %v7825, 4294901760
  %7838 = vmatpush1.msra.mxu0 %v7837
  %7839 = vmatprep.subr.mxu0 0.0
  %v7840 = vand.u32 %v7826, 4294901760
  %7841 = vmatpush1.msra.mxu0 %v7840
  %7842 = vmatprep.subr.mxu0 0.0
  %v7843 = vand.u32 %v7827, 4294901760
  %7844 = vmatpush1.msra.mxu0 %v7843
  %7845 = vmatprep.subr.mxu0 0.0
  %7846 = vmatpush1.msra.mxu0 0.0
  %7847 = vmatprep.subr.mxu0 0.0
  %7848 = vmatpush1.msra.mxu0 0.0
  %7849 = vmatprep.subr.mxu0 0.0
  %7850 = vmatpush1.msra.mxu0 0.0
  %7851 = vmatprep.subr.mxu0 0.0
  %7852 = vmatpush1.msra.mxu0 0.0
  %7853 = vmatprep.subr.mxu0 0.0
  %7854 = vmatpush1.msra.mxu0 0.0
  %7855 = vmatprep.subr.mxu0 0.0
  %7856 = vmatpush1.msra.mxu0 0.0
  %7857 = vmatprep.subr.mxu0 0.0
  %7858 = vmatpush1.msra.mxu0 0.0
  %7859 = vmatprep.subr.mxu0 0.0
  %7860 = vmatpush1.msra.mxu0 0.0
  %7861 = vmatprep.subr.mxu0 0.0
  %7862 = vmatpush1.msra.mxu0 0.0
  %7863 = vmatprep.subr.mxu0 0.0
  %7864 = vmatpush1.msra.mxu0 0.0
  %7865 = vmatprep.subr.mxu0 0.0
  %7866 = vmatpush1.msra.mxu0 0.0
  %7867 = vmatprep.subr.mxu0 0.0
  %7868 = vmatpush1.msra.mxu0 0.0
  %7869 = vmatprep.subr.mxu0 0.0
  %7870 = vmatpush1.msra.mxu0 0.0
  %7871 = vmatprep.subr.mxu0 0.0
  %7872 = vmatpush1.msra.mxu0 0.0
  %7873 = vmatprep.subr.mxu0 0.0
  %7874 = vmatpush1.msra.mxu0 0.0
  %7875 = vmatprep.subr.mxu0 0.0
  %7876 = vmatpush1.msra.mxu0 0.0
  %7877 = vmatprep.subr.mxu0 0.0
  %7878 = vmatpush1.msra.mxu0 0.0
  %7879 = vmatprep.subr.mxu0 0.0
  %7880 = vmatpush1.msra.mxu0 0.0
  %7881 = vmatprep.subr.mxu0 0.0
  %7882 = vmatpush1.msra.mxu0 0.0
  %7883 = vmatprep.subr.mxu0 0.0
  %7884 = vmatpush1.msra.mxu0 0.0
  %7885 = vmatprep.subr.mxu0 0.0
  %7886 = vmatpush1.msra.mxu0 0.0
  %7887 = vmatprep.subr.mxu0 0.0
  %7888 = vmatpush1.msra.mxu0 0.0
  %7889 = vmatprep.subr.mxu0 0.0
  %7890 = vmatpush1.msra.mxu0 0.0
  %7891 = vmatprep.subr.mxu0 0.0
  %7892 = vmatpush1.msra.mxu0 0.0
  %7893 = vmatprep.subr.mxu0 0.0
  %7894 = vmatpush1.msra.mxu0 0.0
  %7895 = vmatprep.subr.mxu0 0.0
  %7896 = vmatpush1.msra.mxu0 0.0
  %7897 = vmatprep.subr.mxu0 0.0
  %7898 = vmatpush1.msra.mxu0 0.0
  %7899 = vmatprep.subr.mxu0 0.0
  %7900 = vmatpush1.msra.mxu0 0.0
  %7901 = vmatprep.mubr.f32.mxu0 0.0
  %v7902 = vand.u32 %v7831, 4294901760
  %v7903 = vsub.f32 %v7831, %v7902
  %v7904 = vand.u32 %v7903, 4294901760
  %v7905 = vsub.f32 %v7903, %v7904
  %v7906 = vand.u32 %v7905, 4294901760
  %7907 = vmatmul.mubr.f32.gmra.mrb[0].mxu0 %v7906
  %v7908 = vpop.f32.mrb[0].mxu0
  %v7909 = vadd.f32 0.0, %v7908
  %v7910 = vpop.f32.mrb[0].mxu0
  %7911 = vdwg.mxu0
  %7912 = vmatprep.subr.mxu0 0.0
  %v7913 = vand.u32 %v7824, 4294901760
  %v7914 = vsub.f32 %v7824, %v7913
  %v7915 = vand.u32 %v7914, 4294901760
  %v7916 = vsub.f32 %v7914, %v7915
  %v7917 = vand.u32 %v7916, 4294901760
  %7918 = vmatpush1.msra.mxu0 %v7917
  %7919 = vmatprep.subr.mxu0 0.0
  %v7920 = vand.u32 %v7825, 4294901760
  %v7921 = vsub.f32 %v7825, %v7920
  %v7922 = vand.u32 %v7921, 4294901760
  %v7923 = vsub.f32 %v7921, %v7922
  %v7924 = vand.u32 %v7923, 4294901760
  %7925 = vmatpush1.msra.mxu0 %v7924
  %7926 = vmatprep.subr.mxu0 0.0
  %v7927 = vand.u32 %v7826, 4294901760
  %v7928 = vsub.f32 %v7826, %v7927
  %v7929 = vand.u32 %v7928, 4294901760
  %v7930 = vsub.f32 %v7928, %v7929
  %v7931 = vand.u32 %v7930, 4294901760
  %7932 = vmatpush1.msra.mxu0 %v7931
  %7933 = vmatprep.subr.mxu0 0.0
  %v7934 = vand.u32 %v7827, 4294901760
  %v7935 = vsub.f32 %v7827, %v7934
  %v7936 = vand.u32 %v7935, 4294901760
  %v7937 = vsub.f32 %v7935, %v7936
  %v7938 = vand.u32 %v7937, 4294901760
  %7939 = vmatpush1.msra.mxu0 %v7938
  %7940 = vmatprep.subr.mxu0 0.0
  %7941 = vmatpush1.msra.mxu0 0.0
  %7942 = vmatprep.subr.mxu0 0.0
  %7943 = vmatpush1.msra.mxu0 0.0
  %7944 = vmatprep.subr.mxu0 0.0
  %7945 = vmatpush1.msra.mxu0 0.0
  %7946 = vmatprep.subr.mxu0 0.0
  %7947 = vmatpush1.msra.mxu0 0.0
  %7948 = vmatprep.subr.mxu0 0.0
  %7949 = vmatpush1.msra.mxu0 0.0
  %7950 = vmatprep.subr.mxu0 0.0
  %7951 = vmatpush1.msra.mxu0 0.0
  %7952 = vmatprep.subr.mxu0 0.0
  %7953 = vmatpush1.msra.mxu0 0.0
  %7954 = vmatprep.subr.mxu0 0.0
  %7955 = vmatpush1.msra.mxu0 0.0
  %7956 = vmatprep.subr.mxu0 0.0
  %7957 = vmatpush1.msra.mxu0 0.0
  %7958 = vmatprep.subr.mxu0 0.0
  %7959 = vmatpush1.msra.mxu0 0.0
  %7960 = vmatprep.subr.mxu0 0.0
  %7961 = vmatpush1.msra.mxu0 0.0
  %7962 = vmatprep.subr.mxu0 0.0
  %7963 = vmatpush1.msra.mxu0 0.0
  %7964 = vmatprep.subr.mxu0 0.0
  %7965 = vmatpush1.msra.mxu0 0.0
  %7966 = vmatprep.subr.mxu0 0.0
  %7967 = vmatpush1.msra.mxu0 0.0
  %7968 = vmatprep.subr.mxu0 0.0
  %7969 = vmatpush1.msra.mxu0 0.0
  %7970 = vmatprep.subr.mxu0 0.0
  %7971 = vmatpush1.msra.mxu0 0.0
  %7972 = vmatprep.subr.mxu0 0.0
  %7973 = vmatpush1.msra.mxu0 0.0
  %7974 = vmatprep.subr.mxu0 0.0
  %7975 = vmatpush1.msra.mxu0 0.0
  %7976 = vmatprep.subr.mxu0 0.0
  %7977 = vmatpush1.msra.mxu0 0.0
  %7978 = vmatprep.subr.mxu0 0.0
  %7979 = vmatpush1.msra.mxu0 0.0
  %7980 = vmatprep.subr.mxu0 0.0
  %7981 = vmatpush1.msra.mxu0 0.0
  %7982 = vmatprep.subr.mxu0 0.0
  %7983 = vmatpush1.msra.mxu0 0.0
  %7984 = vmatprep.subr.mxu0 0.0
  %7985 = vmatpush1.msra.mxu0 0.0
  %7986 = vmatprep.subr.mxu0 0.0
  %7987 = vmatpush1.msra.mxu0 0.0
  %7988 = vmatprep.subr.mxu0 0.0
  %7989 = vmatpush1.msra.mxu0 0.0
  %7990 = vmatprep.subr.mxu0 0.0
  %7991 = vmatpush1.msra.mxu0 0.0
  %7992 = vmatprep.subr.mxu0 0.0
  %7993 = vmatpush1.msra.mxu0 0.0
  %7994 = vmatprep.subr.mxu0 0.0
  %7995 = vmatpush1.msra.mxu0 0.0
  %7996 = vmatprep.mubr.f32.mxu0 0.0
  %v7997 = vand.u32 %v7831, 4294901760
  %7998 = vmatmul.mubr.f32.gmra.mrb[0].mxu0 %v7997
  %v7999 = vpop.f32.mrb[0].mxu0
  %v8000 = vadd.f32 %v7909, %v7999
  %v8001 = vpop.f32.mrb[0].mxu0
  %8002 = vdwg.mxu0
  %8003 = vmatprep.subr.mxu0 0.0
  %v8004 = vand.u32 %v7824, 4294901760
  %v8005 = vsub.f32 %v7824, %v8004
  %8006 = vmatpush1.msra.mxu0 %v8005
  %8007 = vmatprep.subr.mxu0 0.0
  %v8008 = vand.u32 %v7825, 4294901760
  %v8009 = vsub.f32 %v7825, %v8008
  %8010 = vmatpush1.msra.mxu0 %v8009
  %8011 = vmatprep.subr.mxu0 0.0
  %v8012 = vand.u32 %v7826, 4294901760
  %v8013 = vsub.f32 %v7826, %v8012
  %8014 = vmatpush1.msra.mxu0 %v8013
  %8015 = vmatprep.subr.mxu0 0.0
  %v8016 = vand.u32 %v7827, 4294901760
  %v8017 = vsub.f32 %v7827, %v8016
  %8018 = vmatpush1.msra.mxu0 %v8017
  %8019 = vmatprep.subr.mxu0 0.0
  %8020 = vmatpush1.msra.mxu0 0.0
  %8021 = vmatprep.subr.mxu0 0.0
  %8022 = vmatpush1.msra.mxu0 0.0
  %8023 = vmatprep.subr.mxu0 0.0
  %8024 = vmatpush1.msra.mxu0 0.0
  %8025 = vmatprep.subr.mxu0 0.0
  %8026 = vmatpush1.msra.mxu0 0.0
  %8027 = vmatprep.subr.mxu0 0.0
  %8028 = vmatpush1.msra.mxu0 0.0
  %8029 = vmatprep.subr.mxu0 0.0
  %8030 = vmatpush1.msra.mxu0 0.0
  %8031 = vmatprep.subr.mxu0 0.0
  %8032 = vmatpush1.msra.mxu0 0.0
  %8033 = vmatprep.subr.mxu0 0.0
  %8034 = vmatpush1.msra.mxu0 0.0
  %8035 = vmatprep.subr.mxu0 0.0
  %8036 = vmatpush1.msra.mxu0 0.0
  %8037 = vmatprep.subr.mxu0 0.0
  %8038 = vmatpush1.msra.mxu0 0.0
  %8039 = vmatprep.subr.mxu0 0.0
  %8040 = vmatpush1.msra.mxu0 0.0
  %8041 = vmatprep.subr.mxu0 0.0
  %8042 = vmatpush1.msra.mxu0 0.0
  %8043 = vmatprep.subr.mxu0 0.0
  %8044 = vmatpush1.msra.mxu0 0.0
  %8045 = vmatprep.subr.mxu0 0.0
  %8046 = vmatpush1.msra.mxu0 0.0
  %8047 = vmatprep.subr.mxu0 0.0
  %8048 = vmatpush1.msra.mxu0 0.0
  %8049 = vmatprep.subr.mxu0 0.0
  %8050 = vmatpush1.msra.mxu0 0.0
  %8051 = vmatprep.subr.mxu0 0.0
  %8052 = vmatpush1.msra.mxu0 0.0
  %8053 = vmatprep.subr.mxu0 0.0
  %8054 = vmatpush1.msra.mxu0 0.0
  %8055 = vmatprep.subr.mxu0 0.0
  %8056 = vmatpush1.msra.mxu0 0.0
  %8057 = vmatprep.subr.mxu0 0.0
  %8058 = vmatpush1.msra.mxu0 0.0
  %8059 = vmatprep.subr.mxu0 0.0
  %8060 = vmatpush1.msra.mxu0 0.0
  %8061 = vmatprep.subr.mxu0 0.0
  %8062 = vmatpush1.msra.mxu0 0.0
  %8063 = vmatprep.subr.mxu0 0.0
  %8064 = vmatpush1.msra.mxu0 0.0
  %8065 = vmatprep.subr.mxu0 0.0
  %8066 = vmatpush1.msra.mxu0 0.0
  %8067 = vmatprep.subr.mxu0 0.0
  %8068 = vmatpush1.msra.mxu0 0.0
  %8069 = vmatprep.subr.mxu0 0.0
  %8070 = vmatpush1.msra.mxu0 0.0
  %8071 = vmatprep.subr.mxu0 0.0
  %8072 = vmatpush1.msra.mxu0 0.0
  %8073 = vmatprep.subr.mxu0 0.0
  %8074 = vmatpush1.msra.mxu0 0.0
  %8075 = vmatprep.mubr.f32.mxu0 0.0
  %v8076 = vand.u32 %v7831, 4294901760
  %v8077 = vsub.f32 %v7831, %v8076
  %8078 = vmatmul.mubr.f32.gmra.mrb[0].mxu0 %v8077
  %v8079 = vpop.f32.mrb[0].mxu0
  %v8080 = vadd.f32 %v8000, %v8079
  %v8081 = vpop.f32.mrb[0].mxu0
  %8082 = vdwg.mxu0
  %8083 = vmatprep.subr.mxu0 0.0
  %v8084 = vand.u32 %v7824, 4294901760
  %8085 = vmatpush1.msra.mxu0 %v8084
  %8086 = vmatprep.subr.mxu0 0.0
  %v8087 = vand.u32 %v7825, 4294901760
  %8088 = vmatpush1.msra.mxu0 %v8087
  %8089 = vmatprep.subr.mxu0 0.0
  %v8090 = vand.u32 %v7826, 4294901760
  %8091 = vmatpush1.msra.mxu0 %v8090
  %8092 = vmatprep.subr.mxu0 0.0
  %v8093 = vand.u32 %v7827, 4294901760
  %8094 = vmatpush1.msra.mxu0 %v8093
  %8095 = vmatprep.subr.mxu0 0.0
  %8096 = vmatpush1.msra.mxu0 0.0
  %8097 = vmatprep.subr.mxu0 0.0
  %8098 = vmatpush1.msra.mxu0 0.0
  %8099 = vmatprep.subr.mxu0 0.0
  %8100 = vmatpush1.msra.mxu0 0.0
  %8101 = vmatprep.subr.mxu0 0.0
  %8102 = vmatpush1.msra.mxu0 0.0
  %8103 = vmatprep.subr.mxu0 0.0
  %8104 = vmatpush1.msra.mxu0 0.0
  %8105 = vmatprep.subr.mxu0 0.0
  %8106 = vmatpush1.msra.mxu0 0.0
  %8107 = vmatprep.subr.mxu0 0.0
  %8108 = vmatpush1.msra.mxu0 0.0
  %8109 = vmatprep.subr.mxu0 0.0
  %8110 = vmatpush1.msra.mxu0 0.0
  %8111 = vmatprep.subr.mxu0 0.0
  %8112 = vmatpush1.msra.mxu0 0.0
  %8113 = vmatprep.subr.mxu0 0.0
  %8114 = vmatpush1.msra.mxu0 0.0
  %8115 = vmatprep.subr.mxu0 0.0
  %8116 = vmatpush1.msra.mxu0 0.0
  %8117 = vmatprep.subr.mxu0 0.0
  %8118 = vmatpush1.msra.mxu0 0.0
  %8119 = vmatprep.subr.mxu0 0.0
  %8120 = vmatpush1.msra.mxu0 0.0
  %8121 = vmatprep.subr.mxu0 0.0
  %8122 = vmatpush1.msra.mxu0 0.0
  %8123 = vmatprep.subr.mxu0 0.0
  %8124 = vmatpush1.msra.mxu0 0.0
  %8125 = vmatprep.subr.mxu0 0.0
  %8126 = vmatpush1.msra.mxu0 0.0
  %8127 = vmatprep.subr.mxu0 0.0
  %8128 = vmatpush1.msra.mxu0 0.0
  %8129 = vmatprep.subr.mxu0 0.0
  %8130 = vmatpush1.msra.mxu0 0.0
  %8131 = vmatprep.subr.mxu0 0.0
  %8132 = vmatpush1.msra.mxu0 0.0
  %8133 = vmatprep.subr.mxu0 0.0
  %8134 = vmatpush1.msra.mxu0 0.0
  %8135 = vmatprep.subr.mxu0 0.0
  %8136 = vmatpush1.msra.mxu0 0.0
  %8137 = vmatprep.subr.mxu0 0.0
  %8138 = vmatpush1.msra.mxu0 0.0
  %8139 = vmatprep.subr.mxu0 0.0
  %8140 = vmatpush1.msra.mxu0 0.0
  %8141 = vmatprep.subr.mxu0 0.0
  %8142 = vmatpush1.msra.mxu0 0.0
  %8143 = vmatprep.subr.mxu0 0.0
  %8144 = vmatpush1.msra.mxu0 0.0
  %8145 = vmatprep.subr.mxu0 0.0
  %8146 = vmatpush1.msra.mxu0 0.0
  %8147 = vmatprep.subr.mxu0 0.0
  %8148 = vmatpush1.msra.mxu0 0.0
  %8149 = vmatprep.subr.mxu0 0.0
  %8150 = vmatpush1.msra.mxu0 0.0
  %8151 = vmatprep.mubr.f32.mxu0 0.0
  %v8152 = vand.u32 %v7831, 4294901760
  %v8153 = vsub.f32 %v7831, %v8152
  %v8154 = vand.u32 %v8153, 4294901760
  %8155 = vmatmul.mubr.f32.gmra.mrb[0].mxu0 %v8154
  %v8156 = vpop.f32.mrb[0].mxu0
  %v8157 = vadd.f32 %v8080, %v8156
  %v8158 = vpop.f32.mrb[0].mxu0
  %8159 = vdwg.mxu0
  %8160 = vmatprep.subr.mxu0 0.0
  %v8161 = vand.u32 %v7824, 4294901760
  %v8162 = vsub.f32 %v7824, %v8161
  %v8163 = vand.u32 %v8162, 4294901760
  %8164 = vmatpush1.msra.mxu0 %v8163
  %8165 = vmatprep.subr.mxu0 0.0
  %v8166 = vand.u32 %v7825, 4294901760
  %v8167 = vsub.f32 %v7825, %v8166
  %v8168 = vand.u32 %v8167, 4294901760
  %8169 = vmatpush1.msra.mxu0 %v8168
  %8170 = vmatprep.subr.mxu0 0.0
  %v8171 = vand.u32 %v7826, 4294901760
  %v8172 = vsub.f32 %v7826, %v8171
  %v8173 = vand.u32 %v8172, 4294901760
  %8174 = vmatpush1.msra.mxu0 %v8173
  %8175 = vmatprep.subr.mxu0 0.0
  %v8176 = vand.u32 %v7827, 4294901760
  %v8177 = vsub.f32 %v7827, %v8176
  %v8178 = vand.u32 %v8177, 4294901760
  %8179 = vmatpush1.msra.mxu0 %v8178
  %8180 = vmatprep.subr.mxu0 0.0
  %8181 = vmatpush1.msra.mxu0 0.0
  %8182 = vmatprep.subr.mxu0 0.0
  %8183 = vmatpush1.msra.mxu0 0.0
  %8184 = vmatprep.subr.mxu0 0.0
  %8185 = vmatpush1.msra.mxu0 0.0
  %8186 = vmatprep.subr.mxu0 0.0
  %8187 = vmatpush1.msra.mxu0 0.0
  %8188 = vmatprep.subr.mxu0 0.0
  %8189 = vmatpush1.msra.mxu0 0.0
  %8190 = vmatprep.subr.mxu0 0.0
  %8191 = vmatpush1.msra.mxu0 0.0
  %8192 = vmatprep.subr.mxu0 0.0
  %8193 = vmatpush1.msra.mxu0 0.0
  %8194 = vmatprep.subr.mxu0 0.0
  %8195 = vmatpush1.msra.mxu0 0.0
  %8196 = vmatprep.subr.mxu0 0.0
  %8197 = vmatpush1.msra.mxu0 0.0
  %8198 = vmatprep.subr.mxu0 0.0
  %8199 = vmatpush1.msra.mxu0 0.0
  %8200 = vmatprep.subr.mxu0 0.0
  %8201 = vmatpush1.msra.mxu0 0.0
  %8202 = vmatprep.subr.mxu0 0.0
  %8203 = vmatpush1.msra.mxu0 0.0
  %8204 = vmatprep.subr.mxu0 0.0
  %8205 = vmatpush1.msra.mxu0 0.0
  %8206 = vmatprep.subr.mxu0 0.0
  %8207 = vmatpush1.msra.mxu0 0.0
  %8208 = vmatprep.subr.mxu0 0.0
  %8209 = vmatpush1.msra.mxu0 0.0
  %8210 = vmatprep.subr.mxu0 0.0
  %8211 = vmatpush1.msra.mxu0 0.0
  %8212 = vmatprep.subr.mxu0 0.0
  %8213 = vmatpush1.msra.mxu0 0.0
  %8214 = vmatprep.subr.mxu0 0.0
  %8215 = vmatpush1.msra.mxu0 0.0
  %8216 = vmatprep.subr.mxu0 0.0
  %8217 = vmatpush1.msra.mxu0 0.0
  %8218 = vmatprep.subr.mxu0 0.0
  %8219 = vmatpush1.msra.mxu0 0.0
  %8220 = vmatprep.subr.mxu0 0.0
  %8221 = vmatpush1.msra.mxu0 0.0
  %8222 = vmatprep.subr.mxu0 0.0
  %8223 = vmatpush1.msra.mxu0 0.0
  %8224 = vmatprep.subr.mxu0 0.0
  %8225 = vmatpush1.msra.mxu0 0.0
  %8226 = vmatprep.subr.mxu0 0.0
  %8227 = vmatpush1.msra.mxu0 0.0
  %8228 = vmatprep.subr.mxu0 0.0
  %8229 = vmatpush1.msra.mxu0 0.0
  %8230 = vmatprep.subr.mxu0 0.0
  %8231 = vmatpush1.msra.mxu0 0.0
  %8232 = vmatprep.subr.mxu0 0.0
  %8233 = vmatpush1.msra.mxu0 0.0
  %8234 = vmatprep.subr.mxu0 0.0
  %8235 = vmatpush1.msra.mxu0 0.0
  %8236 = vmatprep.mubr.f32.mxu0 0.0
  %v8237 = vand.u32 %v7831, 4294901760
  %8238 = vmatmul.mubr.f32.gmra.mrb[0].mxu0 %v8237
  %v8239 = vpop.f32.mrb[0].mxu0
  %v8240 = vadd.f32 %v8157, %v8239
  %v8241 = vpop.f32.mrb[0].mxu0
  %8242 = vdwg.mxu0
  %8243 = vmatprep.subr.mxu0 0.0
  %v8244 = vand.u32 %v7824, 4294901760
  %8245 = vmatpush1.msra.mxu0 %v8244
  %8246 = vmatprep.subr.mxu0 0.0
  %v8247 = vand.u32 %v7825, 4294901760
  %8248 = vmatpush1.msra.mxu0 %v8247
  %8249 = vmatprep.subr.mxu0 0.0
  %v8250 = vand.u32 %v7826, 4294901760
  %8251 = vmatpush1.msra.mxu0 %v8250
  %8252 = vmatprep.subr.mxu0 0.0
  %v8253 = vand.u32 %v7827, 4294901760
  %8254 = vmatpush1.msra.mxu0 %v8253
  %8255 = vmatprep.subr.mxu0 0.0
  %8256 = vmatpush1.msra.mxu0 0.0
  %8257 = vmatprep.subr.mxu0 0.0
  %8258 = vmatpush1.msra.mxu0 0.0
  %8259 = vmatprep.subr.mxu0 0.0
  %8260 = vmatpush1.msra.mxu0 0.0
  %8261 = vmatprep.subr.mxu0 0.0
  %8262 = vmatpush1.msra.mxu0 0.0
  %8263 = vmatprep.subr.mxu0 0.0
  %8264 = vmatpush1.msra.mxu0 0.0
  %8265 = vmatprep.subr.mxu0 0.0
  %8266 = vmatpush1.msra.mxu0 0.0
  %8267 = vmatprep.subr.mxu0 0.0
  %8268 = vmatpush1.msra.mxu0 0.0
  %8269 = vmatprep.subr.mxu0 0.0
  %8270 = vmatpush1.msra.mxu0 0.0
  %8271 = vmatprep.subr.mxu0 0.0
  %8272 = vmatpush1.msra.mxu0 0.0
  %8273 = vmatprep.subr.mxu0 0.0
  %8274 = vmatpush1.msra.mxu0 0.0
  %8275 = vmatprep.subr.mxu0 0.0
  %8276 = vmatpush1.msra.mxu0 0.0
  %8277 = vmatprep.subr.mxu0 0.0
  %8278 = vmatpush1.msra.mxu0 0.0
  %8279 = vmatprep.subr.mxu0 0.0
  %8280 = vmatpush1.msra.mxu0 0.0
  %8281 = vmatprep.subr.mxu0 0.0
  %8282 = vmatpush1.msra.mxu0 0.0
  %8283 = vmatprep.subr.mxu0 0.0
  %8284 = vmatpush1.msra.mxu0 0.0
  %8285 = vmatprep.subr.mxu0 0.0
  %8286 = vmatpush1.msra.mxu0 0.0
  %8287 = vmatprep.subr.mxu0 0.0
  %8288 = vmatpush1.msra.mxu0 0.0
  %8289 = vmatprep.subr.mxu0 0.0
  %8290 = vmatpush1.msra.mxu0 0.0
  %8291 = vmatprep.subr.mxu0 0.0
  %8292 = vmatpush1.msra.mxu0 0.0
  %8293 = vmatprep.subr.mxu0 0.0
  %8294 = vmatpush1.msra.mxu0 0.0
  %8295 = vmatprep.subr.mxu0 0.0
  %8296 = vmatpush1.msra.mxu0 0.0
  %8297 = vmatprep.subr.mxu0 0.0
  %8298 = vmatpush1.msra.mxu0 0.0
  %8299 = vmatprep.subr.mxu0 0.0
  %8300 = vmatpush1.msra.mxu0 0.0
  %8301 = vmatprep.subr.mxu0 0.0
  %8302 = vmatpush1.msra.mxu0 0.0
  %8303 = vmatprep.subr.mxu0 0.0
  %8304 = vmatpush1.msra.mxu0 0.0
  %8305 = vmatprep.subr.mxu0 0.0
  %8306 = vmatpush1.msra.mxu0 0.0
  %8307 = vmatprep.subr.mxu0 0.0
  %8308 = vmatpush1.msra.mxu0 0.0
  %8309 = vmatprep.subr.mxu0 0.0
  %8310 = vmatpush1.msra.mxu0 0.0
  %8311 = vmatprep.mubr.f32.mxu0 0.0
  %v8312 = vand.u32 %v7831, 4294901760
  %8313 = vmatmul.mubr.f32.gmra.mrb[0].mxu0 %v8312
  %v8314 = vpop.f32.mrb[0].mxu0
  %v8315 = vadd.f32 %v8240, %v8314
  %v8316 = vpop.f32.mrb[0].mxu0
  %8317 = vdwg.mxu0
  %v8318 = vadd.f32 %v7821, %v8315
  %v8319 = vld [vmem:[%s13] sm:$0x1]
  %v8321 = vlaneseq
  %v8322 = vshrl.u32 %v8321, 7
  %v8323 = vsub.s32 0, %v8322
  %v8324 = vrot.slane %v8319, %v8323
  %v8326 = vadd.f32 %v8318, %v8324
  %8327 = vmax.xlane.f32.xlu0 %v8326
  %v8328 = vpop.xlane.xlu0 %8327
  %v8329 = vsub.f32 %v8326, %v8328
  %v8330 = vmul.f32 %v8329, 1.442695
  %v8331 = vpow.pop %v8330
  %8332 = vadd.xlane.f32.xlu0 %v8331
  %v8333 = vpop.xlane.xlu0 %8332
  %v8334 = vlog2.pop %v8333
  %v8335 = vmul.f32 %v8334, 0.6931472
  %v8336 = vsub.f32 %v8329, %v8335
  %8337 = vst [vmem:[%s14] sm:$0xff] %v8336
  // Predicated region
  $region58: #{bert_bilstm_forward.1} parent=0 // pred_check
    _
  $region59: #{bert_bilstm_forward.1} parent=0 // pred_check_branch
    %8339 = sbr.rel (0) target = $region61
  $region60: #{bert_bilstm_forward.1} parent=0 // pred_region
    _
  $region61: #{bert_bilstm_forward.1} parent=0 // pred_fallthru
    _
  // Predicated region
  $region62: #{bert_bilstm_forward.1} parent=0 // pred_check
    _
  $region63: #{bert_bilstm_forward.1} parent=0 // pred_check_branch
    %8341 = sbr.rel (0) target = $region65
  $region64: #{bert_bilstm_forward.1} parent=0 // pred_region
    _
  $region65: #{bert_bilstm_forward.1} parent=0 // pred_fallthru
    _

</llo_original>
